<compile_context>
chip_gen: v5e
topology: v5e:2x2
jax: 0.10.0
libtpu: 0.0.40
codegen_flags: <defaults>
</compile_context>

<pallas_src>
import math
import jax
import jax.numpy as jnp
from jax import lax
from jax.experimental import pallas as pl
from jax.experimental.pallas import tpu as pltpu


def _fused_upsample_conv_kernel(x_ref, w_ref, b_ref, o_ref):
    """One (image, output-lane-tile) grid step.

    x_ref: (1, H+2, W*C) bf16  per-image zero-padded rows (H halo), ORIGINAL resolution
    w_ref: (3, W*C, TL)  bf16  folded [prev | cur | next] weights for this output-lane tile
    b_ref: (1, TL)       f32   per-lane bias (channel bias tiled over 2*Wu)
    o_ref: (1, H, TL)          row j holds upsampled output rows (2j, 2j+1) for this lane tile
    """
    h = o_ref.shape[1]
    xw = x_ref[0]                                                   # (H+2, W*C), one VMEM load
    acc = jnp.dot(xw[0:h], w_ref[0], preferred_element_type=jnp.float32)          # x[j-1]
    acc += jnp.dot(xw[1:h + 1], w_ref[1], preferred_element_type=jnp.float32)     # x[j]
    acc += jnp.dot(xw[2:h + 2], w_ref[2], preferred_element_type=jnp.float32)     # x[j+1]
    o_ref[0] = (acc + b_ref[...]).astype(o_ref.dtype)


def fold_upsample_conv_params(weight, bias, W):
    """Fold nearest-2x upsample (H and W) + 'same' padding + 3x3 taps into matmul params.

    Returns (wstk, brow):
      wstk : (3, W*Cin, 2*Wu*Cout) bf16  -- [prev | cur | next] original-row weights
      brow : (1, 2*Wu*Cout)        f32
    Pure jnp (jit/trace safe). In a real model, call once at module init (depends only on the
    conv parameters and W), not per forward call.
    """
    weight = jnp.asarray(weight, jnp.float32)                       # (Cout, Cin, 3, 3)
    Cout, Cin, KH, KW = weight.shape
    Wu = 2 * W
    # A[kx, wq, wo] = 1 iff upsampled output column wo reads original column wq through tap kx
    # (cq = wo + kx - 1 is the column in upsampled+padded space; wq = cq // 2 nearest-up source).
    wo = jnp.arange(Wu)
    kx = jnp.arange(KW)
    cq = wo[None, :] + kx[:, None] - 1                              # (KW, Wu)
    valid = (cq >= 0) & (cq < Wu)
    src = jnp.where(valid, cq // 2, -1)                             # (KW, Wu)
    A = (src[:, None, :] == jnp.arange(W)[None, :, None]).astype(jnp.float32)   # (KW, W, Wu)
    # W2[ky]: (W*Cin, Wu*Cout) maps original-W input columns -> upsampled output columns.
    W2 = jnp.einsum("kqw,ciyk->yqiwc", A, weight).reshape(KH, W * Cin, Wu * Cout)
    zero = jnp.zeros_like(W2[0])
    # Even output row 2j   = x[j-1] @ W2[0]           + x[j]   @ (W2[1] + W2[2])
    # Odd  output row 2j+1 = x[j]   @ (W2[0] + W2[1]) + x[j+1] @ W2[2]
    # Lane layout per input row j: [even row 2j | odd row 2j+1], each (Wu, Cout) flattened.
    w_prev = jnp.concatenate([W2[0], zero], axis=-1)
    w_cur = jnp.concatenate([W2[1] + W2[2], W2[0] + W2[1]], axis=-1)
    w_next = jnp.concatenate([zero, W2[2]], axis=-1)
    wstk = jnp.stack([w_prev, w_cur, w_next], axis=0).astype(jnp.bfloat16)
    brow = jnp.tile(jnp.asarray(bias, jnp.float32), 2 * Wu)[None, :]
    return wstk, brow


def _pick_lane_tile(L, cap=1024):
    """Largest multiple-of-128 divisor of L that is <= cap (full L if it already fits)."""
    if L <= cap:
        return L
    t = cap - cap % 128
    while t >= 128:
        if L % t == 0:
            return t
        t -= 128
    return L


def upsample_forward(x, weight=None, bias=None, *, with_conv=True, channels_last=False,
                     folded=None, out_dtype=None):
    """Forward pass of Upsample: nearest 2x interpolate, then optional 3x3 'same' conv.

    x is NCHW by default (matches the PyTorch module contract). Pass channels_last=True to run
    NHWC end-to-end with no layout transposes (recommended when the surrounding model is NHWC).
    `folded` is an optional (wstk, brow) pair from fold_upsample_conv_params (precompute once).
    """
    if not with_conv:
        # Nearest-neighbour 2x duplication only: single broadcast + reshape => one HBM write.
        # TODO(synk): kept in plain JAX (memory-bound copy; a Pallas kernel adds nothing here).
        if channels_last:
            N, H, W, C = x.shape
            return jnp.broadcast_to(x[:, :, None, :, None, :],
                                    (N, H, 2, W, 2, C)).reshape(N, 2 * H, 2 * W, C)
        N, C, H, W = x.shape
        return jnp.broadcast_to(x[:, :, :, None, :, None],
                                (N, C, H, 2, W, 2)).reshape(N, C, 2 * H, 2 * W)

    if channels_last:
        N, H, W, C = x.shape
        x_nhwc = x
    else:
        N, C, H, W = x.shape
        x_nhwc = jnp.transpose(x, (0, 2, 3, 1))   # boundary transpose, NCHW module contract only
    Hu, Wu = 2 * H, 2 * W
    out_dtype = x.dtype if out_dtype is None else out_dtype

    if folded is None:
        folded = fold_upsample_conv_params(weight, bias, W)
    wstk, brow = folded
    K1 = W * C                      # contraction size per ky tap
    L = 2 * Wu * C                  # lanes per input row: [even row | odd row] x (Wu, C)

    # Single zero-pad along H (the only extra pass over the input); bf16 MXU operand.
    xp = jnp.pad(x_nhwc.reshape(N, H, K1).astype(jnp.bfloat16), ((0, 0), (1, 1), (0, 0)))

    TL = _pick_lane_tile(L)
    grid = (N, L // TL)             # both axes fully parallel; >= 2 steps keeps both v7x TCs busy

    out_flat = pl.pallas_call(
        _fused_upsample_conv_kernel,
        out_shape=jax.ShapeDtypeStruct((N, H, L), out_dtype),
        grid=grid,
        in_specs=[
            pl.BlockSpec((1, H + 2, K1), lambda n, l: (n, 0, 0)),
            # Grid-invariant per L-tile and small (3*K1*TL bf16). TODO(synk): at large W*C also
            # single-buffer these blocks (pipeline_mode=pl.Buffered(1)) to halve weight VMEM
            # on v7x's 64 MiB budget.
            pl.BlockSpec((3, K1, TL), lambda n, l: (0, 0, l)),
            pl.BlockSpec((1, TL), lambda n, l: (0, l)),
        ],
        out_specs=pl.BlockSpec((1, H, TL), lambda n, l: (n, 0, l)),
        compiler_params=pltpu.CompilerParams(
            dimension_semantics=("parallel", "parallel"),
            vmem_limit_bytes=32 * 1024 * 1024,
        ),
    )(xp, wstk, brow)

    # Row j lanes are [even row 2j | odd row 2j+1] x (Wu, C): reshape to NHWC is a free view.
    out_nhwc = out_flat.reshape(N, Hu, Wu, C)
    if channels_last:
        return out_nhwc
    # NHWC -> NCHW only because the module contract is NCHW (use channels_last=True to skip it).
    return jnp.transpose(out_nhwc, (0, 3, 1, 2))


if __name__ == "__main__":
    key = jax.random.PRNGKey(0)
    kx_, kw_, kb_ = jax.random.split(key, 3)

    N, C, H, W = 2, 4, 16, 16
    x = jax.random.normal(kx_, (N, C, H, W), dtype=jnp.float32)

    # Conv2d(C, C, 3, stride=1, padding=1) params, PyTorch-style uniform init.
    fan_in = C * 3 * 3
    bound = 1.0 / math.sqrt(fan_in)
    weight = jax.random.uniform(kw_, (C, C, 3, 3), minval=-bound, maxval=bound, dtype=jnp.float32)
    bias = jax.random.uniform(kb_, (C,), minval=-bound, maxval=bound, dtype=jnp.float32)

    # Reference: nearest upsample + lax conv in f32 (kernel uses bf16 operands -> loose tol).
    xu = jnp.repeat(jnp.repeat(x, 2, axis=2), 2, axis=3)
    ref = lax.conv_general_dilated(
        xu, weight, window_strides=(1, 1), padding=((1, 1), (1, 1)),
        dimension_numbers=("NCHW", "OIHW", "NCHW")) + bias.reshape(1, C, 1, 1)

    # 1) NCHW module contract, jitted end-to-end (the jnp weight fold traces cleanly under jit).
    fwd = jax.jit(lambda xx, ww, bb: upsample_forward(xx, ww, bb, with_conv=True))
    out = jax.block_until_ready(fwd(x, weight, bias))
    assert out.shape == (N, C, 2 * H, 2 * W)
    assert jnp.allclose(out, ref, atol=5e-2, rtol=5e-2), "mismatch vs reference conv (NCHW)"

    # 2) NHWC end-to-end path with the folded weights precomputed once (zero layout transposes).
    folded = fold_upsample_conv_params(weight, bias, W)
    x_nhwc = jnp.transpose(x, (0, 2, 3, 1))
    out_nhwc = jax.block_until_ready(
        upsample_forward(x_nhwc, with_conv=True, channels_last=True, folded=folded))
    assert out_nhwc.shape == (N, 2 * H, 2 * W, C)
    assert jnp.allclose(out_nhwc, jnp.transpose(ref, (0, 2, 3, 1)), atol=5e-2, rtol=5e-2), \
        "mismatch vs reference conv (NHWC)"

    # 3) with_conv=False path (nearest upsample only, exact).
    out_up = jax.block_until_ready(upsample_forward(x, with_conv=False))
    assert out_up.shape == (N, C, 2 * H, 2 * W)
    assert jnp.array_equal(out_up, jnp.repeat(jnp.repeat(x, 2, axis=2), 2, axis=3))

    print("KERNEL_OK")
</pallas_src>

<mosaic_0001>
module attributes {stable_mosaic.version = 11 : i64} {
  func.func @_fused_upsample_conv_kernel(%arg0: i32, %arg1: i32, %arg2: memref<1x18x64xbf16, #tpu.memory_space<vmem>>, %arg3: memref<3x64x256xbf16, #tpu.memory_space<vmem>>, %arg4: memref<1x256xf32, #tpu.memory_space<vmem>>, %arg5: memref<1x16x256xf32, #tpu.memory_space<vmem>>) attributes {dimension_semantics = [#tpu.dimension_semantics<parallel>, #tpu.dimension_semantics<parallel>], iteration_bounds = array<i64: 2, 1>, scalar_prefetch = 0 : i64, scratch_operands = 0 : i64, tpu.core_type = #tpu.core_type<tc>, window_params = [{transform_indices = @transform_0, window_bounds = array<i64: 1, 18, 64>}, {transform_indices = @transform_1, window_bounds = array<i64: 3, 64, 256>}, {transform_indices = @transform_2, window_bounds = array<i64: 1, 256>}, {transform_indices = @transform_3, window_bounds = array<i64: 1, 16, 256>}]} {
    %c0 = arith.constant 0 : index
    %c0_0 = arith.constant 0 : index
    %c0_1 = arith.constant 0 : index
    %0 = vector.load %arg2[%c0, %c0_0, %c0_1] : memref<1x18x64xbf16, #tpu.memory_space<vmem>>, vector<1x18x64xbf16>
    %1 = vector.shape_cast %0 : vector<1x18x64xbf16> to vector<18x64xbf16>
    %2 = vector.extract_strided_slice %1 {offsets = [0, 0], sizes = [16, 64], strides = [1, 1]} : vector<18x64xbf16> to vector<16x64xbf16>
    %c0_2 = arith.constant 0 : index
    %c0_3 = arith.constant 0 : index
    %c0_4 = arith.constant 0 : index
    %3 = vector.load %arg3[%c0_2, %c0_3, %c0_4] : memref<3x64x256xbf16, #tpu.memory_space<vmem>>, vector<1x64x256xbf16>
    %4 = vector.shape_cast %3 : vector<1x64x256xbf16> to vector<64x256xbf16>
    %cst = arith.constant dense<0.000000e+00> : vector<16x256xf32>
    %5 = tpu.matmul %2, %4, %cst {dimension_numbers = #tpu.dot_dimension_numbers<[1], [0], [0], [1], [0, 0, 1, 1], [], []>} : vector<16x64xbf16>, vector<64x256xbf16>, vector<16x256xf32> -> vector<16x256xf32>
    %6 = vector.extract_strided_slice %1 {offsets = [1, 0], sizes = [16, 64], strides = [1, 1]} : vector<18x64xbf16> to vector<16x64xbf16>
    %c1 = arith.constant 1 : index
    %c0_5 = arith.constant 0 : index
    %c0_6 = arith.constant 0 : index
    %7 = vector.load %arg3[%c1, %c0_5, %c0_6] : memref<3x64x256xbf16, #tpu.memory_space<vmem>>, vector<1x64x256xbf16>
    %8 = vector.shape_cast %7 : vector<1x64x256xbf16> to vector<64x256xbf16>
    %cst_7 = arith.constant dense<0.000000e+00> : vector<16x256xf32>
    %9 = tpu.matmul %6, %8, %cst_7 {dimension_numbers = #tpu.dot_dimension_numbers<[1], [0], [0], [1], [0, 0, 1, 1], [], []>} : vector<16x64xbf16>, vector<64x256xbf16>, vector<16x256xf32> -> vector<16x256xf32>
    %10 = arith.addf %5, %9 : vector<16x256xf32>
    %11 = vector.extract_strided_slice %1 {offsets = [2, 0], sizes = [16, 64], strides = [1, 1]} : vector<18x64xbf16> to vector<16x64xbf16>
    %c2 = arith.constant 2 : index
    %c0_8 = arith.constant 0 : index
    %c0_9 = arith.constant 0 : index
    %12 = vector.load %arg3[%c2, %c0_8, %c0_9] : memref<3x64x256xbf16, #tpu.memory_space<vmem>>, vector<1x64x256xbf16>
    %13 = vector.shape_cast %12 : vector<1x64x256xbf16> to vector<64x256xbf16>
    %cst_10 = arith.constant dense<0.000000e+00> : vector<16x256xf32>
    %14 = tpu.matmul %11, %13, %cst_10 {dimension_numbers = #tpu.dot_dimension_numbers<[1], [0], [0], [1], [0, 0, 1, 1], [], []>} : vector<16x64xbf16>, vector<64x256xbf16>, vector<16x256xf32> -> vector<16x256xf32>
    %15 = arith.addf %10, %14 : vector<16x256xf32>
    %c0_11 = arith.constant 0 : index
    %c0_12 = arith.constant 0 : index
    %16 = vector.load %arg4[%c0_11, %c0_12] : memref<1x256xf32, #tpu.memory_space<vmem>>, vector<1x256xf32>
    %17 = vector.broadcast %16 : vector<1x256xf32> to vector<16x256xf32>
    %18 = arith.addf %15, %17 : vector<16x256xf32>
    %c0_13 = arith.constant 0 : index
    %c0_14 = arith.constant 0 : index
    %c0_15 = arith.constant 0 : index
    %19 = vector.load %arg5[%c0_13, %c0_14, %c0_15] : memref<1x16x256xf32, #tpu.memory_space<vmem>>, vector<1x16x256xf32>
    %20 = vector.shape_cast %19 : vector<1x16x256xf32> to vector<16x256xf32>
    %21 = vector.shape_cast %18 : vector<16x256xf32> to vector<1x16x256xf32>
    tpu.vector_store %arg5[%c0_13, %c0_14, %c0_15], %21 {strides = array<i32>} : memref<1x16x256xf32, #tpu.memory_space<vmem>>, vector<1x16x256xf32>,
    return
  }
  func.func @transform_0(%arg0: i32, %arg1: i32) -> (i32, i32, i32) {
    %c0_i32 = arith.constant 0 : i32
    %c0_i32_0 = arith.constant 0 : i32
    %c0_i32_1 = arith.constant 0 : i32
    return %arg0, %c0_i32, %c0_i32_0 : i32, i32, i32
  }
  func.func @transform_1(%arg0: i32, %arg1: i32) -> (i32, i32, i32) {
    %c0_i32 = arith.constant 0 : i32
    %c0_i32_0 = arith.constant 0 : i32
    %c0_i32_1 = arith.constant 0 : i32
    return %c0_i32, %c0_i32_0, %arg1 : i32, i32, i32
  }
  func.func @transform_2(%arg0: i32, %arg1: i32) -> (i32, i32) {
    %c0_i32 = arith.constant 0 : i32
    %c0_i32_0 = arith.constant 0 : i32
    return %c0_i32, %arg1 : i32, i32
  }
  func.func @transform_3(%arg0: i32, %arg1: i32) -> (i32, i32, i32) {
    %c0_i32 = arith.constant 0 : i32
    %c0_i32_0 = arith.constant 0 : i32
    return %arg0, %c0_i32, %arg1 : i32, i32, i32
  }
}

</mosaic_0001>

<llo_original>
// kernel: tile.8
$region0: #{tile.8}
  #allocation2 [shape = 's32[1]{0}', space=sflag, size = 0x4, scoped, tag = 'scoped memory for tile.8']
  %s0 = inlined_call_operand.hbm [shape: f32[4], index: 0, kind: input, shape index: {}]
  %s1 = inlined_call_operand.vmem [shape: f32[64,4], index: 1, kind: output, shape index: {}]
  $region1: #{tile.8} parent=0
    #allocation0 [shape = 'u8[512]{0}', space=vmem, size = 0x400, scoped, tag = 'operand span for operand 0']
    #allocation1 [shape = 's32[1]{0}', space=sflag, size = 0x4, scoped, tag = 'scoped memory for tile.8']
    %2 = vsyncpa [#allocation1], 0
    // Predicated region
    $region2: #{tile.8} parent=1 // pred_check
      _
    $region3: #{tile.8} parent=1 // pred_check_branch
      %4 = sbr.rel (0) target = $region5
    $region4: #{tile.8} parent=1 // pred_region
      %6 = vsyncadd [#allocation1], 0
      %s8 = sshll.u32 %s0, 4
      %s9 = int_to_ptr.hbm [resolvable:$true] %s8
      %s10 = sshll.u32 [#allocation0], 4
      %s11 = int_to_ptr.vmem [resolvable:$true] %s10
      %13 = dma.hbm_to_vmem [thread:$0]  %s9, 16, %s11, [#allocation1]
    $region5: #{tile.8} parent=1 // pred_fallthru
      _
    // Predicated region
    $region6: #{tile.8} parent=1 // pred_check
      _
    $region7: #{tile.8} parent=1 // pred_check_branch
      %15 = sbr.rel (0) target = $region9
    $region8: #{tile.8} parent=1 // pred_region
      %17 = dma.done [#allocation1], 16
    $region9: #{tile.8} parent=1 // pred_fallthru
      _
    %v18 = vld [vmem:[#allocation0] ss:$0 sm:$0xff]
    %19 = vst [vmem:[%s1] sm:$0xff] %v18
    %s20 = scalar_lea.vmem %s1, 8
    %21 = vst [vmem:[%s20] sm:$0xff] %v18
    %s22 = scalar_lea.vmem %s1, 16
    %23 = vst [vmem:[%s22] sm:$0xff] %v18
    %s24 = scalar_lea.vmem %s1, 24
    %25 = vst [vmem:[%s24] sm:$0xff] %v18
    %s26 = scalar_lea.vmem %s1, 32
    %27 = vst [vmem:[%s26] sm:$0xff] %v18
    %s28 = scalar_lea.vmem %s1, 40
    %29 = vst [vmem:[%s28] sm:$0xff] %v18
    %s30 = scalar_lea.vmem %s1, 48
    %31 = vst [vmem:[%s30] sm:$0xff] %v18
    %s32 = scalar_lea.vmem %s1, 56
    %33 = vst [vmem:[%s32] sm:$0xff] %v18
    %34 = vsyncpa [#allocation1], 1

// kernel: tile.9
$region0: #{tile.9}
  %s0 = inlined_call_operand.vmem [shape: f32[64,4], index: 0, kind: input, shape index: {}]
  %s1 = inlined_call_operand.vmem [shape: f32[1,256], index: 1, kind: output, shape index: {}]
  $region1: #{tile.9} parent=0
    #allocation0 [shape = 'u8[8192]{0}', space=vmem, size = 0x2000, scoped, tag = 'scoped mem for output reshape']
    %v2 = vld [vmem:[%s0] sm:$0x1]
    %s3 = scalar_lea.vmem %s0, 31
    %v4 = vld [vmem:[%s3] sm:$0x2]
    %vm5 = vcmask 1041409
    %v6 = vsel %vm5, %v4, %v2
    %vm7 = vcmask 31744
    %8 = vst.msk [vmem:[#allocation0] ss:$8 sm:$0x3] %vm7, %v6
    %s9 = scalar_lea.vmem %s0, 31
    %v10 = vld [vmem:[%s9] sm:$0x1]
    %s11 = scalar_lea.vmem %s0, 62
    %v12 = vld [vmem:[%s11] sm:$0x2]
    %vm13 = vcmask 1041409
    %v14 = vsel %vm13, %v12, %v10
    %15 = vrot.lane.b32.xlu0 %v14, 124
    %v16 = vpop.permute.xlu0 %15
    %vm17 = vcmask 1048544
    %18 = vst.msk [vmem:[#allocation0] ss:$8 sm:$0x3] %vm17, %v16
    %s19 = scalar_lea.vmem %s0, 30
    %v20 = vld [vmem:[%s19] sm:$0x1]
    %s21 = scalar_lea.vmem %s0, 61
    %v22 = vld [vmem:[%s21] sm:$0x2]
    %vm23 = vcmask 1041409
    %v24 = vsel %vm23, %v22, %v20
    %25 = vrot.lane.b32.xlu0 %v24, 120
    %v26 = vpop.permute.xlu0 %25
    %vm27 = vcmask 1015744
    %28 = vst.msk [vmem:[#allocation0] ss:$8 sm:$0x3] %vm27, %v26
    %s29 = scalar_lea.vmem %s0, 29
    %v30 = vld [vmem:[%s29] sm:$0x1]
    %s31 = scalar_lea.vmem %s0, 60
    %v32 = vld [vmem:[%s31] sm:$0x2]
    %vm33 = vcmask 1041409
    %v34 = vsel %vm33, %v32, %v30
    %35 = vrot.lane.b32.xlu0 %v34, 116
    %v36 = vpop.permute.xlu0 %35
    %vm37 = vcmask 982944
    %38 = vst.msk [vmem:[#allocation0] ss:$8 sm:$0x3] %vm37, %v36
    %s39 = scalar_lea.vmem %s0, 28
    %v40 = vld [vmem:[%s39] sm:$0x1]
    %s41 = scalar_lea.vmem %s0, 59
    %v42 = vld [vmem:[%s41] sm:$0x2]
    %vm43 = vcmask 1041409
    %v44 = vsel %vm43, %v42, %v40
    %45 = vrot.lane.b32.xlu0 %v44, 112
    %v46 = vpop.permute.xlu0 %45
    %vm47 = vcmask 950144
    %48 = vst.msk [vmem:[#allocation0] ss:$8 sm:$0x3] %vm47, %v46
    %s49 = scalar_lea.vmem %s0, 27
    %v50 = vld [vmem:[%s49] sm:$0x1]
    %s51 = scalar_lea.vmem %s0, 58
    %v52 = vld [vmem:[%s51] sm:$0x2]
    %vm53 = vcmask 1041409
    %v54 = vsel %vm53, %v52, %v50
    %55 = vrot.lane.b32.xlu0 %v54, 108
    %v56 = vpop.permute.xlu0 %55
    %vm57 = vcmask 917344
    %58 = vst.msk [vmem:[#allocation0] ss:$8 sm:$0x3] %vm57, %v56
    %s59 = scalar_lea.vmem %s0, 26
    %v60 = vld [vmem:[%s59] sm:$0x1]
    %s61 = scalar_lea.vmem %s0, 57
    %v62 = vld [vmem:[%s61] sm:$0x2]
    %vm63 = vcmask 1041409
    %v64 = vsel %vm63, %v62, %v60
    %65 = vrot.lane.b32.xlu0 %v64, 104
    %v66 = vpop.permute.xlu0 %65
    %vm67 = vcmask 884544
    %68 = vst.msk [vmem:[#allocation0] ss:$8 sm:$0x3] %vm67, %v66
    %s69 = scalar_lea.vmem %s0, 25
    %v70 = vld [vmem:[%s69] sm:$0x1]
    %s71 = scalar_lea.vmem %s0, 56
    %v72 = vld [vmem:[%s71] sm:$0x2]
    %vm73 = vcmask 1041409
    %v74 = vsel %vm73, %v72, %v70
    %75 = vrot.lane.b32.xlu0 %v74, 100
    %v76 = vpop.permute.xlu0 %75
    %vm77 = vcmask 851744
    %78 = vst.msk [vmem:[#allocation0] ss:$8 sm:$0x3] %vm77, %v76
    %s79 = scalar_lea.vmem %s0, 24
    %v80 = vld [vmem:[%s79] sm:$0x1]
    %s81 = scalar_lea.vmem %s0, 55
    %v82 = vld [vmem:[%s81] sm:$0x2]
    %vm83 = vcmask 1041409
    %v84 = vsel %vm83, %v82, %v80
    %85 = vrot.lane.b32.xlu0 %v84, 96
    %v86 = vpop.permute.xlu0 %85
    %vm87 = vcmask 818944
    %88 = vst.msk [vmem:[#allocation0] ss:$8 sm:$0x3] %vm87, %v86
    %s89 = scalar_lea.vmem %s0, 23
    %v90 = vld [vmem:[%s89] sm:$0x1]
    %s91 = scalar_lea.vmem %s0, 54
    %v92 = vld [vmem:[%s91] sm:$0x2]
    %vm93 = vcmask 1041409
    %v94 = vsel %vm93, %v92, %v90
    %95 = vrot.lane.b32.xlu0 %v94, 92
    %v96 = vpop.permute.xlu0 %95
    %vm97 = vcmask 786144
    %98 = vst.msk [vmem:[#allocation0] ss:$8 sm:$0x3] %vm97, %v96
    %s99 = scalar_lea.vmem %s0, 22
    %v100 = vld [vmem:[%s99] sm:$0x1]
    %s101 = scalar_lea.vmem %s0, 53
    %v102 = vld [vmem:[%s101] sm:$0x2]
    %vm103 = vcmask 1041409
    %v104 = vsel %vm103, %v102, %v100
    %105 = vrot.lane.b32.xlu0 %v104, 88
    %v106 = vpop.permute.xlu0 %105
    %vm107 = vcmask 753344
    %108 = vst.msk [vmem:[#allocation0] ss:$8 sm:$0x3] %vm107, %v106
    %s109 = scalar_lea.vmem %s0, 21
    %v110 = vld [vmem:[%s109] sm:$0x1]
    %s111 = scalar_lea.vmem %s0, 52
    %v112 = vld [vmem:[%s111] sm:$0x2]
    %vm113 = vcmask 1041409
    %v114 = vsel %vm113, %v112, %v110
    %115 = vrot.lane.b32.xlu0 %v114, 84
    %v116 = vpop.permute.xlu0 %115
    %vm117 = vcmask 720544
    %118 = vst.msk [vmem:[#allocation0] ss:$8 sm:$0x3] %vm117, %v116
    %s119 = scalar_lea.vmem %s0, 20
    %v120 = vld [vmem:[%s119] sm:$0x1]
    %s121 = scalar_lea.vmem %s0, 51
    %v122 = vld [vmem:[%s121] sm:$0x2]
    %vm123 = vcmask 1041409
    %v124 = vsel %vm123, %v122, %v120
    %125 = vrot.lane.b32.xlu0 %v124, 80
    %v126 = vpop.permute.xlu0 %125
    %vm127 = vcmask 687744
    %128 = vst.msk [vmem:[#allocation0] ss:$8 sm:$0x3] %vm127, %v126
    %s129 = scalar_lea.vmem %s0, 19
    %v130 = vld [vmem:[%s129] sm:$0x1]
    %s131 = scalar_lea.vmem %s0, 50
    %v132 = vld [vmem:[%s131] sm:$0x2]
    %vm133 = vcmask 1041409
    %v134 = vsel %vm133, %v132, %v130
    %135 = vrot.lane.b32.xlu0 %v134, 76
    %v136 = vpop.permute.xlu0 %135
    %vm137 = vcmask 654944
    %138 = vst.msk [vmem:[#allocation0] ss:$8 sm:$0x3] %vm137, %v136
    %s139 = scalar_lea.vmem %s0, 18
    %v140 = vld [vmem:[%s139] sm:$0x1]
    %s141 = scalar_lea.vmem %s0, 49
    %v142 = vld [vmem:[%s141] sm:$0x2]
    %vm143 = vcmask 1041409
    %v144 = vsel %vm143, %v142, %v140
    %145 = vrot.lane.b32.xlu0 %v144, 72
    %v146 = vpop.permute.xlu0 %145
    %vm147 = vcmask 622144
    %148 = vst.msk [vmem:[#allocation0] ss:$8 sm:$0x3] %vm147, %v146
    %s149 = scalar_lea.vmem %s0, 17
    %v150 = vld [vmem:[%s149] sm:$0x1]
    %s151 = scalar_lea.vmem %s0, 48
    %v152 = vld [vmem:[%s151] sm:$0x2]
    %vm153 = vcmask 1041409
    %v154 = vsel %vm153, %v152, %v150
    %155 = vrot.lane.b32.xlu0 %v154, 68
    %v156 = vpop.permute.xlu0 %155
    %vm157 = vcmask 589344
    %158 = vst.msk [vmem:[#allocation0] ss:$8 sm:$0x3] %vm157, %v156
    %s159 = scalar_lea.vmem %s0, 16
    %v160 = vld [vmem:[%s159] sm:$0x1]
    %s161 = scalar_lea.vmem %s0, 47
    %v162 = vld [vmem:[%s161] sm:$0x2]
    %vm163 = vcmask 1041409
    %v164 = vsel %vm163, %v162, %v160
    %165 = vrot.lane.b32.xlu0 %v164, 64
    %v166 = vpop.permute.xlu0 %165
    %vm167 = vcmask 556544
    %168 = vst.msk [vmem:[#allocation0] ss:$8 sm:$0x3] %vm167, %v166
    %s169 = scalar_lea.vmem %s0, 15
    %v170 = vld [vmem:[%s169] sm:$0x1]
    %s171 = scalar_lea.vmem %s0, 46
    %v172 = vld [vmem:[%s171] sm:$0x2]
    %vm173 = vcmask 1041409
    %v174 = vsel %vm173, %v172, %v170
    %175 = vrot.lane.b32.xlu0 %v174, 60
    %v176 = vpop.permute.xlu0 %175
    %vm177 = vcmask 523744
    %178 = vst.msk [vmem:[#allocation0] ss:$8 sm:$0x3] %vm177, %v176
    %s179 = scalar_lea.vmem %s0, 14
    %v180 = vld [vmem:[%s179] sm:$0x1]
    %s181 = scalar_lea.vmem %s0, 45
    %v182 = vld [vmem:[%s181] sm:$0x2]
    %vm183 = vcmask 1041409
    %v184 = vsel %vm183, %v182, %v180
    %185 = vrot.lane.b32.xlu0 %v184, 56
    %v186 = vpop.permute.xlu0 %185
    %vm187 = vcmask 490944
    %188 = vst.msk [vmem:[#allocation0] ss:$8 sm:$0x3] %vm187, %v186
    %s189 = scalar_lea.vmem %s0, 13
    %v190 = vld [vmem:[%s189] sm:$0x1]
    %s191 = scalar_lea.vmem %s0, 44
    %v192 = vld [vmem:[%s191] sm:$0x2]
    %vm193 = vcmask 1041409
    %v194 = vsel %vm193, %v192, %v190
    %195 = vrot.lane.b32.xlu0 %v194, 52
    %v196 = vpop.permute.xlu0 %195
    %vm197 = vcmask 458144
    %198 = vst.msk [vmem:[#allocation0] ss:$8 sm:$0x3] %vm197, %v196
    %s199 = scalar_lea.vmem %s0, 12
    %v200 = vld [vmem:[%s199] sm:$0x1]
    %s201 = scalar_lea.vmem %s0, 43
    %v202 = vld [vmem:[%s201] sm:$0x2]
    %vm203 = vcmask 1041409
    %v204 = vsel %vm203, %v202, %v200
    %205 = vrot.lane.b32.xlu0 %v204, 48
    %v206 = vpop.permute.xlu0 %205
    %vm207 = vcmask 425344
    %208 = vst.msk [vmem:[#allocation0] ss:$8 sm:$0x3] %vm207, %v206
    %s209 = scalar_lea.vmem %s0, 11
    %v210 = vld [vmem:[%s209] sm:$0x1]
    %s211 = scalar_lea.vmem %s0, 42
    %v212 = vld [vmem:[%s211] sm:$0x2]
    %vm213 = vcmask 1041409
    %v214 = vsel %vm213, %v212, %v210
    %215 = vrot.lane.b32.xlu0 %v214, 44
    %v216 = vpop.permute.xlu0 %215
    %vm217 = vcmask 392544
    %218 = vst.msk [vmem:[#allocation0] ss:$8 sm:$0x3] %vm217, %v216
    %s219 = scalar_lea.vmem %s0, 10
    %v220 = vld [vmem:[%s219] sm:$0x1]
    %s221 = scalar_lea.vmem %s0, 41
    %v222 = vld [vmem:[%s221] sm:$0x2]
    %vm223 = vcmask 1041409
    %v224 = vsel %vm223, %v222, %v220
    %225 = vrot.lane.b32.xlu0 %v224, 40
    %v226 = vpop.permute.xlu0 %225
    %vm227 = vcmask 359744
    %228 = vst.msk [vmem:[#allocation0] ss:$8 sm:$0x3] %vm227, %v226
    %s229 = scalar_lea.vmem %s0, 9
    %v230 = vld [vmem:[%s229] sm:$0x1]
    %s231 = scalar_lea.vmem %s0, 40
    %v232 = vld [vmem:[%s231] sm:$0x2]
    %vm233 = vcmask 1041409
    %v234 = vsel %vm233, %v232, %v230
    %235 = vrot.lane.b32.xlu0 %v234, 36
    %v236 = vpop.permute.xlu0 %235
    %vm237 = vcmask 326944
    %238 = vst.msk [vmem:[#allocation0] ss:$8 sm:$0x3] %vm237, %v236
    %s239 = scalar_lea.vmem %s0, 8
    %v240 = vld [vmem:[%s239] sm:$0x1]
    %s241 = scalar_lea.vmem %s0, 39
    %v242 = vld [vmem:[%s241] sm:$0x2]
    %vm243 = vcmask 1041409
    %v244 = vsel %vm243, %v242, %v240
    %245 = vrot.lane.b32.xlu0 %v244, 32
    %v246 = vpop.permute.xlu0 %245
    %vm247 = vcmask 294144
    %248 = vst.msk [vmem:[#allocation0] ss:$8 sm:$0x3] %vm247, %v246
    %s249 = scalar_lea.vmem %s0, 7
    %v250 = vld [vmem:[%s249] sm:$0x1]
    %s251 = scalar_lea.vmem %s0, 38
    %v252 = vld [vmem:[%s251] sm:$0x2]
    %vm253 = vcmask 1041409
    %v254 = vsel %vm253, %v252, %v250
    %255 = vrot.lane.b32.xlu0 %v254, 28
    %v256 = vpop.permute.xlu0 %255
    %vm257 = vcmask 261344
    %258 = vst.msk [vmem:[#allocation0] ss:$8 sm:$0x3] %vm257, %v256
    %s259 = scalar_lea.vmem %s0, 6
    %v260 = vld [vmem:[%s259] sm:$0x1]
    %s261 = scalar_lea.vmem %s0, 37
    %v262 = vld [vmem:[%s261] sm:$0x2]
    %vm263 = vcmask 1041409
    %v264 = vsel %vm263, %v262, %v260
    %265 = vrot.lane.b32.xlu0 %v264, 24
    %v266 = vpop.permute.xlu0 %265
    %vm267 = vcmask 228544
    %268 = vst.msk [vmem:[#allocation0] ss:$8 sm:$0x3] %vm267, %v266
    %s269 = scalar_lea.vmem %s0, 5
    %v270 = vld [vmem:[%s269] sm:$0x1]
    %s271 = scalar_lea.vmem %s0, 36
    %v272 = vld [vmem:[%s271] sm:$0x2]
    %vm273 = vcmask 1041409
    %v274 = vsel %vm273, %v272, %v270
    %275 = vrot.lane.b32.xlu0 %v274, 20
    %v276 = vpop.permute.xlu0 %275
    %vm277 = vcmask 195744
    %278 = vst.msk [vmem:[#allocation0] ss:$8 sm:$0x3] %vm277, %v276
    %s279 = scalar_lea.vmem %s0, 4
    %v280 = vld [vmem:[%s279] sm:$0x1]
    %s281 = scalar_lea.vmem %s0, 35
    %v282 = vld [vmem:[%s281] sm:$0x2]
    %vm283 = vcmask 1041409
    %v284 = vsel %vm283, %v282, %v280
    %285 = vrot.lane.b32.xlu0 %v284, 16
    %v286 = vpop.permute.xlu0 %285
    %vm287 = vcmask 162944
    %288 = vst.msk [vmem:[#allocation0] ss:$8 sm:$0x3] %vm287, %v286
    %s289 = scalar_lea.vmem %s0, 3
    %v290 = vld [vmem:[%s289] sm:$0x1]
    %s291 = scalar_lea.vmem %s0, 34
    %v292 = vld [vmem:[%s291] sm:$0x2]
    %vm293 = vcmask 1041409
    %v294 = vsel %vm293, %v292, %v290
    %295 = vrot.lane.b32.xlu0 %v294, 12
    %v296 = vpop.permute.xlu0 %295
    %vm297 = vcmask 130144
    %298 = vst.msk [vmem:[#allocation0] ss:$8 sm:$0x3] %vm297, %v296
    %s299 = scalar_lea.vmem %s0, 2
    %v300 = vld [vmem:[%s299] sm:$0x1]
    %s301 = scalar_lea.vmem %s0, 33
    %v302 = vld [vmem:[%s301] sm:$0x2]
    %vm303 = vcmask 1041409
    %v304 = vsel %vm303, %v302, %v300
    %305 = vrot.lane.b32.xlu0 %v304, 8
    %v306 = vpop.permute.xlu0 %305
    %vm307 = vcmask 97344
    %308 = vst.msk [vmem:[#allocation0] ss:$8 sm:$0x3] %vm307, %v306
    %s309 = scalar_lea.vmem %s0, 1
    %v310 = vld [vmem:[%s309] sm:$0x1]
    %s311 = scalar_lea.vmem %s0, 32
    %v312 = vld [vmem:[%s311] sm:$0x2]
    %vm313 = vcmask 1041409
    %v314 = vsel %vm313, %v312, %v310
    %315 = vrot.lane.b32.xlu0 %v314, 4
    %v316 = vpop.permute.xlu0 %315
    %vm317 = vcmask 64544
    %318 = vst.msk [vmem:[#allocation0] ss:$8 sm:$0x3] %vm317, %v316
    %s320 = ssub.s32 2, 1
    %v321 = vld [vmem:[#allocation0] sm:%s320]
    %s323 = ssub.s32 2, 1
    %324 = vst [vmem:[%s1] sm:%s323] %v321
    %s325 = scalar_lea.vmem [#allocation0], 8
    %v326 = vld [vmem:[%s325] sm:%s320]
    %s328 = ssub.s32 2, 1
    %s329 = scalar_lea.vmem %s1, 1
    %330 = vst [vmem:[%s329] sm:%s328] %v326

// kernel: squeeze.6
$region0: #{squeeze.6}
  %s0 = inlined_call_operand.vmem [shape: f32[1,16,4,32,4], index: 0, kind: input, shape index: {}]
  %s1 = inlined_call_operand.vmem [shape: f32[64,128], index: 1, kind: output, shape index: {}]
  %v2 = vld [vmem:[%s0] sm:$0x1]
  %s3 = scalar_lea.vmem %s0, 31
  %v4 = vld [vmem:[%s3] sm:$0x2]
  %vm5 = vcmask 1041409
  %v6 = vsel %vm5, %v4, %v2
  %s7 = scalar_lea.vmem %s0, 62
  %v8 = vld [vmem:[%s7] sm:$0x4]
  %vm9 = vcmask 1042434
  %v10 = vsel %vm9, %v8, %v6
  %s11 = scalar_lea.vmem %s0, 93
  %v12 = vld [vmem:[%s11] sm:$0x8]
  %vm13 = vcmask 1043459
  %v14 = vsel %vm13, %v12, %v10
  %s15 = scalar_lea.vmem %s0, 124
  %v16 = vld [vmem:[%s15] sm:$0x10]
  %vm17 = vcmask 1044484
  %v18 = vsel %vm17, %v16, %v14
  %s19 = scalar_lea.vmem %s0, 155
  %v20 = vld [vmem:[%s19] sm:$0x20]
  %vm21 = vcmask 1045509
  %v22 = vsel %vm21, %v20, %v18
  %s23 = scalar_lea.vmem %s0, 186
  %v24 = vld [vmem:[%s23] sm:$0x40]
  %vm25 = vcmask 1046534
  %v26 = vsel %vm25, %v24, %v22
  %s27 = scalar_lea.vmem %s0, 217
  %v28 = vld [vmem:[%s27] sm:$0x80]
  %vm29 = vcmask 1047559
  %v30 = vsel %vm29, %v28, %v26
  %vm31 = vcmask 31744
  %32 = vst.msk [vmem:[%s1] sm:$0xff] %vm31, %v30
  %s33 = scalar_lea.vmem %s0, 256
  %v34 = vld [vmem:[%s33] sm:$0x1]
  %s35 = scalar_lea.vmem %s0, 287
  %v36 = vld [vmem:[%s35] sm:$0x2]
  %vm37 = vcmask 1041409
  %v38 = vsel %vm37, %v36, %v34
  %s39 = scalar_lea.vmem %s0, 318
  %v40 = vld [vmem:[%s39] sm:$0x4]
  %vm41 = vcmask 1042434
  %v42 = vsel %vm41, %v40, %v38
  %s43 = scalar_lea.vmem %s0, 349
  %v44 = vld [vmem:[%s43] sm:$0x8]
  %vm45 = vcmask 1043459
  %v46 = vsel %vm45, %v44, %v42
  %s47 = scalar_lea.vmem %s0, 380
  %v48 = vld [vmem:[%s47] sm:$0x10]
  %vm49 = vcmask 1044484
  %v50 = vsel %vm49, %v48, %v46
  %s51 = scalar_lea.vmem %s0, 411
  %v52 = vld [vmem:[%s51] sm:$0x20]
  %vm53 = vcmask 1045509
  %v54 = vsel %vm53, %v52, %v50
  %s55 = scalar_lea.vmem %s0, 442
  %v56 = vld [vmem:[%s55] sm:$0x40]
  %vm57 = vcmask 1046534
  %v58 = vsel %vm57, %v56, %v54
  %s59 = scalar_lea.vmem %s0, 473
  %v60 = vld [vmem:[%s59] sm:$0x80]
  %vm61 = vcmask 1047559
  %v62 = vsel %vm61, %v60, %v58
  %vm63 = vcmask 31744
  %s64 = scalar_lea.vmem %s1, 8
  %65 = vst.msk [vmem:[%s64] sm:$0xff] %vm63, %v62
  %s66 = scalar_lea.vmem %s0, 512
  %v67 = vld [vmem:[%s66] sm:$0x1]
  %s68 = scalar_lea.vmem %s0, 543
  %v69 = vld [vmem:[%s68] sm:$0x2]
  %vm70 = vcmask 1041409
  %v71 = vsel %vm70, %v69, %v67
  %s72 = scalar_lea.vmem %s0, 574
  %v73 = vld [vmem:[%s72] sm:$0x4]
  %vm74 = vcmask 1042434
  %v75 = vsel %vm74, %v73, %v71
  %s76 = scalar_lea.vmem %s0, 605
  %v77 = vld [vmem:[%s76] sm:$0x8]
  %vm78 = vcmask 1043459
  %v79 = vsel %vm78, %v77, %v75
  %s80 = scalar_lea.vmem %s0, 636
  %v81 = vld [vmem:[%s80] sm:$0x10]
  %vm82 = vcmask 1044484
  %v83 = vsel %vm82, %v81, %v79
  %s84 = scalar_lea.vmem %s0, 667
  %v85 = vld [vmem:[%s84] sm:$0x20]
  %vm86 = vcmask 1045509
  %v87 = vsel %vm86, %v85, %v83
  %s88 = scalar_lea.vmem %s0, 698
  %v89 = vld [vmem:[%s88] sm:$0x40]
  %vm90 = vcmask 1046534
  %v91 = vsel %vm90, %v89, %v87
  %s92 = scalar_lea.vmem %s0, 729
  %v93 = vld [vmem:[%s92] sm:$0x80]
  %vm94 = vcmask 1047559
  %v95 = vsel %vm94, %v93, %v91
  %vm96 = vcmask 31744
  %s97 = scalar_lea.vmem %s1, 16
  %98 = vst.msk [vmem:[%s97] sm:$0xff] %vm96, %v95
  %s99 = scalar_lea.vmem %s0, 768
  %v100 = vld [vmem:[%s99] sm:$0x1]
  %s101 = scalar_lea.vmem %s0, 799
  %v102 = vld [vmem:[%s101] sm:$0x2]
  %vm103 = vcmask 1041409
  %v104 = vsel %vm103, %v102, %v100
  %s105 = scalar_lea.vmem %s0, 830
  %v106 = vld [vmem:[%s105] sm:$0x4]
  %vm107 = vcmask 1042434
  %v108 = vsel %vm107, %v106, %v104
  %s109 = scalar_lea.vmem %s0, 861
  %v110 = vld [vmem:[%s109] sm:$0x8]
  %vm111 = vcmask 1043459
  %v112 = vsel %vm111, %v110, %v108
  %s113 = scalar_lea.vmem %s0, 892
  %v114 = vld [vmem:[%s113] sm:$0x10]
  %vm115 = vcmask 1044484
  %v116 = vsel %vm115, %v114, %v112
  %s117 = scalar_lea.vmem %s0, 923
  %v118 = vld [vmem:[%s117] sm:$0x20]
  %vm119 = vcmask 1045509
  %v120 = vsel %vm119, %v118, %v116
  %s121 = scalar_lea.vmem %s0, 954
  %v122 = vld [vmem:[%s121] sm:$0x40]
  %vm123 = vcmask 1046534
  %v124 = vsel %vm123, %v122, %v120
  %s125 = scalar_lea.vmem %s0, 985
  %v126 = vld [vmem:[%s125] sm:$0x80]
  %vm127 = vcmask 1047559
  %v128 = vsel %vm127, %v126, %v124
  %vm129 = vcmask 31744
  %s130 = scalar_lea.vmem %s1, 24
  %131 = vst.msk [vmem:[%s130] sm:$0xff] %vm129, %v128
  %s132 = scalar_lea.vmem %s0, 1024
  %v133 = vld [vmem:[%s132] sm:$0x1]
  %s134 = scalar_lea.vmem %s0, 1055
  %v135 = vld [vmem:[%s134] sm:$0x2]
  %vm136 = vcmask 1041409
  %v137 = vsel %vm136, %v135, %v133
  %s138 = scalar_lea.vmem %s0, 1086
  %v139 = vld [vmem:[%s138] sm:$0x4]
  %vm140 = vcmask 1042434
  %v141 = vsel %vm140, %v139, %v137
  %s142 = scalar_lea.vmem %s0, 1117
  %v143 = vld [vmem:[%s142] sm:$0x8]
  %vm144 = vcmask 1043459
  %v145 = vsel %vm144, %v143, %v141
  %s146 = scalar_lea.vmem %s0, 1148
  %v147 = vld [vmem:[%s146] sm:$0x10]
  %vm148 = vcmask 1044484
  %v149 = vsel %vm148, %v147, %v145
  %s150 = scalar_lea.vmem %s0, 1179
  %v151 = vld [vmem:[%s150] sm:$0x20]
  %vm152 = vcmask 1045509
  %v153 = vsel %vm152, %v151, %v149
  %s154 = scalar_lea.vmem %s0, 1210
  %v155 = vld [vmem:[%s154] sm:$0x40]
  %vm156 = vcmask 1046534
  %v157 = vsel %vm156, %v155, %v153
  %s158 = scalar_lea.vmem %s0, 1241
  %v159 = vld [vmem:[%s158] sm:$0x80]
  %vm160 = vcmask 1047559
  %v161 = vsel %vm160, %v159, %v157
  %vm162 = vcmask 31744
  %s163 = scalar_lea.vmem %s1, 32
  %164 = vst.msk [vmem:[%s163] sm:$0xff] %vm162, %v161
  %s165 = scalar_lea.vmem %s0, 1280
  %v166 = vld [vmem:[%s165] sm:$0x1]
  %s167 = scalar_lea.vmem %s0, 1311
  %v168 = vld [vmem:[%s167] sm:$0x2]
  %vm169 = vcmask 1041409
  %v170 = vsel %vm169, %v168, %v166
  %s171 = scalar_lea.vmem %s0, 1342
  %v172 = vld [vmem:[%s171] sm:$0x4]
  %vm173 = vcmask 1042434
  %v174 = vsel %vm173, %v172, %v170
  %s175 = scalar_lea.vmem %s0, 1373
  %v176 = vld [vmem:[%s175] sm:$0x8]
  %vm177 = vcmask 1043459
  %v178 = vsel %vm177, %v176, %v174
  %s179 = scalar_lea.vmem %s0, 1404
  %v180 = vld [vmem:[%s179] sm:$0x10]
  %vm181 = vcmask 1044484
  %v182 = vsel %vm181, %v180, %v178
  %s183 = scalar_lea.vmem %s0, 1435
  %v184 = vld [vmem:[%s183] sm:$0x20]
  %vm185 = vcmask 1045509
  %v186 = vsel %vm185, %v184, %v182
  %s187 = scalar_lea.vmem %s0, 1466
  %v188 = vld [vmem:[%s187] sm:$0x40]
  %vm189 = vcmask 1046534
  %v190 = vsel %vm189, %v188, %v186
  %s191 = scalar_lea.vmem %s0, 1497
  %v192 = vld [vmem:[%s191] sm:$0x80]
  %vm193 = vcmask 1047559
  %v194 = vsel %vm193, %v192, %v190
  %vm195 = vcmask 31744
  %s196 = scalar_lea.vmem %s1, 40
  %197 = vst.msk [vmem:[%s196] sm:$0xff] %vm195, %v194
  %s198 = scalar_lea.vmem %s0, 1536
  %v199 = vld [vmem:[%s198] sm:$0x1]
  %s200 = scalar_lea.vmem %s0, 1567
  %v201 = vld [vmem:[%s200] sm:$0x2]
  %vm202 = vcmask 1041409
  %v203 = vsel %vm202, %v201, %v199
  %s204 = scalar_lea.vmem %s0, 1598
  %v205 = vld [vmem:[%s204] sm:$0x4]
  %vm206 = vcmask 1042434
  %v207 = vsel %vm206, %v205, %v203
  %s208 = scalar_lea.vmem %s0, 1629
  %v209 = vld [vmem:[%s208] sm:$0x8]
  %vm210 = vcmask 1043459
  %v211 = vsel %vm210, %v209, %v207
  %s212 = scalar_lea.vmem %s0, 1660
  %v213 = vld [vmem:[%s212] sm:$0x10]
  %vm214 = vcmask 1044484
  %v215 = vsel %vm214, %v213, %v211
  %s216 = scalar_lea.vmem %s0, 1691
  %v217 = vld [vmem:[%s216] sm:$0x20]
  %vm218 = vcmask 1045509
  %v219 = vsel %vm218, %v217, %v215
  %s220 = scalar_lea.vmem %s0, 1722
  %v221 = vld [vmem:[%s220] sm:$0x40]
  %vm222 = vcmask 1046534
  %v223 = vsel %vm222, %v221, %v219
  %s224 = scalar_lea.vmem %s0, 1753
  %v225 = vld [vmem:[%s224] sm:$0x80]
  %vm226 = vcmask 1047559
  %v227 = vsel %vm226, %v225, %v223
  %vm228 = vcmask 31744
  %s229 = scalar_lea.vmem %s1, 48
  %230 = vst.msk [vmem:[%s229] sm:$0xff] %vm228, %v227
  %s231 = scalar_lea.vmem %s0, 1792
  %v232 = vld [vmem:[%s231] sm:$0x1]
  %s233 = scalar_lea.vmem %s0, 1823
  %v234 = vld [vmem:[%s233] sm:$0x2]
  %vm235 = vcmask 1041409
  %v236 = vsel %vm235, %v234, %v232
  %s237 = scalar_lea.vmem %s0, 1854
  %v238 = vld [vmem:[%s237] sm:$0x4]
  %vm239 = vcmask 1042434
  %v240 = vsel %vm239, %v238, %v236
  %s241 = scalar_lea.vmem %s0, 1885
  %v242 = vld [vmem:[%s241] sm:$0x8]
  %vm243 = vcmask 1043459
  %v244 = vsel %vm243, %v242, %v240
  %s245 = scalar_lea.vmem %s0, 1916
  %v246 = vld [vmem:[%s245] sm:$0x10]
  %vm247 = vcmask 1044484
  %v248 = vsel %vm247, %v246, %v244
  %s249 = scalar_lea.vmem %s0, 1947
  %v250 = vld [vmem:[%s249] sm:$0x20]
  %vm251 = vcmask 1045509
  %v252 = vsel %vm251, %v250, %v248
  %s253 = scalar_lea.vmem %s0, 1978
  %v254 = vld [vmem:[%s253] sm:$0x40]
  %vm255 = vcmask 1046534
  %v256 = vsel %vm255, %v254, %v252
  %s257 = scalar_lea.vmem %s0, 2009
  %v258 = vld [vmem:[%s257] sm:$0x80]
  %vm259 = vcmask 1047559
  %v260 = vsel %vm259, %v258, %v256
  %vm261 = vcmask 31744
  %s262 = scalar_lea.vmem %s1, 56
  %263 = vst.msk [vmem:[%s262] sm:$0xff] %vm261, %v260
  %s264 = scalar_lea.vmem %s0, 31
  %v265 = vld [vmem:[%s264] sm:$0x1]
  %s266 = scalar_lea.vmem %s0, 62
  %v267 = vld [vmem:[%s266] sm:$0x2]
  %vm268 = vcmask 1041409
  %v269 = vsel %vm268, %v267, %v265
  %s270 = scalar_lea.vmem %s0, 93
  %v271 = vld [vmem:[%s270] sm:$0x4]
  %vm272 = vcmask 1042434
  %v273 = vsel %vm272, %v271, %v269
  %s274 = scalar_lea.vmem %s0, 124
  %v275 = vld [vmem:[%s274] sm:$0x8]
  %vm276 = vcmask 1043459
  %v277 = vsel %vm276, %v275, %v273
  %s278 = scalar_lea.vmem %s0, 155
  %v279 = vld [vmem:[%s278] sm:$0x10]
  %vm280 = vcmask 1044484
  %v281 = vsel %vm280, %v279, %v277
  %s282 = scalar_lea.vmem %s0, 186
  %v283 = vld [vmem:[%s282] sm:$0x20]
  %vm284 = vcmask 1045509
  %v285 = vsel %vm284, %v283, %v281
  %s286 = scalar_lea.vmem %s0, 217
  %v287 = vld [vmem:[%s286] sm:$0x40]
  %vm288 = vcmask 1046534
  %v289 = vsel %vm288, %v287, %v285
  %s290 = scalar_lea.vmem %s0, 248
  %v291 = vld [vmem:[%s290] sm:$0x80]
  %vm292 = vcmask 1047559
  %v293 = vsel %vm292, %v291, %v289
  %294 = vrot.lane.b32.xlu0 %v293, 124
  %v295 = vpop.permute.xlu0 %294
  %vm296 = vcmask 1048544
  %297 = vst.msk [vmem:[%s1] sm:$0xff] %vm296, %v295
  %s298 = scalar_lea.vmem %s0, 1055
  %v299 = vld [vmem:[%s298] sm:$0x1]
  %s300 = scalar_lea.vmem %s0, 1086
  %v301 = vld [vmem:[%s300] sm:$0x2]
  %vm302 = vcmask 1041409
  %v303 = vsel %vm302, %v301, %v299
  %s304 = scalar_lea.vmem %s0, 1117
  %v305 = vld [vmem:[%s304] sm:$0x4]
  %vm306 = vcmask 1042434
  %v307 = vsel %vm306, %v305, %v303
  %s308 = scalar_lea.vmem %s0, 1148
  %v309 = vld [vmem:[%s308] sm:$0x8]
  %vm310 = vcmask 1043459
  %v311 = vsel %vm310, %v309, %v307
  %s312 = scalar_lea.vmem %s0, 1179
  %v313 = vld [vmem:[%s312] sm:$0x10]
  %vm314 = vcmask 1044484
  %v315 = vsel %vm314, %v313, %v311
  %s316 = scalar_lea.vmem %s0, 1210
  %v317 = vld [vmem:[%s316] sm:$0x20]
  %vm318 = vcmask 1045509
  %v319 = vsel %vm318, %v317, %v315
  %s320 = scalar_lea.vmem %s0, 1241
  %v321 = vld [vmem:[%s320] sm:$0x40]
  %vm322 = vcmask 1046534
  %v323 = vsel %vm322, %v321, %v319
  %s324 = scalar_lea.vmem %s0, 1272
  %v325 = vld [vmem:[%s324] sm:$0x80]
  %vm326 = vcmask 1047559
  %v327 = vsel %vm326, %v325, %v323
  %328 = vrot.lane.b32.xlu0 %v327, 124
  %v329 = vpop.permute.xlu0 %328
  %vm330 = vcmask 1048544
  %s331 = scalar_lea.vmem %s1, 32
  %332 = vst.msk [vmem:[%s331] sm:$0xff] %vm330, %v329
  %s333 = scalar_lea.vmem %s0, 287
  %v334 = vld [vmem:[%s333] sm:$0x1]
  %s335 = scalar_lea.vmem %s0, 318
  %v336 = vld [vmem:[%s335] sm:$0x2]
  %vm337 = vcmask 1041409
  %v338 = vsel %vm337, %v336, %v334
  %s339 = scalar_lea.vmem %s0, 349
  %v340 = vld [vmem:[%s339] sm:$0x4]
  %vm341 = vcmask 1042434
  %v342 = vsel %vm341, %v340, %v338
  %s343 = scalar_lea.vmem %s0, 380
  %v344 = vld [vmem:[%s343] sm:$0x8]
  %vm345 = vcmask 1043459
  %v346 = vsel %vm345, %v344, %v342
  %s347 = scalar_lea.vmem %s0, 411
  %v348 = vld [vmem:[%s347] sm:$0x10]
  %vm349 = vcmask 1044484
  %v350 = vsel %vm349, %v348, %v346
  %s351 = scalar_lea.vmem %s0, 442
  %v352 = vld [vmem:[%s351] sm:$0x20]
  %vm353 = vcmask 1045509
  %v354 = vsel %vm353, %v352, %v350
  %s355 = scalar_lea.vmem %s0, 473
  %v356 = vld [vmem:[%s355] sm:$0x40]
  %vm357 = vcmask 1046534
  %v358 = vsel %vm357, %v356, %v354
  %s359 = scalar_lea.vmem %s0, 504
  %v360 = vld [vmem:[%s359] sm:$0x80]
  %vm361 = vcmask 1047559
  %v362 = vsel %vm361, %v360, %v358
  %363 = vrot.lane.b32.xlu0 %v362, 124
  %v364 = vpop.permute.xlu0 %363
  %vm365 = vcmask 1048544
  %s366 = scalar_lea.vmem %s1, 8
  %367 = vst.msk [vmem:[%s366] sm:$0xff] %vm365, %v364
  %s368 = scalar_lea.vmem %s0, 1311
  %v369 = vld [vmem:[%s368] sm:$0x1]
  %s370 = scalar_lea.vmem %s0, 1342
  %v371 = vld [vmem:[%s370] sm:$0x2]
  %vm372 = vcmask 1041409
  %v373 = vsel %vm372, %v371, %v369
  %s374 = scalar_lea.vmem %s0, 1373
  %v375 = vld [vmem:[%s374] sm:$0x4]
  %vm376 = vcmask 1042434
  %v377 = vsel %vm376, %v375, %v373
  %s378 = scalar_lea.vmem %s0, 1404
  %v379 = vld [vmem:[%s378] sm:$0x8]
  %vm380 = vcmask 1043459
  %v381 = vsel %vm380, %v379, %v377
  %s382 = scalar_lea.vmem %s0, 1435
  %v383 = vld [vmem:[%s382] sm:$0x10]
  %vm384 = vcmask 1044484
  %v385 = vsel %vm384, %v383, %v381
  %s386 = scalar_lea.vmem %s0, 1466
  %v387 = vld [vmem:[%s386] sm:$0x20]
  %vm388 = vcmask 1045509
  %v389 = vsel %vm388, %v387, %v385
  %s390 = scalar_lea.vmem %s0, 1497
  %v391 = vld [vmem:[%s390] sm:$0x40]
  %vm392 = vcmask 1046534
  %v393 = vsel %vm392, %v391, %v389
  %s394 = scalar_lea.vmem %s0, 1528
  %v395 = vld [vmem:[%s394] sm:$0x80]
  %vm396 = vcmask 1047559
  %v397 = vsel %vm396, %v395, %v393
  %398 = vrot.lane.b32.xlu0 %v397, 124
  %v399 = vpop.permute.xlu0 %398
  %vm400 = vcmask 1048544
  %s401 = scalar_lea.vmem %s1, 40
  %402 = vst.msk [vmem:[%s401] sm:$0xff] %vm400, %v399
  %s403 = scalar_lea.vmem %s0, 543
  %v404 = vld [vmem:[%s403] sm:$0x1]
  %s405 = scalar_lea.vmem %s0, 574
  %v406 = vld [vmem:[%s405] sm:$0x2]
  %vm407 = vcmask 1041409
  %v408 = vsel %vm407, %v406, %v404
  %s409 = scalar_lea.vmem %s0, 605
  %v410 = vld [vmem:[%s409] sm:$0x4]
  %vm411 = vcmask 1042434
  %v412 = vsel %vm411, %v410, %v408
  %s413 = scalar_lea.vmem %s0, 636
  %v414 = vld [vmem:[%s413] sm:$0x8]
  %vm415 = vcmask 1043459
  %v416 = vsel %vm415, %v414, %v412
  %s417 = scalar_lea.vmem %s0, 667
  %v418 = vld [vmem:[%s417] sm:$0x10]
  %vm419 = vcmask 1044484
  %v420 = vsel %vm419, %v418, %v416
  %s421 = scalar_lea.vmem %s0, 698
  %v422 = vld [vmem:[%s421] sm:$0x20]
  %vm423 = vcmask 1045509
  %v424 = vsel %vm423, %v422, %v420
  %s425 = scalar_lea.vmem %s0, 729
  %v426 = vld [vmem:[%s425] sm:$0x40]
  %vm427 = vcmask 1046534
  %v428 = vsel %vm427, %v426, %v424
  %s429 = scalar_lea.vmem %s0, 760
  %v430 = vld [vmem:[%s429] sm:$0x80]
  %vm431 = vcmask 1047559
  %v432 = vsel %vm431, %v430, %v428
  %433 = vrot.lane.b32.xlu0 %v432, 124
  %v434 = vpop.permute.xlu0 %433
  %vm435 = vcmask 1048544
  %s436 = scalar_lea.vmem %s1, 16
  %437 = vst.msk [vmem:[%s436] sm:$0xff] %vm435, %v434
  %s438 = scalar_lea.vmem %s0, 1567
  %v439 = vld [vmem:[%s438] sm:$0x1]
  %s440 = scalar_lea.vmem %s0, 1598
  %v441 = vld [vmem:[%s440] sm:$0x2]
  %vm442 = vcmask 1041409
  %v443 = vsel %vm442, %v441, %v439
  %s444 = scalar_lea.vmem %s0, 1629
  %v445 = vld [vmem:[%s444] sm:$0x4]
  %vm446 = vcmask 1042434
  %v447 = vsel %vm446, %v445, %v443
  %s448 = scalar_lea.vmem %s0, 1660
  %v449 = vld [vmem:[%s448] sm:$0x8]
  %vm450 = vcmask 1043459
  %v451 = vsel %vm450, %v449, %v447
  %s452 = scalar_lea.vmem %s0, 1691
  %v453 = vld [vmem:[%s452] sm:$0x10]
  %vm454 = vcmask 1044484
  %v455 = vsel %vm454, %v453, %v451
  %s456 = scalar_lea.vmem %s0, 1722
  %v457 = vld [vmem:[%s456] sm:$0x20]
  %vm458 = vcmask 1045509
  %v459 = vsel %vm458, %v457, %v455
  %s460 = scalar_lea.vmem %s0, 1753
  %v461 = vld [vmem:[%s460] sm:$0x40]
  %vm462 = vcmask 1046534
  %v463 = vsel %vm462, %v461, %v459
  %s464 = scalar_lea.vmem %s0, 1784
  %v465 = vld [vmem:[%s464] sm:$0x80]
  %vm466 = vcmask 1047559
  %v467 = vsel %vm466, %v465, %v463
  %468 = vrot.lane.b32.xlu0 %v467, 124
  %v469 = vpop.permute.xlu0 %468
  %vm470 = vcmask 1048544
  %s471 = scalar_lea.vmem %s1, 48
  %472 = vst.msk [vmem:[%s471] sm:$0xff] %vm470, %v469
  %s473 = scalar_lea.vmem %s0, 799
  %v474 = vld [vmem:[%s473] sm:$0x1]
  %s475 = scalar_lea.vmem %s0, 830
  %v476 = vld [vmem:[%s475] sm:$0x2]
  %vm477 = vcmask 1041409
  %v478 = vsel %vm477, %v476, %v474
  %s479 = scalar_lea.vmem %s0, 861
  %v480 = vld [vmem:[%s479] sm:$0x4]
  %vm481 = vcmask 1042434
  %v482 = vsel %vm481, %v480, %v478
  %s483 = scalar_lea.vmem %s0, 892
  %v484 = vld [vmem:[%s483] sm:$0x8]
  %vm485 = vcmask 1043459
  %v486 = vsel %vm485, %v484, %v482
  %s487 = scalar_lea.vmem %s0, 923
  %v488 = vld [vmem:[%s487] sm:$0x10]
  %vm489 = vcmask 1044484
  %v490 = vsel %vm489, %v488, %v486
  %s491 = scalar_lea.vmem %s0, 954
  %v492 = vld [vmem:[%s491] sm:$0x20]
  %vm493 = vcmask 1045509
  %v494 = vsel %vm493, %v492, %v490
  %s495 = scalar_lea.vmem %s0, 985
  %v496 = vld [vmem:[%s495] sm:$0x40]
  %vm497 = vcmask 1046534
  %v498 = vsel %vm497, %v496, %v494
  %s499 = scalar_lea.vmem %s0, 1016
  %v500 = vld [vmem:[%s499] sm:$0x80]
  %vm501 = vcmask 1047559
  %v502 = vsel %vm501, %v500, %v498
  %503 = vrot.lane.b32.xlu0 %v502, 124
  %v504 = vpop.permute.xlu0 %503
  %vm505 = vcmask 1048544
  %s506 = scalar_lea.vmem %s1, 24
  %507 = vst.msk [vmem:[%s506] sm:$0xff] %vm505, %v504
  %s508 = scalar_lea.vmem %s0, 1823
  %v509 = vld [vmem:[%s508] sm:$0x1]
  %s510 = scalar_lea.vmem %s0, 1854
  %v511 = vld [vmem:[%s510] sm:$0x2]
  %vm512 = vcmask 1041409
  %v513 = vsel %vm512, %v511, %v509
  %s514 = scalar_lea.vmem %s0, 1885
  %v515 = vld [vmem:[%s514] sm:$0x4]
  %vm516 = vcmask 1042434
  %v517 = vsel %vm516, %v515, %v513
  %s518 = scalar_lea.vmem %s0, 1916
  %v519 = vld [vmem:[%s518] sm:$0x8]
  %vm520 = vcmask 1043459
  %v521 = vsel %vm520, %v519, %v517
  %s522 = scalar_lea.vmem %s0, 1947
  %v523 = vld [vmem:[%s522] sm:$0x10]
  %vm524 = vcmask 1044484
  %v525 = vsel %vm524, %v523, %v521
  %s526 = scalar_lea.vmem %s0, 1978
  %v527 = vld [vmem:[%s526] sm:$0x20]
  %vm528 = vcmask 1045509
  %v529 = vsel %vm528, %v527, %v525
  %s530 = scalar_lea.vmem %s0, 2009
  %v531 = vld [vmem:[%s530] sm:$0x40]
  %vm532 = vcmask 1046534
  %v533 = vsel %vm532, %v531, %v529
  %s534 = scalar_lea.vmem %s0, 2040
  %v535 = vld [vmem:[%s534] sm:$0x80]
  %vm536 = vcmask 1047559
  %v537 = vsel %vm536, %v535, %v533
  %538 = vrot.lane.b32.xlu0 %v537, 124
  %v539 = vpop.permute.xlu0 %538
  %vm540 = vcmask 1048544
  %s541 = scalar_lea.vmem %s1, 56
  %542 = vst.msk [vmem:[%s541] sm:$0xff] %vm540, %v539
  %s543 = scalar_lea.vmem %s0, 30
  %v544 = vld [vmem:[%s543] sm:$0x1]
  %s545 = scalar_lea.vmem %s0, 61
  %v546 = vld [vmem:[%s545] sm:$0x2]
  %vm547 = vcmask 1041409
  %v548 = vsel %vm547, %v546, %v544
  %s549 = scalar_lea.vmem %s0, 92
  %v550 = vld [vmem:[%s549] sm:$0x4]
  %vm551 = vcmask 1042434
  %v552 = vsel %vm551, %v550, %v548
  %s553 = scalar_lea.vmem %s0, 123
  %v554 = vld [vmem:[%s553] sm:$0x8]
  %vm555 = vcmask 1043459
  %v556 = vsel %vm555, %v554, %v552
  %s557 = scalar_lea.vmem %s0, 154
  %v558 = vld [vmem:[%s557] sm:$0x10]
  %vm559 = vcmask 1044484
  %v560 = vsel %vm559, %v558, %v556
  %s561 = scalar_lea.vmem %s0, 185
  %v562 = vld [vmem:[%s561] sm:$0x20]
  %vm563 = vcmask 1045509
  %v564 = vsel %vm563, %v562, %v560
  %s565 = scalar_lea.vmem %s0, 216
  %v566 = vld [vmem:[%s565] sm:$0x40]
  %vm567 = vcmask 1046534
  %v568 = vsel %vm567, %v566, %v564
  %s569 = scalar_lea.vmem %s0, 247
  %v570 = vld [vmem:[%s569] sm:$0x80]
  %vm571 = vcmask 1047559
  %v572 = vsel %vm571, %v570, %v568
  %573 = vrot.lane.b32.xlu0 %v572, 120
  %v574 = vpop.permute.xlu0 %573
  %vm575 = vcmask 1015744
  %576 = vst.msk [vmem:[%s1] sm:$0xff] %vm575, %v574
  %s577 = scalar_lea.vmem %s0, 1054
  %v578 = vld [vmem:[%s577] sm:$0x1]
  %s579 = scalar_lea.vmem %s0, 1085
  %v580 = vld [vmem:[%s579] sm:$0x2]
  %vm581 = vcmask 1041409
  %v582 = vsel %vm581, %v580, %v578
  %s583 = scalar_lea.vmem %s0, 1116
  %v584 = vld [vmem:[%s583] sm:$0x4]
  %vm585 = vcmask 1042434
  %v586 = vsel %vm585, %v584, %v582
  %s587 = scalar_lea.vmem %s0, 1147
  %v588 = vld [vmem:[%s587] sm:$0x8]
  %vm589 = vcmask 1043459
  %v590 = vsel %vm589, %v588, %v586
  %s591 = scalar_lea.vmem %s0, 1178
  %v592 = vld [vmem:[%s591] sm:$0x10]
  %vm593 = vcmask 1044484
  %v594 = vsel %vm593, %v592, %v590
  %s595 = scalar_lea.vmem %s0, 1209
  %v596 = vld [vmem:[%s595] sm:$0x20]
  %vm597 = vcmask 1045509
  %v598 = vsel %vm597, %v596, %v594
  %s599 = scalar_lea.vmem %s0, 1240
  %v600 = vld [vmem:[%s599] sm:$0x40]
  %vm601 = vcmask 1046534
  %v602 = vsel %vm601, %v600, %v598
  %s603 = scalar_lea.vmem %s0, 1271
  %v604 = vld [vmem:[%s603] sm:$0x80]
  %vm605 = vcmask 1047559
  %v606 = vsel %vm605, %v604, %v602
  %607 = vrot.lane.b32.xlu0 %v606, 120
  %v608 = vpop.permute.xlu0 %607
  %vm609 = vcmask 1015744
  %s610 = scalar_lea.vmem %s1, 32
  %611 = vst.msk [vmem:[%s610] sm:$0xff] %vm609, %v608
  %s612 = scalar_lea.vmem %s0, 286
  %v613 = vld [vmem:[%s612] sm:$0x1]
  %s614 = scalar_lea.vmem %s0, 317
  %v615 = vld [vmem:[%s614] sm:$0x2]
  %vm616 = vcmask 1041409
  %v617 = vsel %vm616, %v615, %v613
  %s618 = scalar_lea.vmem %s0, 348
  %v619 = vld [vmem:[%s618] sm:$0x4]
  %vm620 = vcmask 1042434
  %v621 = vsel %vm620, %v619, %v617
  %s622 = scalar_lea.vmem %s0, 379
  %v623 = vld [vmem:[%s622] sm:$0x8]
  %vm624 = vcmask 1043459
  %v625 = vsel %vm624, %v623, %v621
  %s626 = scalar_lea.vmem %s0, 410
  %v627 = vld [vmem:[%s626] sm:$0x10]
  %vm628 = vcmask 1044484
  %v629 = vsel %vm628, %v627, %v625
  %s630 = scalar_lea.vmem %s0, 441
  %v631 = vld [vmem:[%s630] sm:$0x20]
  %vm632 = vcmask 1045509
  %v633 = vsel %vm632, %v631, %v629
  %s634 = scalar_lea.vmem %s0, 472
  %v635 = vld [vmem:[%s634] sm:$0x40]
  %vm636 = vcmask 1046534
  %v637 = vsel %vm636, %v635, %v633
  %s638 = scalar_lea.vmem %s0, 503
  %v639 = vld [vmem:[%s638] sm:$0x80]
  %vm640 = vcmask 1047559
  %v641 = vsel %vm640, %v639, %v637
  %642 = vrot.lane.b32.xlu0 %v641, 120
  %v643 = vpop.permute.xlu0 %642
  %vm644 = vcmask 1015744
  %s645 = scalar_lea.vmem %s1, 8
  %646 = vst.msk [vmem:[%s645] sm:$0xff] %vm644, %v643
  %s647 = scalar_lea.vmem %s0, 1310
  %v648 = vld [vmem:[%s647] sm:$0x1]
  %s649 = scalar_lea.vmem %s0, 1341
  %v650 = vld [vmem:[%s649] sm:$0x2]
  %vm651 = vcmask 1041409
  %v652 = vsel %vm651, %v650, %v648
  %s653 = scalar_lea.vmem %s0, 1372
  %v654 = vld [vmem:[%s653] sm:$0x4]
  %vm655 = vcmask 1042434
  %v656 = vsel %vm655, %v654, %v652
  %s657 = scalar_lea.vmem %s0, 1403
  %v658 = vld [vmem:[%s657] sm:$0x8]
  %vm659 = vcmask 1043459
  %v660 = vsel %vm659, %v658, %v656
  %s661 = scalar_lea.vmem %s0, 1434
  %v662 = vld [vmem:[%s661] sm:$0x10]
  %vm663 = vcmask 1044484
  %v664 = vsel %vm663, %v662, %v660
  %s665 = scalar_lea.vmem %s0, 1465
  %v666 = vld [vmem:[%s665] sm:$0x20]
  %vm667 = vcmask 1045509
  %v668 = vsel %vm667, %v666, %v664
  %s669 = scalar_lea.vmem %s0, 1496
  %v670 = vld [vmem:[%s669] sm:$0x40]
  %vm671 = vcmask 1046534
  %v672 = vsel %vm671, %v670, %v668
  %s673 = scalar_lea.vmem %s0, 1527
  %v674 = vld [vmem:[%s673] sm:$0x80]
  %vm675 = vcmask 1047559
  %v676 = vsel %vm675, %v674, %v672
  %677 = vrot.lane.b32.xlu0 %v676, 120
  %v678 = vpop.permute.xlu0 %677
  %vm679 = vcmask 1015744
  %s680 = scalar_lea.vmem %s1, 40
  %681 = vst.msk [vmem:[%s680] sm:$0xff] %vm679, %v678
  %s682 = scalar_lea.vmem %s0, 542
  %v683 = vld [vmem:[%s682] sm:$0x1]
  %s684 = scalar_lea.vmem %s0, 573
  %v685 = vld [vmem:[%s684] sm:$0x2]
  %vm686 = vcmask 1041409
  %v687 = vsel %vm686, %v685, %v683
  %s688 = scalar_lea.vmem %s0, 604
  %v689 = vld [vmem:[%s688] sm:$0x4]
  %vm690 = vcmask 1042434
  %v691 = vsel %vm690, %v689, %v687
  %s692 = scalar_lea.vmem %s0, 635
  %v693 = vld [vmem:[%s692] sm:$0x8]
  %vm694 = vcmask 1043459
  %v695 = vsel %vm694, %v693, %v691
  %s696 = scalar_lea.vmem %s0, 666
  %v697 = vld [vmem:[%s696] sm:$0x10]
  %vm698 = vcmask 1044484
  %v699 = vsel %vm698, %v697, %v695
  %s700 = scalar_lea.vmem %s0, 697
  %v701 = vld [vmem:[%s700] sm:$0x20]
  %vm702 = vcmask 1045509
  %v703 = vsel %vm702, %v701, %v699
  %s704 = scalar_lea.vmem %s0, 728
  %v705 = vld [vmem:[%s704] sm:$0x40]
  %vm706 = vcmask 1046534
  %v707 = vsel %vm706, %v705, %v703
  %s708 = scalar_lea.vmem %s0, 759
  %v709 = vld [vmem:[%s708] sm:$0x80]
  %vm710 = vcmask 1047559
  %v711 = vsel %vm710, %v709, %v707
  %712 = vrot.lane.b32.xlu0 %v711, 120
  %v713 = vpop.permute.xlu0 %712
  %vm714 = vcmask 1015744
  %s715 = scalar_lea.vmem %s1, 16
  %716 = vst.msk [vmem:[%s715] sm:$0xff] %vm714, %v713
  %s717 = scalar_lea.vmem %s0, 1566
  %v718 = vld [vmem:[%s717] sm:$0x1]
  %s719 = scalar_lea.vmem %s0, 1597
  %v720 = vld [vmem:[%s719] sm:$0x2]
  %vm721 = vcmask 1041409
  %v722 = vsel %vm721, %v720, %v718
  %s723 = scalar_lea.vmem %s0, 1628
  %v724 = vld [vmem:[%s723] sm:$0x4]
  %vm725 = vcmask 1042434
  %v726 = vsel %vm725, %v724, %v722
  %s727 = scalar_lea.vmem %s0, 1659
  %v728 = vld [vmem:[%s727] sm:$0x8]
  %vm729 = vcmask 1043459
  %v730 = vsel %vm729, %v728, %v726
  %s731 = scalar_lea.vmem %s0, 1690
  %v732 = vld [vmem:[%s731] sm:$0x10]
  %vm733 = vcmask 1044484
  %v734 = vsel %vm733, %v732, %v730
  %s735 = scalar_lea.vmem %s0, 1721
  %v736 = vld [vmem:[%s735] sm:$0x20]
  %vm737 = vcmask 1045509
  %v738 = vsel %vm737, %v736, %v734
  %s739 = scalar_lea.vmem %s0, 1752
  %v740 = vld [vmem:[%s739] sm:$0x40]
  %vm741 = vcmask 1046534
  %v742 = vsel %vm741, %v740, %v738
  %s743 = scalar_lea.vmem %s0, 1783
  %v744 = vld [vmem:[%s743] sm:$0x80]
  %vm745 = vcmask 1047559
  %v746 = vsel %vm745, %v744, %v742
  %747 = vrot.lane.b32.xlu0 %v746, 120
  %v748 = vpop.permute.xlu0 %747
  %vm749 = vcmask 1015744
  %s750 = scalar_lea.vmem %s1, 48
  %751 = vst.msk [vmem:[%s750] sm:$0xff] %vm749, %v748
  %s752 = scalar_lea.vmem %s0, 798
  %v753 = vld [vmem:[%s752] sm:$0x1]
  %s754 = scalar_lea.vmem %s0, 829
  %v755 = vld [vmem:[%s754] sm:$0x2]
  %vm756 = vcmask 1041409
  %v757 = vsel %vm756, %v755, %v753
  %s758 = scalar_lea.vmem %s0, 860
  %v759 = vld [vmem:[%s758] sm:$0x4]
  %vm760 = vcmask 1042434
  %v761 = vsel %vm760, %v759, %v757
  %s762 = scalar_lea.vmem %s0, 891
  %v763 = vld [vmem:[%s762] sm:$0x8]
  %vm764 = vcmask 1043459
  %v765 = vsel %vm764, %v763, %v761
  %s766 = scalar_lea.vmem %s0, 922
  %v767 = vld [vmem:[%s766] sm:$0x10]
  %vm768 = vcmask 1044484
  %v769 = vsel %vm768, %v767, %v765
  %s770 = scalar_lea.vmem %s0, 953
  %v771 = vld [vmem:[%s770] sm:$0x20]
  %vm772 = vcmask 1045509
  %v773 = vsel %vm772, %v771, %v769
  %s774 = scalar_lea.vmem %s0, 984
  %v775 = vld [vmem:[%s774] sm:$0x40]
  %vm776 = vcmask 1046534
  %v777 = vsel %vm776, %v775, %v773
  %s778 = scalar_lea.vmem %s0, 1015
  %v779 = vld [vmem:[%s778] sm:$0x80]
  %vm780 = vcmask 1047559
  %v781 = vsel %vm780, %v779, %v777
  %782 = vrot.lane.b32.xlu0 %v781, 120
  %v783 = vpop.permute.xlu0 %782
  %vm784 = vcmask 1015744
  %s785 = scalar_lea.vmem %s1, 24
  %786 = vst.msk [vmem:[%s785] sm:$0xff] %vm784, %v783
  %s787 = scalar_lea.vmem %s0, 1822
  %v788 = vld [vmem:[%s787] sm:$0x1]
  %s789 = scalar_lea.vmem %s0, 1853
  %v790 = vld [vmem:[%s789] sm:$0x2]
  %vm791 = vcmask 1041409
  %v792 = vsel %vm791, %v790, %v788
  %s793 = scalar_lea.vmem %s0, 1884
  %v794 = vld [vmem:[%s793] sm:$0x4]
  %vm795 = vcmask 1042434
  %v796 = vsel %vm795, %v794, %v792
  %s797 = scalar_lea.vmem %s0, 1915
  %v798 = vld [vmem:[%s797] sm:$0x8]
  %vm799 = vcmask 1043459
  %v800 = vsel %vm799, %v798, %v796
  %s801 = scalar_lea.vmem %s0, 1946
  %v802 = vld [vmem:[%s801] sm:$0x10]
  %vm803 = vcmask 1044484
  %v804 = vsel %vm803, %v802, %v800
  %s805 = scalar_lea.vmem %s0, 1977
  %v806 = vld [vmem:[%s805] sm:$0x20]
  %vm807 = vcmask 1045509
  %v808 = vsel %vm807, %v806, %v804
  %s809 = scalar_lea.vmem %s0, 2008
  %v810 = vld [vmem:[%s809] sm:$0x40]
  %vm811 = vcmask 1046534
  %v812 = vsel %vm811, %v810, %v808
  %s813 = scalar_lea.vmem %s0, 2039
  %v814 = vld [vmem:[%s813] sm:$0x80]
  %vm815 = vcmask 1047559
  %v816 = vsel %vm815, %v814, %v812
  %817 = vrot.lane.b32.xlu0 %v816, 120
  %v818 = vpop.permute.xlu0 %817
  %vm819 = vcmask 1015744
  %s820 = scalar_lea.vmem %s1, 56
  %821 = vst.msk [vmem:[%s820] sm:$0xff] %vm819, %v818
  %s822 = scalar_lea.vmem %s0, 29
  %v823 = vld [vmem:[%s822] sm:$0x1]
  %s824 = scalar_lea.vmem %s0, 60
  %v825 = vld [vmem:[%s824] sm:$0x2]
  %vm826 = vcmask 1041409
  %v827 = vsel %vm826, %v825, %v823
  %s828 = scalar_lea.vmem %s0, 91
  %v829 = vld [vmem:[%s828] sm:$0x4]
  %vm830 = vcmask 1042434
  %v831 = vsel %vm830, %v829, %v827
  %s832 = scalar_lea.vmem %s0, 122
  %v833 = vld [vmem:[%s832] sm:$0x8]
  %vm834 = vcmask 1043459
  %v835 = vsel %vm834, %v833, %v831
  %s836 = scalar_lea.vmem %s0, 153
  %v837 = vld [vmem:[%s836] sm:$0x10]
  %vm838 = vcmask 1044484
  %v839 = vsel %vm838, %v837, %v835
  %s840 = scalar_lea.vmem %s0, 184
  %v841 = vld [vmem:[%s840] sm:$0x20]
  %vm842 = vcmask 1045509
  %v843 = vsel %vm842, %v841, %v839
  %s844 = scalar_lea.vmem %s0, 215
  %v845 = vld [vmem:[%s844] sm:$0x40]
  %vm846 = vcmask 1046534
  %v847 = vsel %vm846, %v845, %v843
  %s848 = scalar_lea.vmem %s0, 246
  %v849 = vld [vmem:[%s848] sm:$0x80]
  %vm850 = vcmask 1047559
  %v851 = vsel %vm850, %v849, %v847
  %852 = vrot.lane.b32.xlu0 %v851, 116
  %v853 = vpop.permute.xlu0 %852
  %vm854 = vcmask 982944
  %855 = vst.msk [vmem:[%s1] sm:$0xff] %vm854, %v853
  %s856 = scalar_lea.vmem %s0, 1053
  %v857 = vld [vmem:[%s856] sm:$0x1]
  %s858 = scalar_lea.vmem %s0, 1084
  %v859 = vld [vmem:[%s858] sm:$0x2]
  %vm860 = vcmask 1041409
  %v861 = vsel %vm860, %v859, %v857
  %s862 = scalar_lea.vmem %s0, 1115
  %v863 = vld [vmem:[%s862] sm:$0x4]
  %vm864 = vcmask 1042434
  %v865 = vsel %vm864, %v863, %v861
  %s866 = scalar_lea.vmem %s0, 1146
  %v867 = vld [vmem:[%s866] sm:$0x8]
  %vm868 = vcmask 1043459
  %v869 = vsel %vm868, %v867, %v865
  %s870 = scalar_lea.vmem %s0, 1177
  %v871 = vld [vmem:[%s870] sm:$0x10]
  %vm872 = vcmask 1044484
  %v873 = vsel %vm872, %v871, %v869
  %s874 = scalar_lea.vmem %s0, 1208
  %v875 = vld [vmem:[%s874] sm:$0x20]
  %vm876 = vcmask 1045509
  %v877 = vsel %vm876, %v875, %v873
  %s878 = scalar_lea.vmem %s0, 1239
  %v879 = vld [vmem:[%s878] sm:$0x40]
  %vm880 = vcmask 1046534
  %v881 = vsel %vm880, %v879, %v877
  %s882 = scalar_lea.vmem %s0, 1270
  %v883 = vld [vmem:[%s882] sm:$0x80]
  %vm884 = vcmask 1047559
  %v885 = vsel %vm884, %v883, %v881
  %886 = vrot.lane.b32.xlu0 %v885, 116
  %v887 = vpop.permute.xlu0 %886
  %vm888 = vcmask 982944
  %s889 = scalar_lea.vmem %s1, 32
  %890 = vst.msk [vmem:[%s889] sm:$0xff] %vm888, %v887
  %s891 = scalar_lea.vmem %s0, 285
  %v892 = vld [vmem:[%s891] sm:$0x1]
  %s893 = scalar_lea.vmem %s0, 316
  %v894 = vld [vmem:[%s893] sm:$0x2]
  %vm895 = vcmask 1041409
  %v896 = vsel %vm895, %v894, %v892
  %s897 = scalar_lea.vmem %s0, 347
  %v898 = vld [vmem:[%s897] sm:$0x4]
  %vm899 = vcmask 1042434
  %v900 = vsel %vm899, %v898, %v896
  %s901 = scalar_lea.vmem %s0, 378
  %v902 = vld [vmem:[%s901] sm:$0x8]
  %vm903 = vcmask 1043459
  %v904 = vsel %vm903, %v902, %v900
  %s905 = scalar_lea.vmem %s0, 409
  %v906 = vld [vmem:[%s905] sm:$0x10]
  %vm907 = vcmask 1044484
  %v908 = vsel %vm907, %v906, %v904
  %s909 = scalar_lea.vmem %s0, 440
  %v910 = vld [vmem:[%s909] sm:$0x20]
  %vm911 = vcmask 1045509
  %v912 = vsel %vm911, %v910, %v908
  %s913 = scalar_lea.vmem %s0, 471
  %v914 = vld [vmem:[%s913] sm:$0x40]
  %vm915 = vcmask 1046534
  %v916 = vsel %vm915, %v914, %v912
  %s917 = scalar_lea.vmem %s0, 502
  %v918 = vld [vmem:[%s917] sm:$0x80]
  %vm919 = vcmask 1047559
  %v920 = vsel %vm919, %v918, %v916
  %921 = vrot.lane.b32.xlu0 %v920, 116
  %v922 = vpop.permute.xlu0 %921
  %vm923 = vcmask 982944
  %s924 = scalar_lea.vmem %s1, 8
  %925 = vst.msk [vmem:[%s924] sm:$0xff] %vm923, %v922
  %s926 = scalar_lea.vmem %s0, 1309
  %v927 = vld [vmem:[%s926] sm:$0x1]
  %s928 = scalar_lea.vmem %s0, 1340
  %v929 = vld [vmem:[%s928] sm:$0x2]
  %vm930 = vcmask 1041409
  %v931 = vsel %vm930, %v929, %v927
  %s932 = scalar_lea.vmem %s0, 1371
  %v933 = vld [vmem:[%s932] sm:$0x4]
  %vm934 = vcmask 1042434
  %v935 = vsel %vm934, %v933, %v931
  %s936 = scalar_lea.vmem %s0, 1402
  %v937 = vld [vmem:[%s936] sm:$0x8]
  %vm938 = vcmask 1043459
  %v939 = vsel %vm938, %v937, %v935
  %s940 = scalar_lea.vmem %s0, 1433
  %v941 = vld [vmem:[%s940] sm:$0x10]
  %vm942 = vcmask 1044484
  %v943 = vsel %vm942, %v941, %v939
  %s944 = scalar_lea.vmem %s0, 1464
  %v945 = vld [vmem:[%s944] sm:$0x20]
  %vm946 = vcmask 1045509
  %v947 = vsel %vm946, %v945, %v943
  %s948 = scalar_lea.vmem %s0, 1495
  %v949 = vld [vmem:[%s948] sm:$0x40]
  %vm950 = vcmask 1046534
  %v951 = vsel %vm950, %v949, %v947
  %s952 = scalar_lea.vmem %s0, 1526
  %v953 = vld [vmem:[%s952] sm:$0x80]
  %vm954 = vcmask 1047559
  %v955 = vsel %vm954, %v953, %v951
  %956 = vrot.lane.b32.xlu0 %v955, 116
  %v957 = vpop.permute.xlu0 %956
  %vm958 = vcmask 982944
  %s959 = scalar_lea.vmem %s1, 40
  %960 = vst.msk [vmem:[%s959] sm:$0xff] %vm958, %v957
  %s961 = scalar_lea.vmem %s0, 541
  %v962 = vld [vmem:[%s961] sm:$0x1]
  %s963 = scalar_lea.vmem %s0, 572
  %v964 = vld [vmem:[%s963] sm:$0x2]
  %vm965 = vcmask 1041409
  %v966 = vsel %vm965, %v964, %v962
  %s967 = scalar_lea.vmem %s0, 603
  %v968 = vld [vmem:[%s967] sm:$0x4]
  %vm969 = vcmask 1042434
  %v970 = vsel %vm969, %v968, %v966
  %s971 = scalar_lea.vmem %s0, 634
  %v972 = vld [vmem:[%s971] sm:$0x8]
  %vm973 = vcmask 1043459
  %v974 = vsel %vm973, %v972, %v970
  %s975 = scalar_lea.vmem %s0, 665
  %v976 = vld [vmem:[%s975] sm:$0x10]
  %vm977 = vcmask 1044484
  %v978 = vsel %vm977, %v976, %v974
  %s979 = scalar_lea.vmem %s0, 696
  %v980 = vld [vmem:[%s979] sm:$0x20]
  %vm981 = vcmask 1045509
  %v982 = vsel %vm981, %v980, %v978
  %s983 = scalar_lea.vmem %s0, 727
  %v984 = vld [vmem:[%s983] sm:$0x40]
  %vm985 = vcmask 1046534
  %v986 = vsel %vm985, %v984, %v982
  %s987 = scalar_lea.vmem %s0, 758
  %v988 = vld [vmem:[%s987] sm:$0x80]
  %vm989 = vcmask 1047559
  %v990 = vsel %vm989, %v988, %v986
  %991 = vrot.lane.b32.xlu0 %v990, 116
  %v992 = vpop.permute.xlu0 %991
  %vm993 = vcmask 982944
  %s994 = scalar_lea.vmem %s1, 16
  %995 = vst.msk [vmem:[%s994] sm:$0xff] %vm993, %v992
  %s996 = scalar_lea.vmem %s0, 1565
  %v997 = vld [vmem:[%s996] sm:$0x1]
  %s998 = scalar_lea.vmem %s0, 1596
  %v999 = vld [vmem:[%s998] sm:$0x2]
  %vm1000 = vcmask 1041409
  %v1001 = vsel %vm1000, %v999, %v997
  %s1002 = scalar_lea.vmem %s0, 1627
  %v1003 = vld [vmem:[%s1002] sm:$0x4]
  %vm1004 = vcmask 1042434
  %v1005 = vsel %vm1004, %v1003, %v1001
  %s1006 = scalar_lea.vmem %s0, 1658
  %v1007 = vld [vmem:[%s1006] sm:$0x8]
  %vm1008 = vcmask 1043459
  %v1009 = vsel %vm1008, %v1007, %v1005
  %s1010 = scalar_lea.vmem %s0, 1689
  %v1011 = vld [vmem:[%s1010] sm:$0x10]
  %vm1012 = vcmask 1044484
  %v1013 = vsel %vm1012, %v1011, %v1009
  %s1014 = scalar_lea.vmem %s0, 1720
  %v1015 = vld [vmem:[%s1014] sm:$0x20]
  %vm1016 = vcmask 1045509
  %v1017 = vsel %vm1016, %v1015, %v1013
  %s1018 = scalar_lea.vmem %s0, 1751
  %v1019 = vld [vmem:[%s1018] sm:$0x40]
  %vm1020 = vcmask 1046534
  %v1021 = vsel %vm1020, %v1019, %v1017
  %s1022 = scalar_lea.vmem %s0, 1782
  %v1023 = vld [vmem:[%s1022] sm:$0x80]
  %vm1024 = vcmask 1047559
  %v1025 = vsel %vm1024, %v1023, %v1021
  %1026 = vrot.lane.b32.xlu0 %v1025, 116
  %v1027 = vpop.permute.xlu0 %1026
  %vm1028 = vcmask 982944
  %s1029 = scalar_lea.vmem %s1, 48
  %1030 = vst.msk [vmem:[%s1029] sm:$0xff] %vm1028, %v1027
  %s1031 = scalar_lea.vmem %s0, 797
  %v1032 = vld [vmem:[%s1031] sm:$0x1]
  %s1033 = scalar_lea.vmem %s0, 828
  %v1034 = vld [vmem:[%s1033] sm:$0x2]
  %vm1035 = vcmask 1041409
  %v1036 = vsel %vm1035, %v1034, %v1032
  %s1037 = scalar_lea.vmem %s0, 859
  %v1038 = vld [vmem:[%s1037] sm:$0x4]
  %vm1039 = vcmask 1042434
  %v1040 = vsel %vm1039, %v1038, %v1036
  %s1041 = scalar_lea.vmem %s0, 890
  %v1042 = vld [vmem:[%s1041] sm:$0x8]
  %vm1043 = vcmask 1043459
  %v1044 = vsel %vm1043, %v1042, %v1040
  %s1045 = scalar_lea.vmem %s0, 921
  %v1046 = vld [vmem:[%s1045] sm:$0x10]
  %vm1047 = vcmask 1044484
  %v1048 = vsel %vm1047, %v1046, %v1044
  %s1049 = scalar_lea.vmem %s0, 952
  %v1050 = vld [vmem:[%s1049] sm:$0x20]
  %vm1051 = vcmask 1045509
  %v1052 = vsel %vm1051, %v1050, %v1048
  %s1053 = scalar_lea.vmem %s0, 983
  %v1054 = vld [vmem:[%s1053] sm:$0x40]
  %vm1055 = vcmask 1046534
  %v1056 = vsel %vm1055, %v1054, %v1052
  %s1057 = scalar_lea.vmem %s0, 1014
  %v1058 = vld [vmem:[%s1057] sm:$0x80]
  %vm1059 = vcmask 1047559
  %v1060 = vsel %vm1059, %v1058, %v1056
  %1061 = vrot.lane.b32.xlu0 %v1060, 116
  %v1062 = vpop.permute.xlu0 %1061
  %vm1063 = vcmask 982944
  %s1064 = scalar_lea.vmem %s1, 24
  %1065 = vst.msk [vmem:[%s1064] sm:$0xff] %vm1063, %v1062
  %s1066 = scalar_lea.vmem %s0, 1821
  %v1067 = vld [vmem:[%s1066] sm:$0x1]
  %s1068 = scalar_lea.vmem %s0, 1852
  %v1069 = vld [vmem:[%s1068] sm:$0x2]
  %vm1070 = vcmask 1041409
  %v1071 = vsel %vm1070, %v1069, %v1067
  %s1072 = scalar_lea.vmem %s0, 1883
  %v1073 = vld [vmem:[%s1072] sm:$0x4]
  %vm1074 = vcmask 1042434
  %v1075 = vsel %vm1074, %v1073, %v1071
  %s1076 = scalar_lea.vmem %s0, 1914
  %v1077 = vld [vmem:[%s1076] sm:$0x8]
  %vm1078 = vcmask 1043459
  %v1079 = vsel %vm1078, %v1077, %v1075
  %s1080 = scalar_lea.vmem %s0, 1945
  %v1081 = vld [vmem:[%s1080] sm:$0x10]
  %vm1082 = vcmask 1044484
  %v1083 = vsel %vm1082, %v1081, %v1079
  %s1084 = scalar_lea.vmem %s0, 1976
  %v1085 = vld [vmem:[%s1084] sm:$0x20]
  %vm1086 = vcmask 1045509
  %v1087 = vsel %vm1086, %v1085, %v1083
  %s1088 = scalar_lea.vmem %s0, 2007
  %v1089 = vld [vmem:[%s1088] sm:$0x40]
  %vm1090 = vcmask 1046534
  %v1091 = vsel %vm1090, %v1089, %v1087
  %s1092 = scalar_lea.vmem %s0, 2038
  %v1093 = vld [vmem:[%s1092] sm:$0x80]
  %vm1094 = vcmask 1047559
  %v1095 = vsel %vm1094, %v1093, %v1091
  %1096 = vrot.lane.b32.xlu0 %v1095, 116
  %v1097 = vpop.permute.xlu0 %1096
  %vm1098 = vcmask 982944
  %s1099 = scalar_lea.vmem %s1, 56
  %1100 = vst.msk [vmem:[%s1099] sm:$0xff] %vm1098, %v1097
  %s1101 = scalar_lea.vmem %s0, 28
  %v1102 = vld [vmem:[%s1101] sm:$0x1]
  %s1103 = scalar_lea.vmem %s0, 59
  %v1104 = vld [vmem:[%s1103] sm:$0x2]
  %vm1105 = vcmask 1041409
  %v1106 = vsel %vm1105, %v1104, %v1102
  %s1107 = scalar_lea.vmem %s0, 90
  %v1108 = vld [vmem:[%s1107] sm:$0x4]
  %vm1109 = vcmask 1042434
  %v1110 = vsel %vm1109, %v1108, %v1106
  %s1111 = scalar_lea.vmem %s0, 121
  %v1112 = vld [vmem:[%s1111] sm:$0x8]
  %vm1113 = vcmask 1043459
  %v1114 = vsel %vm1113, %v1112, %v1110
  %s1115 = scalar_lea.vmem %s0, 152
  %v1116 = vld [vmem:[%s1115] sm:$0x10]
  %vm1117 = vcmask 1044484
  %v1118 = vsel %vm1117, %v1116, %v1114
  %s1119 = scalar_lea.vmem %s0, 183
  %v1120 = vld [vmem:[%s1119] sm:$0x20]
  %vm1121 = vcmask 1045509
  %v1122 = vsel %vm1121, %v1120, %v1118
  %s1123 = scalar_lea.vmem %s0, 214
  %v1124 = vld [vmem:[%s1123] sm:$0x40]
  %vm1125 = vcmask 1046534
  %v1126 = vsel %vm1125, %v1124, %v1122
  %s1127 = scalar_lea.vmem %s0, 245
  %v1128 = vld [vmem:[%s1127] sm:$0x80]
  %vm1129 = vcmask 1047559
  %v1130 = vsel %vm1129, %v1128, %v1126
  %1131 = vrot.lane.b32.xlu0 %v1130, 112
  %v1132 = vpop.permute.xlu0 %1131
  %vm1133 = vcmask 950144
  %1134 = vst.msk [vmem:[%s1] sm:$0xff] %vm1133, %v1132
  %s1135 = scalar_lea.vmem %s0, 1052
  %v1136 = vld [vmem:[%s1135] sm:$0x1]
  %s1137 = scalar_lea.vmem %s0, 1083
  %v1138 = vld [vmem:[%s1137] sm:$0x2]
  %vm1139 = vcmask 1041409
  %v1140 = vsel %vm1139, %v1138, %v1136
  %s1141 = scalar_lea.vmem %s0, 1114
  %v1142 = vld [vmem:[%s1141] sm:$0x4]
  %vm1143 = vcmask 1042434
  %v1144 = vsel %vm1143, %v1142, %v1140
  %s1145 = scalar_lea.vmem %s0, 1145
  %v1146 = vld [vmem:[%s1145] sm:$0x8]
  %vm1147 = vcmask 1043459
  %v1148 = vsel %vm1147, %v1146, %v1144
  %s1149 = scalar_lea.vmem %s0, 1176
  %v1150 = vld [vmem:[%s1149] sm:$0x10]
  %vm1151 = vcmask 1044484
  %v1152 = vsel %vm1151, %v1150, %v1148
  %s1153 = scalar_lea.vmem %s0, 1207
  %v1154 = vld [vmem:[%s1153] sm:$0x20]
  %vm1155 = vcmask 1045509
  %v1156 = vsel %vm1155, %v1154, %v1152
  %s1157 = scalar_lea.vmem %s0, 1238
  %v1158 = vld [vmem:[%s1157] sm:$0x40]
  %vm1159 = vcmask 1046534
  %v1160 = vsel %vm1159, %v1158, %v1156
  %s1161 = scalar_lea.vmem %s0, 1269
  %v1162 = vld [vmem:[%s1161] sm:$0x80]
  %vm1163 = vcmask 1047559
  %v1164 = vsel %vm1163, %v1162, %v1160
  %1165 = vrot.lane.b32.xlu0 %v1164, 112
  %v1166 = vpop.permute.xlu0 %1165
  %vm1167 = vcmask 950144
  %s1168 = scalar_lea.vmem %s1, 32
  %1169 = vst.msk [vmem:[%s1168] sm:$0xff] %vm1167, %v1166
  %s1170 = scalar_lea.vmem %s0, 284
  %v1171 = vld [vmem:[%s1170] sm:$0x1]
  %s1172 = scalar_lea.vmem %s0, 315
  %v1173 = vld [vmem:[%s1172] sm:$0x2]
  %vm1174 = vcmask 1041409
  %v1175 = vsel %vm1174, %v1173, %v1171
  %s1176 = scalar_lea.vmem %s0, 346
  %v1177 = vld [vmem:[%s1176] sm:$0x4]
  %vm1178 = vcmask 1042434
  %v1179 = vsel %vm1178, %v1177, %v1175
  %s1180 = scalar_lea.vmem %s0, 377
  %v1181 = vld [vmem:[%s1180] sm:$0x8]
  %vm1182 = vcmask 1043459
  %v1183 = vsel %vm1182, %v1181, %v1179
  %s1184 = scalar_lea.vmem %s0, 408
  %v1185 = vld [vmem:[%s1184] sm:$0x10]
  %vm1186 = vcmask 1044484
  %v1187 = vsel %vm1186, %v1185, %v1183
  %s1188 = scalar_lea.vmem %s0, 439
  %v1189 = vld [vmem:[%s1188] sm:$0x20]
  %vm1190 = vcmask 1045509
  %v1191 = vsel %vm1190, %v1189, %v1187
  %s1192 = scalar_lea.vmem %s0, 470
  %v1193 = vld [vmem:[%s1192] sm:$0x40]
  %vm1194 = vcmask 1046534
  %v1195 = vsel %vm1194, %v1193, %v1191
  %s1196 = scalar_lea.vmem %s0, 501
  %v1197 = vld [vmem:[%s1196] sm:$0x80]
  %vm1198 = vcmask 1047559
  %v1199 = vsel %vm1198, %v1197, %v1195
  %1200 = vrot.lane.b32.xlu0 %v1199, 112
  %v1201 = vpop.permute.xlu0 %1200
  %vm1202 = vcmask 950144
  %s1203 = scalar_lea.vmem %s1, 8
  %1204 = vst.msk [vmem:[%s1203] sm:$0xff] %vm1202, %v1201
  %s1205 = scalar_lea.vmem %s0, 1308
  %v1206 = vld [vmem:[%s1205] sm:$0x1]
  %s1207 = scalar_lea.vmem %s0, 1339
  %v1208 = vld [vmem:[%s1207] sm:$0x2]
  %vm1209 = vcmask 1041409
  %v1210 = vsel %vm1209, %v1208, %v1206
  %s1211 = scalar_lea.vmem %s0, 1370
  %v1212 = vld [vmem:[%s1211] sm:$0x4]
  %vm1213 = vcmask 1042434
  %v1214 = vsel %vm1213, %v1212, %v1210
  %s1215 = scalar_lea.vmem %s0, 1401
  %v1216 = vld [vmem:[%s1215] sm:$0x8]
  %vm1217 = vcmask 1043459
  %v1218 = vsel %vm1217, %v1216, %v1214
  %s1219 = scalar_lea.vmem %s0, 1432
  %v1220 = vld [vmem:[%s1219] sm:$0x10]
  %vm1221 = vcmask 1044484
  %v1222 = vsel %vm1221, %v1220, %v1218
  %s1223 = scalar_lea.vmem %s0, 1463
  %v1224 = vld [vmem:[%s1223] sm:$0x20]
  %vm1225 = vcmask 1045509
  %v1226 = vsel %vm1225, %v1224, %v1222
  %s1227 = scalar_lea.vmem %s0, 1494
  %v1228 = vld [vmem:[%s1227] sm:$0x40]
  %vm1229 = vcmask 1046534
  %v1230 = vsel %vm1229, %v1228, %v1226
  %s1231 = scalar_lea.vmem %s0, 1525
  %v1232 = vld [vmem:[%s1231] sm:$0x80]
  %vm1233 = vcmask 1047559
  %v1234 = vsel %vm1233, %v1232, %v1230
  %1235 = vrot.lane.b32.xlu0 %v1234, 112
  %v1236 = vpop.permute.xlu0 %1235
  %vm1237 = vcmask 950144
  %s1238 = scalar_lea.vmem %s1, 40
  %1239 = vst.msk [vmem:[%s1238] sm:$0xff] %vm1237, %v1236
  %s1240 = scalar_lea.vmem %s0, 540
  %v1241 = vld [vmem:[%s1240] sm:$0x1]
  %s1242 = scalar_lea.vmem %s0, 571
  %v1243 = vld [vmem:[%s1242] sm:$0x2]
  %vm1244 = vcmask 1041409
  %v1245 = vsel %vm1244, %v1243, %v1241
  %s1246 = scalar_lea.vmem %s0, 602
  %v1247 = vld [vmem:[%s1246] sm:$0x4]
  %vm1248 = vcmask 1042434
  %v1249 = vsel %vm1248, %v1247, %v1245
  %s1250 = scalar_lea.vmem %s0, 633
  %v1251 = vld [vmem:[%s1250] sm:$0x8]
  %vm1252 = vcmask 1043459
  %v1253 = vsel %vm1252, %v1251, %v1249
  %s1254 = scalar_lea.vmem %s0, 664
  %v1255 = vld [vmem:[%s1254] sm:$0x10]
  %vm1256 = vcmask 1044484
  %v1257 = vsel %vm1256, %v1255, %v1253
  %s1258 = scalar_lea.vmem %s0, 695
  %v1259 = vld [vmem:[%s1258] sm:$0x20]
  %vm1260 = vcmask 1045509
  %v1261 = vsel %vm1260, %v1259, %v1257
  %s1262 = scalar_lea.vmem %s0, 726
  %v1263 = vld [vmem:[%s1262] sm:$0x40]
  %vm1264 = vcmask 1046534
  %v1265 = vsel %vm1264, %v1263, %v1261
  %s1266 = scalar_lea.vmem %s0, 757
  %v1267 = vld [vmem:[%s1266] sm:$0x80]
  %vm1268 = vcmask 1047559
  %v1269 = vsel %vm1268, %v1267, %v1265
  %1270 = vrot.lane.b32.xlu0 %v1269, 112
  %v1271 = vpop.permute.xlu0 %1270
  %vm1272 = vcmask 950144
  %s1273 = scalar_lea.vmem %s1, 16
  %1274 = vst.msk [vmem:[%s1273] sm:$0xff] %vm1272, %v1271
  %s1275 = scalar_lea.vmem %s0, 1564
  %v1276 = vld [vmem:[%s1275] sm:$0x1]
  %s1277 = scalar_lea.vmem %s0, 1595
  %v1278 = vld [vmem:[%s1277] sm:$0x2]
  %vm1279 = vcmask 1041409
  %v1280 = vsel %vm1279, %v1278, %v1276
  %s1281 = scalar_lea.vmem %s0, 1626
  %v1282 = vld [vmem:[%s1281] sm:$0x4]
  %vm1283 = vcmask 1042434
  %v1284 = vsel %vm1283, %v1282, %v1280
  %s1285 = scalar_lea.vmem %s0, 1657
  %v1286 = vld [vmem:[%s1285] sm:$0x8]
  %vm1287 = vcmask 1043459
  %v1288 = vsel %vm1287, %v1286, %v1284
  %s1289 = scalar_lea.vmem %s0, 1688
  %v1290 = vld [vmem:[%s1289] sm:$0x10]
  %vm1291 = vcmask 1044484
  %v1292 = vsel %vm1291, %v1290, %v1288
  %s1293 = scalar_lea.vmem %s0, 1719
  %v1294 = vld [vmem:[%s1293] sm:$0x20]
  %vm1295 = vcmask 1045509
  %v1296 = vsel %vm1295, %v1294, %v1292
  %s1297 = scalar_lea.vmem %s0, 1750
  %v1298 = vld [vmem:[%s1297] sm:$0x40]
  %vm1299 = vcmask 1046534
  %v1300 = vsel %vm1299, %v1298, %v1296
  %s1301 = scalar_lea.vmem %s0, 1781
  %v1302 = vld [vmem:[%s1301] sm:$0x80]
  %vm1303 = vcmask 1047559
  %v1304 = vsel %vm1303, %v1302, %v1300
  %1305 = vrot.lane.b32.xlu0 %v1304, 112
  %v1306 = vpop.permute.xlu0 %1305
  %vm1307 = vcmask 950144
  %s1308 = scalar_lea.vmem %s1, 48
  %1309 = vst.msk [vmem:[%s1308] sm:$0xff] %vm1307, %v1306
  %s1310 = scalar_lea.vmem %s0, 796
  %v1311 = vld [vmem:[%s1310] sm:$0x1]
  %s1312 = scalar_lea.vmem %s0, 827
  %v1313 = vld [vmem:[%s1312] sm:$0x2]
  %vm1314 = vcmask 1041409
  %v1315 = vsel %vm1314, %v1313, %v1311
  %s1316 = scalar_lea.vmem %s0, 858
  %v1317 = vld [vmem:[%s1316] sm:$0x4]
  %vm1318 = vcmask 1042434
  %v1319 = vsel %vm1318, %v1317, %v1315
  %s1320 = scalar_lea.vmem %s0, 889
  %v1321 = vld [vmem:[%s1320] sm:$0x8]
  %vm1322 = vcmask 1043459
  %v1323 = vsel %vm1322, %v1321, %v1319
  %s1324 = scalar_lea.vmem %s0, 920
  %v1325 = vld [vmem:[%s1324] sm:$0x10]
  %vm1326 = vcmask 1044484
  %v1327 = vsel %vm1326, %v1325, %v1323
  %s1328 = scalar_lea.vmem %s0, 951
  %v1329 = vld [vmem:[%s1328] sm:$0x20]
  %vm1330 = vcmask 1045509
  %v1331 = vsel %vm1330, %v1329, %v1327
  %s1332 = scalar_lea.vmem %s0, 982
  %v1333 = vld [vmem:[%s1332] sm:$0x40]
  %vm1334 = vcmask 1046534
  %v1335 = vsel %vm1334, %v1333, %v1331
  %s1336 = scalar_lea.vmem %s0, 1013
  %v1337 = vld [vmem:[%s1336] sm:$0x80]
  %vm1338 = vcmask 1047559
  %v1339 = vsel %vm1338, %v1337, %v1335
  %1340 = vrot.lane.b32.xlu0 %v1339, 112
  %v1341 = vpop.permute.xlu0 %1340
  %vm1342 = vcmask 950144
  %s1343 = scalar_lea.vmem %s1, 24
  %1344 = vst.msk [vmem:[%s1343] sm:$0xff] %vm1342, %v1341
  %s1345 = scalar_lea.vmem %s0, 1820
  %v1346 = vld [vmem:[%s1345] sm:$0x1]
  %s1347 = scalar_lea.vmem %s0, 1851
  %v1348 = vld [vmem:[%s1347] sm:$0x2]
  %vm1349 = vcmask 1041409
  %v1350 = vsel %vm1349, %v1348, %v1346
  %s1351 = scalar_lea.vmem %s0, 1882
  %v1352 = vld [vmem:[%s1351] sm:$0x4]
  %vm1353 = vcmask 1042434
  %v1354 = vsel %vm1353, %v1352, %v1350
  %s1355 = scalar_lea.vmem %s0, 1913
  %v1356 = vld [vmem:[%s1355] sm:$0x8]
  %vm1357 = vcmask 1043459
  %v1358 = vsel %vm1357, %v1356, %v1354
  %s1359 = scalar_lea.vmem %s0, 1944
  %v1360 = vld [vmem:[%s1359] sm:$0x10]
  %vm1361 = vcmask 1044484
  %v1362 = vsel %vm1361, %v1360, %v1358
  %s1363 = scalar_lea.vmem %s0, 1975
  %v1364 = vld [vmem:[%s1363] sm:$0x20]
  %vm1365 = vcmask 1045509
  %v1366 = vsel %vm1365, %v1364, %v1362
  %s1367 = scalar_lea.vmem %s0, 2006
  %v1368 = vld [vmem:[%s1367] sm:$0x40]
  %vm1369 = vcmask 1046534
  %v1370 = vsel %vm1369, %v1368, %v1366
  %s1371 = scalar_lea.vmem %s0, 2037
  %v1372 = vld [vmem:[%s1371] sm:$0x80]
  %vm1373 = vcmask 1047559
  %v1374 = vsel %vm1373, %v1372, %v1370
  %1375 = vrot.lane.b32.xlu0 %v1374, 112
  %v1376 = vpop.permute.xlu0 %1375
  %vm1377 = vcmask 950144
  %s1378 = scalar_lea.vmem %s1, 56
  %1379 = vst.msk [vmem:[%s1378] sm:$0xff] %vm1377, %v1376
  %s1380 = scalar_lea.vmem %s0, 27
  %v1381 = vld [vmem:[%s1380] sm:$0x1]
  %s1382 = scalar_lea.vmem %s0, 58
  %v1383 = vld [vmem:[%s1382] sm:$0x2]
  %vm1384 = vcmask 1041409
  %v1385 = vsel %vm1384, %v1383, %v1381
  %s1386 = scalar_lea.vmem %s0, 89
  %v1387 = vld [vmem:[%s1386] sm:$0x4]
  %vm1388 = vcmask 1042434
  %v1389 = vsel %vm1388, %v1387, %v1385
  %s1390 = scalar_lea.vmem %s0, 120
  %v1391 = vld [vmem:[%s1390] sm:$0x8]
  %vm1392 = vcmask 1043459
  %v1393 = vsel %vm1392, %v1391, %v1389
  %s1394 = scalar_lea.vmem %s0, 151
  %v1395 = vld [vmem:[%s1394] sm:$0x10]
  %vm1396 = vcmask 1044484
  %v1397 = vsel %vm1396, %v1395, %v1393
  %s1398 = scalar_lea.vmem %s0, 182
  %v1399 = vld [vmem:[%s1398] sm:$0x20]
  %vm1400 = vcmask 1045509
  %v1401 = vsel %vm1400, %v1399, %v1397
  %s1402 = scalar_lea.vmem %s0, 213
  %v1403 = vld [vmem:[%s1402] sm:$0x40]
  %vm1404 = vcmask 1046534
  %v1405 = vsel %vm1404, %v1403, %v1401
  %s1406 = scalar_lea.vmem %s0, 244
  %v1407 = vld [vmem:[%s1406] sm:$0x80]
  %vm1408 = vcmask 1047559
  %v1409 = vsel %vm1408, %v1407, %v1405
  %1410 = vrot.lane.b32.xlu0 %v1409, 108
  %v1411 = vpop.permute.xlu0 %1410
  %vm1412 = vcmask 917344
  %1413 = vst.msk [vmem:[%s1] sm:$0xff] %vm1412, %v1411
  %s1414 = scalar_lea.vmem %s0, 1051
  %v1415 = vld [vmem:[%s1414] sm:$0x1]
  %s1416 = scalar_lea.vmem %s0, 1082
  %v1417 = vld [vmem:[%s1416] sm:$0x2]
  %vm1418 = vcmask 1041409
  %v1419 = vsel %vm1418, %v1417, %v1415
  %s1420 = scalar_lea.vmem %s0, 1113
  %v1421 = vld [vmem:[%s1420] sm:$0x4]
  %vm1422 = vcmask 1042434
  %v1423 = vsel %vm1422, %v1421, %v1419
  %s1424 = scalar_lea.vmem %s0, 1144
  %v1425 = vld [vmem:[%s1424] sm:$0x8]
  %vm1426 = vcmask 1043459
  %v1427 = vsel %vm1426, %v1425, %v1423
  %s1428 = scalar_lea.vmem %s0, 1175
  %v1429 = vld [vmem:[%s1428] sm:$0x10]
  %vm1430 = vcmask 1044484
  %v1431 = vsel %vm1430, %v1429, %v1427
  %s1432 = scalar_lea.vmem %s0, 1206
  %v1433 = vld [vmem:[%s1432] sm:$0x20]
  %vm1434 = vcmask 1045509
  %v1435 = vsel %vm1434, %v1433, %v1431
  %s1436 = scalar_lea.vmem %s0, 1237
  %v1437 = vld [vmem:[%s1436] sm:$0x40]
  %vm1438 = vcmask 1046534
  %v1439 = vsel %vm1438, %v1437, %v1435
  %s1440 = scalar_lea.vmem %s0, 1268
  %v1441 = vld [vmem:[%s1440] sm:$0x80]
  %vm1442 = vcmask 1047559
  %v1443 = vsel %vm1442, %v1441, %v1439
  %1444 = vrot.lane.b32.xlu0 %v1443, 108
  %v1445 = vpop.permute.xlu0 %1444
  %vm1446 = vcmask 917344
  %s1447 = scalar_lea.vmem %s1, 32
  %1448 = vst.msk [vmem:[%s1447] sm:$0xff] %vm1446, %v1445
  %s1449 = scalar_lea.vmem %s0, 283
  %v1450 = vld [vmem:[%s1449] sm:$0x1]
  %s1451 = scalar_lea.vmem %s0, 314
  %v1452 = vld [vmem:[%s1451] sm:$0x2]
  %vm1453 = vcmask 1041409
  %v1454 = vsel %vm1453, %v1452, %v1450
  %s1455 = scalar_lea.vmem %s0, 345
  %v1456 = vld [vmem:[%s1455] sm:$0x4]
  %vm1457 = vcmask 1042434
  %v1458 = vsel %vm1457, %v1456, %v1454
  %s1459 = scalar_lea.vmem %s0, 376
  %v1460 = vld [vmem:[%s1459] sm:$0x8]
  %vm1461 = vcmask 1043459
  %v1462 = vsel %vm1461, %v1460, %v1458
  %s1463 = scalar_lea.vmem %s0, 407
  %v1464 = vld [vmem:[%s1463] sm:$0x10]
  %vm1465 = vcmask 1044484
  %v1466 = vsel %vm1465, %v1464, %v1462
  %s1467 = scalar_lea.vmem %s0, 438
  %v1468 = vld [vmem:[%s1467] sm:$0x20]
  %vm1469 = vcmask 1045509
  %v1470 = vsel %vm1469, %v1468, %v1466
  %s1471 = scalar_lea.vmem %s0, 469
  %v1472 = vld [vmem:[%s1471] sm:$0x40]
  %vm1473 = vcmask 1046534
  %v1474 = vsel %vm1473, %v1472, %v1470
  %s1475 = scalar_lea.vmem %s0, 500
  %v1476 = vld [vmem:[%s1475] sm:$0x80]
  %vm1477 = vcmask 1047559
  %v1478 = vsel %vm1477, %v1476, %v1474
  %1479 = vrot.lane.b32.xlu0 %v1478, 108
  %v1480 = vpop.permute.xlu0 %1479
  %vm1481 = vcmask 917344
  %s1482 = scalar_lea.vmem %s1, 8
  %1483 = vst.msk [vmem:[%s1482] sm:$0xff] %vm1481, %v1480
  %s1484 = scalar_lea.vmem %s0, 1307
  %v1485 = vld [vmem:[%s1484] sm:$0x1]
  %s1486 = scalar_lea.vmem %s0, 1338
  %v1487 = vld [vmem:[%s1486] sm:$0x2]
  %vm1488 = vcmask 1041409
  %v1489 = vsel %vm1488, %v1487, %v1485
  %s1490 = scalar_lea.vmem %s0, 1369
  %v1491 = vld [vmem:[%s1490] sm:$0x4]
  %vm1492 = vcmask 1042434
  %v1493 = vsel %vm1492, %v1491, %v1489
  %s1494 = scalar_lea.vmem %s0, 1400
  %v1495 = vld [vmem:[%s1494] sm:$0x8]
  %vm1496 = vcmask 1043459
  %v1497 = vsel %vm1496, %v1495, %v1493
  %s1498 = scalar_lea.vmem %s0, 1431
  %v1499 = vld [vmem:[%s1498] sm:$0x10]
  %vm1500 = vcmask 1044484
  %v1501 = vsel %vm1500, %v1499, %v1497
  %s1502 = scalar_lea.vmem %s0, 1462
  %v1503 = vld [vmem:[%s1502] sm:$0x20]
  %vm1504 = vcmask 1045509
  %v1505 = vsel %vm1504, %v1503, %v1501
  %s1506 = scalar_lea.vmem %s0, 1493
  %v1507 = vld [vmem:[%s1506] sm:$0x40]
  %vm1508 = vcmask 1046534
  %v1509 = vsel %vm1508, %v1507, %v1505
  %s1510 = scalar_lea.vmem %s0, 1524
  %v1511 = vld [vmem:[%s1510] sm:$0x80]
  %vm1512 = vcmask 1047559
  %v1513 = vsel %vm1512, %v1511, %v1509
  %1514 = vrot.lane.b32.xlu0 %v1513, 108
  %v1515 = vpop.permute.xlu0 %1514
  %vm1516 = vcmask 917344
  %s1517 = scalar_lea.vmem %s1, 40
  %1518 = vst.msk [vmem:[%s1517] sm:$0xff] %vm1516, %v1515
  %s1519 = scalar_lea.vmem %s0, 539
  %v1520 = vld [vmem:[%s1519] sm:$0x1]
  %s1521 = scalar_lea.vmem %s0, 570
  %v1522 = vld [vmem:[%s1521] sm:$0x2]
  %vm1523 = vcmask 1041409
  %v1524 = vsel %vm1523, %v1522, %v1520
  %s1525 = scalar_lea.vmem %s0, 601
  %v1526 = vld [vmem:[%s1525] sm:$0x4]
  %vm1527 = vcmask 1042434
  %v1528 = vsel %vm1527, %v1526, %v1524
  %s1529 = scalar_lea.vmem %s0, 632
  %v1530 = vld [vmem:[%s1529] sm:$0x8]
  %vm1531 = vcmask 1043459
  %v1532 = vsel %vm1531, %v1530, %v1528
  %s1533 = scalar_lea.vmem %s0, 663
  %v1534 = vld [vmem:[%s1533] sm:$0x10]
  %vm1535 = vcmask 1044484
  %v1536 = vsel %vm1535, %v1534, %v1532
  %s1537 = scalar_lea.vmem %s0, 694
  %v1538 = vld [vmem:[%s1537] sm:$0x20]
  %vm1539 = vcmask 1045509
  %v1540 = vsel %vm1539, %v1538, %v1536
  %s1541 = scalar_lea.vmem %s0, 725
  %v1542 = vld [vmem:[%s1541] sm:$0x40]
  %vm1543 = vcmask 1046534
  %v1544 = vsel %vm1543, %v1542, %v1540
  %s1545 = scalar_lea.vmem %s0, 756
  %v1546 = vld [vmem:[%s1545] sm:$0x80]
  %vm1547 = vcmask 1047559
  %v1548 = vsel %vm1547, %v1546, %v1544
  %1549 = vrot.lane.b32.xlu0 %v1548, 108
  %v1550 = vpop.permute.xlu0 %1549
  %vm1551 = vcmask 917344
  %s1552 = scalar_lea.vmem %s1, 16
  %1553 = vst.msk [vmem:[%s1552] sm:$0xff] %vm1551, %v1550
  %s1554 = scalar_lea.vmem %s0, 1563
  %v1555 = vld [vmem:[%s1554] sm:$0x1]
  %s1556 = scalar_lea.vmem %s0, 1594
  %v1557 = vld [vmem:[%s1556] sm:$0x2]
  %vm1558 = vcmask 1041409
  %v1559 = vsel %vm1558, %v1557, %v1555
  %s1560 = scalar_lea.vmem %s0, 1625
  %v1561 = vld [vmem:[%s1560] sm:$0x4]
  %vm1562 = vcmask 1042434
  %v1563 = vsel %vm1562, %v1561, %v1559
  %s1564 = scalar_lea.vmem %s0, 1656
  %v1565 = vld [vmem:[%s1564] sm:$0x8]
  %vm1566 = vcmask 1043459
  %v1567 = vsel %vm1566, %v1565, %v1563
  %s1568 = scalar_lea.vmem %s0, 1687
  %v1569 = vld [vmem:[%s1568] sm:$0x10]
  %vm1570 = vcmask 1044484
  %v1571 = vsel %vm1570, %v1569, %v1567
  %s1572 = scalar_lea.vmem %s0, 1718
  %v1573 = vld [vmem:[%s1572] sm:$0x20]
  %vm1574 = vcmask 1045509
  %v1575 = vsel %vm1574, %v1573, %v1571
  %s1576 = scalar_lea.vmem %s0, 1749
  %v1577 = vld [vmem:[%s1576] sm:$0x40]
  %vm1578 = vcmask 1046534
  %v1579 = vsel %vm1578, %v1577, %v1575
  %s1580 = scalar_lea.vmem %s0, 1780
  %v1581 = vld [vmem:[%s1580] sm:$0x80]
  %vm1582 = vcmask 1047559
  %v1583 = vsel %vm1582, %v1581, %v1579
  %1584 = vrot.lane.b32.xlu0 %v1583, 108
  %v1585 = vpop.permute.xlu0 %1584
  %vm1586 = vcmask 917344
  %s1587 = scalar_lea.vmem %s1, 48
  %1588 = vst.msk [vmem:[%s1587] sm:$0xff] %vm1586, %v1585
  %s1589 = scalar_lea.vmem %s0, 795
  %v1590 = vld [vmem:[%s1589] sm:$0x1]
  %s1591 = scalar_lea.vmem %s0, 826
  %v1592 = vld [vmem:[%s1591] sm:$0x2]
  %vm1593 = vcmask 1041409
  %v1594 = vsel %vm1593, %v1592, %v1590
  %s1595 = scalar_lea.vmem %s0, 857
  %v1596 = vld [vmem:[%s1595] sm:$0x4]
  %vm1597 = vcmask 1042434
  %v1598 = vsel %vm1597, %v1596, %v1594
  %s1599 = scalar_lea.vmem %s0, 888
  %v1600 = vld [vmem:[%s1599] sm:$0x8]
  %vm1601 = vcmask 1043459
  %v1602 = vsel %vm1601, %v1600, %v1598
  %s1603 = scalar_lea.vmem %s0, 919
  %v1604 = vld [vmem:[%s1603] sm:$0x10]
  %vm1605 = vcmask 1044484
  %v1606 = vsel %vm1605, %v1604, %v1602
  %s1607 = scalar_lea.vmem %s0, 950
  %v1608 = vld [vmem:[%s1607] sm:$0x20]
  %vm1609 = vcmask 1045509
  %v1610 = vsel %vm1609, %v1608, %v1606
  %s1611 = scalar_lea.vmem %s0, 981
  %v1612 = vld [vmem:[%s1611] sm:$0x40]
  %vm1613 = vcmask 1046534
  %v1614 = vsel %vm1613, %v1612, %v1610
  %s1615 = scalar_lea.vmem %s0, 1012
  %v1616 = vld [vmem:[%s1615] sm:$0x80]
  %vm1617 = vcmask 1047559
  %v1618 = vsel %vm1617, %v1616, %v1614
  %1619 = vrot.lane.b32.xlu0 %v1618, 108
  %v1620 = vpop.permute.xlu0 %1619
  %vm1621 = vcmask 917344
  %s1622 = scalar_lea.vmem %s1, 24
  %1623 = vst.msk [vmem:[%s1622] sm:$0xff] %vm1621, %v1620
  %s1624 = scalar_lea.vmem %s0, 1819
  %v1625 = vld [vmem:[%s1624] sm:$0x1]
  %s1626 = scalar_lea.vmem %s0, 1850
  %v1627 = vld [vmem:[%s1626] sm:$0x2]
  %vm1628 = vcmask 1041409
  %v1629 = vsel %vm1628, %v1627, %v1625
  %s1630 = scalar_lea.vmem %s0, 1881
  %v1631 = vld [vmem:[%s1630] sm:$0x4]
  %vm1632 = vcmask 1042434
  %v1633 = vsel %vm1632, %v1631, %v1629
  %s1634 = scalar_lea.vmem %s0, 1912
  %v1635 = vld [vmem:[%s1634] sm:$0x8]
  %vm1636 = vcmask 1043459
  %v1637 = vsel %vm1636, %v1635, %v1633
  %s1638 = scalar_lea.vmem %s0, 1943
  %v1639 = vld [vmem:[%s1638] sm:$0x10]
  %vm1640 = vcmask 1044484
  %v1641 = vsel %vm1640, %v1639, %v1637
  %s1642 = scalar_lea.vmem %s0, 1974
  %v1643 = vld [vmem:[%s1642] sm:$0x20]
  %vm1644 = vcmask 1045509
  %v1645 = vsel %vm1644, %v1643, %v1641
  %s1646 = scalar_lea.vmem %s0, 2005
  %v1647 = vld [vmem:[%s1646] sm:$0x40]
  %vm1648 = vcmask 1046534
  %v1649 = vsel %vm1648, %v1647, %v1645
  %s1650 = scalar_lea.vmem %s0, 2036
  %v1651 = vld [vmem:[%s1650] sm:$0x80]
  %vm1652 = vcmask 1047559
  %v1653 = vsel %vm1652, %v1651, %v1649
  %1654 = vrot.lane.b32.xlu0 %v1653, 108
  %v1655 = vpop.permute.xlu0 %1654
  %vm1656 = vcmask 917344
  %s1657 = scalar_lea.vmem %s1, 56
  %1658 = vst.msk [vmem:[%s1657] sm:$0xff] %vm1656, %v1655
  %s1659 = scalar_lea.vmem %s0, 26
  %v1660 = vld [vmem:[%s1659] sm:$0x1]
  %s1661 = scalar_lea.vmem %s0, 57
  %v1662 = vld [vmem:[%s1661] sm:$0x2]
  %vm1663 = vcmask 1041409
  %v1664 = vsel %vm1663, %v1662, %v1660
  %s1665 = scalar_lea.vmem %s0, 88
  %v1666 = vld [vmem:[%s1665] sm:$0x4]
  %vm1667 = vcmask 1042434
  %v1668 = vsel %vm1667, %v1666, %v1664
  %s1669 = scalar_lea.vmem %s0, 119
  %v1670 = vld [vmem:[%s1669] sm:$0x8]
  %vm1671 = vcmask 1043459
  %v1672 = vsel %vm1671, %v1670, %v1668
  %s1673 = scalar_lea.vmem %s0, 150
  %v1674 = vld [vmem:[%s1673] sm:$0x10]
  %vm1675 = vcmask 1044484
  %v1676 = vsel %vm1675, %v1674, %v1672
  %s1677 = scalar_lea.vmem %s0, 181
  %v1678 = vld [vmem:[%s1677] sm:$0x20]
  %vm1679 = vcmask 1045509
  %v1680 = vsel %vm1679, %v1678, %v1676
  %s1681 = scalar_lea.vmem %s0, 212
  %v1682 = vld [vmem:[%s1681] sm:$0x40]
  %vm1683 = vcmask 1046534
  %v1684 = vsel %vm1683, %v1682, %v1680
  %s1685 = scalar_lea.vmem %s0, 243
  %v1686 = vld [vmem:[%s1685] sm:$0x80]
  %vm1687 = vcmask 1047559
  %v1688 = vsel %vm1687, %v1686, %v1684
  %1689 = vrot.lane.b32.xlu0 %v1688, 104
  %v1690 = vpop.permute.xlu0 %1689
  %vm1691 = vcmask 884544
  %1692 = vst.msk [vmem:[%s1] sm:$0xff] %vm1691, %v1690
  %s1693 = scalar_lea.vmem %s0, 1050
  %v1694 = vld [vmem:[%s1693] sm:$0x1]
  %s1695 = scalar_lea.vmem %s0, 1081
  %v1696 = vld [vmem:[%s1695] sm:$0x2]
  %vm1697 = vcmask 1041409
  %v1698 = vsel %vm1697, %v1696, %v1694
  %s1699 = scalar_lea.vmem %s0, 1112
  %v1700 = vld [vmem:[%s1699] sm:$0x4]
  %vm1701 = vcmask 1042434
  %v1702 = vsel %vm1701, %v1700, %v1698
  %s1703 = scalar_lea.vmem %s0, 1143
  %v1704 = vld [vmem:[%s1703] sm:$0x8]
  %vm1705 = vcmask 1043459
  %v1706 = vsel %vm1705, %v1704, %v1702
  %s1707 = scalar_lea.vmem %s0, 1174
  %v1708 = vld [vmem:[%s1707] sm:$0x10]
  %vm1709 = vcmask 1044484
  %v1710 = vsel %vm1709, %v1708, %v1706
  %s1711 = scalar_lea.vmem %s0, 1205
  %v1712 = vld [vmem:[%s1711] sm:$0x20]
  %vm1713 = vcmask 1045509
  %v1714 = vsel %vm1713, %v1712, %v1710
  %s1715 = scalar_lea.vmem %s0, 1236
  %v1716 = vld [vmem:[%s1715] sm:$0x40]
  %vm1717 = vcmask 1046534
  %v1718 = vsel %vm1717, %v1716, %v1714
  %s1719 = scalar_lea.vmem %s0, 1267
  %v1720 = vld [vmem:[%s1719] sm:$0x80]
  %vm1721 = vcmask 1047559
  %v1722 = vsel %vm1721, %v1720, %v1718
  %1723 = vrot.lane.b32.xlu0 %v1722, 104
  %v1724 = vpop.permute.xlu0 %1723
  %vm1725 = vcmask 884544
  %s1726 = scalar_lea.vmem %s1, 32
  %1727 = vst.msk [vmem:[%s1726] sm:$0xff] %vm1725, %v1724
  %s1728 = scalar_lea.vmem %s0, 282
  %v1729 = vld [vmem:[%s1728] sm:$0x1]
  %s1730 = scalar_lea.vmem %s0, 313
  %v1731 = vld [vmem:[%s1730] sm:$0x2]
  %vm1732 = vcmask 1041409
  %v1733 = vsel %vm1732, %v1731, %v1729
  %s1734 = scalar_lea.vmem %s0, 344
  %v1735 = vld [vmem:[%s1734] sm:$0x4]
  %vm1736 = vcmask 1042434
  %v1737 = vsel %vm1736, %v1735, %v1733
  %s1738 = scalar_lea.vmem %s0, 375
  %v1739 = vld [vmem:[%s1738] sm:$0x8]
  %vm1740 = vcmask 1043459
  %v1741 = vsel %vm1740, %v1739, %v1737
  %s1742 = scalar_lea.vmem %s0, 406
  %v1743 = vld [vmem:[%s1742] sm:$0x10]
  %vm1744 = vcmask 1044484
  %v1745 = vsel %vm1744, %v1743, %v1741
  %s1746 = scalar_lea.vmem %s0, 437
  %v1747 = vld [vmem:[%s1746] sm:$0x20]
  %vm1748 = vcmask 1045509
  %v1749 = vsel %vm1748, %v1747, %v1745
  %s1750 = scalar_lea.vmem %s0, 468
  %v1751 = vld [vmem:[%s1750] sm:$0x40]
  %vm1752 = vcmask 1046534
  %v1753 = vsel %vm1752, %v1751, %v1749
  %s1754 = scalar_lea.vmem %s0, 499
  %v1755 = vld [vmem:[%s1754] sm:$0x80]
  %vm1756 = vcmask 1047559
  %v1757 = vsel %vm1756, %v1755, %v1753
  %1758 = vrot.lane.b32.xlu0 %v1757, 104
  %v1759 = vpop.permute.xlu0 %1758
  %vm1760 = vcmask 884544
  %s1761 = scalar_lea.vmem %s1, 8
  %1762 = vst.msk [vmem:[%s1761] sm:$0xff] %vm1760, %v1759
  %s1763 = scalar_lea.vmem %s0, 1306
  %v1764 = vld [vmem:[%s1763] sm:$0x1]
  %s1765 = scalar_lea.vmem %s0, 1337
  %v1766 = vld [vmem:[%s1765] sm:$0x2]
  %vm1767 = vcmask 1041409
  %v1768 = vsel %vm1767, %v1766, %v1764
  %s1769 = scalar_lea.vmem %s0, 1368
  %v1770 = vld [vmem:[%s1769] sm:$0x4]
  %vm1771 = vcmask 1042434
  %v1772 = vsel %vm1771, %v1770, %v1768
  %s1773 = scalar_lea.vmem %s0, 1399
  %v1774 = vld [vmem:[%s1773] sm:$0x8]
  %vm1775 = vcmask 1043459
  %v1776 = vsel %vm1775, %v1774, %v1772
  %s1777 = scalar_lea.vmem %s0, 1430
  %v1778 = vld [vmem:[%s1777] sm:$0x10]
  %vm1779 = vcmask 1044484
  %v1780 = vsel %vm1779, %v1778, %v1776
  %s1781 = scalar_lea.vmem %s0, 1461
  %v1782 = vld [vmem:[%s1781] sm:$0x20]
  %vm1783 = vcmask 1045509
  %v1784 = vsel %vm1783, %v1782, %v1780
  %s1785 = scalar_lea.vmem %s0, 1492
  %v1786 = vld [vmem:[%s1785] sm:$0x40]
  %vm1787 = vcmask 1046534
  %v1788 = vsel %vm1787, %v1786, %v1784
  %s1789 = scalar_lea.vmem %s0, 1523
  %v1790 = vld [vmem:[%s1789] sm:$0x80]
  %vm1791 = vcmask 1047559
  %v1792 = vsel %vm1791, %v1790, %v1788
  %1793 = vrot.lane.b32.xlu0 %v1792, 104
  %v1794 = vpop.permute.xlu0 %1793
  %vm1795 = vcmask 884544
  %s1796 = scalar_lea.vmem %s1, 40
  %1797 = vst.msk [vmem:[%s1796] sm:$0xff] %vm1795, %v1794
  %s1798 = scalar_lea.vmem %s0, 538
  %v1799 = vld [vmem:[%s1798] sm:$0x1]
  %s1800 = scalar_lea.vmem %s0, 569
  %v1801 = vld [vmem:[%s1800] sm:$0x2]
  %vm1802 = vcmask 1041409
  %v1803 = vsel %vm1802, %v1801, %v1799
  %s1804 = scalar_lea.vmem %s0, 600
  %v1805 = vld [vmem:[%s1804] sm:$0x4]
  %vm1806 = vcmask 1042434
  %v1807 = vsel %vm1806, %v1805, %v1803
  %s1808 = scalar_lea.vmem %s0, 631
  %v1809 = vld [vmem:[%s1808] sm:$0x8]
  %vm1810 = vcmask 1043459
  %v1811 = vsel %vm1810, %v1809, %v1807
  %s1812 = scalar_lea.vmem %s0, 662
  %v1813 = vld [vmem:[%s1812] sm:$0x10]
  %vm1814 = vcmask 1044484
  %v1815 = vsel %vm1814, %v1813, %v1811
  %s1816 = scalar_lea.vmem %s0, 693
  %v1817 = vld [vmem:[%s1816] sm:$0x20]
  %vm1818 = vcmask 1045509
  %v1819 = vsel %vm1818, %v1817, %v1815
  %s1820 = scalar_lea.vmem %s0, 724
  %v1821 = vld [vmem:[%s1820] sm:$0x40]
  %vm1822 = vcmask 1046534
  %v1823 = vsel %vm1822, %v1821, %v1819
  %s1824 = scalar_lea.vmem %s0, 755
  %v1825 = vld [vmem:[%s1824] sm:$0x80]
  %vm1826 = vcmask 1047559
  %v1827 = vsel %vm1826, %v1825, %v1823
  %1828 = vrot.lane.b32.xlu0 %v1827, 104
  %v1829 = vpop.permute.xlu0 %1828
  %vm1830 = vcmask 884544
  %s1831 = scalar_lea.vmem %s1, 16
  %1832 = vst.msk [vmem:[%s1831] sm:$0xff] %vm1830, %v1829
  %s1833 = scalar_lea.vmem %s0, 1562
  %v1834 = vld [vmem:[%s1833] sm:$0x1]
  %s1835 = scalar_lea.vmem %s0, 1593
  %v1836 = vld [vmem:[%s1835] sm:$0x2]
  %vm1837 = vcmask 1041409
  %v1838 = vsel %vm1837, %v1836, %v1834
  %s1839 = scalar_lea.vmem %s0, 1624
  %v1840 = vld [vmem:[%s1839] sm:$0x4]
  %vm1841 = vcmask 1042434
  %v1842 = vsel %vm1841, %v1840, %v1838
  %s1843 = scalar_lea.vmem %s0, 1655
  %v1844 = vld [vmem:[%s1843] sm:$0x8]
  %vm1845 = vcmask 1043459
  %v1846 = vsel %vm1845, %v1844, %v1842
  %s1847 = scalar_lea.vmem %s0, 1686
  %v1848 = vld [vmem:[%s1847] sm:$0x10]
  %vm1849 = vcmask 1044484
  %v1850 = vsel %vm1849, %v1848, %v1846
  %s1851 = scalar_lea.vmem %s0, 1717
  %v1852 = vld [vmem:[%s1851] sm:$0x20]
  %vm1853 = vcmask 1045509
  %v1854 = vsel %vm1853, %v1852, %v1850
  %s1855 = scalar_lea.vmem %s0, 1748
  %v1856 = vld [vmem:[%s1855] sm:$0x40]
  %vm1857 = vcmask 1046534
  %v1858 = vsel %vm1857, %v1856, %v1854
  %s1859 = scalar_lea.vmem %s0, 1779
  %v1860 = vld [vmem:[%s1859] sm:$0x80]
  %vm1861 = vcmask 1047559
  %v1862 = vsel %vm1861, %v1860, %v1858
  %1863 = vrot.lane.b32.xlu0 %v1862, 104
  %v1864 = vpop.permute.xlu0 %1863
  %vm1865 = vcmask 884544
  %s1866 = scalar_lea.vmem %s1, 48
  %1867 = vst.msk [vmem:[%s1866] sm:$0xff] %vm1865, %v1864
  %s1868 = scalar_lea.vmem %s0, 794
  %v1869 = vld [vmem:[%s1868] sm:$0x1]
  %s1870 = scalar_lea.vmem %s0, 825
  %v1871 = vld [vmem:[%s1870] sm:$0x2]
  %vm1872 = vcmask 1041409
  %v1873 = vsel %vm1872, %v1871, %v1869
  %s1874 = scalar_lea.vmem %s0, 856
  %v1875 = vld [vmem:[%s1874] sm:$0x4]
  %vm1876 = vcmask 1042434
  %v1877 = vsel %vm1876, %v1875, %v1873
  %s1878 = scalar_lea.vmem %s0, 887
  %v1879 = vld [vmem:[%s1878] sm:$0x8]
  %vm1880 = vcmask 1043459
  %v1881 = vsel %vm1880, %v1879, %v1877
  %s1882 = scalar_lea.vmem %s0, 918
  %v1883 = vld [vmem:[%s1882] sm:$0x10]
  %vm1884 = vcmask 1044484
  %v1885 = vsel %vm1884, %v1883, %v1881
  %s1886 = scalar_lea.vmem %s0, 949
  %v1887 = vld [vmem:[%s1886] sm:$0x20]
  %vm1888 = vcmask 1045509
  %v1889 = vsel %vm1888, %v1887, %v1885
  %s1890 = scalar_lea.vmem %s0, 980
  %v1891 = vld [vmem:[%s1890] sm:$0x40]
  %vm1892 = vcmask 1046534
  %v1893 = vsel %vm1892, %v1891, %v1889
  %s1894 = scalar_lea.vmem %s0, 1011
  %v1895 = vld [vmem:[%s1894] sm:$0x80]
  %vm1896 = vcmask 1047559
  %v1897 = vsel %vm1896, %v1895, %v1893
  %1898 = vrot.lane.b32.xlu0 %v1897, 104
  %v1899 = vpop.permute.xlu0 %1898
  %vm1900 = vcmask 884544
  %s1901 = scalar_lea.vmem %s1, 24
  %1902 = vst.msk [vmem:[%s1901] sm:$0xff] %vm1900, %v1899
  %s1903 = scalar_lea.vmem %s0, 1818
  %v1904 = vld [vmem:[%s1903] sm:$0x1]
  %s1905 = scalar_lea.vmem %s0, 1849
  %v1906 = vld [vmem:[%s1905] sm:$0x2]
  %vm1907 = vcmask 1041409
  %v1908 = vsel %vm1907, %v1906, %v1904
  %s1909 = scalar_lea.vmem %s0, 1880
  %v1910 = vld [vmem:[%s1909] sm:$0x4]
  %vm1911 = vcmask 1042434
  %v1912 = vsel %vm1911, %v1910, %v1908
  %s1913 = scalar_lea.vmem %s0, 1911
  %v1914 = vld [vmem:[%s1913] sm:$0x8]
  %vm1915 = vcmask 1043459
  %v1916 = vsel %vm1915, %v1914, %v1912
  %s1917 = scalar_lea.vmem %s0, 1942
  %v1918 = vld [vmem:[%s1917] sm:$0x10]
  %vm1919 = vcmask 1044484
  %v1920 = vsel %vm1919, %v1918, %v1916
  %s1921 = scalar_lea.vmem %s0, 1973
  %v1922 = vld [vmem:[%s1921] sm:$0x20]
  %vm1923 = vcmask 1045509
  %v1924 = vsel %vm1923, %v1922, %v1920
  %s1925 = scalar_lea.vmem %s0, 2004
  %v1926 = vld [vmem:[%s1925] sm:$0x40]
  %vm1927 = vcmask 1046534
  %v1928 = vsel %vm1927, %v1926, %v1924
  %s1929 = scalar_lea.vmem %s0, 2035
  %v1930 = vld [vmem:[%s1929] sm:$0x80]
  %vm1931 = vcmask 1047559
  %v1932 = vsel %vm1931, %v1930, %v1928
  %1933 = vrot.lane.b32.xlu0 %v1932, 104
  %v1934 = vpop.permute.xlu0 %1933
  %vm1935 = vcmask 884544
  %s1936 = scalar_lea.vmem %s1, 56
  %1937 = vst.msk [vmem:[%s1936] sm:$0xff] %vm1935, %v1934
  %s1938 = scalar_lea.vmem %s0, 25
  %v1939 = vld [vmem:[%s1938] sm:$0x1]
  %s1940 = scalar_lea.vmem %s0, 56
  %v1941 = vld [vmem:[%s1940] sm:$0x2]
  %vm1942 = vcmask 1041409
  %v1943 = vsel %vm1942, %v1941, %v1939
  %s1944 = scalar_lea.vmem %s0, 87
  %v1945 = vld [vmem:[%s1944] sm:$0x4]
  %vm1946 = vcmask 1042434
  %v1947 = vsel %vm1946, %v1945, %v1943
  %s1948 = scalar_lea.vmem %s0, 118
  %v1949 = vld [vmem:[%s1948] sm:$0x8]
  %vm1950 = vcmask 1043459
  %v1951 = vsel %vm1950, %v1949, %v1947
  %s1952 = scalar_lea.vmem %s0, 149
  %v1953 = vld [vmem:[%s1952] sm:$0x10]
  %vm1954 = vcmask 1044484
  %v1955 = vsel %vm1954, %v1953, %v1951
  %s1956 = scalar_lea.vmem %s0, 180
  %v1957 = vld [vmem:[%s1956] sm:$0x20]
  %vm1958 = vcmask 1045509
  %v1959 = vsel %vm1958, %v1957, %v1955
  %s1960 = scalar_lea.vmem %s0, 211
  %v1961 = vld [vmem:[%s1960] sm:$0x40]
  %vm1962 = vcmask 1046534
  %v1963 = vsel %vm1962, %v1961, %v1959
  %s1964 = scalar_lea.vmem %s0, 242
  %v1965 = vld [vmem:[%s1964] sm:$0x80]
  %vm1966 = vcmask 1047559
  %v1967 = vsel %vm1966, %v1965, %v1963
  %1968 = vrot.lane.b32.xlu0 %v1967, 100
  %v1969 = vpop.permute.xlu0 %1968
  %vm1970 = vcmask 851744
  %1971 = vst.msk [vmem:[%s1] sm:$0xff] %vm1970, %v1969
  %s1972 = scalar_lea.vmem %s0, 1049
  %v1973 = vld [vmem:[%s1972] sm:$0x1]
  %s1974 = scalar_lea.vmem %s0, 1080
  %v1975 = vld [vmem:[%s1974] sm:$0x2]
  %vm1976 = vcmask 1041409
  %v1977 = vsel %vm1976, %v1975, %v1973
  %s1978 = scalar_lea.vmem %s0, 1111
  %v1979 = vld [vmem:[%s1978] sm:$0x4]
  %vm1980 = vcmask 1042434
  %v1981 = vsel %vm1980, %v1979, %v1977
  %s1982 = scalar_lea.vmem %s0, 1142
  %v1983 = vld [vmem:[%s1982] sm:$0x8]
  %vm1984 = vcmask 1043459
  %v1985 = vsel %vm1984, %v1983, %v1981
  %s1986 = scalar_lea.vmem %s0, 1173
  %v1987 = vld [vmem:[%s1986] sm:$0x10]
  %vm1988 = vcmask 1044484
  %v1989 = vsel %vm1988, %v1987, %v1985
  %s1990 = scalar_lea.vmem %s0, 1204
  %v1991 = vld [vmem:[%s1990] sm:$0x20]
  %vm1992 = vcmask 1045509
  %v1993 = vsel %vm1992, %v1991, %v1989
  %s1994 = scalar_lea.vmem %s0, 1235
  %v1995 = vld [vmem:[%s1994] sm:$0x40]
  %vm1996 = vcmask 1046534
  %v1997 = vsel %vm1996, %v1995, %v1993
  %s1998 = scalar_lea.vmem %s0, 1266
  %v1999 = vld [vmem:[%s1998] sm:$0x80]
  %vm2000 = vcmask 1047559
  %v2001 = vsel %vm2000, %v1999, %v1997
  %2002 = vrot.lane.b32.xlu0 %v2001, 100
  %v2003 = vpop.permute.xlu0 %2002
  %vm2004 = vcmask 851744
  %s2005 = scalar_lea.vmem %s1, 32
  %2006 = vst.msk [vmem:[%s2005] sm:$0xff] %vm2004, %v2003
  %s2007 = scalar_lea.vmem %s0, 281
  %v2008 = vld [vmem:[%s2007] sm:$0x1]
  %s2009 = scalar_lea.vmem %s0, 312
  %v2010 = vld [vmem:[%s2009] sm:$0x2]
  %vm2011 = vcmask 1041409
  %v2012 = vsel %vm2011, %v2010, %v2008
  %s2013 = scalar_lea.vmem %s0, 343
  %v2014 = vld [vmem:[%s2013] sm:$0x4]
  %vm2015 = vcmask 1042434
  %v2016 = vsel %vm2015, %v2014, %v2012
  %s2017 = scalar_lea.vmem %s0, 374
  %v2018 = vld [vmem:[%s2017] sm:$0x8]
  %vm2019 = vcmask 1043459
  %v2020 = vsel %vm2019, %v2018, %v2016
  %s2021 = scalar_lea.vmem %s0, 405
  %v2022 = vld [vmem:[%s2021] sm:$0x10]
  %vm2023 = vcmask 1044484
  %v2024 = vsel %vm2023, %v2022, %v2020
  %s2025 = scalar_lea.vmem %s0, 436
  %v2026 = vld [vmem:[%s2025] sm:$0x20]
  %vm2027 = vcmask 1045509
  %v2028 = vsel %vm2027, %v2026, %v2024
  %s2029 = scalar_lea.vmem %s0, 467
  %v2030 = vld [vmem:[%s2029] sm:$0x40]
  %vm2031 = vcmask 1046534
  %v2032 = vsel %vm2031, %v2030, %v2028
  %s2033 = scalar_lea.vmem %s0, 498
  %v2034 = vld [vmem:[%s2033] sm:$0x80]
  %vm2035 = vcmask 1047559
  %v2036 = vsel %vm2035, %v2034, %v2032
  %2037 = vrot.lane.b32.xlu0 %v2036, 100
  %v2038 = vpop.permute.xlu0 %2037
  %vm2039 = vcmask 851744
  %s2040 = scalar_lea.vmem %s1, 8
  %2041 = vst.msk [vmem:[%s2040] sm:$0xff] %vm2039, %v2038
  %s2042 = scalar_lea.vmem %s0, 1305
  %v2043 = vld [vmem:[%s2042] sm:$0x1]
  %s2044 = scalar_lea.vmem %s0, 1336
  %v2045 = vld [vmem:[%s2044] sm:$0x2]
  %vm2046 = vcmask 1041409
  %v2047 = vsel %vm2046, %v2045, %v2043
  %s2048 = scalar_lea.vmem %s0, 1367
  %v2049 = vld [vmem:[%s2048] sm:$0x4]
  %vm2050 = vcmask 1042434
  %v2051 = vsel %vm2050, %v2049, %v2047
  %s2052 = scalar_lea.vmem %s0, 1398
  %v2053 = vld [vmem:[%s2052] sm:$0x8]
  %vm2054 = vcmask 1043459
  %v2055 = vsel %vm2054, %v2053, %v2051
  %s2056 = scalar_lea.vmem %s0, 1429
  %v2057 = vld [vmem:[%s2056] sm:$0x10]
  %vm2058 = vcmask 1044484
  %v2059 = vsel %vm2058, %v2057, %v2055
  %s2060 = scalar_lea.vmem %s0, 1460
  %v2061 = vld [vmem:[%s2060] sm:$0x20]
  %vm2062 = vcmask 1045509
  %v2063 = vsel %vm2062, %v2061, %v2059
  %s2064 = scalar_lea.vmem %s0, 1491
  %v2065 = vld [vmem:[%s2064] sm:$0x40]
  %vm2066 = vcmask 1046534
  %v2067 = vsel %vm2066, %v2065, %v2063
  %s2068 = scalar_lea.vmem %s0, 1522
  %v2069 = vld [vmem:[%s2068] sm:$0x80]
  %vm2070 = vcmask 1047559
  %v2071 = vsel %vm2070, %v2069, %v2067
  %2072 = vrot.lane.b32.xlu0 %v2071, 100
  %v2073 = vpop.permute.xlu0 %2072
  %vm2074 = vcmask 851744
  %s2075 = scalar_lea.vmem %s1, 40
  %2076 = vst.msk [vmem:[%s2075] sm:$0xff] %vm2074, %v2073
  %s2077 = scalar_lea.vmem %s0, 537
  %v2078 = vld [vmem:[%s2077] sm:$0x1]
  %s2079 = scalar_lea.vmem %s0, 568
  %v2080 = vld [vmem:[%s2079] sm:$0x2]
  %vm2081 = vcmask 1041409
  %v2082 = vsel %vm2081, %v2080, %v2078
  %s2083 = scalar_lea.vmem %s0, 599
  %v2084 = vld [vmem:[%s2083] sm:$0x4]
  %vm2085 = vcmask 1042434
  %v2086 = vsel %vm2085, %v2084, %v2082
  %s2087 = scalar_lea.vmem %s0, 630
  %v2088 = vld [vmem:[%s2087] sm:$0x8]
  %vm2089 = vcmask 1043459
  %v2090 = vsel %vm2089, %v2088, %v2086
  %s2091 = scalar_lea.vmem %s0, 661
  %v2092 = vld [vmem:[%s2091] sm:$0x10]
  %vm2093 = vcmask 1044484
  %v2094 = vsel %vm2093, %v2092, %v2090
  %s2095 = scalar_lea.vmem %s0, 692
  %v2096 = vld [vmem:[%s2095] sm:$0x20]
  %vm2097 = vcmask 1045509
  %v2098 = vsel %vm2097, %v2096, %v2094
  %s2099 = scalar_lea.vmem %s0, 723
  %v2100 = vld [vmem:[%s2099] sm:$0x40]
  %vm2101 = vcmask 1046534
  %v2102 = vsel %vm2101, %v2100, %v2098
  %s2103 = scalar_lea.vmem %s0, 754
  %v2104 = vld [vmem:[%s2103] sm:$0x80]
  %vm2105 = vcmask 1047559
  %v2106 = vsel %vm2105, %v2104, %v2102
  %2107 = vrot.lane.b32.xlu0 %v2106, 100
  %v2108 = vpop.permute.xlu0 %2107
  %vm2109 = vcmask 851744
  %s2110 = scalar_lea.vmem %s1, 16
  %2111 = vst.msk [vmem:[%s2110] sm:$0xff] %vm2109, %v2108
  %s2112 = scalar_lea.vmem %s0, 1561
  %v2113 = vld [vmem:[%s2112] sm:$0x1]
  %s2114 = scalar_lea.vmem %s0, 1592
  %v2115 = vld [vmem:[%s2114] sm:$0x2]
  %vm2116 = vcmask 1041409
  %v2117 = vsel %vm2116, %v2115, %v2113
  %s2118 = scalar_lea.vmem %s0, 1623
  %v2119 = vld [vmem:[%s2118] sm:$0x4]
  %vm2120 = vcmask 1042434
  %v2121 = vsel %vm2120, %v2119, %v2117
  %s2122 = scalar_lea.vmem %s0, 1654
  %v2123 = vld [vmem:[%s2122] sm:$0x8]
  %vm2124 = vcmask 1043459
  %v2125 = vsel %vm2124, %v2123, %v2121
  %s2126 = scalar_lea.vmem %s0, 1685
  %v2127 = vld [vmem:[%s2126] sm:$0x10]
  %vm2128 = vcmask 1044484
  %v2129 = vsel %vm2128, %v2127, %v2125
  %s2130 = scalar_lea.vmem %s0, 1716
  %v2131 = vld [vmem:[%s2130] sm:$0x20]
  %vm2132 = vcmask 1045509
  %v2133 = vsel %vm2132, %v2131, %v2129
  %s2134 = scalar_lea.vmem %s0, 1747
  %v2135 = vld [vmem:[%s2134] sm:$0x40]
  %vm2136 = vcmask 1046534
  %v2137 = vsel %vm2136, %v2135, %v2133
  %s2138 = scalar_lea.vmem %s0, 1778
  %v2139 = vld [vmem:[%s2138] sm:$0x80]
  %vm2140 = vcmask 1047559
  %v2141 = vsel %vm2140, %v2139, %v2137
  %2142 = vrot.lane.b32.xlu0 %v2141, 100
  %v2143 = vpop.permute.xlu0 %2142
  %vm2144 = vcmask 851744
  %s2145 = scalar_lea.vmem %s1, 48
  %2146 = vst.msk [vmem:[%s2145] sm:$0xff] %vm2144, %v2143
  %s2147 = scalar_lea.vmem %s0, 793
  %v2148 = vld [vmem:[%s2147] sm:$0x1]
  %s2149 = scalar_lea.vmem %s0, 824
  %v2150 = vld [vmem:[%s2149] sm:$0x2]
  %vm2151 = vcmask 1041409
  %v2152 = vsel %vm2151, %v2150, %v2148
  %s2153 = scalar_lea.vmem %s0, 855
  %v2154 = vld [vmem:[%s2153] sm:$0x4]
  %vm2155 = vcmask 1042434
  %v2156 = vsel %vm2155, %v2154, %v2152
  %s2157 = scalar_lea.vmem %s0, 886
  %v2158 = vld [vmem:[%s2157] sm:$0x8]
  %vm2159 = vcmask 1043459
  %v2160 = vsel %vm2159, %v2158, %v2156
  %s2161 = scalar_lea.vmem %s0, 917
  %v2162 = vld [vmem:[%s2161] sm:$0x10]
  %vm2163 = vcmask 1044484
  %v2164 = vsel %vm2163, %v2162, %v2160
  %s2165 = scalar_lea.vmem %s0, 948
  %v2166 = vld [vmem:[%s2165] sm:$0x20]
  %vm2167 = vcmask 1045509
  %v2168 = vsel %vm2167, %v2166, %v2164
  %s2169 = scalar_lea.vmem %s0, 979
  %v2170 = vld [vmem:[%s2169] sm:$0x40]
  %vm2171 = vcmask 1046534
  %v2172 = vsel %vm2171, %v2170, %v2168
  %s2173 = scalar_lea.vmem %s0, 1010
  %v2174 = vld [vmem:[%s2173] sm:$0x80]
  %vm2175 = vcmask 1047559
  %v2176 = vsel %vm2175, %v2174, %v2172
  %2177 = vrot.lane.b32.xlu0 %v2176, 100
  %v2178 = vpop.permute.xlu0 %2177
  %vm2179 = vcmask 851744
  %s2180 = scalar_lea.vmem %s1, 24
  %2181 = vst.msk [vmem:[%s2180] sm:$0xff] %vm2179, %v2178
  %s2182 = scalar_lea.vmem %s0, 1817
  %v2183 = vld [vmem:[%s2182] sm:$0x1]
  %s2184 = scalar_lea.vmem %s0, 1848
  %v2185 = vld [vmem:[%s2184] sm:$0x2]
  %vm2186 = vcmask 1041409
  %v2187 = vsel %vm2186, %v2185, %v2183
  %s2188 = scalar_lea.vmem %s0, 1879
  %v2189 = vld [vmem:[%s2188] sm:$0x4]
  %vm2190 = vcmask 1042434
  %v2191 = vsel %vm2190, %v2189, %v2187
  %s2192 = scalar_lea.vmem %s0, 1910
  %v2193 = vld [vmem:[%s2192] sm:$0x8]
  %vm2194 = vcmask 1043459
  %v2195 = vsel %vm2194, %v2193, %v2191
  %s2196 = scalar_lea.vmem %s0, 1941
  %v2197 = vld [vmem:[%s2196] sm:$0x10]
  %vm2198 = vcmask 1044484
  %v2199 = vsel %vm2198, %v2197, %v2195
  %s2200 = scalar_lea.vmem %s0, 1972
  %v2201 = vld [vmem:[%s2200] sm:$0x20]
  %vm2202 = vcmask 1045509
  %v2203 = vsel %vm2202, %v2201, %v2199
  %s2204 = scalar_lea.vmem %s0, 2003
  %v2205 = vld [vmem:[%s2204] sm:$0x40]
  %vm2206 = vcmask 1046534
  %v2207 = vsel %vm2206, %v2205, %v2203
  %s2208 = scalar_lea.vmem %s0, 2034
  %v2209 = vld [vmem:[%s2208] sm:$0x80]
  %vm2210 = vcmask 1047559
  %v2211 = vsel %vm2210, %v2209, %v2207
  %2212 = vrot.lane.b32.xlu0 %v2211, 100
  %v2213 = vpop.permute.xlu0 %2212
  %vm2214 = vcmask 851744
  %s2215 = scalar_lea.vmem %s1, 56
  %2216 = vst.msk [vmem:[%s2215] sm:$0xff] %vm2214, %v2213
  %s2217 = scalar_lea.vmem %s0, 24
  %v2218 = vld [vmem:[%s2217] sm:$0x1]
  %s2219 = scalar_lea.vmem %s0, 55
  %v2220 = vld [vmem:[%s2219] sm:$0x2]
  %vm2221 = vcmask 1041409
  %v2222 = vsel %vm2221, %v2220, %v2218
  %s2223 = scalar_lea.vmem %s0, 86
  %v2224 = vld [vmem:[%s2223] sm:$0x4]
  %vm2225 = vcmask 1042434
  %v2226 = vsel %vm2225, %v2224, %v2222
  %s2227 = scalar_lea.vmem %s0, 117
  %v2228 = vld [vmem:[%s2227] sm:$0x8]
  %vm2229 = vcmask 1043459
  %v2230 = vsel %vm2229, %v2228, %v2226
  %s2231 = scalar_lea.vmem %s0, 148
  %v2232 = vld [vmem:[%s2231] sm:$0x10]
  %vm2233 = vcmask 1044484
  %v2234 = vsel %vm2233, %v2232, %v2230
  %s2235 = scalar_lea.vmem %s0, 179
  %v2236 = vld [vmem:[%s2235] sm:$0x20]
  %vm2237 = vcmask 1045509
  %v2238 = vsel %vm2237, %v2236, %v2234
  %s2239 = scalar_lea.vmem %s0, 210
  %v2240 = vld [vmem:[%s2239] sm:$0x40]
  %vm2241 = vcmask 1046534
  %v2242 = vsel %vm2241, %v2240, %v2238
  %s2243 = scalar_lea.vmem %s0, 241
  %v2244 = vld [vmem:[%s2243] sm:$0x80]
  %vm2245 = vcmask 1047559
  %v2246 = vsel %vm2245, %v2244, %v2242
  %2247 = vrot.lane.b32.xlu0 %v2246, 96
  %v2248 = vpop.permute.xlu0 %2247
  %vm2249 = vcmask 818944
  %2250 = vst.msk [vmem:[%s1] sm:$0xff] %vm2249, %v2248
  %s2251 = scalar_lea.vmem %s0, 1048
  %v2252 = vld [vmem:[%s2251] sm:$0x1]
  %s2253 = scalar_lea.vmem %s0, 1079
  %v2254 = vld [vmem:[%s2253] sm:$0x2]
  %vm2255 = vcmask 1041409
  %v2256 = vsel %vm2255, %v2254, %v2252
  %s2257 = scalar_lea.vmem %s0, 1110
  %v2258 = vld [vmem:[%s2257] sm:$0x4]
  %vm2259 = vcmask 1042434
  %v2260 = vsel %vm2259, %v2258, %v2256
  %s2261 = scalar_lea.vmem %s0, 1141
  %v2262 = vld [vmem:[%s2261] sm:$0x8]
  %vm2263 = vcmask 1043459
  %v2264 = vsel %vm2263, %v2262, %v2260
  %s2265 = scalar_lea.vmem %s0, 1172
  %v2266 = vld [vmem:[%s2265] sm:$0x10]
  %vm2267 = vcmask 1044484
  %v2268 = vsel %vm2267, %v2266, %v2264
  %s2269 = scalar_lea.vmem %s0, 1203
  %v2270 = vld [vmem:[%s2269] sm:$0x20]
  %vm2271 = vcmask 1045509
  %v2272 = vsel %vm2271, %v2270, %v2268
  %s2273 = scalar_lea.vmem %s0, 1234
  %v2274 = vld [vmem:[%s2273] sm:$0x40]
  %vm2275 = vcmask 1046534
  %v2276 = vsel %vm2275, %v2274, %v2272
  %s2277 = scalar_lea.vmem %s0, 1265
  %v2278 = vld [vmem:[%s2277] sm:$0x80]
  %vm2279 = vcmask 1047559
  %v2280 = vsel %vm2279, %v2278, %v2276
  %2281 = vrot.lane.b32.xlu0 %v2280, 96
  %v2282 = vpop.permute.xlu0 %2281
  %vm2283 = vcmask 818944
  %s2284 = scalar_lea.vmem %s1, 32
  %2285 = vst.msk [vmem:[%s2284] sm:$0xff] %vm2283, %v2282
  %s2286 = scalar_lea.vmem %s0, 280
  %v2287 = vld [vmem:[%s2286] sm:$0x1]
  %s2288 = scalar_lea.vmem %s0, 311
  %v2289 = vld [vmem:[%s2288] sm:$0x2]
  %vm2290 = vcmask 1041409
  %v2291 = vsel %vm2290, %v2289, %v2287
  %s2292 = scalar_lea.vmem %s0, 342
  %v2293 = vld [vmem:[%s2292] sm:$0x4]
  %vm2294 = vcmask 1042434
  %v2295 = vsel %vm2294, %v2293, %v2291
  %s2296 = scalar_lea.vmem %s0, 373
  %v2297 = vld [vmem:[%s2296] sm:$0x8]
  %vm2298 = vcmask 1043459
  %v2299 = vsel %vm2298, %v2297, %v2295
  %s2300 = scalar_lea.vmem %s0, 404
  %v2301 = vld [vmem:[%s2300] sm:$0x10]
  %vm2302 = vcmask 1044484
  %v2303 = vsel %vm2302, %v2301, %v2299
  %s2304 = scalar_lea.vmem %s0, 435
  %v2305 = vld [vmem:[%s2304] sm:$0x20]
  %vm2306 = vcmask 1045509
  %v2307 = vsel %vm2306, %v2305, %v2303
  %s2308 = scalar_lea.vmem %s0, 466
  %v2309 = vld [vmem:[%s2308] sm:$0x40]
  %vm2310 = vcmask 1046534
  %v2311 = vsel %vm2310, %v2309, %v2307
  %s2312 = scalar_lea.vmem %s0, 497
  %v2313 = vld [vmem:[%s2312] sm:$0x80]
  %vm2314 = vcmask 1047559
  %v2315 = vsel %vm2314, %v2313, %v2311
  %2316 = vrot.lane.b32.xlu0 %v2315, 96
  %v2317 = vpop.permute.xlu0 %2316
  %vm2318 = vcmask 818944
  %s2319 = scalar_lea.vmem %s1, 8
  %2320 = vst.msk [vmem:[%s2319] sm:$0xff] %vm2318, %v2317
  %s2321 = scalar_lea.vmem %s0, 1304
  %v2322 = vld [vmem:[%s2321] sm:$0x1]
  %s2323 = scalar_lea.vmem %s0, 1335
  %v2324 = vld [vmem:[%s2323] sm:$0x2]
  %vm2325 = vcmask 1041409
  %v2326 = vsel %vm2325, %v2324, %v2322
  %s2327 = scalar_lea.vmem %s0, 1366
  %v2328 = vld [vmem:[%s2327] sm:$0x4]
  %vm2329 = vcmask 1042434
  %v2330 = vsel %vm2329, %v2328, %v2326
  %s2331 = scalar_lea.vmem %s0, 1397
  %v2332 = vld [vmem:[%s2331] sm:$0x8]
  %vm2333 = vcmask 1043459
  %v2334 = vsel %vm2333, %v2332, %v2330
  %s2335 = scalar_lea.vmem %s0, 1428
  %v2336 = vld [vmem:[%s2335] sm:$0x10]
  %vm2337 = vcmask 1044484
  %v2338 = vsel %vm2337, %v2336, %v2334
  %s2339 = scalar_lea.vmem %s0, 1459
  %v2340 = vld [vmem:[%s2339] sm:$0x20]
  %vm2341 = vcmask 1045509
  %v2342 = vsel %vm2341, %v2340, %v2338
  %s2343 = scalar_lea.vmem %s0, 1490
  %v2344 = vld [vmem:[%s2343] sm:$0x40]
  %vm2345 = vcmask 1046534
  %v2346 = vsel %vm2345, %v2344, %v2342
  %s2347 = scalar_lea.vmem %s0, 1521
  %v2348 = vld [vmem:[%s2347] sm:$0x80]
  %vm2349 = vcmask 1047559
  %v2350 = vsel %vm2349, %v2348, %v2346
  %2351 = vrot.lane.b32.xlu0 %v2350, 96
  %v2352 = vpop.permute.xlu0 %2351
  %vm2353 = vcmask 818944
  %s2354 = scalar_lea.vmem %s1, 40
  %2355 = vst.msk [vmem:[%s2354] sm:$0xff] %vm2353, %v2352
  %s2356 = scalar_lea.vmem %s0, 536
  %v2357 = vld [vmem:[%s2356] sm:$0x1]
  %s2358 = scalar_lea.vmem %s0, 567
  %v2359 = vld [vmem:[%s2358] sm:$0x2]
  %vm2360 = vcmask 1041409
  %v2361 = vsel %vm2360, %v2359, %v2357
  %s2362 = scalar_lea.vmem %s0, 598
  %v2363 = vld [vmem:[%s2362] sm:$0x4]
  %vm2364 = vcmask 1042434
  %v2365 = vsel %vm2364, %v2363, %v2361
  %s2366 = scalar_lea.vmem %s0, 629
  %v2367 = vld [vmem:[%s2366] sm:$0x8]
  %vm2368 = vcmask 1043459
  %v2369 = vsel %vm2368, %v2367, %v2365
  %s2370 = scalar_lea.vmem %s0, 660
  %v2371 = vld [vmem:[%s2370] sm:$0x10]
  %vm2372 = vcmask 1044484
  %v2373 = vsel %vm2372, %v2371, %v2369
  %s2374 = scalar_lea.vmem %s0, 691
  %v2375 = vld [vmem:[%s2374] sm:$0x20]
  %vm2376 = vcmask 1045509
  %v2377 = vsel %vm2376, %v2375, %v2373
  %s2378 = scalar_lea.vmem %s0, 722
  %v2379 = vld [vmem:[%s2378] sm:$0x40]
  %vm2380 = vcmask 1046534
  %v2381 = vsel %vm2380, %v2379, %v2377
  %s2382 = scalar_lea.vmem %s0, 753
  %v2383 = vld [vmem:[%s2382] sm:$0x80]
  %vm2384 = vcmask 1047559
  %v2385 = vsel %vm2384, %v2383, %v2381
  %2386 = vrot.lane.b32.xlu0 %v2385, 96
  %v2387 = vpop.permute.xlu0 %2386
  %vm2388 = vcmask 818944
  %s2389 = scalar_lea.vmem %s1, 16
  %2390 = vst.msk [vmem:[%s2389] sm:$0xff] %vm2388, %v2387
  %s2391 = scalar_lea.vmem %s0, 1560
  %v2392 = vld [vmem:[%s2391] sm:$0x1]
  %s2393 = scalar_lea.vmem %s0, 1591
  %v2394 = vld [vmem:[%s2393] sm:$0x2]
  %vm2395 = vcmask 1041409
  %v2396 = vsel %vm2395, %v2394, %v2392
  %s2397 = scalar_lea.vmem %s0, 1622
  %v2398 = vld [vmem:[%s2397] sm:$0x4]
  %vm2399 = vcmask 1042434
  %v2400 = vsel %vm2399, %v2398, %v2396
  %s2401 = scalar_lea.vmem %s0, 1653
  %v2402 = vld [vmem:[%s2401] sm:$0x8]
  %vm2403 = vcmask 1043459
  %v2404 = vsel %vm2403, %v2402, %v2400
  %s2405 = scalar_lea.vmem %s0, 1684
  %v2406 = vld [vmem:[%s2405] sm:$0x10]
  %vm2407 = vcmask 1044484
  %v2408 = vsel %vm2407, %v2406, %v2404
  %s2409 = scalar_lea.vmem %s0, 1715
  %v2410 = vld [vmem:[%s2409] sm:$0x20]
  %vm2411 = vcmask 1045509
  %v2412 = vsel %vm2411, %v2410, %v2408
  %s2413 = scalar_lea.vmem %s0, 1746
  %v2414 = vld [vmem:[%s2413] sm:$0x40]
  %vm2415 = vcmask 1046534
  %v2416 = vsel %vm2415, %v2414, %v2412
  %s2417 = scalar_lea.vmem %s0, 1777
  %v2418 = vld [vmem:[%s2417] sm:$0x80]
  %vm2419 = vcmask 1047559
  %v2420 = vsel %vm2419, %v2418, %v2416
  %2421 = vrot.lane.b32.xlu0 %v2420, 96
  %v2422 = vpop.permute.xlu0 %2421
  %vm2423 = vcmask 818944
  %s2424 = scalar_lea.vmem %s1, 48
  %2425 = vst.msk [vmem:[%s2424] sm:$0xff] %vm2423, %v2422
  %s2426 = scalar_lea.vmem %s0, 792
  %v2427 = vld [vmem:[%s2426] sm:$0x1]
  %s2428 = scalar_lea.vmem %s0, 823
  %v2429 = vld [vmem:[%s2428] sm:$0x2]
  %vm2430 = vcmask 1041409
  %v2431 = vsel %vm2430, %v2429, %v2427
  %s2432 = scalar_lea.vmem %s0, 854
  %v2433 = vld [vmem:[%s2432] sm:$0x4]
  %vm2434 = vcmask 1042434
  %v2435 = vsel %vm2434, %v2433, %v2431
  %s2436 = scalar_lea.vmem %s0, 885
  %v2437 = vld [vmem:[%s2436] sm:$0x8]
  %vm2438 = vcmask 1043459
  %v2439 = vsel %vm2438, %v2437, %v2435
  %s2440 = scalar_lea.vmem %s0, 916
  %v2441 = vld [vmem:[%s2440] sm:$0x10]
  %vm2442 = vcmask 1044484
  %v2443 = vsel %vm2442, %v2441, %v2439
  %s2444 = scalar_lea.vmem %s0, 947
  %v2445 = vld [vmem:[%s2444] sm:$0x20]
  %vm2446 = vcmask 1045509
  %v2447 = vsel %vm2446, %v2445, %v2443
  %s2448 = scalar_lea.vmem %s0, 978
  %v2449 = vld [vmem:[%s2448] sm:$0x40]
  %vm2450 = vcmask 1046534
  %v2451 = vsel %vm2450, %v2449, %v2447
  %s2452 = scalar_lea.vmem %s0, 1009
  %v2453 = vld [vmem:[%s2452] sm:$0x80]
  %vm2454 = vcmask 1047559
  %v2455 = vsel %vm2454, %v2453, %v2451
  %2456 = vrot.lane.b32.xlu0 %v2455, 96
  %v2457 = vpop.permute.xlu0 %2456
  %vm2458 = vcmask 818944
  %s2459 = scalar_lea.vmem %s1, 24
  %2460 = vst.msk [vmem:[%s2459] sm:$0xff] %vm2458, %v2457
  %s2461 = scalar_lea.vmem %s0, 1816
  %v2462 = vld [vmem:[%s2461] sm:$0x1]
  %s2463 = scalar_lea.vmem %s0, 1847
  %v2464 = vld [vmem:[%s2463] sm:$0x2]
  %vm2465 = vcmask 1041409
  %v2466 = vsel %vm2465, %v2464, %v2462
  %s2467 = scalar_lea.vmem %s0, 1878
  %v2468 = vld [vmem:[%s2467] sm:$0x4]
  %vm2469 = vcmask 1042434
  %v2470 = vsel %vm2469, %v2468, %v2466
  %s2471 = scalar_lea.vmem %s0, 1909
  %v2472 = vld [vmem:[%s2471] sm:$0x8]
  %vm2473 = vcmask 1043459
  %v2474 = vsel %vm2473, %v2472, %v2470
  %s2475 = scalar_lea.vmem %s0, 1940
  %v2476 = vld [vmem:[%s2475] sm:$0x10]
  %vm2477 = vcmask 1044484
  %v2478 = vsel %vm2477, %v2476, %v2474
  %s2479 = scalar_lea.vmem %s0, 1971
  %v2480 = vld [vmem:[%s2479] sm:$0x20]
  %vm2481 = vcmask 1045509
  %v2482 = vsel %vm2481, %v2480, %v2478
  %s2483 = scalar_lea.vmem %s0, 2002
  %v2484 = vld [vmem:[%s2483] sm:$0x40]
  %vm2485 = vcmask 1046534
  %v2486 = vsel %vm2485, %v2484, %v2482
  %s2487 = scalar_lea.vmem %s0, 2033
  %v2488 = vld [vmem:[%s2487] sm:$0x80]
  %vm2489 = vcmask 1047559
  %v2490 = vsel %vm2489, %v2488, %v2486
  %2491 = vrot.lane.b32.xlu0 %v2490, 96
  %v2492 = vpop.permute.xlu0 %2491
  %vm2493 = vcmask 818944
  %s2494 = scalar_lea.vmem %s1, 56
  %2495 = vst.msk [vmem:[%s2494] sm:$0xff] %vm2493, %v2492
  %s2496 = scalar_lea.vmem %s0, 23
  %v2497 = vld [vmem:[%s2496] sm:$0x1]
  %s2498 = scalar_lea.vmem %s0, 54
  %v2499 = vld [vmem:[%s2498] sm:$0x2]
  %vm2500 = vcmask 1041409
  %v2501 = vsel %vm2500, %v2499, %v2497
  %s2502 = scalar_lea.vmem %s0, 85
  %v2503 = vld [vmem:[%s2502] sm:$0x4]
  %vm2504 = vcmask 1042434
  %v2505 = vsel %vm2504, %v2503, %v2501
  %s2506 = scalar_lea.vmem %s0, 116
  %v2507 = vld [vmem:[%s2506] sm:$0x8]
  %vm2508 = vcmask 1043459
  %v2509 = vsel %vm2508, %v2507, %v2505
  %s2510 = scalar_lea.vmem %s0, 147
  %v2511 = vld [vmem:[%s2510] sm:$0x10]
  %vm2512 = vcmask 1044484
  %v2513 = vsel %vm2512, %v2511, %v2509
  %s2514 = scalar_lea.vmem %s0, 178
  %v2515 = vld [vmem:[%s2514] sm:$0x20]
  %vm2516 = vcmask 1045509
  %v2517 = vsel %vm2516, %v2515, %v2513
  %s2518 = scalar_lea.vmem %s0, 209
  %v2519 = vld [vmem:[%s2518] sm:$0x40]
  %vm2520 = vcmask 1046534
  %v2521 = vsel %vm2520, %v2519, %v2517
  %s2522 = scalar_lea.vmem %s0, 240
  %v2523 = vld [vmem:[%s2522] sm:$0x80]
  %vm2524 = vcmask 1047559
  %v2525 = vsel %vm2524, %v2523, %v2521
  %2526 = vrot.lane.b32.xlu0 %v2525, 92
  %v2527 = vpop.permute.xlu0 %2526
  %vm2528 = vcmask 786144
  %2529 = vst.msk [vmem:[%s1] sm:$0xff] %vm2528, %v2527
  %s2530 = scalar_lea.vmem %s0, 1047
  %v2531 = vld [vmem:[%s2530] sm:$0x1]
  %s2532 = scalar_lea.vmem %s0, 1078
  %v2533 = vld [vmem:[%s2532] sm:$0x2]
  %vm2534 = vcmask 1041409
  %v2535 = vsel %vm2534, %v2533, %v2531
  %s2536 = scalar_lea.vmem %s0, 1109
  %v2537 = vld [vmem:[%s2536] sm:$0x4]
  %vm2538 = vcmask 1042434
  %v2539 = vsel %vm2538, %v2537, %v2535
  %s2540 = scalar_lea.vmem %s0, 1140
  %v2541 = vld [vmem:[%s2540] sm:$0x8]
  %vm2542 = vcmask 1043459
  %v2543 = vsel %vm2542, %v2541, %v2539
  %s2544 = scalar_lea.vmem %s0, 1171
  %v2545 = vld [vmem:[%s2544] sm:$0x10]
  %vm2546 = vcmask 1044484
  %v2547 = vsel %vm2546, %v2545, %v2543
  %s2548 = scalar_lea.vmem %s0, 1202
  %v2549 = vld [vmem:[%s2548] sm:$0x20]
  %vm2550 = vcmask 1045509
  %v2551 = vsel %vm2550, %v2549, %v2547
  %s2552 = scalar_lea.vmem %s0, 1233
  %v2553 = vld [vmem:[%s2552] sm:$0x40]
  %vm2554 = vcmask 1046534
  %v2555 = vsel %vm2554, %v2553, %v2551
  %s2556 = scalar_lea.vmem %s0, 1264
  %v2557 = vld [vmem:[%s2556] sm:$0x80]
  %vm2558 = vcmask 1047559
  %v2559 = vsel %vm2558, %v2557, %v2555
  %2560 = vrot.lane.b32.xlu0 %v2559, 92
  %v2561 = vpop.permute.xlu0 %2560
  %vm2562 = vcmask 786144
  %s2563 = scalar_lea.vmem %s1, 32
  %2564 = vst.msk [vmem:[%s2563] sm:$0xff] %vm2562, %v2561
  %s2565 = scalar_lea.vmem %s0, 279
  %v2566 = vld [vmem:[%s2565] sm:$0x1]
  %s2567 = scalar_lea.vmem %s0, 310
  %v2568 = vld [vmem:[%s2567] sm:$0x2]
  %vm2569 = vcmask 1041409
  %v2570 = vsel %vm2569, %v2568, %v2566
  %s2571 = scalar_lea.vmem %s0, 341
  %v2572 = vld [vmem:[%s2571] sm:$0x4]
  %vm2573 = vcmask 1042434
  %v2574 = vsel %vm2573, %v2572, %v2570
  %s2575 = scalar_lea.vmem %s0, 372
  %v2576 = vld [vmem:[%s2575] sm:$0x8]
  %vm2577 = vcmask 1043459
  %v2578 = vsel %vm2577, %v2576, %v2574
  %s2579 = scalar_lea.vmem %s0, 403
  %v2580 = vld [vmem:[%s2579] sm:$0x10]
  %vm2581 = vcmask 1044484
  %v2582 = vsel %vm2581, %v2580, %v2578
  %s2583 = scalar_lea.vmem %s0, 434
  %v2584 = vld [vmem:[%s2583] sm:$0x20]
  %vm2585 = vcmask 1045509
  %v2586 = vsel %vm2585, %v2584, %v2582
  %s2587 = scalar_lea.vmem %s0, 465
  %v2588 = vld [vmem:[%s2587] sm:$0x40]
  %vm2589 = vcmask 1046534
  %v2590 = vsel %vm2589, %v2588, %v2586
  %s2591 = scalar_lea.vmem %s0, 496
  %v2592 = vld [vmem:[%s2591] sm:$0x80]
  %vm2593 = vcmask 1047559
  %v2594 = vsel %vm2593, %v2592, %v2590
  %2595 = vrot.lane.b32.xlu0 %v2594, 92
  %v2596 = vpop.permute.xlu0 %2595
  %vm2597 = vcmask 786144
  %s2598 = scalar_lea.vmem %s1, 8
  %2599 = vst.msk [vmem:[%s2598] sm:$0xff] %vm2597, %v2596
  %s2600 = scalar_lea.vmem %s0, 1303
  %v2601 = vld [vmem:[%s2600] sm:$0x1]
  %s2602 = scalar_lea.vmem %s0, 1334
  %v2603 = vld [vmem:[%s2602] sm:$0x2]
  %vm2604 = vcmask 1041409
  %v2605 = vsel %vm2604, %v2603, %v2601
  %s2606 = scalar_lea.vmem %s0, 1365
  %v2607 = vld [vmem:[%s2606] sm:$0x4]
  %vm2608 = vcmask 1042434
  %v2609 = vsel %vm2608, %v2607, %v2605
  %s2610 = scalar_lea.vmem %s0, 1396
  %v2611 = vld [vmem:[%s2610] sm:$0x8]
  %vm2612 = vcmask 1043459
  %v2613 = vsel %vm2612, %v2611, %v2609
  %s2614 = scalar_lea.vmem %s0, 1427
  %v2615 = vld [vmem:[%s2614] sm:$0x10]
  %vm2616 = vcmask 1044484
  %v2617 = vsel %vm2616, %v2615, %v2613
  %s2618 = scalar_lea.vmem %s0, 1458
  %v2619 = vld [vmem:[%s2618] sm:$0x20]
  %vm2620 = vcmask 1045509
  %v2621 = vsel %vm2620, %v2619, %v2617
  %s2622 = scalar_lea.vmem %s0, 1489
  %v2623 = vld [vmem:[%s2622] sm:$0x40]
  %vm2624 = vcmask 1046534
  %v2625 = vsel %vm2624, %v2623, %v2621
  %s2626 = scalar_lea.vmem %s0, 1520
  %v2627 = vld [vmem:[%s2626] sm:$0x80]
  %vm2628 = vcmask 1047559
  %v2629 = vsel %vm2628, %v2627, %v2625
  %2630 = vrot.lane.b32.xlu0 %v2629, 92
  %v2631 = vpop.permute.xlu0 %2630
  %vm2632 = vcmask 786144
  %s2633 = scalar_lea.vmem %s1, 40
  %2634 = vst.msk [vmem:[%s2633] sm:$0xff] %vm2632, %v2631
  %s2635 = scalar_lea.vmem %s0, 535
  %v2636 = vld [vmem:[%s2635] sm:$0x1]
  %s2637 = scalar_lea.vmem %s0, 566
  %v2638 = vld [vmem:[%s2637] sm:$0x2]
  %vm2639 = vcmask 1041409
  %v2640 = vsel %vm2639, %v2638, %v2636
  %s2641 = scalar_lea.vmem %s0, 597
  %v2642 = vld [vmem:[%s2641] sm:$0x4]
  %vm2643 = vcmask 1042434
  %v2644 = vsel %vm2643, %v2642, %v2640
  %s2645 = scalar_lea.vmem %s0, 628
  %v2646 = vld [vmem:[%s2645] sm:$0x8]
  %vm2647 = vcmask 1043459
  %v2648 = vsel %vm2647, %v2646, %v2644
  %s2649 = scalar_lea.vmem %s0, 659
  %v2650 = vld [vmem:[%s2649] sm:$0x10]
  %vm2651 = vcmask 1044484
  %v2652 = vsel %vm2651, %v2650, %v2648
  %s2653 = scalar_lea.vmem %s0, 690
  %v2654 = vld [vmem:[%s2653] sm:$0x20]
  %vm2655 = vcmask 1045509
  %v2656 = vsel %vm2655, %v2654, %v2652
  %s2657 = scalar_lea.vmem %s0, 721
  %v2658 = vld [vmem:[%s2657] sm:$0x40]
  %vm2659 = vcmask 1046534
  %v2660 = vsel %vm2659, %v2658, %v2656
  %s2661 = scalar_lea.vmem %s0, 752
  %v2662 = vld [vmem:[%s2661] sm:$0x80]
  %vm2663 = vcmask 1047559
  %v2664 = vsel %vm2663, %v2662, %v2660
  %2665 = vrot.lane.b32.xlu0 %v2664, 92
  %v2666 = vpop.permute.xlu0 %2665
  %vm2667 = vcmask 786144
  %s2668 = scalar_lea.vmem %s1, 16
  %2669 = vst.msk [vmem:[%s2668] sm:$0xff] %vm2667, %v2666
  %s2670 = scalar_lea.vmem %s0, 1559
  %v2671 = vld [vmem:[%s2670] sm:$0x1]
  %s2672 = scalar_lea.vmem %s0, 1590
  %v2673 = vld [vmem:[%s2672] sm:$0x2]
  %vm2674 = vcmask 1041409
  %v2675 = vsel %vm2674, %v2673, %v2671
  %s2676 = scalar_lea.vmem %s0, 1621
  %v2677 = vld [vmem:[%s2676] sm:$0x4]
  %vm2678 = vcmask 1042434
  %v2679 = vsel %vm2678, %v2677, %v2675
  %s2680 = scalar_lea.vmem %s0, 1652
  %v2681 = vld [vmem:[%s2680] sm:$0x8]
  %vm2682 = vcmask 1043459
  %v2683 = vsel %vm2682, %v2681, %v2679
  %s2684 = scalar_lea.vmem %s0, 1683
  %v2685 = vld [vmem:[%s2684] sm:$0x10]
  %vm2686 = vcmask 1044484
  %v2687 = vsel %vm2686, %v2685, %v2683
  %s2688 = scalar_lea.vmem %s0, 1714
  %v2689 = vld [vmem:[%s2688] sm:$0x20]
  %vm2690 = vcmask 1045509
  %v2691 = vsel %vm2690, %v2689, %v2687
  %s2692 = scalar_lea.vmem %s0, 1745
  %v2693 = vld [vmem:[%s2692] sm:$0x40]
  %vm2694 = vcmask 1046534
  %v2695 = vsel %vm2694, %v2693, %v2691
  %s2696 = scalar_lea.vmem %s0, 1776
  %v2697 = vld [vmem:[%s2696] sm:$0x80]
  %vm2698 = vcmask 1047559
  %v2699 = vsel %vm2698, %v2697, %v2695
  %2700 = vrot.lane.b32.xlu0 %v2699, 92
  %v2701 = vpop.permute.xlu0 %2700
  %vm2702 = vcmask 786144
  %s2703 = scalar_lea.vmem %s1, 48
  %2704 = vst.msk [vmem:[%s2703] sm:$0xff] %vm2702, %v2701
  %s2705 = scalar_lea.vmem %s0, 791
  %v2706 = vld [vmem:[%s2705] sm:$0x1]
  %s2707 = scalar_lea.vmem %s0, 822
  %v2708 = vld [vmem:[%s2707] sm:$0x2]
  %vm2709 = vcmask 1041409
  %v2710 = vsel %vm2709, %v2708, %v2706
  %s2711 = scalar_lea.vmem %s0, 853
  %v2712 = vld [vmem:[%s2711] sm:$0x4]
  %vm2713 = vcmask 1042434
  %v2714 = vsel %vm2713, %v2712, %v2710
  %s2715 = scalar_lea.vmem %s0, 884
  %v2716 = vld [vmem:[%s2715] sm:$0x8]
  %vm2717 = vcmask 1043459
  %v2718 = vsel %vm2717, %v2716, %v2714
  %s2719 = scalar_lea.vmem %s0, 915
  %v2720 = vld [vmem:[%s2719] sm:$0x10]
  %vm2721 = vcmask 1044484
  %v2722 = vsel %vm2721, %v2720, %v2718
  %s2723 = scalar_lea.vmem %s0, 946
  %v2724 = vld [vmem:[%s2723] sm:$0x20]
  %vm2725 = vcmask 1045509
  %v2726 = vsel %vm2725, %v2724, %v2722
  %s2727 = scalar_lea.vmem %s0, 977
  %v2728 = vld [vmem:[%s2727] sm:$0x40]
  %vm2729 = vcmask 1046534
  %v2730 = vsel %vm2729, %v2728, %v2726
  %s2731 = scalar_lea.vmem %s0, 1008
  %v2732 = vld [vmem:[%s2731] sm:$0x80]
  %vm2733 = vcmask 1047559
  %v2734 = vsel %vm2733, %v2732, %v2730
  %2735 = vrot.lane.b32.xlu0 %v2734, 92
  %v2736 = vpop.permute.xlu0 %2735
  %vm2737 = vcmask 786144
  %s2738 = scalar_lea.vmem %s1, 24
  %2739 = vst.msk [vmem:[%s2738] sm:$0xff] %vm2737, %v2736
  %s2740 = scalar_lea.vmem %s0, 1815
  %v2741 = vld [vmem:[%s2740] sm:$0x1]
  %s2742 = scalar_lea.vmem %s0, 1846
  %v2743 = vld [vmem:[%s2742] sm:$0x2]
  %vm2744 = vcmask 1041409
  %v2745 = vsel %vm2744, %v2743, %v2741
  %s2746 = scalar_lea.vmem %s0, 1877
  %v2747 = vld [vmem:[%s2746] sm:$0x4]
  %vm2748 = vcmask 1042434
  %v2749 = vsel %vm2748, %v2747, %v2745
  %s2750 = scalar_lea.vmem %s0, 1908
  %v2751 = vld [vmem:[%s2750] sm:$0x8]
  %vm2752 = vcmask 1043459
  %v2753 = vsel %vm2752, %v2751, %v2749
  %s2754 = scalar_lea.vmem %s0, 1939
  %v2755 = vld [vmem:[%s2754] sm:$0x10]
  %vm2756 = vcmask 1044484
  %v2757 = vsel %vm2756, %v2755, %v2753
  %s2758 = scalar_lea.vmem %s0, 1970
  %v2759 = vld [vmem:[%s2758] sm:$0x20]
  %vm2760 = vcmask 1045509
  %v2761 = vsel %vm2760, %v2759, %v2757
  %s2762 = scalar_lea.vmem %s0, 2001
  %v2763 = vld [vmem:[%s2762] sm:$0x40]
  %vm2764 = vcmask 1046534
  %v2765 = vsel %vm2764, %v2763, %v2761
  %s2766 = scalar_lea.vmem %s0, 2032
  %v2767 = vld [vmem:[%s2766] sm:$0x80]
  %vm2768 = vcmask 1047559
  %v2769 = vsel %vm2768, %v2767, %v2765
  %2770 = vrot.lane.b32.xlu0 %v2769, 92
  %v2771 = vpop.permute.xlu0 %2770
  %vm2772 = vcmask 786144
  %s2773 = scalar_lea.vmem %s1, 56
  %2774 = vst.msk [vmem:[%s2773] sm:$0xff] %vm2772, %v2771
  %s2775 = scalar_lea.vmem %s0, 22
  %v2776 = vld [vmem:[%s2775] sm:$0x1]
  %s2777 = scalar_lea.vmem %s0, 53
  %v2778 = vld [vmem:[%s2777] sm:$0x2]
  %vm2779 = vcmask 1041409
  %v2780 = vsel %vm2779, %v2778, %v2776
  %s2781 = scalar_lea.vmem %s0, 84
  %v2782 = vld [vmem:[%s2781] sm:$0x4]
  %vm2783 = vcmask 1042434
  %v2784 = vsel %vm2783, %v2782, %v2780
  %s2785 = scalar_lea.vmem %s0, 115
  %v2786 = vld [vmem:[%s2785] sm:$0x8]
  %vm2787 = vcmask 1043459
  %v2788 = vsel %vm2787, %v2786, %v2784
  %s2789 = scalar_lea.vmem %s0, 146
  %v2790 = vld [vmem:[%s2789] sm:$0x10]
  %vm2791 = vcmask 1044484
  %v2792 = vsel %vm2791, %v2790, %v2788
  %s2793 = scalar_lea.vmem %s0, 177
  %v2794 = vld [vmem:[%s2793] sm:$0x20]
  %vm2795 = vcmask 1045509
  %v2796 = vsel %vm2795, %v2794, %v2792
  %s2797 = scalar_lea.vmem %s0, 208
  %v2798 = vld [vmem:[%s2797] sm:$0x40]
  %vm2799 = vcmask 1046534
  %v2800 = vsel %vm2799, %v2798, %v2796
  %s2801 = scalar_lea.vmem %s0, 239
  %v2802 = vld [vmem:[%s2801] sm:$0x80]
  %vm2803 = vcmask 1047559
  %v2804 = vsel %vm2803, %v2802, %v2800
  %2805 = vrot.lane.b32.xlu0 %v2804, 88
  %v2806 = vpop.permute.xlu0 %2805
  %vm2807 = vcmask 753344
  %2808 = vst.msk [vmem:[%s1] sm:$0xff] %vm2807, %v2806
  %s2809 = scalar_lea.vmem %s0, 1046
  %v2810 = vld [vmem:[%s2809] sm:$0x1]
  %s2811 = scalar_lea.vmem %s0, 1077
  %v2812 = vld [vmem:[%s2811] sm:$0x2]
  %vm2813 = vcmask 1041409
  %v2814 = vsel %vm2813, %v2812, %v2810
  %s2815 = scalar_lea.vmem %s0, 1108
  %v2816 = vld [vmem:[%s2815] sm:$0x4]
  %vm2817 = vcmask 1042434
  %v2818 = vsel %vm2817, %v2816, %v2814
  %s2819 = scalar_lea.vmem %s0, 1139
  %v2820 = vld [vmem:[%s2819] sm:$0x8]
  %vm2821 = vcmask 1043459
  %v2822 = vsel %vm2821, %v2820, %v2818
  %s2823 = scalar_lea.vmem %s0, 1170
  %v2824 = vld [vmem:[%s2823] sm:$0x10]
  %vm2825 = vcmask 1044484
  %v2826 = vsel %vm2825, %v2824, %v2822
  %s2827 = scalar_lea.vmem %s0, 1201
  %v2828 = vld [vmem:[%s2827] sm:$0x20]
  %vm2829 = vcmask 1045509
  %v2830 = vsel %vm2829, %v2828, %v2826
  %s2831 = scalar_lea.vmem %s0, 1232
  %v2832 = vld [vmem:[%s2831] sm:$0x40]
  %vm2833 = vcmask 1046534
  %v2834 = vsel %vm2833, %v2832, %v2830
  %s2835 = scalar_lea.vmem %s0, 1263
  %v2836 = vld [vmem:[%s2835] sm:$0x80]
  %vm2837 = vcmask 1047559
  %v2838 = vsel %vm2837, %v2836, %v2834
  %2839 = vrot.lane.b32.xlu0 %v2838, 88
  %v2840 = vpop.permute.xlu0 %2839
  %vm2841 = vcmask 753344
  %s2842 = scalar_lea.vmem %s1, 32
  %2843 = vst.msk [vmem:[%s2842] sm:$0xff] %vm2841, %v2840
  %s2844 = scalar_lea.vmem %s0, 278
  %v2845 = vld [vmem:[%s2844] sm:$0x1]
  %s2846 = scalar_lea.vmem %s0, 309
  %v2847 = vld [vmem:[%s2846] sm:$0x2]
  %vm2848 = vcmask 1041409
  %v2849 = vsel %vm2848, %v2847, %v2845
  %s2850 = scalar_lea.vmem %s0, 340
  %v2851 = vld [vmem:[%s2850] sm:$0x4]
  %vm2852 = vcmask 1042434
  %v2853 = vsel %vm2852, %v2851, %v2849
  %s2854 = scalar_lea.vmem %s0, 371
  %v2855 = vld [vmem:[%s2854] sm:$0x8]
  %vm2856 = vcmask 1043459
  %v2857 = vsel %vm2856, %v2855, %v2853
  %s2858 = scalar_lea.vmem %s0, 402
  %v2859 = vld [vmem:[%s2858] sm:$0x10]
  %vm2860 = vcmask 1044484
  %v2861 = vsel %vm2860, %v2859, %v2857
  %s2862 = scalar_lea.vmem %s0, 433
  %v2863 = vld [vmem:[%s2862] sm:$0x20]
  %vm2864 = vcmask 1045509
  %v2865 = vsel %vm2864, %v2863, %v2861
  %s2866 = scalar_lea.vmem %s0, 464
  %v2867 = vld [vmem:[%s2866] sm:$0x40]
  %vm2868 = vcmask 1046534
  %v2869 = vsel %vm2868, %v2867, %v2865
  %s2870 = scalar_lea.vmem %s0, 495
  %v2871 = vld [vmem:[%s2870] sm:$0x80]
  %vm2872 = vcmask 1047559
  %v2873 = vsel %vm2872, %v2871, %v2869
  %2874 = vrot.lane.b32.xlu0 %v2873, 88
  %v2875 = vpop.permute.xlu0 %2874
  %vm2876 = vcmask 753344
  %s2877 = scalar_lea.vmem %s1, 8
  %2878 = vst.msk [vmem:[%s2877] sm:$0xff] %vm2876, %v2875
  %s2879 = scalar_lea.vmem %s0, 1302
  %v2880 = vld [vmem:[%s2879] sm:$0x1]
  %s2881 = scalar_lea.vmem %s0, 1333
  %v2882 = vld [vmem:[%s2881] sm:$0x2]
  %vm2883 = vcmask 1041409
  %v2884 = vsel %vm2883, %v2882, %v2880
  %s2885 = scalar_lea.vmem %s0, 1364
  %v2886 = vld [vmem:[%s2885] sm:$0x4]
  %vm2887 = vcmask 1042434
  %v2888 = vsel %vm2887, %v2886, %v2884
  %s2889 = scalar_lea.vmem %s0, 1395
  %v2890 = vld [vmem:[%s2889] sm:$0x8]
  %vm2891 = vcmask 1043459
  %v2892 = vsel %vm2891, %v2890, %v2888
  %s2893 = scalar_lea.vmem %s0, 1426
  %v2894 = vld [vmem:[%s2893] sm:$0x10]
  %vm2895 = vcmask 1044484
  %v2896 = vsel %vm2895, %v2894, %v2892
  %s2897 = scalar_lea.vmem %s0, 1457
  %v2898 = vld [vmem:[%s2897] sm:$0x20]
  %vm2899 = vcmask 1045509
  %v2900 = vsel %vm2899, %v2898, %v2896
  %s2901 = scalar_lea.vmem %s0, 1488
  %v2902 = vld [vmem:[%s2901] sm:$0x40]
  %vm2903 = vcmask 1046534
  %v2904 = vsel %vm2903, %v2902, %v2900
  %s2905 = scalar_lea.vmem %s0, 1519
  %v2906 = vld [vmem:[%s2905] sm:$0x80]
  %vm2907 = vcmask 1047559
  %v2908 = vsel %vm2907, %v2906, %v2904
  %2909 = vrot.lane.b32.xlu0 %v2908, 88
  %v2910 = vpop.permute.xlu0 %2909
  %vm2911 = vcmask 753344
  %s2912 = scalar_lea.vmem %s1, 40
  %2913 = vst.msk [vmem:[%s2912] sm:$0xff] %vm2911, %v2910
  %s2914 = scalar_lea.vmem %s0, 534
  %v2915 = vld [vmem:[%s2914] sm:$0x1]
  %s2916 = scalar_lea.vmem %s0, 565
  %v2917 = vld [vmem:[%s2916] sm:$0x2]
  %vm2918 = vcmask 1041409
  %v2919 = vsel %vm2918, %v2917, %v2915
  %s2920 = scalar_lea.vmem %s0, 596
  %v2921 = vld [vmem:[%s2920] sm:$0x4]
  %vm2922 = vcmask 1042434
  %v2923 = vsel %vm2922, %v2921, %v2919
  %s2924 = scalar_lea.vmem %s0, 627
  %v2925 = vld [vmem:[%s2924] sm:$0x8]
  %vm2926 = vcmask 1043459
  %v2927 = vsel %vm2926, %v2925, %v2923
  %s2928 = scalar_lea.vmem %s0, 658
  %v2929 = vld [vmem:[%s2928] sm:$0x10]
  %vm2930 = vcmask 1044484
  %v2931 = vsel %vm2930, %v2929, %v2927
  %s2932 = scalar_lea.vmem %s0, 689
  %v2933 = vld [vmem:[%s2932] sm:$0x20]
  %vm2934 = vcmask 1045509
  %v2935 = vsel %vm2934, %v2933, %v2931
  %s2936 = scalar_lea.vmem %s0, 720
  %v2937 = vld [vmem:[%s2936] sm:$0x40]
  %vm2938 = vcmask 1046534
  %v2939 = vsel %vm2938, %v2937, %v2935
  %s2940 = scalar_lea.vmem %s0, 751
  %v2941 = vld [vmem:[%s2940] sm:$0x80]
  %vm2942 = vcmask 1047559
  %v2943 = vsel %vm2942, %v2941, %v2939
  %2944 = vrot.lane.b32.xlu0 %v2943, 88
  %v2945 = vpop.permute.xlu0 %2944
  %vm2946 = vcmask 753344
  %s2947 = scalar_lea.vmem %s1, 16
  %2948 = vst.msk [vmem:[%s2947] sm:$0xff] %vm2946, %v2945
  %s2949 = scalar_lea.vmem %s0, 1558
  %v2950 = vld [vmem:[%s2949] sm:$0x1]
  %s2951 = scalar_lea.vmem %s0, 1589
  %v2952 = vld [vmem:[%s2951] sm:$0x2]
  %vm2953 = vcmask 1041409
  %v2954 = vsel %vm2953, %v2952, %v2950
  %s2955 = scalar_lea.vmem %s0, 1620
  %v2956 = vld [vmem:[%s2955] sm:$0x4]
  %vm2957 = vcmask 1042434
  %v2958 = vsel %vm2957, %v2956, %v2954
  %s2959 = scalar_lea.vmem %s0, 1651
  %v2960 = vld [vmem:[%s2959] sm:$0x8]
  %vm2961 = vcmask 1043459
  %v2962 = vsel %vm2961, %v2960, %v2958
  %s2963 = scalar_lea.vmem %s0, 1682
  %v2964 = vld [vmem:[%s2963] sm:$0x10]
  %vm2965 = vcmask 1044484
  %v2966 = vsel %vm2965, %v2964, %v2962
  %s2967 = scalar_lea.vmem %s0, 1713
  %v2968 = vld [vmem:[%s2967] sm:$0x20]
  %vm2969 = vcmask 1045509
  %v2970 = vsel %vm2969, %v2968, %v2966
  %s2971 = scalar_lea.vmem %s0, 1744
  %v2972 = vld [vmem:[%s2971] sm:$0x40]
  %vm2973 = vcmask 1046534
  %v2974 = vsel %vm2973, %v2972, %v2970
  %s2975 = scalar_lea.vmem %s0, 1775
  %v2976 = vld [vmem:[%s2975] sm:$0x80]
  %vm2977 = vcmask 1047559
  %v2978 = vsel %vm2977, %v2976, %v2974
  %2979 = vrot.lane.b32.xlu0 %v2978, 88
  %v2980 = vpop.permute.xlu0 %2979
  %vm2981 = vcmask 753344
  %s2982 = scalar_lea.vmem %s1, 48
  %2983 = vst.msk [vmem:[%s2982] sm:$0xff] %vm2981, %v2980
  %s2984 = scalar_lea.vmem %s0, 790
  %v2985 = vld [vmem:[%s2984] sm:$0x1]
  %s2986 = scalar_lea.vmem %s0, 821
  %v2987 = vld [vmem:[%s2986] sm:$0x2]
  %vm2988 = vcmask 1041409
  %v2989 = vsel %vm2988, %v2987, %v2985
  %s2990 = scalar_lea.vmem %s0, 852
  %v2991 = vld [vmem:[%s2990] sm:$0x4]
  %vm2992 = vcmask 1042434
  %v2993 = vsel %vm2992, %v2991, %v2989
  %s2994 = scalar_lea.vmem %s0, 883
  %v2995 = vld [vmem:[%s2994] sm:$0x8]
  %vm2996 = vcmask 1043459
  %v2997 = vsel %vm2996, %v2995, %v2993
  %s2998 = scalar_lea.vmem %s0, 914
  %v2999 = vld [vmem:[%s2998] sm:$0x10]
  %vm3000 = vcmask 1044484
  %v3001 = vsel %vm3000, %v2999, %v2997
  %s3002 = scalar_lea.vmem %s0, 945
  %v3003 = vld [vmem:[%s3002] sm:$0x20]
  %vm3004 = vcmask 1045509
  %v3005 = vsel %vm3004, %v3003, %v3001
  %s3006 = scalar_lea.vmem %s0, 976
  %v3007 = vld [vmem:[%s3006] sm:$0x40]
  %vm3008 = vcmask 1046534
  %v3009 = vsel %vm3008, %v3007, %v3005
  %s3010 = scalar_lea.vmem %s0, 1007
  %v3011 = vld [vmem:[%s3010] sm:$0x80]
  %vm3012 = vcmask 1047559
  %v3013 = vsel %vm3012, %v3011, %v3009
  %3014 = vrot.lane.b32.xlu0 %v3013, 88
  %v3015 = vpop.permute.xlu0 %3014
  %vm3016 = vcmask 753344
  %s3017 = scalar_lea.vmem %s1, 24
  %3018 = vst.msk [vmem:[%s3017] sm:$0xff] %vm3016, %v3015
  %s3019 = scalar_lea.vmem %s0, 1814
  %v3020 = vld [vmem:[%s3019] sm:$0x1]
  %s3021 = scalar_lea.vmem %s0, 1845
  %v3022 = vld [vmem:[%s3021] sm:$0x2]
  %vm3023 = vcmask 1041409
  %v3024 = vsel %vm3023, %v3022, %v3020
  %s3025 = scalar_lea.vmem %s0, 1876
  %v3026 = vld [vmem:[%s3025] sm:$0x4]
  %vm3027 = vcmask 1042434
  %v3028 = vsel %vm3027, %v3026, %v3024
  %s3029 = scalar_lea.vmem %s0, 1907
  %v3030 = vld [vmem:[%s3029] sm:$0x8]
  %vm3031 = vcmask 1043459
  %v3032 = vsel %vm3031, %v3030, %v3028
  %s3033 = scalar_lea.vmem %s0, 1938
  %v3034 = vld [vmem:[%s3033] sm:$0x10]
  %vm3035 = vcmask 1044484
  %v3036 = vsel %vm3035, %v3034, %v3032
  %s3037 = scalar_lea.vmem %s0, 1969
  %v3038 = vld [vmem:[%s3037] sm:$0x20]
  %vm3039 = vcmask 1045509
  %v3040 = vsel %vm3039, %v3038, %v3036
  %s3041 = scalar_lea.vmem %s0, 2000
  %v3042 = vld [vmem:[%s3041] sm:$0x40]
  %vm3043 = vcmask 1046534
  %v3044 = vsel %vm3043, %v3042, %v3040
  %s3045 = scalar_lea.vmem %s0, 2031
  %v3046 = vld [vmem:[%s3045] sm:$0x80]
  %vm3047 = vcmask 1047559
  %v3048 = vsel %vm3047, %v3046, %v3044
  %3049 = vrot.lane.b32.xlu0 %v3048, 88
  %v3050 = vpop.permute.xlu0 %3049
  %vm3051 = vcmask 753344
  %s3052 = scalar_lea.vmem %s1, 56
  %3053 = vst.msk [vmem:[%s3052] sm:$0xff] %vm3051, %v3050
  %s3054 = scalar_lea.vmem %s0, 21
  %v3055 = vld [vmem:[%s3054] sm:$0x1]
  %s3056 = scalar_lea.vmem %s0, 52
  %v3057 = vld [vmem:[%s3056] sm:$0x2]
  %vm3058 = vcmask 1041409
  %v3059 = vsel %vm3058, %v3057, %v3055
  %s3060 = scalar_lea.vmem %s0, 83
  %v3061 = vld [vmem:[%s3060] sm:$0x4]
  %vm3062 = vcmask 1042434
  %v3063 = vsel %vm3062, %v3061, %v3059
  %s3064 = scalar_lea.vmem %s0, 114
  %v3065 = vld [vmem:[%s3064] sm:$0x8]
  %vm3066 = vcmask 1043459
  %v3067 = vsel %vm3066, %v3065, %v3063
  %s3068 = scalar_lea.vmem %s0, 145
  %v3069 = vld [vmem:[%s3068] sm:$0x10]
  %vm3070 = vcmask 1044484
  %v3071 = vsel %vm3070, %v3069, %v3067
  %s3072 = scalar_lea.vmem %s0, 176
  %v3073 = vld [vmem:[%s3072] sm:$0x20]
  %vm3074 = vcmask 1045509
  %v3075 = vsel %vm3074, %v3073, %v3071
  %s3076 = scalar_lea.vmem %s0, 207
  %v3077 = vld [vmem:[%s3076] sm:$0x40]
  %vm3078 = vcmask 1046534
  %v3079 = vsel %vm3078, %v3077, %v3075
  %s3080 = scalar_lea.vmem %s0, 238
  %v3081 = vld [vmem:[%s3080] sm:$0x80]
  %vm3082 = vcmask 1047559
  %v3083 = vsel %vm3082, %v3081, %v3079
  %3084 = vrot.lane.b32.xlu0 %v3083, 84
  %v3085 = vpop.permute.xlu0 %3084
  %vm3086 = vcmask 720544
  %3087 = vst.msk [vmem:[%s1] sm:$0xff] %vm3086, %v3085
  %s3088 = scalar_lea.vmem %s0, 1045
  %v3089 = vld [vmem:[%s3088] sm:$0x1]
  %s3090 = scalar_lea.vmem %s0, 1076
  %v3091 = vld [vmem:[%s3090] sm:$0x2]
  %vm3092 = vcmask 1041409
  %v3093 = vsel %vm3092, %v3091, %v3089
  %s3094 = scalar_lea.vmem %s0, 1107
  %v3095 = vld [vmem:[%s3094] sm:$0x4]
  %vm3096 = vcmask 1042434
  %v3097 = vsel %vm3096, %v3095, %v3093
  %s3098 = scalar_lea.vmem %s0, 1138
  %v3099 = vld [vmem:[%s3098] sm:$0x8]
  %vm3100 = vcmask 1043459
  %v3101 = vsel %vm3100, %v3099, %v3097
  %s3102 = scalar_lea.vmem %s0, 1169
  %v3103 = vld [vmem:[%s3102] sm:$0x10]
  %vm3104 = vcmask 1044484
  %v3105 = vsel %vm3104, %v3103, %v3101
  %s3106 = scalar_lea.vmem %s0, 1200
  %v3107 = vld [vmem:[%s3106] sm:$0x20]
  %vm3108 = vcmask 1045509
  %v3109 = vsel %vm3108, %v3107, %v3105
  %s3110 = scalar_lea.vmem %s0, 1231
  %v3111 = vld [vmem:[%s3110] sm:$0x40]
  %vm3112 = vcmask 1046534
  %v3113 = vsel %vm3112, %v3111, %v3109
  %s3114 = scalar_lea.vmem %s0, 1262
  %v3115 = vld [vmem:[%s3114] sm:$0x80]
  %vm3116 = vcmask 1047559
  %v3117 = vsel %vm3116, %v3115, %v3113
  %3118 = vrot.lane.b32.xlu0 %v3117, 84
  %v3119 = vpop.permute.xlu0 %3118
  %vm3120 = vcmask 720544
  %s3121 = scalar_lea.vmem %s1, 32
  %3122 = vst.msk [vmem:[%s3121] sm:$0xff] %vm3120, %v3119
  %s3123 = scalar_lea.vmem %s0, 277
  %v3124 = vld [vmem:[%s3123] sm:$0x1]
  %s3125 = scalar_lea.vmem %s0, 308
  %v3126 = vld [vmem:[%s3125] sm:$0x2]
  %vm3127 = vcmask 1041409
  %v3128 = vsel %vm3127, %v3126, %v3124
  %s3129 = scalar_lea.vmem %s0, 339
  %v3130 = vld [vmem:[%s3129] sm:$0x4]
  %vm3131 = vcmask 1042434
  %v3132 = vsel %vm3131, %v3130, %v3128
  %s3133 = scalar_lea.vmem %s0, 370
  %v3134 = vld [vmem:[%s3133] sm:$0x8]
  %vm3135 = vcmask 1043459
  %v3136 = vsel %vm3135, %v3134, %v3132
  %s3137 = scalar_lea.vmem %s0, 401
  %v3138 = vld [vmem:[%s3137] sm:$0x10]
  %vm3139 = vcmask 1044484
  %v3140 = vsel %vm3139, %v3138, %v3136
  %s3141 = scalar_lea.vmem %s0, 432
  %v3142 = vld [vmem:[%s3141] sm:$0x20]
  %vm3143 = vcmask 1045509
  %v3144 = vsel %vm3143, %v3142, %v3140
  %s3145 = scalar_lea.vmem %s0, 463
  %v3146 = vld [vmem:[%s3145] sm:$0x40]
  %vm3147 = vcmask 1046534
  %v3148 = vsel %vm3147, %v3146, %v3144
  %s3149 = scalar_lea.vmem %s0, 494
  %v3150 = vld [vmem:[%s3149] sm:$0x80]
  %vm3151 = vcmask 1047559
  %v3152 = vsel %vm3151, %v3150, %v3148
  %3153 = vrot.lane.b32.xlu0 %v3152, 84
  %v3154 = vpop.permute.xlu0 %3153
  %vm3155 = vcmask 720544
  %s3156 = scalar_lea.vmem %s1, 8
  %3157 = vst.msk [vmem:[%s3156] sm:$0xff] %vm3155, %v3154
  %s3158 = scalar_lea.vmem %s0, 1301
  %v3159 = vld [vmem:[%s3158] sm:$0x1]
  %s3160 = scalar_lea.vmem %s0, 1332
  %v3161 = vld [vmem:[%s3160] sm:$0x2]
  %vm3162 = vcmask 1041409
  %v3163 = vsel %vm3162, %v3161, %v3159
  %s3164 = scalar_lea.vmem %s0, 1363
  %v3165 = vld [vmem:[%s3164] sm:$0x4]
  %vm3166 = vcmask 1042434
  %v3167 = vsel %vm3166, %v3165, %v3163
  %s3168 = scalar_lea.vmem %s0, 1394
  %v3169 = vld [vmem:[%s3168] sm:$0x8]
  %vm3170 = vcmask 1043459
  %v3171 = vsel %vm3170, %v3169, %v3167
  %s3172 = scalar_lea.vmem %s0, 1425
  %v3173 = vld [vmem:[%s3172] sm:$0x10]
  %vm3174 = vcmask 1044484
  %v3175 = vsel %vm3174, %v3173, %v3171
  %s3176 = scalar_lea.vmem %s0, 1456
  %v3177 = vld [vmem:[%s3176] sm:$0x20]
  %vm3178 = vcmask 1045509
  %v3179 = vsel %vm3178, %v3177, %v3175
  %s3180 = scalar_lea.vmem %s0, 1487
  %v3181 = vld [vmem:[%s3180] sm:$0x40]
  %vm3182 = vcmask 1046534
  %v3183 = vsel %vm3182, %v3181, %v3179
  %s3184 = scalar_lea.vmem %s0, 1518
  %v3185 = vld [vmem:[%s3184] sm:$0x80]
  %vm3186 = vcmask 1047559
  %v3187 = vsel %vm3186, %v3185, %v3183
  %3188 = vrot.lane.b32.xlu0 %v3187, 84
  %v3189 = vpop.permute.xlu0 %3188
  %vm3190 = vcmask 720544
  %s3191 = scalar_lea.vmem %s1, 40
  %3192 = vst.msk [vmem:[%s3191] sm:$0xff] %vm3190, %v3189
  %s3193 = scalar_lea.vmem %s0, 533
  %v3194 = vld [vmem:[%s3193] sm:$0x1]
  %s3195 = scalar_lea.vmem %s0, 564
  %v3196 = vld [vmem:[%s3195] sm:$0x2]
  %vm3197 = vcmask 1041409
  %v3198 = vsel %vm3197, %v3196, %v3194
  %s3199 = scalar_lea.vmem %s0, 595
  %v3200 = vld [vmem:[%s3199] sm:$0x4]
  %vm3201 = vcmask 1042434
  %v3202 = vsel %vm3201, %v3200, %v3198
  %s3203 = scalar_lea.vmem %s0, 626
  %v3204 = vld [vmem:[%s3203] sm:$0x8]
  %vm3205 = vcmask 1043459
  %v3206 = vsel %vm3205, %v3204, %v3202
  %s3207 = scalar_lea.vmem %s0, 657
  %v3208 = vld [vmem:[%s3207] sm:$0x10]
  %vm3209 = vcmask 1044484
  %v3210 = vsel %vm3209, %v3208, %v3206
  %s3211 = scalar_lea.vmem %s0, 688
  %v3212 = vld [vmem:[%s3211] sm:$0x20]
  %vm3213 = vcmask 1045509
  %v3214 = vsel %vm3213, %v3212, %v3210
  %s3215 = scalar_lea.vmem %s0, 719
  %v3216 = vld [vmem:[%s3215] sm:$0x40]
  %vm3217 = vcmask 1046534
  %v3218 = vsel %vm3217, %v3216, %v3214
  %s3219 = scalar_lea.vmem %s0, 750
  %v3220 = vld [vmem:[%s3219] sm:$0x80]
  %vm3221 = vcmask 1047559
  %v3222 = vsel %vm3221, %v3220, %v3218
  %3223 = vrot.lane.b32.xlu0 %v3222, 84
  %v3224 = vpop.permute.xlu0 %3223
  %vm3225 = vcmask 720544
  %s3226 = scalar_lea.vmem %s1, 16
  %3227 = vst.msk [vmem:[%s3226] sm:$0xff] %vm3225, %v3224
  %s3228 = scalar_lea.vmem %s0, 1557
  %v3229 = vld [vmem:[%s3228] sm:$0x1]
  %s3230 = scalar_lea.vmem %s0, 1588
  %v3231 = vld [vmem:[%s3230] sm:$0x2]
  %vm3232 = vcmask 1041409
  %v3233 = vsel %vm3232, %v3231, %v3229
  %s3234 = scalar_lea.vmem %s0, 1619
  %v3235 = vld [vmem:[%s3234] sm:$0x4]
  %vm3236 = vcmask 1042434
  %v3237 = vsel %vm3236, %v3235, %v3233
  %s3238 = scalar_lea.vmem %s0, 1650
  %v3239 = vld [vmem:[%s3238] sm:$0x8]
  %vm3240 = vcmask 1043459
  %v3241 = vsel %vm3240, %v3239, %v3237
  %s3242 = scalar_lea.vmem %s0, 1681
  %v3243 = vld [vmem:[%s3242] sm:$0x10]
  %vm3244 = vcmask 1044484
  %v3245 = vsel %vm3244, %v3243, %v3241
  %s3246 = scalar_lea.vmem %s0, 1712
  %v3247 = vld [vmem:[%s3246] sm:$0x20]
  %vm3248 = vcmask 1045509
  %v3249 = vsel %vm3248, %v3247, %v3245
  %s3250 = scalar_lea.vmem %s0, 1743
  %v3251 = vld [vmem:[%s3250] sm:$0x40]
  %vm3252 = vcmask 1046534
  %v3253 = vsel %vm3252, %v3251, %v3249
  %s3254 = scalar_lea.vmem %s0, 1774
  %v3255 = vld [vmem:[%s3254] sm:$0x80]
  %vm3256 = vcmask 1047559
  %v3257 = vsel %vm3256, %v3255, %v3253
  %3258 = vrot.lane.b32.xlu0 %v3257, 84
  %v3259 = vpop.permute.xlu0 %3258
  %vm3260 = vcmask 720544
  %s3261 = scalar_lea.vmem %s1, 48
  %3262 = vst.msk [vmem:[%s3261] sm:$0xff] %vm3260, %v3259
  %s3263 = scalar_lea.vmem %s0, 789
  %v3264 = vld [vmem:[%s3263] sm:$0x1]
  %s3265 = scalar_lea.vmem %s0, 820
  %v3266 = vld [vmem:[%s3265] sm:$0x2]
  %vm3267 = vcmask 1041409
  %v3268 = vsel %vm3267, %v3266, %v3264
  %s3269 = scalar_lea.vmem %s0, 851
  %v3270 = vld [vmem:[%s3269] sm:$0x4]
  %vm3271 = vcmask 1042434
  %v3272 = vsel %vm3271, %v3270, %v3268
  %s3273 = scalar_lea.vmem %s0, 882
  %v3274 = vld [vmem:[%s3273] sm:$0x8]
  %vm3275 = vcmask 1043459
  %v3276 = vsel %vm3275, %v3274, %v3272
  %s3277 = scalar_lea.vmem %s0, 913
  %v3278 = vld [vmem:[%s3277] sm:$0x10]
  %vm3279 = vcmask 1044484
  %v3280 = vsel %vm3279, %v3278, %v3276
  %s3281 = scalar_lea.vmem %s0, 944
  %v3282 = vld [vmem:[%s3281] sm:$0x20]
  %vm3283 = vcmask 1045509
  %v3284 = vsel %vm3283, %v3282, %v3280
  %s3285 = scalar_lea.vmem %s0, 975
  %v3286 = vld [vmem:[%s3285] sm:$0x40]
  %vm3287 = vcmask 1046534
  %v3288 = vsel %vm3287, %v3286, %v3284
  %s3289 = scalar_lea.vmem %s0, 1006
  %v3290 = vld [vmem:[%s3289] sm:$0x80]
  %vm3291 = vcmask 1047559
  %v3292 = vsel %vm3291, %v3290, %v3288
  %3293 = vrot.lane.b32.xlu0 %v3292, 84
  %v3294 = vpop.permute.xlu0 %3293
  %vm3295 = vcmask 720544
  %s3296 = scalar_lea.vmem %s1, 24
  %3297 = vst.msk [vmem:[%s3296] sm:$0xff] %vm3295, %v3294
  %s3298 = scalar_lea.vmem %s0, 1813
  %v3299 = vld [vmem:[%s3298] sm:$0x1]
  %s3300 = scalar_lea.vmem %s0, 1844
  %v3301 = vld [vmem:[%s3300] sm:$0x2]
  %vm3302 = vcmask 1041409
  %v3303 = vsel %vm3302, %v3301, %v3299
  %s3304 = scalar_lea.vmem %s0, 1875
  %v3305 = vld [vmem:[%s3304] sm:$0x4]
  %vm3306 = vcmask 1042434
  %v3307 = vsel %vm3306, %v3305, %v3303
  %s3308 = scalar_lea.vmem %s0, 1906
  %v3309 = vld [vmem:[%s3308] sm:$0x8]
  %vm3310 = vcmask 1043459
  %v3311 = vsel %vm3310, %v3309, %v3307
  %s3312 = scalar_lea.vmem %s0, 1937
  %v3313 = vld [vmem:[%s3312] sm:$0x10]
  %vm3314 = vcmask 1044484
  %v3315 = vsel %vm3314, %v3313, %v3311
  %s3316 = scalar_lea.vmem %s0, 1968
  %v3317 = vld [vmem:[%s3316] sm:$0x20]
  %vm3318 = vcmask 1045509
  %v3319 = vsel %vm3318, %v3317, %v3315
  %s3320 = scalar_lea.vmem %s0, 1999
  %v3321 = vld [vmem:[%s3320] sm:$0x40]
  %vm3322 = vcmask 1046534
  %v3323 = vsel %vm3322, %v3321, %v3319
  %s3324 = scalar_lea.vmem %s0, 2030
  %v3325 = vld [vmem:[%s3324] sm:$0x80]
  %vm3326 = vcmask 1047559
  %v3327 = vsel %vm3326, %v3325, %v3323
  %3328 = vrot.lane.b32.xlu0 %v3327, 84
  %v3329 = vpop.permute.xlu0 %3328
  %vm3330 = vcmask 720544
  %s3331 = scalar_lea.vmem %s1, 56
  %3332 = vst.msk [vmem:[%s3331] sm:$0xff] %vm3330, %v3329
  %s3333 = scalar_lea.vmem %s0, 20
  %v3334 = vld [vmem:[%s3333] sm:$0x1]
  %s3335 = scalar_lea.vmem %s0, 51
  %v3336 = vld [vmem:[%s3335] sm:$0x2]
  %vm3337 = vcmask 1041409
  %v3338 = vsel %vm3337, %v3336, %v3334
  %s3339 = scalar_lea.vmem %s0, 82
  %v3340 = vld [vmem:[%s3339] sm:$0x4]
  %vm3341 = vcmask 1042434
  %v3342 = vsel %vm3341, %v3340, %v3338
  %s3343 = scalar_lea.vmem %s0, 113
  %v3344 = vld [vmem:[%s3343] sm:$0x8]
  %vm3345 = vcmask 1043459
  %v3346 = vsel %vm3345, %v3344, %v3342
  %s3347 = scalar_lea.vmem %s0, 144
  %v3348 = vld [vmem:[%s3347] sm:$0x10]
  %vm3349 = vcmask 1044484
  %v3350 = vsel %vm3349, %v3348, %v3346
  %s3351 = scalar_lea.vmem %s0, 175
  %v3352 = vld [vmem:[%s3351] sm:$0x20]
  %vm3353 = vcmask 1045509
  %v3354 = vsel %vm3353, %v3352, %v3350
  %s3355 = scalar_lea.vmem %s0, 206
  %v3356 = vld [vmem:[%s3355] sm:$0x40]
  %vm3357 = vcmask 1046534
  %v3358 = vsel %vm3357, %v3356, %v3354
  %s3359 = scalar_lea.vmem %s0, 237
  %v3360 = vld [vmem:[%s3359] sm:$0x80]
  %vm3361 = vcmask 1047559
  %v3362 = vsel %vm3361, %v3360, %v3358
  %3363 = vrot.lane.b32.xlu0 %v3362, 80
  %v3364 = vpop.permute.xlu0 %3363
  %vm3365 = vcmask 687744
  %3366 = vst.msk [vmem:[%s1] sm:$0xff] %vm3365, %v3364
  %s3367 = scalar_lea.vmem %s0, 1044
  %v3368 = vld [vmem:[%s3367] sm:$0x1]
  %s3369 = scalar_lea.vmem %s0, 1075
  %v3370 = vld [vmem:[%s3369] sm:$0x2]
  %vm3371 = vcmask 1041409
  %v3372 = vsel %vm3371, %v3370, %v3368
  %s3373 = scalar_lea.vmem %s0, 1106
  %v3374 = vld [vmem:[%s3373] sm:$0x4]
  %vm3375 = vcmask 1042434
  %v3376 = vsel %vm3375, %v3374, %v3372
  %s3377 = scalar_lea.vmem %s0, 1137
  %v3378 = vld [vmem:[%s3377] sm:$0x8]
  %vm3379 = vcmask 1043459
  %v3380 = vsel %vm3379, %v3378, %v3376
  %s3381 = scalar_lea.vmem %s0, 1168
  %v3382 = vld [vmem:[%s3381] sm:$0x10]
  %vm3383 = vcmask 1044484
  %v3384 = vsel %vm3383, %v3382, %v3380
  %s3385 = scalar_lea.vmem %s0, 1199
  %v3386 = vld [vmem:[%s3385] sm:$0x20]
  %vm3387 = vcmask 1045509
  %v3388 = vsel %vm3387, %v3386, %v3384
  %s3389 = scalar_lea.vmem %s0, 1230
  %v3390 = vld [vmem:[%s3389] sm:$0x40]
  %vm3391 = vcmask 1046534
  %v3392 = vsel %vm3391, %v3390, %v3388
  %s3393 = scalar_lea.vmem %s0, 1261
  %v3394 = vld [vmem:[%s3393] sm:$0x80]
  %vm3395 = vcmask 1047559
  %v3396 = vsel %vm3395, %v3394, %v3392
  %3397 = vrot.lane.b32.xlu0 %v3396, 80
  %v3398 = vpop.permute.xlu0 %3397
  %vm3399 = vcmask 687744
  %s3400 = scalar_lea.vmem %s1, 32
  %3401 = vst.msk [vmem:[%s3400] sm:$0xff] %vm3399, %v3398
  %s3402 = scalar_lea.vmem %s0, 276
  %v3403 = vld [vmem:[%s3402] sm:$0x1]
  %s3404 = scalar_lea.vmem %s0, 307
  %v3405 = vld [vmem:[%s3404] sm:$0x2]
  %vm3406 = vcmask 1041409
  %v3407 = vsel %vm3406, %v3405, %v3403
  %s3408 = scalar_lea.vmem %s0, 338
  %v3409 = vld [vmem:[%s3408] sm:$0x4]
  %vm3410 = vcmask 1042434
  %v3411 = vsel %vm3410, %v3409, %v3407
  %s3412 = scalar_lea.vmem %s0, 369
  %v3413 = vld [vmem:[%s3412] sm:$0x8]
  %vm3414 = vcmask 1043459
  %v3415 = vsel %vm3414, %v3413, %v3411
  %s3416 = scalar_lea.vmem %s0, 400
  %v3417 = vld [vmem:[%s3416] sm:$0x10]
  %vm3418 = vcmask 1044484
  %v3419 = vsel %vm3418, %v3417, %v3415
  %s3420 = scalar_lea.vmem %s0, 431
  %v3421 = vld [vmem:[%s3420] sm:$0x20]
  %vm3422 = vcmask 1045509
  %v3423 = vsel %vm3422, %v3421, %v3419
  %s3424 = scalar_lea.vmem %s0, 462
  %v3425 = vld [vmem:[%s3424] sm:$0x40]
  %vm3426 = vcmask 1046534
  %v3427 = vsel %vm3426, %v3425, %v3423
  %s3428 = scalar_lea.vmem %s0, 493
  %v3429 = vld [vmem:[%s3428] sm:$0x80]
  %vm3430 = vcmask 1047559
  %v3431 = vsel %vm3430, %v3429, %v3427
  %3432 = vrot.lane.b32.xlu0 %v3431, 80
  %v3433 = vpop.permute.xlu0 %3432
  %vm3434 = vcmask 687744
  %s3435 = scalar_lea.vmem %s1, 8
  %3436 = vst.msk [vmem:[%s3435] sm:$0xff] %vm3434, %v3433
  %s3437 = scalar_lea.vmem %s0, 1300
  %v3438 = vld [vmem:[%s3437] sm:$0x1]
  %s3439 = scalar_lea.vmem %s0, 1331
  %v3440 = vld [vmem:[%s3439] sm:$0x2]
  %vm3441 = vcmask 1041409
  %v3442 = vsel %vm3441, %v3440, %v3438
  %s3443 = scalar_lea.vmem %s0, 1362
  %v3444 = vld [vmem:[%s3443] sm:$0x4]
  %vm3445 = vcmask 1042434
  %v3446 = vsel %vm3445, %v3444, %v3442
  %s3447 = scalar_lea.vmem %s0, 1393
  %v3448 = vld [vmem:[%s3447] sm:$0x8]
  %vm3449 = vcmask 1043459
  %v3450 = vsel %vm3449, %v3448, %v3446
  %s3451 = scalar_lea.vmem %s0, 1424
  %v3452 = vld [vmem:[%s3451] sm:$0x10]
  %vm3453 = vcmask 1044484
  %v3454 = vsel %vm3453, %v3452, %v3450
  %s3455 = scalar_lea.vmem %s0, 1455
  %v3456 = vld [vmem:[%s3455] sm:$0x20]
  %vm3457 = vcmask 1045509
  %v3458 = vsel %vm3457, %v3456, %v3454
  %s3459 = scalar_lea.vmem %s0, 1486
  %v3460 = vld [vmem:[%s3459] sm:$0x40]
  %vm3461 = vcmask 1046534
  %v3462 = vsel %vm3461, %v3460, %v3458
  %s3463 = scalar_lea.vmem %s0, 1517
  %v3464 = vld [vmem:[%s3463] sm:$0x80]
  %vm3465 = vcmask 1047559
  %v3466 = vsel %vm3465, %v3464, %v3462
  %3467 = vrot.lane.b32.xlu0 %v3466, 80
  %v3468 = vpop.permute.xlu0 %3467
  %vm3469 = vcmask 687744
  %s3470 = scalar_lea.vmem %s1, 40
  %3471 = vst.msk [vmem:[%s3470] sm:$0xff] %vm3469, %v3468
  %s3472 = scalar_lea.vmem %s0, 532
  %v3473 = vld [vmem:[%s3472] sm:$0x1]
  %s3474 = scalar_lea.vmem %s0, 563
  %v3475 = vld [vmem:[%s3474] sm:$0x2]
  %vm3476 = vcmask 1041409
  %v3477 = vsel %vm3476, %v3475, %v3473
  %s3478 = scalar_lea.vmem %s0, 594
  %v3479 = vld [vmem:[%s3478] sm:$0x4]
  %vm3480 = vcmask 1042434
  %v3481 = vsel %vm3480, %v3479, %v3477
  %s3482 = scalar_lea.vmem %s0, 625
  %v3483 = vld [vmem:[%s3482] sm:$0x8]
  %vm3484 = vcmask 1043459
  %v3485 = vsel %vm3484, %v3483, %v3481
  %s3486 = scalar_lea.vmem %s0, 656
  %v3487 = vld [vmem:[%s3486] sm:$0x10]
  %vm3488 = vcmask 1044484
  %v3489 = vsel %vm3488, %v3487, %v3485
  %s3490 = scalar_lea.vmem %s0, 687
  %v3491 = vld [vmem:[%s3490] sm:$0x20]
  %vm3492 = vcmask 1045509
  %v3493 = vsel %vm3492, %v3491, %v3489
  %s3494 = scalar_lea.vmem %s0, 718
  %v3495 = vld [vmem:[%s3494] sm:$0x40]
  %vm3496 = vcmask 1046534
  %v3497 = vsel %vm3496, %v3495, %v3493
  %s3498 = scalar_lea.vmem %s0, 749
  %v3499 = vld [vmem:[%s3498] sm:$0x80]
  %vm3500 = vcmask 1047559
  %v3501 = vsel %vm3500, %v3499, %v3497
  %3502 = vrot.lane.b32.xlu0 %v3501, 80
  %v3503 = vpop.permute.xlu0 %3502
  %vm3504 = vcmask 687744
  %s3505 = scalar_lea.vmem %s1, 16
  %3506 = vst.msk [vmem:[%s3505] sm:$0xff] %vm3504, %v3503
  %s3507 = scalar_lea.vmem %s0, 1556
  %v3508 = vld [vmem:[%s3507] sm:$0x1]
  %s3509 = scalar_lea.vmem %s0, 1587
  %v3510 = vld [vmem:[%s3509] sm:$0x2]
  %vm3511 = vcmask 1041409
  %v3512 = vsel %vm3511, %v3510, %v3508
  %s3513 = scalar_lea.vmem %s0, 1618
  %v3514 = vld [vmem:[%s3513] sm:$0x4]
  %vm3515 = vcmask 1042434
  %v3516 = vsel %vm3515, %v3514, %v3512
  %s3517 = scalar_lea.vmem %s0, 1649
  %v3518 = vld [vmem:[%s3517] sm:$0x8]
  %vm3519 = vcmask 1043459
  %v3520 = vsel %vm3519, %v3518, %v3516
  %s3521 = scalar_lea.vmem %s0, 1680
  %v3522 = vld [vmem:[%s3521] sm:$0x10]
  %vm3523 = vcmask 1044484
  %v3524 = vsel %vm3523, %v3522, %v3520
  %s3525 = scalar_lea.vmem %s0, 1711
  %v3526 = vld [vmem:[%s3525] sm:$0x20]
  %vm3527 = vcmask 1045509
  %v3528 = vsel %vm3527, %v3526, %v3524
  %s3529 = scalar_lea.vmem %s0, 1742
  %v3530 = vld [vmem:[%s3529] sm:$0x40]
  %vm3531 = vcmask 1046534
  %v3532 = vsel %vm3531, %v3530, %v3528
  %s3533 = scalar_lea.vmem %s0, 1773
  %v3534 = vld [vmem:[%s3533] sm:$0x80]
  %vm3535 = vcmask 1047559
  %v3536 = vsel %vm3535, %v3534, %v3532
  %3537 = vrot.lane.b32.xlu0 %v3536, 80
  %v3538 = vpop.permute.xlu0 %3537
  %vm3539 = vcmask 687744
  %s3540 = scalar_lea.vmem %s1, 48
  %3541 = vst.msk [vmem:[%s3540] sm:$0xff] %vm3539, %v3538
  %s3542 = scalar_lea.vmem %s0, 788
  %v3543 = vld [vmem:[%s3542] sm:$0x1]
  %s3544 = scalar_lea.vmem %s0, 819
  %v3545 = vld [vmem:[%s3544] sm:$0x2]
  %vm3546 = vcmask 1041409
  %v3547 = vsel %vm3546, %v3545, %v3543
  %s3548 = scalar_lea.vmem %s0, 850
  %v3549 = vld [vmem:[%s3548] sm:$0x4]
  %vm3550 = vcmask 1042434
  %v3551 = vsel %vm3550, %v3549, %v3547
  %s3552 = scalar_lea.vmem %s0, 881
  %v3553 = vld [vmem:[%s3552] sm:$0x8]
  %vm3554 = vcmask 1043459
  %v3555 = vsel %vm3554, %v3553, %v3551
  %s3556 = scalar_lea.vmem %s0, 912
  %v3557 = vld [vmem:[%s3556] sm:$0x10]
  %vm3558 = vcmask 1044484
  %v3559 = vsel %vm3558, %v3557, %v3555
  %s3560 = scalar_lea.vmem %s0, 943
  %v3561 = vld [vmem:[%s3560] sm:$0x20]
  %vm3562 = vcmask 1045509
  %v3563 = vsel %vm3562, %v3561, %v3559
  %s3564 = scalar_lea.vmem %s0, 974
  %v3565 = vld [vmem:[%s3564] sm:$0x40]
  %vm3566 = vcmask 1046534
  %v3567 = vsel %vm3566, %v3565, %v3563
  %s3568 = scalar_lea.vmem %s0, 1005
  %v3569 = vld [vmem:[%s3568] sm:$0x80]
  %vm3570 = vcmask 1047559
  %v3571 = vsel %vm3570, %v3569, %v3567
  %3572 = vrot.lane.b32.xlu0 %v3571, 80
  %v3573 = vpop.permute.xlu0 %3572
  %vm3574 = vcmask 687744
  %s3575 = scalar_lea.vmem %s1, 24
  %3576 = vst.msk [vmem:[%s3575] sm:$0xff] %vm3574, %v3573
  %s3577 = scalar_lea.vmem %s0, 1812
  %v3578 = vld [vmem:[%s3577] sm:$0x1]
  %s3579 = scalar_lea.vmem %s0, 1843
  %v3580 = vld [vmem:[%s3579] sm:$0x2]
  %vm3581 = vcmask 1041409
  %v3582 = vsel %vm3581, %v3580, %v3578
  %s3583 = scalar_lea.vmem %s0, 1874
  %v3584 = vld [vmem:[%s3583] sm:$0x4]
  %vm3585 = vcmask 1042434
  %v3586 = vsel %vm3585, %v3584, %v3582
  %s3587 = scalar_lea.vmem %s0, 1905
  %v3588 = vld [vmem:[%s3587] sm:$0x8]
  %vm3589 = vcmask 1043459
  %v3590 = vsel %vm3589, %v3588, %v3586
  %s3591 = scalar_lea.vmem %s0, 1936
  %v3592 = vld [vmem:[%s3591] sm:$0x10]
  %vm3593 = vcmask 1044484
  %v3594 = vsel %vm3593, %v3592, %v3590
  %s3595 = scalar_lea.vmem %s0, 1967
  %v3596 = vld [vmem:[%s3595] sm:$0x20]
  %vm3597 = vcmask 1045509
  %v3598 = vsel %vm3597, %v3596, %v3594
  %s3599 = scalar_lea.vmem %s0, 1998
  %v3600 = vld [vmem:[%s3599] sm:$0x40]
  %vm3601 = vcmask 1046534
  %v3602 = vsel %vm3601, %v3600, %v3598
  %s3603 = scalar_lea.vmem %s0, 2029
  %v3604 = vld [vmem:[%s3603] sm:$0x80]
  %vm3605 = vcmask 1047559
  %v3606 = vsel %vm3605, %v3604, %v3602
  %3607 = vrot.lane.b32.xlu0 %v3606, 80
  %v3608 = vpop.permute.xlu0 %3607
  %vm3609 = vcmask 687744
  %s3610 = scalar_lea.vmem %s1, 56
  %3611 = vst.msk [vmem:[%s3610] sm:$0xff] %vm3609, %v3608
  %s3612 = scalar_lea.vmem %s0, 19
  %v3613 = vld [vmem:[%s3612] sm:$0x1]
  %s3614 = scalar_lea.vmem %s0, 50
  %v3615 = vld [vmem:[%s3614] sm:$0x2]
  %vm3616 = vcmask 1041409
  %v3617 = vsel %vm3616, %v3615, %v3613
  %s3618 = scalar_lea.vmem %s0, 81
  %v3619 = vld [vmem:[%s3618] sm:$0x4]
  %vm3620 = vcmask 1042434
  %v3621 = vsel %vm3620, %v3619, %v3617
  %s3622 = scalar_lea.vmem %s0, 112
  %v3623 = vld [vmem:[%s3622] sm:$0x8]
  %vm3624 = vcmask 1043459
  %v3625 = vsel %vm3624, %v3623, %v3621
  %s3626 = scalar_lea.vmem %s0, 143
  %v3627 = vld [vmem:[%s3626] sm:$0x10]
  %vm3628 = vcmask 1044484
  %v3629 = vsel %vm3628, %v3627, %v3625
  %s3630 = scalar_lea.vmem %s0, 174
  %v3631 = vld [vmem:[%s3630] sm:$0x20]
  %vm3632 = vcmask 1045509
  %v3633 = vsel %vm3632, %v3631, %v3629
  %s3634 = scalar_lea.vmem %s0, 205
  %v3635 = vld [vmem:[%s3634] sm:$0x40]
  %vm3636 = vcmask 1046534
  %v3637 = vsel %vm3636, %v3635, %v3633
  %s3638 = scalar_lea.vmem %s0, 236
  %v3639 = vld [vmem:[%s3638] sm:$0x80]
  %vm3640 = vcmask 1047559
  %v3641 = vsel %vm3640, %v3639, %v3637
  %3642 = vrot.lane.b32.xlu0 %v3641, 76
  %v3643 = vpop.permute.xlu0 %3642
  %vm3644 = vcmask 654944
  %3645 = vst.msk [vmem:[%s1] sm:$0xff] %vm3644, %v3643
  %s3646 = scalar_lea.vmem %s0, 1043
  %v3647 = vld [vmem:[%s3646] sm:$0x1]
  %s3648 = scalar_lea.vmem %s0, 1074
  %v3649 = vld [vmem:[%s3648] sm:$0x2]
  %vm3650 = vcmask 1041409
  %v3651 = vsel %vm3650, %v3649, %v3647
  %s3652 = scalar_lea.vmem %s0, 1105
  %v3653 = vld [vmem:[%s3652] sm:$0x4]
  %vm3654 = vcmask 1042434
  %v3655 = vsel %vm3654, %v3653, %v3651
  %s3656 = scalar_lea.vmem %s0, 1136
  %v3657 = vld [vmem:[%s3656] sm:$0x8]
  %vm3658 = vcmask 1043459
  %v3659 = vsel %vm3658, %v3657, %v3655
  %s3660 = scalar_lea.vmem %s0, 1167
  %v3661 = vld [vmem:[%s3660] sm:$0x10]
  %vm3662 = vcmask 1044484
  %v3663 = vsel %vm3662, %v3661, %v3659
  %s3664 = scalar_lea.vmem %s0, 1198
  %v3665 = vld [vmem:[%s3664] sm:$0x20]
  %vm3666 = vcmask 1045509
  %v3667 = vsel %vm3666, %v3665, %v3663
  %s3668 = scalar_lea.vmem %s0, 1229
  %v3669 = vld [vmem:[%s3668] sm:$0x40]
  %vm3670 = vcmask 1046534
  %v3671 = vsel %vm3670, %v3669, %v3667
  %s3672 = scalar_lea.vmem %s0, 1260
  %v3673 = vld [vmem:[%s3672] sm:$0x80]
  %vm3674 = vcmask 1047559
  %v3675 = vsel %vm3674, %v3673, %v3671
  %3676 = vrot.lane.b32.xlu0 %v3675, 76
  %v3677 = vpop.permute.xlu0 %3676
  %vm3678 = vcmask 654944
  %s3679 = scalar_lea.vmem %s1, 32
  %3680 = vst.msk [vmem:[%s3679] sm:$0xff] %vm3678, %v3677
  %s3681 = scalar_lea.vmem %s0, 275
  %v3682 = vld [vmem:[%s3681] sm:$0x1]
  %s3683 = scalar_lea.vmem %s0, 306
  %v3684 = vld [vmem:[%s3683] sm:$0x2]
  %vm3685 = vcmask 1041409
  %v3686 = vsel %vm3685, %v3684, %v3682
  %s3687 = scalar_lea.vmem %s0, 337
  %v3688 = vld [vmem:[%s3687] sm:$0x4]
  %vm3689 = vcmask 1042434
  %v3690 = vsel %vm3689, %v3688, %v3686
  %s3691 = scalar_lea.vmem %s0, 368
  %v3692 = vld [vmem:[%s3691] sm:$0x8]
  %vm3693 = vcmask 1043459
  %v3694 = vsel %vm3693, %v3692, %v3690
  %s3695 = scalar_lea.vmem %s0, 399
  %v3696 = vld [vmem:[%s3695] sm:$0x10]
  %vm3697 = vcmask 1044484
  %v3698 = vsel %vm3697, %v3696, %v3694
  %s3699 = scalar_lea.vmem %s0, 430
  %v3700 = vld [vmem:[%s3699] sm:$0x20]
  %vm3701 = vcmask 1045509
  %v3702 = vsel %vm3701, %v3700, %v3698
  %s3703 = scalar_lea.vmem %s0, 461
  %v3704 = vld [vmem:[%s3703] sm:$0x40]
  %vm3705 = vcmask 1046534
  %v3706 = vsel %vm3705, %v3704, %v3702
  %s3707 = scalar_lea.vmem %s0, 492
  %v3708 = vld [vmem:[%s3707] sm:$0x80]
  %vm3709 = vcmask 1047559
  %v3710 = vsel %vm3709, %v3708, %v3706
  %3711 = vrot.lane.b32.xlu0 %v3710, 76
  %v3712 = vpop.permute.xlu0 %3711
  %vm3713 = vcmask 654944
  %s3714 = scalar_lea.vmem %s1, 8
  %3715 = vst.msk [vmem:[%s3714] sm:$0xff] %vm3713, %v3712
  %s3716 = scalar_lea.vmem %s0, 1299
  %v3717 = vld [vmem:[%s3716] sm:$0x1]
  %s3718 = scalar_lea.vmem %s0, 1330
  %v3719 = vld [vmem:[%s3718] sm:$0x2]
  %vm3720 = vcmask 1041409
  %v3721 = vsel %vm3720, %v3719, %v3717
  %s3722 = scalar_lea.vmem %s0, 1361
  %v3723 = vld [vmem:[%s3722] sm:$0x4]
  %vm3724 = vcmask 1042434
  %v3725 = vsel %vm3724, %v3723, %v3721
  %s3726 = scalar_lea.vmem %s0, 1392
  %v3727 = vld [vmem:[%s3726] sm:$0x8]
  %vm3728 = vcmask 1043459
  %v3729 = vsel %vm3728, %v3727, %v3725
  %s3730 = scalar_lea.vmem %s0, 1423
  %v3731 = vld [vmem:[%s3730] sm:$0x10]
  %vm3732 = vcmask 1044484
  %v3733 = vsel %vm3732, %v3731, %v3729
  %s3734 = scalar_lea.vmem %s0, 1454
  %v3735 = vld [vmem:[%s3734] sm:$0x20]
  %vm3736 = vcmask 1045509
  %v3737 = vsel %vm3736, %v3735, %v3733
  %s3738 = scalar_lea.vmem %s0, 1485
  %v3739 = vld [vmem:[%s3738] sm:$0x40]
  %vm3740 = vcmask 1046534
  %v3741 = vsel %vm3740, %v3739, %v3737
  %s3742 = scalar_lea.vmem %s0, 1516
  %v3743 = vld [vmem:[%s3742] sm:$0x80]
  %vm3744 = vcmask 1047559
  %v3745 = vsel %vm3744, %v3743, %v3741
  %3746 = vrot.lane.b32.xlu0 %v3745, 76
  %v3747 = vpop.permute.xlu0 %3746
  %vm3748 = vcmask 654944
  %s3749 = scalar_lea.vmem %s1, 40
  %3750 = vst.msk [vmem:[%s3749] sm:$0xff] %vm3748, %v3747
  %s3751 = scalar_lea.vmem %s0, 531
  %v3752 = vld [vmem:[%s3751] sm:$0x1]
  %s3753 = scalar_lea.vmem %s0, 562
  %v3754 = vld [vmem:[%s3753] sm:$0x2]
  %vm3755 = vcmask 1041409
  %v3756 = vsel %vm3755, %v3754, %v3752
  %s3757 = scalar_lea.vmem %s0, 593
  %v3758 = vld [vmem:[%s3757] sm:$0x4]
  %vm3759 = vcmask 1042434
  %v3760 = vsel %vm3759, %v3758, %v3756
  %s3761 = scalar_lea.vmem %s0, 624
  %v3762 = vld [vmem:[%s3761] sm:$0x8]
  %vm3763 = vcmask 1043459
  %v3764 = vsel %vm3763, %v3762, %v3760
  %s3765 = scalar_lea.vmem %s0, 655
  %v3766 = vld [vmem:[%s3765] sm:$0x10]
  %vm3767 = vcmask 1044484
  %v3768 = vsel %vm3767, %v3766, %v3764
  %s3769 = scalar_lea.vmem %s0, 686
  %v3770 = vld [vmem:[%s3769] sm:$0x20]
  %vm3771 = vcmask 1045509
  %v3772 = vsel %vm3771, %v3770, %v3768
  %s3773 = scalar_lea.vmem %s0, 717
  %v3774 = vld [vmem:[%s3773] sm:$0x40]
  %vm3775 = vcmask 1046534
  %v3776 = vsel %vm3775, %v3774, %v3772
  %s3777 = scalar_lea.vmem %s0, 748
  %v3778 = vld [vmem:[%s3777] sm:$0x80]
  %vm3779 = vcmask 1047559
  %v3780 = vsel %vm3779, %v3778, %v3776
  %3781 = vrot.lane.b32.xlu0 %v3780, 76
  %v3782 = vpop.permute.xlu0 %3781
  %vm3783 = vcmask 654944
  %s3784 = scalar_lea.vmem %s1, 16
  %3785 = vst.msk [vmem:[%s3784] sm:$0xff] %vm3783, %v3782
  %s3786 = scalar_lea.vmem %s0, 1555
  %v3787 = vld [vmem:[%s3786] sm:$0x1]
  %s3788 = scalar_lea.vmem %s0, 1586
  %v3789 = vld [vmem:[%s3788] sm:$0x2]
  %vm3790 = vcmask 1041409
  %v3791 = vsel %vm3790, %v3789, %v3787
  %s3792 = scalar_lea.vmem %s0, 1617
  %v3793 = vld [vmem:[%s3792] sm:$0x4]
  %vm3794 = vcmask 1042434
  %v3795 = vsel %vm3794, %v3793, %v3791
  %s3796 = scalar_lea.vmem %s0, 1648
  %v3797 = vld [vmem:[%s3796] sm:$0x8]
  %vm3798 = vcmask 1043459
  %v3799 = vsel %vm3798, %v3797, %v3795
  %s3800 = scalar_lea.vmem %s0, 1679
  %v3801 = vld [vmem:[%s3800] sm:$0x10]
  %vm3802 = vcmask 1044484
  %v3803 = vsel %vm3802, %v3801, %v3799
  %s3804 = scalar_lea.vmem %s0, 1710
  %v3805 = vld [vmem:[%s3804] sm:$0x20]
  %vm3806 = vcmask 1045509
  %v3807 = vsel %vm3806, %v3805, %v3803
  %s3808 = scalar_lea.vmem %s0, 1741
  %v3809 = vld [vmem:[%s3808] sm:$0x40]
  %vm3810 = vcmask 1046534
  %v3811 = vsel %vm3810, %v3809, %v3807
  %s3812 = scalar_lea.vmem %s0, 1772
  %v3813 = vld [vmem:[%s3812] sm:$0x80]
  %vm3814 = vcmask 1047559
  %v3815 = vsel %vm3814, %v3813, %v3811
  %3816 = vrot.lane.b32.xlu0 %v3815, 76
  %v3817 = vpop.permute.xlu0 %3816
  %vm3818 = vcmask 654944
  %s3819 = scalar_lea.vmem %s1, 48
  %3820 = vst.msk [vmem:[%s3819] sm:$0xff] %vm3818, %v3817
  %s3821 = scalar_lea.vmem %s0, 787
  %v3822 = vld [vmem:[%s3821] sm:$0x1]
  %s3823 = scalar_lea.vmem %s0, 818
  %v3824 = vld [vmem:[%s3823] sm:$0x2]
  %vm3825 = vcmask 1041409
  %v3826 = vsel %vm3825, %v3824, %v3822
  %s3827 = scalar_lea.vmem %s0, 849
  %v3828 = vld [vmem:[%s3827] sm:$0x4]
  %vm3829 = vcmask 1042434
  %v3830 = vsel %vm3829, %v3828, %v3826
  %s3831 = scalar_lea.vmem %s0, 880
  %v3832 = vld [vmem:[%s3831] sm:$0x8]
  %vm3833 = vcmask 1043459
  %v3834 = vsel %vm3833, %v3832, %v3830
  %s3835 = scalar_lea.vmem %s0, 911
  %v3836 = vld [vmem:[%s3835] sm:$0x10]
  %vm3837 = vcmask 1044484
  %v3838 = vsel %vm3837, %v3836, %v3834
  %s3839 = scalar_lea.vmem %s0, 942
  %v3840 = vld [vmem:[%s3839] sm:$0x20]
  %vm3841 = vcmask 1045509
  %v3842 = vsel %vm3841, %v3840, %v3838
  %s3843 = scalar_lea.vmem %s0, 973
  %v3844 = vld [vmem:[%s3843] sm:$0x40]
  %vm3845 = vcmask 1046534
  %v3846 = vsel %vm3845, %v3844, %v3842
  %s3847 = scalar_lea.vmem %s0, 1004
  %v3848 = vld [vmem:[%s3847] sm:$0x80]
  %vm3849 = vcmask 1047559
  %v3850 = vsel %vm3849, %v3848, %v3846
  %3851 = vrot.lane.b32.xlu0 %v3850, 76
  %v3852 = vpop.permute.xlu0 %3851
  %vm3853 = vcmask 654944
  %s3854 = scalar_lea.vmem %s1, 24
  %3855 = vst.msk [vmem:[%s3854] sm:$0xff] %vm3853, %v3852
  %s3856 = scalar_lea.vmem %s0, 1811
  %v3857 = vld [vmem:[%s3856] sm:$0x1]
  %s3858 = scalar_lea.vmem %s0, 1842
  %v3859 = vld [vmem:[%s3858] sm:$0x2]
  %vm3860 = vcmask 1041409
  %v3861 = vsel %vm3860, %v3859, %v3857
  %s3862 = scalar_lea.vmem %s0, 1873
  %v3863 = vld [vmem:[%s3862] sm:$0x4]
  %vm3864 = vcmask 1042434
  %v3865 = vsel %vm3864, %v3863, %v3861
  %s3866 = scalar_lea.vmem %s0, 1904
  %v3867 = vld [vmem:[%s3866] sm:$0x8]
  %vm3868 = vcmask 1043459
  %v3869 = vsel %vm3868, %v3867, %v3865
  %s3870 = scalar_lea.vmem %s0, 1935
  %v3871 = vld [vmem:[%s3870] sm:$0x10]
  %vm3872 = vcmask 1044484
  %v3873 = vsel %vm3872, %v3871, %v3869
  %s3874 = scalar_lea.vmem %s0, 1966
  %v3875 = vld [vmem:[%s3874] sm:$0x20]
  %vm3876 = vcmask 1045509
  %v3877 = vsel %vm3876, %v3875, %v3873
  %s3878 = scalar_lea.vmem %s0, 1997
  %v3879 = vld [vmem:[%s3878] sm:$0x40]
  %vm3880 = vcmask 1046534
  %v3881 = vsel %vm3880, %v3879, %v3877
  %s3882 = scalar_lea.vmem %s0, 2028
  %v3883 = vld [vmem:[%s3882] sm:$0x80]
  %vm3884 = vcmask 1047559
  %v3885 = vsel %vm3884, %v3883, %v3881
  %3886 = vrot.lane.b32.xlu0 %v3885, 76
  %v3887 = vpop.permute.xlu0 %3886
  %vm3888 = vcmask 654944
  %s3889 = scalar_lea.vmem %s1, 56
  %3890 = vst.msk [vmem:[%s3889] sm:$0xff] %vm3888, %v3887
  %s3891 = scalar_lea.vmem %s0, 18
  %v3892 = vld [vmem:[%s3891] sm:$0x1]
  %s3893 = scalar_lea.vmem %s0, 49
  %v3894 = vld [vmem:[%s3893] sm:$0x2]
  %vm3895 = vcmask 1041409
  %v3896 = vsel %vm3895, %v3894, %v3892
  %s3897 = scalar_lea.vmem %s0, 80
  %v3898 = vld [vmem:[%s3897] sm:$0x4]
  %vm3899 = vcmask 1042434
  %v3900 = vsel %vm3899, %v3898, %v3896
  %s3901 = scalar_lea.vmem %s0, 111
  %v3902 = vld [vmem:[%s3901] sm:$0x8]
  %vm3903 = vcmask 1043459
  %v3904 = vsel %vm3903, %v3902, %v3900
  %s3905 = scalar_lea.vmem %s0, 142
  %v3906 = vld [vmem:[%s3905] sm:$0x10]
  %vm3907 = vcmask 1044484
  %v3908 = vsel %vm3907, %v3906, %v3904
  %s3909 = scalar_lea.vmem %s0, 173
  %v3910 = vld [vmem:[%s3909] sm:$0x20]
  %vm3911 = vcmask 1045509
  %v3912 = vsel %vm3911, %v3910, %v3908
  %s3913 = scalar_lea.vmem %s0, 204
  %v3914 = vld [vmem:[%s3913] sm:$0x40]
  %vm3915 = vcmask 1046534
  %v3916 = vsel %vm3915, %v3914, %v3912
  %s3917 = scalar_lea.vmem %s0, 235
  %v3918 = vld [vmem:[%s3917] sm:$0x80]
  %vm3919 = vcmask 1047559
  %v3920 = vsel %vm3919, %v3918, %v3916
  %3921 = vrot.lane.b32.xlu0 %v3920, 72
  %v3922 = vpop.permute.xlu0 %3921
  %vm3923 = vcmask 622144
  %3924 = vst.msk [vmem:[%s1] sm:$0xff] %vm3923, %v3922
  %s3925 = scalar_lea.vmem %s0, 1042
  %v3926 = vld [vmem:[%s3925] sm:$0x1]
  %s3927 = scalar_lea.vmem %s0, 1073
  %v3928 = vld [vmem:[%s3927] sm:$0x2]
  %vm3929 = vcmask 1041409
  %v3930 = vsel %vm3929, %v3928, %v3926
  %s3931 = scalar_lea.vmem %s0, 1104
  %v3932 = vld [vmem:[%s3931] sm:$0x4]
  %vm3933 = vcmask 1042434
  %v3934 = vsel %vm3933, %v3932, %v3930
  %s3935 = scalar_lea.vmem %s0, 1135
  %v3936 = vld [vmem:[%s3935] sm:$0x8]
  %vm3937 = vcmask 1043459
  %v3938 = vsel %vm3937, %v3936, %v3934
  %s3939 = scalar_lea.vmem %s0, 1166
  %v3940 = vld [vmem:[%s3939] sm:$0x10]
  %vm3941 = vcmask 1044484
  %v3942 = vsel %vm3941, %v3940, %v3938
  %s3943 = scalar_lea.vmem %s0, 1197
  %v3944 = vld [vmem:[%s3943] sm:$0x20]
  %vm3945 = vcmask 1045509
  %v3946 = vsel %vm3945, %v3944, %v3942
  %s3947 = scalar_lea.vmem %s0, 1228
  %v3948 = vld [vmem:[%s3947] sm:$0x40]
  %vm3949 = vcmask 1046534
  %v3950 = vsel %vm3949, %v3948, %v3946
  %s3951 = scalar_lea.vmem %s0, 1259
  %v3952 = vld [vmem:[%s3951] sm:$0x80]
  %vm3953 = vcmask 1047559
  %v3954 = vsel %vm3953, %v3952, %v3950
  %3955 = vrot.lane.b32.xlu0 %v3954, 72
  %v3956 = vpop.permute.xlu0 %3955
  %vm3957 = vcmask 622144
  %s3958 = scalar_lea.vmem %s1, 32
  %3959 = vst.msk [vmem:[%s3958] sm:$0xff] %vm3957, %v3956
  %s3960 = scalar_lea.vmem %s0, 274
  %v3961 = vld [vmem:[%s3960] sm:$0x1]
  %s3962 = scalar_lea.vmem %s0, 305
  %v3963 = vld [vmem:[%s3962] sm:$0x2]
  %vm3964 = vcmask 1041409
  %v3965 = vsel %vm3964, %v3963, %v3961
  %s3966 = scalar_lea.vmem %s0, 336
  %v3967 = vld [vmem:[%s3966] sm:$0x4]
  %vm3968 = vcmask 1042434
  %v3969 = vsel %vm3968, %v3967, %v3965
  %s3970 = scalar_lea.vmem %s0, 367
  %v3971 = vld [vmem:[%s3970] sm:$0x8]
  %vm3972 = vcmask 1043459
  %v3973 = vsel %vm3972, %v3971, %v3969
  %s3974 = scalar_lea.vmem %s0, 398
  %v3975 = vld [vmem:[%s3974] sm:$0x10]
  %vm3976 = vcmask 1044484
  %v3977 = vsel %vm3976, %v3975, %v3973
  %s3978 = scalar_lea.vmem %s0, 429
  %v3979 = vld [vmem:[%s3978] sm:$0x20]
  %vm3980 = vcmask 1045509
  %v3981 = vsel %vm3980, %v3979, %v3977
  %s3982 = scalar_lea.vmem %s0, 460
  %v3983 = vld [vmem:[%s3982] sm:$0x40]
  %vm3984 = vcmask 1046534
  %v3985 = vsel %vm3984, %v3983, %v3981
  %s3986 = scalar_lea.vmem %s0, 491
  %v3987 = vld [vmem:[%s3986] sm:$0x80]
  %vm3988 = vcmask 1047559
  %v3989 = vsel %vm3988, %v3987, %v3985
  %3990 = vrot.lane.b32.xlu0 %v3989, 72
  %v3991 = vpop.permute.xlu0 %3990
  %vm3992 = vcmask 622144
  %s3993 = scalar_lea.vmem %s1, 8
  %3994 = vst.msk [vmem:[%s3993] sm:$0xff] %vm3992, %v3991
  %s3995 = scalar_lea.vmem %s0, 1298
  %v3996 = vld [vmem:[%s3995] sm:$0x1]
  %s3997 = scalar_lea.vmem %s0, 1329
  %v3998 = vld [vmem:[%s3997] sm:$0x2]
  %vm3999 = vcmask 1041409
  %v4000 = vsel %vm3999, %v3998, %v3996
  %s4001 = scalar_lea.vmem %s0, 1360
  %v4002 = vld [vmem:[%s4001] sm:$0x4]
  %vm4003 = vcmask 1042434
  %v4004 = vsel %vm4003, %v4002, %v4000
  %s4005 = scalar_lea.vmem %s0, 1391
  %v4006 = vld [vmem:[%s4005] sm:$0x8]
  %vm4007 = vcmask 1043459
  %v4008 = vsel %vm4007, %v4006, %v4004
  %s4009 = scalar_lea.vmem %s0, 1422
  %v4010 = vld [vmem:[%s4009] sm:$0x10]
  %vm4011 = vcmask 1044484
  %v4012 = vsel %vm4011, %v4010, %v4008
  %s4013 = scalar_lea.vmem %s0, 1453
  %v4014 = vld [vmem:[%s4013] sm:$0x20]
  %vm4015 = vcmask 1045509
  %v4016 = vsel %vm4015, %v4014, %v4012
  %s4017 = scalar_lea.vmem %s0, 1484
  %v4018 = vld [vmem:[%s4017] sm:$0x40]
  %vm4019 = vcmask 1046534
  %v4020 = vsel %vm4019, %v4018, %v4016
  %s4021 = scalar_lea.vmem %s0, 1515
  %v4022 = vld [vmem:[%s4021] sm:$0x80]
  %vm4023 = vcmask 1047559
  %v4024 = vsel %vm4023, %v4022, %v4020
  %4025 = vrot.lane.b32.xlu0 %v4024, 72
  %v4026 = vpop.permute.xlu0 %4025
  %vm4027 = vcmask 622144
  %s4028 = scalar_lea.vmem %s1, 40
  %4029 = vst.msk [vmem:[%s4028] sm:$0xff] %vm4027, %v4026
  %s4030 = scalar_lea.vmem %s0, 530
  %v4031 = vld [vmem:[%s4030] sm:$0x1]
  %s4032 = scalar_lea.vmem %s0, 561
  %v4033 = vld [vmem:[%s4032] sm:$0x2]
  %vm4034 = vcmask 1041409
  %v4035 = vsel %vm4034, %v4033, %v4031
  %s4036 = scalar_lea.vmem %s0, 592
  %v4037 = vld [vmem:[%s4036] sm:$0x4]
  %vm4038 = vcmask 1042434
  %v4039 = vsel %vm4038, %v4037, %v4035
  %s4040 = scalar_lea.vmem %s0, 623
  %v4041 = vld [vmem:[%s4040] sm:$0x8]
  %vm4042 = vcmask 1043459
  %v4043 = vsel %vm4042, %v4041, %v4039
  %s4044 = scalar_lea.vmem %s0, 654
  %v4045 = vld [vmem:[%s4044] sm:$0x10]
  %vm4046 = vcmask 1044484
  %v4047 = vsel %vm4046, %v4045, %v4043
  %s4048 = scalar_lea.vmem %s0, 685
  %v4049 = vld [vmem:[%s4048] sm:$0x20]
  %vm4050 = vcmask 1045509
  %v4051 = vsel %vm4050, %v4049, %v4047
  %s4052 = scalar_lea.vmem %s0, 716
  %v4053 = vld [vmem:[%s4052] sm:$0x40]
  %vm4054 = vcmask 1046534
  %v4055 = vsel %vm4054, %v4053, %v4051
  %s4056 = scalar_lea.vmem %s0, 747
  %v4057 = vld [vmem:[%s4056] sm:$0x80]
  %vm4058 = vcmask 1047559
  %v4059 = vsel %vm4058, %v4057, %v4055
  %4060 = vrot.lane.b32.xlu0 %v4059, 72
  %v4061 = vpop.permute.xlu0 %4060
  %vm4062 = vcmask 622144
  %s4063 = scalar_lea.vmem %s1, 16
  %4064 = vst.msk [vmem:[%s4063] sm:$0xff] %vm4062, %v4061
  %s4065 = scalar_lea.vmem %s0, 1554
  %v4066 = vld [vmem:[%s4065] sm:$0x1]
  %s4067 = scalar_lea.vmem %s0, 1585
  %v4068 = vld [vmem:[%s4067] sm:$0x2]
  %vm4069 = vcmask 1041409
  %v4070 = vsel %vm4069, %v4068, %v4066
  %s4071 = scalar_lea.vmem %s0, 1616
  %v4072 = vld [vmem:[%s4071] sm:$0x4]
  %vm4073 = vcmask 1042434
  %v4074 = vsel %vm4073, %v4072, %v4070
  %s4075 = scalar_lea.vmem %s0, 1647
  %v4076 = vld [vmem:[%s4075] sm:$0x8]
  %vm4077 = vcmask 1043459
  %v4078 = vsel %vm4077, %v4076, %v4074
  %s4079 = scalar_lea.vmem %s0, 1678
  %v4080 = vld [vmem:[%s4079] sm:$0x10]
  %vm4081 = vcmask 1044484
  %v4082 = vsel %vm4081, %v4080, %v4078
  %s4083 = scalar_lea.vmem %s0, 1709
  %v4084 = vld [vmem:[%s4083] sm:$0x20]
  %vm4085 = vcmask 1045509
  %v4086 = vsel %vm4085, %v4084, %v4082
  %s4087 = scalar_lea.vmem %s0, 1740
  %v4088 = vld [vmem:[%s4087] sm:$0x40]
  %vm4089 = vcmask 1046534
  %v4090 = vsel %vm4089, %v4088, %v4086
  %s4091 = scalar_lea.vmem %s0, 1771
  %v4092 = vld [vmem:[%s4091] sm:$0x80]
  %vm4093 = vcmask 1047559
  %v4094 = vsel %vm4093, %v4092, %v4090
  %4095 = vrot.lane.b32.xlu0 %v4094, 72
  %v4096 = vpop.permute.xlu0 %4095
  %vm4097 = vcmask 622144
  %s4098 = scalar_lea.vmem %s1, 48
  %4099 = vst.msk [vmem:[%s4098] sm:$0xff] %vm4097, %v4096
  %s4100 = scalar_lea.vmem %s0, 786
  %v4101 = vld [vmem:[%s4100] sm:$0x1]
  %s4102 = scalar_lea.vmem %s0, 817
  %v4103 = vld [vmem:[%s4102] sm:$0x2]
  %vm4104 = vcmask 1041409
  %v4105 = vsel %vm4104, %v4103, %v4101
  %s4106 = scalar_lea.vmem %s0, 848
  %v4107 = vld [vmem:[%s4106] sm:$0x4]
  %vm4108 = vcmask 1042434
  %v4109 = vsel %vm4108, %v4107, %v4105
  %s4110 = scalar_lea.vmem %s0, 879
  %v4111 = vld [vmem:[%s4110] sm:$0x8]
  %vm4112 = vcmask 1043459
  %v4113 = vsel %vm4112, %v4111, %v4109
  %s4114 = scalar_lea.vmem %s0, 910
  %v4115 = vld [vmem:[%s4114] sm:$0x10]
  %vm4116 = vcmask 1044484
  %v4117 = vsel %vm4116, %v4115, %v4113
  %s4118 = scalar_lea.vmem %s0, 941
  %v4119 = vld [vmem:[%s4118] sm:$0x20]
  %vm4120 = vcmask 1045509
  %v4121 = vsel %vm4120, %v4119, %v4117
  %s4122 = scalar_lea.vmem %s0, 972
  %v4123 = vld [vmem:[%s4122] sm:$0x40]
  %vm4124 = vcmask 1046534
  %v4125 = vsel %vm4124, %v4123, %v4121
  %s4126 = scalar_lea.vmem %s0, 1003
  %v4127 = vld [vmem:[%s4126] sm:$0x80]
  %vm4128 = vcmask 1047559
  %v4129 = vsel %vm4128, %v4127, %v4125
  %4130 = vrot.lane.b32.xlu0 %v4129, 72
  %v4131 = vpop.permute.xlu0 %4130
  %vm4132 = vcmask 622144
  %s4133 = scalar_lea.vmem %s1, 24
  %4134 = vst.msk [vmem:[%s4133] sm:$0xff] %vm4132, %v4131
  %s4135 = scalar_lea.vmem %s0, 1810
  %v4136 = vld [vmem:[%s4135] sm:$0x1]
  %s4137 = scalar_lea.vmem %s0, 1841
  %v4138 = vld [vmem:[%s4137] sm:$0x2]
  %vm4139 = vcmask 1041409
  %v4140 = vsel %vm4139, %v4138, %v4136
  %s4141 = scalar_lea.vmem %s0, 1872
  %v4142 = vld [vmem:[%s4141] sm:$0x4]
  %vm4143 = vcmask 1042434
  %v4144 = vsel %vm4143, %v4142, %v4140
  %s4145 = scalar_lea.vmem %s0, 1903
  %v4146 = vld [vmem:[%s4145] sm:$0x8]
  %vm4147 = vcmask 1043459
  %v4148 = vsel %vm4147, %v4146, %v4144
  %s4149 = scalar_lea.vmem %s0, 1934
  %v4150 = vld [vmem:[%s4149] sm:$0x10]
  %vm4151 = vcmask 1044484
  %v4152 = vsel %vm4151, %v4150, %v4148
  %s4153 = scalar_lea.vmem %s0, 1965
  %v4154 = vld [vmem:[%s4153] sm:$0x20]
  %vm4155 = vcmask 1045509
  %v4156 = vsel %vm4155, %v4154, %v4152
  %s4157 = scalar_lea.vmem %s0, 1996
  %v4158 = vld [vmem:[%s4157] sm:$0x40]
  %vm4159 = vcmask 1046534
  %v4160 = vsel %vm4159, %v4158, %v4156
  %s4161 = scalar_lea.vmem %s0, 2027
  %v4162 = vld [vmem:[%s4161] sm:$0x80]
  %vm4163 = vcmask 1047559
  %v4164 = vsel %vm4163, %v4162, %v4160
  %4165 = vrot.lane.b32.xlu0 %v4164, 72
  %v4166 = vpop.permute.xlu0 %4165
  %vm4167 = vcmask 622144
  %s4168 = scalar_lea.vmem %s1, 56
  %4169 = vst.msk [vmem:[%s4168] sm:$0xff] %vm4167, %v4166
  %s4170 = scalar_lea.vmem %s0, 17
  %v4171 = vld [vmem:[%s4170] sm:$0x1]
  %s4172 = scalar_lea.vmem %s0, 48
  %v4173 = vld [vmem:[%s4172] sm:$0x2]
  %vm4174 = vcmask 1041409
  %v4175 = vsel %vm4174, %v4173, %v4171
  %s4176 = scalar_lea.vmem %s0, 79
  %v4177 = vld [vmem:[%s4176] sm:$0x4]
  %vm4178 = vcmask 1042434
  %v4179 = vsel %vm4178, %v4177, %v4175
  %s4180 = scalar_lea.vmem %s0, 110
  %v4181 = vld [vmem:[%s4180] sm:$0x8]
  %vm4182 = vcmask 1043459
  %v4183 = vsel %vm4182, %v4181, %v4179
  %s4184 = scalar_lea.vmem %s0, 141
  %v4185 = vld [vmem:[%s4184] sm:$0x10]
  %vm4186 = vcmask 1044484
  %v4187 = vsel %vm4186, %v4185, %v4183
  %s4188 = scalar_lea.vmem %s0, 172
  %v4189 = vld [vmem:[%s4188] sm:$0x20]
  %vm4190 = vcmask 1045509
  %v4191 = vsel %vm4190, %v4189, %v4187
  %s4192 = scalar_lea.vmem %s0, 203
  %v4193 = vld [vmem:[%s4192] sm:$0x40]
  %vm4194 = vcmask 1046534
  %v4195 = vsel %vm4194, %v4193, %v4191
  %s4196 = scalar_lea.vmem %s0, 234
  %v4197 = vld [vmem:[%s4196] sm:$0x80]
  %vm4198 = vcmask 1047559
  %v4199 = vsel %vm4198, %v4197, %v4195
  %4200 = vrot.lane.b32.xlu0 %v4199, 68
  %v4201 = vpop.permute.xlu0 %4200
  %vm4202 = vcmask 589344
  %4203 = vst.msk [vmem:[%s1] sm:$0xff] %vm4202, %v4201
  %s4204 = scalar_lea.vmem %s0, 1041
  %v4205 = vld [vmem:[%s4204] sm:$0x1]
  %s4206 = scalar_lea.vmem %s0, 1072
  %v4207 = vld [vmem:[%s4206] sm:$0x2]
  %vm4208 = vcmask 1041409
  %v4209 = vsel %vm4208, %v4207, %v4205
  %s4210 = scalar_lea.vmem %s0, 1103
  %v4211 = vld [vmem:[%s4210] sm:$0x4]
  %vm4212 = vcmask 1042434
  %v4213 = vsel %vm4212, %v4211, %v4209
  %s4214 = scalar_lea.vmem %s0, 1134
  %v4215 = vld [vmem:[%s4214] sm:$0x8]
  %vm4216 = vcmask 1043459
  %v4217 = vsel %vm4216, %v4215, %v4213
  %s4218 = scalar_lea.vmem %s0, 1165
  %v4219 = vld [vmem:[%s4218] sm:$0x10]
  %vm4220 = vcmask 1044484
  %v4221 = vsel %vm4220, %v4219, %v4217
  %s4222 = scalar_lea.vmem %s0, 1196
  %v4223 = vld [vmem:[%s4222] sm:$0x20]
  %vm4224 = vcmask 1045509
  %v4225 = vsel %vm4224, %v4223, %v4221
  %s4226 = scalar_lea.vmem %s0, 1227
  %v4227 = vld [vmem:[%s4226] sm:$0x40]
  %vm4228 = vcmask 1046534
  %v4229 = vsel %vm4228, %v4227, %v4225
  %s4230 = scalar_lea.vmem %s0, 1258
  %v4231 = vld [vmem:[%s4230] sm:$0x80]
  %vm4232 = vcmask 1047559
  %v4233 = vsel %vm4232, %v4231, %v4229
  %4234 = vrot.lane.b32.xlu0 %v4233, 68
  %v4235 = vpop.permute.xlu0 %4234
  %vm4236 = vcmask 589344
  %s4237 = scalar_lea.vmem %s1, 32
  %4238 = vst.msk [vmem:[%s4237] sm:$0xff] %vm4236, %v4235
  %s4239 = scalar_lea.vmem %s0, 273
  %v4240 = vld [vmem:[%s4239] sm:$0x1]
  %s4241 = scalar_lea.vmem %s0, 304
  %v4242 = vld [vmem:[%s4241] sm:$0x2]
  %vm4243 = vcmask 1041409
  %v4244 = vsel %vm4243, %v4242, %v4240
  %s4245 = scalar_lea.vmem %s0, 335
  %v4246 = vld [vmem:[%s4245] sm:$0x4]
  %vm4247 = vcmask 1042434
  %v4248 = vsel %vm4247, %v4246, %v4244
  %s4249 = scalar_lea.vmem %s0, 366
  %v4250 = vld [vmem:[%s4249] sm:$0x8]
  %vm4251 = vcmask 1043459
  %v4252 = vsel %vm4251, %v4250, %v4248
  %s4253 = scalar_lea.vmem %s0, 397
  %v4254 = vld [vmem:[%s4253] sm:$0x10]
  %vm4255 = vcmask 1044484
  %v4256 = vsel %vm4255, %v4254, %v4252
  %s4257 = scalar_lea.vmem %s0, 428
  %v4258 = vld [vmem:[%s4257] sm:$0x20]
  %vm4259 = vcmask 1045509
  %v4260 = vsel %vm4259, %v4258, %v4256
  %s4261 = scalar_lea.vmem %s0, 459
  %v4262 = vld [vmem:[%s4261] sm:$0x40]
  %vm4263 = vcmask 1046534
  %v4264 = vsel %vm4263, %v4262, %v4260
  %s4265 = scalar_lea.vmem %s0, 490
  %v4266 = vld [vmem:[%s4265] sm:$0x80]
  %vm4267 = vcmask 1047559
  %v4268 = vsel %vm4267, %v4266, %v4264
  %4269 = vrot.lane.b32.xlu0 %v4268, 68
  %v4270 = vpop.permute.xlu0 %4269
  %vm4271 = vcmask 589344
  %s4272 = scalar_lea.vmem %s1, 8
  %4273 = vst.msk [vmem:[%s4272] sm:$0xff] %vm4271, %v4270
  %s4274 = scalar_lea.vmem %s0, 1297
  %v4275 = vld [vmem:[%s4274] sm:$0x1]
  %s4276 = scalar_lea.vmem %s0, 1328
  %v4277 = vld [vmem:[%s4276] sm:$0x2]
  %vm4278 = vcmask 1041409
  %v4279 = vsel %vm4278, %v4277, %v4275
  %s4280 = scalar_lea.vmem %s0, 1359
  %v4281 = vld [vmem:[%s4280] sm:$0x4]
  %vm4282 = vcmask 1042434
  %v4283 = vsel %vm4282, %v4281, %v4279
  %s4284 = scalar_lea.vmem %s0, 1390
  %v4285 = vld [vmem:[%s4284] sm:$0x8]
  %vm4286 = vcmask 1043459
  %v4287 = vsel %vm4286, %v4285, %v4283
  %s4288 = scalar_lea.vmem %s0, 1421
  %v4289 = vld [vmem:[%s4288] sm:$0x10]
  %vm4290 = vcmask 1044484
  %v4291 = vsel %vm4290, %v4289, %v4287
  %s4292 = scalar_lea.vmem %s0, 1452
  %v4293 = vld [vmem:[%s4292] sm:$0x20]
  %vm4294 = vcmask 1045509
  %v4295 = vsel %vm4294, %v4293, %v4291
  %s4296 = scalar_lea.vmem %s0, 1483
  %v4297 = vld [vmem:[%s4296] sm:$0x40]
  %vm4298 = vcmask 1046534
  %v4299 = vsel %vm4298, %v4297, %v4295
  %s4300 = scalar_lea.vmem %s0, 1514
  %v4301 = vld [vmem:[%s4300] sm:$0x80]
  %vm4302 = vcmask 1047559
  %v4303 = vsel %vm4302, %v4301, %v4299
  %4304 = vrot.lane.b32.xlu0 %v4303, 68
  %v4305 = vpop.permute.xlu0 %4304
  %vm4306 = vcmask 589344
  %s4307 = scalar_lea.vmem %s1, 40
  %4308 = vst.msk [vmem:[%s4307] sm:$0xff] %vm4306, %v4305
  %s4309 = scalar_lea.vmem %s0, 529
  %v4310 = vld [vmem:[%s4309] sm:$0x1]
  %s4311 = scalar_lea.vmem %s0, 560
  %v4312 = vld [vmem:[%s4311] sm:$0x2]
  %vm4313 = vcmask 1041409
  %v4314 = vsel %vm4313, %v4312, %v4310
  %s4315 = scalar_lea.vmem %s0, 591
  %v4316 = vld [vmem:[%s4315] sm:$0x4]
  %vm4317 = vcmask 1042434
  %v4318 = vsel %vm4317, %v4316, %v4314
  %s4319 = scalar_lea.vmem %s0, 622
  %v4320 = vld [vmem:[%s4319] sm:$0x8]
  %vm4321 = vcmask 1043459
  %v4322 = vsel %vm4321, %v4320, %v4318
  %s4323 = scalar_lea.vmem %s0, 653
  %v4324 = vld [vmem:[%s4323] sm:$0x10]
  %vm4325 = vcmask 1044484
  %v4326 = vsel %vm4325, %v4324, %v4322
  %s4327 = scalar_lea.vmem %s0, 684
  %v4328 = vld [vmem:[%s4327] sm:$0x20]
  %vm4329 = vcmask 1045509
  %v4330 = vsel %vm4329, %v4328, %v4326
  %s4331 = scalar_lea.vmem %s0, 715
  %v4332 = vld [vmem:[%s4331] sm:$0x40]
  %vm4333 = vcmask 1046534
  %v4334 = vsel %vm4333, %v4332, %v4330
  %s4335 = scalar_lea.vmem %s0, 746
  %v4336 = vld [vmem:[%s4335] sm:$0x80]
  %vm4337 = vcmask 1047559
  %v4338 = vsel %vm4337, %v4336, %v4334
  %4339 = vrot.lane.b32.xlu0 %v4338, 68
  %v4340 = vpop.permute.xlu0 %4339
  %vm4341 = vcmask 589344
  %s4342 = scalar_lea.vmem %s1, 16
  %4343 = vst.msk [vmem:[%s4342] sm:$0xff] %vm4341, %v4340
  %s4344 = scalar_lea.vmem %s0, 1553
  %v4345 = vld [vmem:[%s4344] sm:$0x1]
  %s4346 = scalar_lea.vmem %s0, 1584
  %v4347 = vld [vmem:[%s4346] sm:$0x2]
  %vm4348 = vcmask 1041409
  %v4349 = vsel %vm4348, %v4347, %v4345
  %s4350 = scalar_lea.vmem %s0, 1615
  %v4351 = vld [vmem:[%s4350] sm:$0x4]
  %vm4352 = vcmask 1042434
  %v4353 = vsel %vm4352, %v4351, %v4349
  %s4354 = scalar_lea.vmem %s0, 1646
  %v4355 = vld [vmem:[%s4354] sm:$0x8]
  %vm4356 = vcmask 1043459
  %v4357 = vsel %vm4356, %v4355, %v4353
  %s4358 = scalar_lea.vmem %s0, 1677
  %v4359 = vld [vmem:[%s4358] sm:$0x10]
  %vm4360 = vcmask 1044484
  %v4361 = vsel %vm4360, %v4359, %v4357
  %s4362 = scalar_lea.vmem %s0, 1708
  %v4363 = vld [vmem:[%s4362] sm:$0x20]
  %vm4364 = vcmask 1045509
  %v4365 = vsel %vm4364, %v4363, %v4361
  %s4366 = scalar_lea.vmem %s0, 1739
  %v4367 = vld [vmem:[%s4366] sm:$0x40]
  %vm4368 = vcmask 1046534
  %v4369 = vsel %vm4368, %v4367, %v4365
  %s4370 = scalar_lea.vmem %s0, 1770
  %v4371 = vld [vmem:[%s4370] sm:$0x80]
  %vm4372 = vcmask 1047559
  %v4373 = vsel %vm4372, %v4371, %v4369
  %4374 = vrot.lane.b32.xlu0 %v4373, 68
  %v4375 = vpop.permute.xlu0 %4374
  %vm4376 = vcmask 589344
  %s4377 = scalar_lea.vmem %s1, 48
  %4378 = vst.msk [vmem:[%s4377] sm:$0xff] %vm4376, %v4375
  %s4379 = scalar_lea.vmem %s0, 785
  %v4380 = vld [vmem:[%s4379] sm:$0x1]
  %s4381 = scalar_lea.vmem %s0, 816
  %v4382 = vld [vmem:[%s4381] sm:$0x2]
  %vm4383 = vcmask 1041409
  %v4384 = vsel %vm4383, %v4382, %v4380
  %s4385 = scalar_lea.vmem %s0, 847
  %v4386 = vld [vmem:[%s4385] sm:$0x4]
  %vm4387 = vcmask 1042434
  %v4388 = vsel %vm4387, %v4386, %v4384
  %s4389 = scalar_lea.vmem %s0, 878
  %v4390 = vld [vmem:[%s4389] sm:$0x8]
  %vm4391 = vcmask 1043459
  %v4392 = vsel %vm4391, %v4390, %v4388
  %s4393 = scalar_lea.vmem %s0, 909
  %v4394 = vld [vmem:[%s4393] sm:$0x10]
  %vm4395 = vcmask 1044484
  %v4396 = vsel %vm4395, %v4394, %v4392
  %s4397 = scalar_lea.vmem %s0, 940
  %v4398 = vld [vmem:[%s4397] sm:$0x20]
  %vm4399 = vcmask 1045509
  %v4400 = vsel %vm4399, %v4398, %v4396
  %s4401 = scalar_lea.vmem %s0, 971
  %v4402 = vld [vmem:[%s4401] sm:$0x40]
  %vm4403 = vcmask 1046534
  %v4404 = vsel %vm4403, %v4402, %v4400
  %s4405 = scalar_lea.vmem %s0, 1002
  %v4406 = vld [vmem:[%s4405] sm:$0x80]
  %vm4407 = vcmask 1047559
  %v4408 = vsel %vm4407, %v4406, %v4404
  %4409 = vrot.lane.b32.xlu0 %v4408, 68
  %v4410 = vpop.permute.xlu0 %4409
  %vm4411 = vcmask 589344
  %s4412 = scalar_lea.vmem %s1, 24
  %4413 = vst.msk [vmem:[%s4412] sm:$0xff] %vm4411, %v4410
  %s4414 = scalar_lea.vmem %s0, 1809
  %v4415 = vld [vmem:[%s4414] sm:$0x1]
  %s4416 = scalar_lea.vmem %s0, 1840
  %v4417 = vld [vmem:[%s4416] sm:$0x2]
  %vm4418 = vcmask 1041409
  %v4419 = vsel %vm4418, %v4417, %v4415
  %s4420 = scalar_lea.vmem %s0, 1871
  %v4421 = vld [vmem:[%s4420] sm:$0x4]
  %vm4422 = vcmask 1042434
  %v4423 = vsel %vm4422, %v4421, %v4419
  %s4424 = scalar_lea.vmem %s0, 1902
  %v4425 = vld [vmem:[%s4424] sm:$0x8]
  %vm4426 = vcmask 1043459
  %v4427 = vsel %vm4426, %v4425, %v4423
  %s4428 = scalar_lea.vmem %s0, 1933
  %v4429 = vld [vmem:[%s4428] sm:$0x10]
  %vm4430 = vcmask 1044484
  %v4431 = vsel %vm4430, %v4429, %v4427
  %s4432 = scalar_lea.vmem %s0, 1964
  %v4433 = vld [vmem:[%s4432] sm:$0x20]
  %vm4434 = vcmask 1045509
  %v4435 = vsel %vm4434, %v4433, %v4431
  %s4436 = scalar_lea.vmem %s0, 1995
  %v4437 = vld [vmem:[%s4436] sm:$0x40]
  %vm4438 = vcmask 1046534
  %v4439 = vsel %vm4438, %v4437, %v4435
  %s4440 = scalar_lea.vmem %s0, 2026
  %v4441 = vld [vmem:[%s4440] sm:$0x80]
  %vm4442 = vcmask 1047559
  %v4443 = vsel %vm4442, %v4441, %v4439
  %4444 = vrot.lane.b32.xlu0 %v4443, 68
  %v4445 = vpop.permute.xlu0 %4444
  %vm4446 = vcmask 589344
  %s4447 = scalar_lea.vmem %s1, 56
  %4448 = vst.msk [vmem:[%s4447] sm:$0xff] %vm4446, %v4445
  %s4449 = scalar_lea.vmem %s0, 16
  %v4450 = vld [vmem:[%s4449] sm:$0x1]
  %s4451 = scalar_lea.vmem %s0, 47
  %v4452 = vld [vmem:[%s4451] sm:$0x2]
  %vm4453 = vcmask 1041409
  %v4454 = vsel %vm4453, %v4452, %v4450
  %s4455 = scalar_lea.vmem %s0, 78
  %v4456 = vld [vmem:[%s4455] sm:$0x4]
  %vm4457 = vcmask 1042434
  %v4458 = vsel %vm4457, %v4456, %v4454
  %s4459 = scalar_lea.vmem %s0, 109
  %v4460 = vld [vmem:[%s4459] sm:$0x8]
  %vm4461 = vcmask 1043459
  %v4462 = vsel %vm4461, %v4460, %v4458
  %s4463 = scalar_lea.vmem %s0, 140
  %v4464 = vld [vmem:[%s4463] sm:$0x10]
  %vm4465 = vcmask 1044484
  %v4466 = vsel %vm4465, %v4464, %v4462
  %s4467 = scalar_lea.vmem %s0, 171
  %v4468 = vld [vmem:[%s4467] sm:$0x20]
  %vm4469 = vcmask 1045509
  %v4470 = vsel %vm4469, %v4468, %v4466
  %s4471 = scalar_lea.vmem %s0, 202
  %v4472 = vld [vmem:[%s4471] sm:$0x40]
  %vm4473 = vcmask 1046534
  %v4474 = vsel %vm4473, %v4472, %v4470
  %s4475 = scalar_lea.vmem %s0, 233
  %v4476 = vld [vmem:[%s4475] sm:$0x80]
  %vm4477 = vcmask 1047559
  %v4478 = vsel %vm4477, %v4476, %v4474
  %4479 = vrot.lane.b32.xlu0 %v4478, 64
  %v4480 = vpop.permute.xlu0 %4479
  %vm4481 = vcmask 556544
  %4482 = vst.msk [vmem:[%s1] sm:$0xff] %vm4481, %v4480
  %s4483 = scalar_lea.vmem %s0, 1040
  %v4484 = vld [vmem:[%s4483] sm:$0x1]
  %s4485 = scalar_lea.vmem %s0, 1071
  %v4486 = vld [vmem:[%s4485] sm:$0x2]
  %vm4487 = vcmask 1041409
  %v4488 = vsel %vm4487, %v4486, %v4484
  %s4489 = scalar_lea.vmem %s0, 1102
  %v4490 = vld [vmem:[%s4489] sm:$0x4]
  %vm4491 = vcmask 1042434
  %v4492 = vsel %vm4491, %v4490, %v4488
  %s4493 = scalar_lea.vmem %s0, 1133
  %v4494 = vld [vmem:[%s4493] sm:$0x8]
  %vm4495 = vcmask 1043459
  %v4496 = vsel %vm4495, %v4494, %v4492
  %s4497 = scalar_lea.vmem %s0, 1164
  %v4498 = vld [vmem:[%s4497] sm:$0x10]
  %vm4499 = vcmask 1044484
  %v4500 = vsel %vm4499, %v4498, %v4496
  %s4501 = scalar_lea.vmem %s0, 1195
  %v4502 = vld [vmem:[%s4501] sm:$0x20]
  %vm4503 = vcmask 1045509
  %v4504 = vsel %vm4503, %v4502, %v4500
  %s4505 = scalar_lea.vmem %s0, 1226
  %v4506 = vld [vmem:[%s4505] sm:$0x40]
  %vm4507 = vcmask 1046534
  %v4508 = vsel %vm4507, %v4506, %v4504
  %s4509 = scalar_lea.vmem %s0, 1257
  %v4510 = vld [vmem:[%s4509] sm:$0x80]
  %vm4511 = vcmask 1047559
  %v4512 = vsel %vm4511, %v4510, %v4508
  %4513 = vrot.lane.b32.xlu0 %v4512, 64
  %v4514 = vpop.permute.xlu0 %4513
  %vm4515 = vcmask 556544
  %s4516 = scalar_lea.vmem %s1, 32
  %4517 = vst.msk [vmem:[%s4516] sm:$0xff] %vm4515, %v4514
  %s4518 = scalar_lea.vmem %s0, 272
  %v4519 = vld [vmem:[%s4518] sm:$0x1]
  %s4520 = scalar_lea.vmem %s0, 303
  %v4521 = vld [vmem:[%s4520] sm:$0x2]
  %vm4522 = vcmask 1041409
  %v4523 = vsel %vm4522, %v4521, %v4519
  %s4524 = scalar_lea.vmem %s0, 334
  %v4525 = vld [vmem:[%s4524] sm:$0x4]
  %vm4526 = vcmask 1042434
  %v4527 = vsel %vm4526, %v4525, %v4523
  %s4528 = scalar_lea.vmem %s0, 365
  %v4529 = vld [vmem:[%s4528] sm:$0x8]
  %vm4530 = vcmask 1043459
  %v4531 = vsel %vm4530, %v4529, %v4527
  %s4532 = scalar_lea.vmem %s0, 396
  %v4533 = vld [vmem:[%s4532] sm:$0x10]
  %vm4534 = vcmask 1044484
  %v4535 = vsel %vm4534, %v4533, %v4531
  %s4536 = scalar_lea.vmem %s0, 427
  %v4537 = vld [vmem:[%s4536] sm:$0x20]
  %vm4538 = vcmask 1045509
  %v4539 = vsel %vm4538, %v4537, %v4535
  %s4540 = scalar_lea.vmem %s0, 458
  %v4541 = vld [vmem:[%s4540] sm:$0x40]
  %vm4542 = vcmask 1046534
  %v4543 = vsel %vm4542, %v4541, %v4539
  %s4544 = scalar_lea.vmem %s0, 489
  %v4545 = vld [vmem:[%s4544] sm:$0x80]
  %vm4546 = vcmask 1047559
  %v4547 = vsel %vm4546, %v4545, %v4543
  %4548 = vrot.lane.b32.xlu0 %v4547, 64
  %v4549 = vpop.permute.xlu0 %4548
  %vm4550 = vcmask 556544
  %s4551 = scalar_lea.vmem %s1, 8
  %4552 = vst.msk [vmem:[%s4551] sm:$0xff] %vm4550, %v4549
  %s4553 = scalar_lea.vmem %s0, 1296
  %v4554 = vld [vmem:[%s4553] sm:$0x1]
  %s4555 = scalar_lea.vmem %s0, 1327
  %v4556 = vld [vmem:[%s4555] sm:$0x2]
  %vm4557 = vcmask 1041409
  %v4558 = vsel %vm4557, %v4556, %v4554
  %s4559 = scalar_lea.vmem %s0, 1358
  %v4560 = vld [vmem:[%s4559] sm:$0x4]
  %vm4561 = vcmask 1042434
  %v4562 = vsel %vm4561, %v4560, %v4558
  %s4563 = scalar_lea.vmem %s0, 1389
  %v4564 = vld [vmem:[%s4563] sm:$0x8]
  %vm4565 = vcmask 1043459
  %v4566 = vsel %vm4565, %v4564, %v4562
  %s4567 = scalar_lea.vmem %s0, 1420
  %v4568 = vld [vmem:[%s4567] sm:$0x10]
  %vm4569 = vcmask 1044484
  %v4570 = vsel %vm4569, %v4568, %v4566
  %s4571 = scalar_lea.vmem %s0, 1451
  %v4572 = vld [vmem:[%s4571] sm:$0x20]
  %vm4573 = vcmask 1045509
  %v4574 = vsel %vm4573, %v4572, %v4570
  %s4575 = scalar_lea.vmem %s0, 1482
  %v4576 = vld [vmem:[%s4575] sm:$0x40]
  %vm4577 = vcmask 1046534
  %v4578 = vsel %vm4577, %v4576, %v4574
  %s4579 = scalar_lea.vmem %s0, 1513
  %v4580 = vld [vmem:[%s4579] sm:$0x80]
  %vm4581 = vcmask 1047559
  %v4582 = vsel %vm4581, %v4580, %v4578
  %4583 = vrot.lane.b32.xlu0 %v4582, 64
  %v4584 = vpop.permute.xlu0 %4583
  %vm4585 = vcmask 556544
  %s4586 = scalar_lea.vmem %s1, 40
  %4587 = vst.msk [vmem:[%s4586] sm:$0xff] %vm4585, %v4584
  %s4588 = scalar_lea.vmem %s0, 528
  %v4589 = vld [vmem:[%s4588] sm:$0x1]
  %s4590 = scalar_lea.vmem %s0, 559
  %v4591 = vld [vmem:[%s4590] sm:$0x2]
  %vm4592 = vcmask 1041409
  %v4593 = vsel %vm4592, %v4591, %v4589
  %s4594 = scalar_lea.vmem %s0, 590
  %v4595 = vld [vmem:[%s4594] sm:$0x4]
  %vm4596 = vcmask 1042434
  %v4597 = vsel %vm4596, %v4595, %v4593
  %s4598 = scalar_lea.vmem %s0, 621
  %v4599 = vld [vmem:[%s4598] sm:$0x8]
  %vm4600 = vcmask 1043459
  %v4601 = vsel %vm4600, %v4599, %v4597
  %s4602 = scalar_lea.vmem %s0, 652
  %v4603 = vld [vmem:[%s4602] sm:$0x10]
  %vm4604 = vcmask 1044484
  %v4605 = vsel %vm4604, %v4603, %v4601
  %s4606 = scalar_lea.vmem %s0, 683
  %v4607 = vld [vmem:[%s4606] sm:$0x20]
  %vm4608 = vcmask 1045509
  %v4609 = vsel %vm4608, %v4607, %v4605
  %s4610 = scalar_lea.vmem %s0, 714
  %v4611 = vld [vmem:[%s4610] sm:$0x40]
  %vm4612 = vcmask 1046534
  %v4613 = vsel %vm4612, %v4611, %v4609
  %s4614 = scalar_lea.vmem %s0, 745
  %v4615 = vld [vmem:[%s4614] sm:$0x80]
  %vm4616 = vcmask 1047559
  %v4617 = vsel %vm4616, %v4615, %v4613
  %4618 = vrot.lane.b32.xlu0 %v4617, 64
  %v4619 = vpop.permute.xlu0 %4618
  %vm4620 = vcmask 556544
  %s4621 = scalar_lea.vmem %s1, 16
  %4622 = vst.msk [vmem:[%s4621] sm:$0xff] %vm4620, %v4619
  %s4623 = scalar_lea.vmem %s0, 1552
  %v4624 = vld [vmem:[%s4623] sm:$0x1]
  %s4625 = scalar_lea.vmem %s0, 1583
  %v4626 = vld [vmem:[%s4625] sm:$0x2]
  %vm4627 = vcmask 1041409
  %v4628 = vsel %vm4627, %v4626, %v4624
  %s4629 = scalar_lea.vmem %s0, 1614
  %v4630 = vld [vmem:[%s4629] sm:$0x4]
  %vm4631 = vcmask 1042434
  %v4632 = vsel %vm4631, %v4630, %v4628
  %s4633 = scalar_lea.vmem %s0, 1645
  %v4634 = vld [vmem:[%s4633] sm:$0x8]
  %vm4635 = vcmask 1043459
  %v4636 = vsel %vm4635, %v4634, %v4632
  %s4637 = scalar_lea.vmem %s0, 1676
  %v4638 = vld [vmem:[%s4637] sm:$0x10]
  %vm4639 = vcmask 1044484
  %v4640 = vsel %vm4639, %v4638, %v4636
  %s4641 = scalar_lea.vmem %s0, 1707
  %v4642 = vld [vmem:[%s4641] sm:$0x20]
  %vm4643 = vcmask 1045509
  %v4644 = vsel %vm4643, %v4642, %v4640
  %s4645 = scalar_lea.vmem %s0, 1738
  %v4646 = vld [vmem:[%s4645] sm:$0x40]
  %vm4647 = vcmask 1046534
  %v4648 = vsel %vm4647, %v4646, %v4644
  %s4649 = scalar_lea.vmem %s0, 1769
  %v4650 = vld [vmem:[%s4649] sm:$0x80]
  %vm4651 = vcmask 1047559
  %v4652 = vsel %vm4651, %v4650, %v4648
  %4653 = vrot.lane.b32.xlu0 %v4652, 64
  %v4654 = vpop.permute.xlu0 %4653
  %vm4655 = vcmask 556544
  %s4656 = scalar_lea.vmem %s1, 48
  %4657 = vst.msk [vmem:[%s4656] sm:$0xff] %vm4655, %v4654
  %s4658 = scalar_lea.vmem %s0, 784
  %v4659 = vld [vmem:[%s4658] sm:$0x1]
  %s4660 = scalar_lea.vmem %s0, 815
  %v4661 = vld [vmem:[%s4660] sm:$0x2]
  %vm4662 = vcmask 1041409
  %v4663 = vsel %vm4662, %v4661, %v4659
  %s4664 = scalar_lea.vmem %s0, 846
  %v4665 = vld [vmem:[%s4664] sm:$0x4]
  %vm4666 = vcmask 1042434
  %v4667 = vsel %vm4666, %v4665, %v4663
  %s4668 = scalar_lea.vmem %s0, 877
  %v4669 = vld [vmem:[%s4668] sm:$0x8]
  %vm4670 = vcmask 1043459
  %v4671 = vsel %vm4670, %v4669, %v4667
  %s4672 = scalar_lea.vmem %s0, 908
  %v4673 = vld [vmem:[%s4672] sm:$0x10]
  %vm4674 = vcmask 1044484
  %v4675 = vsel %vm4674, %v4673, %v4671
  %s4676 = scalar_lea.vmem %s0, 939
  %v4677 = vld [vmem:[%s4676] sm:$0x20]
  %vm4678 = vcmask 1045509
  %v4679 = vsel %vm4678, %v4677, %v4675
  %s4680 = scalar_lea.vmem %s0, 970
  %v4681 = vld [vmem:[%s4680] sm:$0x40]
  %vm4682 = vcmask 1046534
  %v4683 = vsel %vm4682, %v4681, %v4679
  %s4684 = scalar_lea.vmem %s0, 1001
  %v4685 = vld [vmem:[%s4684] sm:$0x80]
  %vm4686 = vcmask 1047559
  %v4687 = vsel %vm4686, %v4685, %v4683
  %4688 = vrot.lane.b32.xlu0 %v4687, 64
  %v4689 = vpop.permute.xlu0 %4688
  %vm4690 = vcmask 556544
  %s4691 = scalar_lea.vmem %s1, 24
  %4692 = vst.msk [vmem:[%s4691] sm:$0xff] %vm4690, %v4689
  %s4693 = scalar_lea.vmem %s0, 1808
  %v4694 = vld [vmem:[%s4693] sm:$0x1]
  %s4695 = scalar_lea.vmem %s0, 1839
  %v4696 = vld [vmem:[%s4695] sm:$0x2]
  %vm4697 = vcmask 1041409
  %v4698 = vsel %vm4697, %v4696, %v4694
  %s4699 = scalar_lea.vmem %s0, 1870
  %v4700 = vld [vmem:[%s4699] sm:$0x4]
  %vm4701 = vcmask 1042434
  %v4702 = vsel %vm4701, %v4700, %v4698
  %s4703 = scalar_lea.vmem %s0, 1901
  %v4704 = vld [vmem:[%s4703] sm:$0x8]
  %vm4705 = vcmask 1043459
  %v4706 = vsel %vm4705, %v4704, %v4702
  %s4707 = scalar_lea.vmem %s0, 1932
  %v4708 = vld [vmem:[%s4707] sm:$0x10]
  %vm4709 = vcmask 1044484
  %v4710 = vsel %vm4709, %v4708, %v4706
  %s4711 = scalar_lea.vmem %s0, 1963
  %v4712 = vld [vmem:[%s4711] sm:$0x20]
  %vm4713 = vcmask 1045509
  %v4714 = vsel %vm4713, %v4712, %v4710
  %s4715 = scalar_lea.vmem %s0, 1994
  %v4716 = vld [vmem:[%s4715] sm:$0x40]
  %vm4717 = vcmask 1046534
  %v4718 = vsel %vm4717, %v4716, %v4714
  %s4719 = scalar_lea.vmem %s0, 2025
  %v4720 = vld [vmem:[%s4719] sm:$0x80]
  %vm4721 = vcmask 1047559
  %v4722 = vsel %vm4721, %v4720, %v4718
  %4723 = vrot.lane.b32.xlu0 %v4722, 64
  %v4724 = vpop.permute.xlu0 %4723
  %vm4725 = vcmask 556544
  %s4726 = scalar_lea.vmem %s1, 56
  %4727 = vst.msk [vmem:[%s4726] sm:$0xff] %vm4725, %v4724
  %s4728 = scalar_lea.vmem %s0, 15
  %v4729 = vld [vmem:[%s4728] sm:$0x1]
  %s4730 = scalar_lea.vmem %s0, 46
  %v4731 = vld [vmem:[%s4730] sm:$0x2]
  %vm4732 = vcmask 1041409
  %v4733 = vsel %vm4732, %v4731, %v4729
  %s4734 = scalar_lea.vmem %s0, 77
  %v4735 = vld [vmem:[%s4734] sm:$0x4]
  %vm4736 = vcmask 1042434
  %v4737 = vsel %vm4736, %v4735, %v4733
  %s4738 = scalar_lea.vmem %s0, 108
  %v4739 = vld [vmem:[%s4738] sm:$0x8]
  %vm4740 = vcmask 1043459
  %v4741 = vsel %vm4740, %v4739, %v4737
  %s4742 = scalar_lea.vmem %s0, 139
  %v4743 = vld [vmem:[%s4742] sm:$0x10]
  %vm4744 = vcmask 1044484
  %v4745 = vsel %vm4744, %v4743, %v4741
  %s4746 = scalar_lea.vmem %s0, 170
  %v4747 = vld [vmem:[%s4746] sm:$0x20]
  %vm4748 = vcmask 1045509
  %v4749 = vsel %vm4748, %v4747, %v4745
  %s4750 = scalar_lea.vmem %s0, 201
  %v4751 = vld [vmem:[%s4750] sm:$0x40]
  %vm4752 = vcmask 1046534
  %v4753 = vsel %vm4752, %v4751, %v4749
  %s4754 = scalar_lea.vmem %s0, 232
  %v4755 = vld [vmem:[%s4754] sm:$0x80]
  %vm4756 = vcmask 1047559
  %v4757 = vsel %vm4756, %v4755, %v4753
  %4758 = vrot.lane.b32.xlu0 %v4757, 60
  %v4759 = vpop.permute.xlu0 %4758
  %vm4760 = vcmask 523744
  %4761 = vst.msk [vmem:[%s1] sm:$0xff] %vm4760, %v4759
  %s4762 = scalar_lea.vmem %s0, 1039
  %v4763 = vld [vmem:[%s4762] sm:$0x1]
  %s4764 = scalar_lea.vmem %s0, 1070
  %v4765 = vld [vmem:[%s4764] sm:$0x2]
  %vm4766 = vcmask 1041409
  %v4767 = vsel %vm4766, %v4765, %v4763
  %s4768 = scalar_lea.vmem %s0, 1101
  %v4769 = vld [vmem:[%s4768] sm:$0x4]
  %vm4770 = vcmask 1042434
  %v4771 = vsel %vm4770, %v4769, %v4767
  %s4772 = scalar_lea.vmem %s0, 1132
  %v4773 = vld [vmem:[%s4772] sm:$0x8]
  %vm4774 = vcmask 1043459
  %v4775 = vsel %vm4774, %v4773, %v4771
  %s4776 = scalar_lea.vmem %s0, 1163
  %v4777 = vld [vmem:[%s4776] sm:$0x10]
  %vm4778 = vcmask 1044484
  %v4779 = vsel %vm4778, %v4777, %v4775
  %s4780 = scalar_lea.vmem %s0, 1194
  %v4781 = vld [vmem:[%s4780] sm:$0x20]
  %vm4782 = vcmask 1045509
  %v4783 = vsel %vm4782, %v4781, %v4779
  %s4784 = scalar_lea.vmem %s0, 1225
  %v4785 = vld [vmem:[%s4784] sm:$0x40]
  %vm4786 = vcmask 1046534
  %v4787 = vsel %vm4786, %v4785, %v4783
  %s4788 = scalar_lea.vmem %s0, 1256
  %v4789 = vld [vmem:[%s4788] sm:$0x80]
  %vm4790 = vcmask 1047559
  %v4791 = vsel %vm4790, %v4789, %v4787
  %4792 = vrot.lane.b32.xlu0 %v4791, 60
  %v4793 = vpop.permute.xlu0 %4792
  %vm4794 = vcmask 523744
  %s4795 = scalar_lea.vmem %s1, 32
  %4796 = vst.msk [vmem:[%s4795] sm:$0xff] %vm4794, %v4793
  %s4797 = scalar_lea.vmem %s0, 271
  %v4798 = vld [vmem:[%s4797] sm:$0x1]
  %s4799 = scalar_lea.vmem %s0, 302
  %v4800 = vld [vmem:[%s4799] sm:$0x2]
  %vm4801 = vcmask 1041409
  %v4802 = vsel %vm4801, %v4800, %v4798
  %s4803 = scalar_lea.vmem %s0, 333
  %v4804 = vld [vmem:[%s4803] sm:$0x4]
  %vm4805 = vcmask 1042434
  %v4806 = vsel %vm4805, %v4804, %v4802
  %s4807 = scalar_lea.vmem %s0, 364
  %v4808 = vld [vmem:[%s4807] sm:$0x8]
  %vm4809 = vcmask 1043459
  %v4810 = vsel %vm4809, %v4808, %v4806
  %s4811 = scalar_lea.vmem %s0, 395
  %v4812 = vld [vmem:[%s4811] sm:$0x10]
  %vm4813 = vcmask 1044484
  %v4814 = vsel %vm4813, %v4812, %v4810
  %s4815 = scalar_lea.vmem %s0, 426
  %v4816 = vld [vmem:[%s4815] sm:$0x20]
  %vm4817 = vcmask 1045509
  %v4818 = vsel %vm4817, %v4816, %v4814
  %s4819 = scalar_lea.vmem %s0, 457
  %v4820 = vld [vmem:[%s4819] sm:$0x40]
  %vm4821 = vcmask 1046534
  %v4822 = vsel %vm4821, %v4820, %v4818
  %s4823 = scalar_lea.vmem %s0, 488
  %v4824 = vld [vmem:[%s4823] sm:$0x80]
  %vm4825 = vcmask 1047559
  %v4826 = vsel %vm4825, %v4824, %v4822
  %4827 = vrot.lane.b32.xlu0 %v4826, 60
  %v4828 = vpop.permute.xlu0 %4827
  %vm4829 = vcmask 523744
  %s4830 = scalar_lea.vmem %s1, 8
  %4831 = vst.msk [vmem:[%s4830] sm:$0xff] %vm4829, %v4828
  %s4832 = scalar_lea.vmem %s0, 1295
  %v4833 = vld [vmem:[%s4832] sm:$0x1]
  %s4834 = scalar_lea.vmem %s0, 1326
  %v4835 = vld [vmem:[%s4834] sm:$0x2]
  %vm4836 = vcmask 1041409
  %v4837 = vsel %vm4836, %v4835, %v4833
  %s4838 = scalar_lea.vmem %s0, 1357
  %v4839 = vld [vmem:[%s4838] sm:$0x4]
  %vm4840 = vcmask 1042434
  %v4841 = vsel %vm4840, %v4839, %v4837
  %s4842 = scalar_lea.vmem %s0, 1388
  %v4843 = vld [vmem:[%s4842] sm:$0x8]
  %vm4844 = vcmask 1043459
  %v4845 = vsel %vm4844, %v4843, %v4841
  %s4846 = scalar_lea.vmem %s0, 1419
  %v4847 = vld [vmem:[%s4846] sm:$0x10]
  %vm4848 = vcmask 1044484
  %v4849 = vsel %vm4848, %v4847, %v4845
  %s4850 = scalar_lea.vmem %s0, 1450
  %v4851 = vld [vmem:[%s4850] sm:$0x20]
  %vm4852 = vcmask 1045509
  %v4853 = vsel %vm4852, %v4851, %v4849
  %s4854 = scalar_lea.vmem %s0, 1481
  %v4855 = vld [vmem:[%s4854] sm:$0x40]
  %vm4856 = vcmask 1046534
  %v4857 = vsel %vm4856, %v4855, %v4853
  %s4858 = scalar_lea.vmem %s0, 1512
  %v4859 = vld [vmem:[%s4858] sm:$0x80]
  %vm4860 = vcmask 1047559
  %v4861 = vsel %vm4860, %v4859, %v4857
  %4862 = vrot.lane.b32.xlu0 %v4861, 60
  %v4863 = vpop.permute.xlu0 %4862
  %vm4864 = vcmask 523744
  %s4865 = scalar_lea.vmem %s1, 40
  %4866 = vst.msk [vmem:[%s4865] sm:$0xff] %vm4864, %v4863
  %s4867 = scalar_lea.vmem %s0, 527
  %v4868 = vld [vmem:[%s4867] sm:$0x1]
  %s4869 = scalar_lea.vmem %s0, 558
  %v4870 = vld [vmem:[%s4869] sm:$0x2]
  %vm4871 = vcmask 1041409
  %v4872 = vsel %vm4871, %v4870, %v4868
  %s4873 = scalar_lea.vmem %s0, 589
  %v4874 = vld [vmem:[%s4873] sm:$0x4]
  %vm4875 = vcmask 1042434
  %v4876 = vsel %vm4875, %v4874, %v4872
  %s4877 = scalar_lea.vmem %s0, 620
  %v4878 = vld [vmem:[%s4877] sm:$0x8]
  %vm4879 = vcmask 1043459
  %v4880 = vsel %vm4879, %v4878, %v4876
  %s4881 = scalar_lea.vmem %s0, 651
  %v4882 = vld [vmem:[%s4881] sm:$0x10]
  %vm4883 = vcmask 1044484
  %v4884 = vsel %vm4883, %v4882, %v4880
  %s4885 = scalar_lea.vmem %s0, 682
  %v4886 = vld [vmem:[%s4885] sm:$0x20]
  %vm4887 = vcmask 1045509
  %v4888 = vsel %vm4887, %v4886, %v4884
  %s4889 = scalar_lea.vmem %s0, 713
  %v4890 = vld [vmem:[%s4889] sm:$0x40]
  %vm4891 = vcmask 1046534
  %v4892 = vsel %vm4891, %v4890, %v4888
  %s4893 = scalar_lea.vmem %s0, 744
  %v4894 = vld [vmem:[%s4893] sm:$0x80]
  %vm4895 = vcmask 1047559
  %v4896 = vsel %vm4895, %v4894, %v4892
  %4897 = vrot.lane.b32.xlu0 %v4896, 60
  %v4898 = vpop.permute.xlu0 %4897
  %vm4899 = vcmask 523744
  %s4900 = scalar_lea.vmem %s1, 16
  %4901 = vst.msk [vmem:[%s4900] sm:$0xff] %vm4899, %v4898
  %s4902 = scalar_lea.vmem %s0, 1551
  %v4903 = vld [vmem:[%s4902] sm:$0x1]
  %s4904 = scalar_lea.vmem %s0, 1582
  %v4905 = vld [vmem:[%s4904] sm:$0x2]
  %vm4906 = vcmask 1041409
  %v4907 = vsel %vm4906, %v4905, %v4903
  %s4908 = scalar_lea.vmem %s0, 1613
  %v4909 = vld [vmem:[%s4908] sm:$0x4]
  %vm4910 = vcmask 1042434
  %v4911 = vsel %vm4910, %v4909, %v4907
  %s4912 = scalar_lea.vmem %s0, 1644
  %v4913 = vld [vmem:[%s4912] sm:$0x8]
  %vm4914 = vcmask 1043459
  %v4915 = vsel %vm4914, %v4913, %v4911
  %s4916 = scalar_lea.vmem %s0, 1675
  %v4917 = vld [vmem:[%s4916] sm:$0x10]
  %vm4918 = vcmask 1044484
  %v4919 = vsel %vm4918, %v4917, %v4915
  %s4920 = scalar_lea.vmem %s0, 1706
  %v4921 = vld [vmem:[%s4920] sm:$0x20]
  %vm4922 = vcmask 1045509
  %v4923 = vsel %vm4922, %v4921, %v4919
  %s4924 = scalar_lea.vmem %s0, 1737
  %v4925 = vld [vmem:[%s4924] sm:$0x40]
  %vm4926 = vcmask 1046534
  %v4927 = vsel %vm4926, %v4925, %v4923
  %s4928 = scalar_lea.vmem %s0, 1768
  %v4929 = vld [vmem:[%s4928] sm:$0x80]
  %vm4930 = vcmask 1047559
  %v4931 = vsel %vm4930, %v4929, %v4927
  %4932 = vrot.lane.b32.xlu0 %v4931, 60
  %v4933 = vpop.permute.xlu0 %4932
  %vm4934 = vcmask 523744
  %s4935 = scalar_lea.vmem %s1, 48
  %4936 = vst.msk [vmem:[%s4935] sm:$0xff] %vm4934, %v4933
  %s4937 = scalar_lea.vmem %s0, 783
  %v4938 = vld [vmem:[%s4937] sm:$0x1]
  %s4939 = scalar_lea.vmem %s0, 814
  %v4940 = vld [vmem:[%s4939] sm:$0x2]
  %vm4941 = vcmask 1041409
  %v4942 = vsel %vm4941, %v4940, %v4938
  %s4943 = scalar_lea.vmem %s0, 845
  %v4944 = vld [vmem:[%s4943] sm:$0x4]
  %vm4945 = vcmask 1042434
  %v4946 = vsel %vm4945, %v4944, %v4942
  %s4947 = scalar_lea.vmem %s0, 876
  %v4948 = vld [vmem:[%s4947] sm:$0x8]
  %vm4949 = vcmask 1043459
  %v4950 = vsel %vm4949, %v4948, %v4946
  %s4951 = scalar_lea.vmem %s0, 907
  %v4952 = vld [vmem:[%s4951] sm:$0x10]
  %vm4953 = vcmask 1044484
  %v4954 = vsel %vm4953, %v4952, %v4950
  %s4955 = scalar_lea.vmem %s0, 938
  %v4956 = vld [vmem:[%s4955] sm:$0x20]
  %vm4957 = vcmask 1045509
  %v4958 = vsel %vm4957, %v4956, %v4954
  %s4959 = scalar_lea.vmem %s0, 969
  %v4960 = vld [vmem:[%s4959] sm:$0x40]
  %vm4961 = vcmask 1046534
  %v4962 = vsel %vm4961, %v4960, %v4958
  %s4963 = scalar_lea.vmem %s0, 1000
  %v4964 = vld [vmem:[%s4963] sm:$0x80]
  %vm4965 = vcmask 1047559
  %v4966 = vsel %vm4965, %v4964, %v4962
  %4967 = vrot.lane.b32.xlu0 %v4966, 60
  %v4968 = vpop.permute.xlu0 %4967
  %vm4969 = vcmask 523744
  %s4970 = scalar_lea.vmem %s1, 24
  %4971 = vst.msk [vmem:[%s4970] sm:$0xff] %vm4969, %v4968
  %s4972 = scalar_lea.vmem %s0, 1807
  %v4973 = vld [vmem:[%s4972] sm:$0x1]
  %s4974 = scalar_lea.vmem %s0, 1838
  %v4975 = vld [vmem:[%s4974] sm:$0x2]
  %vm4976 = vcmask 1041409
  %v4977 = vsel %vm4976, %v4975, %v4973
  %s4978 = scalar_lea.vmem %s0, 1869
  %v4979 = vld [vmem:[%s4978] sm:$0x4]
  %vm4980 = vcmask 1042434
  %v4981 = vsel %vm4980, %v4979, %v4977
  %s4982 = scalar_lea.vmem %s0, 1900
  %v4983 = vld [vmem:[%s4982] sm:$0x8]
  %vm4984 = vcmask 1043459
  %v4985 = vsel %vm4984, %v4983, %v4981
  %s4986 = scalar_lea.vmem %s0, 1931
  %v4987 = vld [vmem:[%s4986] sm:$0x10]
  %vm4988 = vcmask 1044484
  %v4989 = vsel %vm4988, %v4987, %v4985
  %s4990 = scalar_lea.vmem %s0, 1962
  %v4991 = vld [vmem:[%s4990] sm:$0x20]
  %vm4992 = vcmask 1045509
  %v4993 = vsel %vm4992, %v4991, %v4989
  %s4994 = scalar_lea.vmem %s0, 1993
  %v4995 = vld [vmem:[%s4994] sm:$0x40]
  %vm4996 = vcmask 1046534
  %v4997 = vsel %vm4996, %v4995, %v4993
  %s4998 = scalar_lea.vmem %s0, 2024
  %v4999 = vld [vmem:[%s4998] sm:$0x80]
  %vm5000 = vcmask 1047559
  %v5001 = vsel %vm5000, %v4999, %v4997
  %5002 = vrot.lane.b32.xlu0 %v5001, 60
  %v5003 = vpop.permute.xlu0 %5002
  %vm5004 = vcmask 523744
  %s5005 = scalar_lea.vmem %s1, 56
  %5006 = vst.msk [vmem:[%s5005] sm:$0xff] %vm5004, %v5003
  %s5007 = scalar_lea.vmem %s0, 14
  %v5008 = vld [vmem:[%s5007] sm:$0x1]
  %s5009 = scalar_lea.vmem %s0, 45
  %v5010 = vld [vmem:[%s5009] sm:$0x2]
  %vm5011 = vcmask 1041409
  %v5012 = vsel %vm5011, %v5010, %v5008
  %s5013 = scalar_lea.vmem %s0, 76
  %v5014 = vld [vmem:[%s5013] sm:$0x4]
  %vm5015 = vcmask 1042434
  %v5016 = vsel %vm5015, %v5014, %v5012
  %s5017 = scalar_lea.vmem %s0, 107
  %v5018 = vld [vmem:[%s5017] sm:$0x8]
  %vm5019 = vcmask 1043459
  %v5020 = vsel %vm5019, %v5018, %v5016
  %s5021 = scalar_lea.vmem %s0, 138
  %v5022 = vld [vmem:[%s5021] sm:$0x10]
  %vm5023 = vcmask 1044484
  %v5024 = vsel %vm5023, %v5022, %v5020
  %s5025 = scalar_lea.vmem %s0, 169
  %v5026 = vld [vmem:[%s5025] sm:$0x20]
  %vm5027 = vcmask 1045509
  %v5028 = vsel %vm5027, %v5026, %v5024
  %s5029 = scalar_lea.vmem %s0, 200
  %v5030 = vld [vmem:[%s5029] sm:$0x40]
  %vm5031 = vcmask 1046534
  %v5032 = vsel %vm5031, %v5030, %v5028
  %s5033 = scalar_lea.vmem %s0, 231
  %v5034 = vld [vmem:[%s5033] sm:$0x80]
  %vm5035 = vcmask 1047559
  %v5036 = vsel %vm5035, %v5034, %v5032
  %5037 = vrot.lane.b32.xlu0 %v5036, 56
  %v5038 = vpop.permute.xlu0 %5037
  %vm5039 = vcmask 490944
  %5040 = vst.msk [vmem:[%s1] sm:$0xff] %vm5039, %v5038
  %s5041 = scalar_lea.vmem %s0, 1038
  %v5042 = vld [vmem:[%s5041] sm:$0x1]
  %s5043 = scalar_lea.vmem %s0, 1069
  %v5044 = vld [vmem:[%s5043] sm:$0x2]
  %vm5045 = vcmask 1041409
  %v5046 = vsel %vm5045, %v5044, %v5042
  %s5047 = scalar_lea.vmem %s0, 1100
  %v5048 = vld [vmem:[%s5047] sm:$0x4]
  %vm5049 = vcmask 1042434
  %v5050 = vsel %vm5049, %v5048, %v5046
  %s5051 = scalar_lea.vmem %s0, 1131
  %v5052 = vld [vmem:[%s5051] sm:$0x8]
  %vm5053 = vcmask 1043459
  %v5054 = vsel %vm5053, %v5052, %v5050
  %s5055 = scalar_lea.vmem %s0, 1162
  %v5056 = vld [vmem:[%s5055] sm:$0x10]
  %vm5057 = vcmask 1044484
  %v5058 = vsel %vm5057, %v5056, %v5054
  %s5059 = scalar_lea.vmem %s0, 1193
  %v5060 = vld [vmem:[%s5059] sm:$0x20]
  %vm5061 = vcmask 1045509
  %v5062 = vsel %vm5061, %v5060, %v5058
  %s5063 = scalar_lea.vmem %s0, 1224
  %v5064 = vld [vmem:[%s5063] sm:$0x40]
  %vm5065 = vcmask 1046534
  %v5066 = vsel %vm5065, %v5064, %v5062
  %s5067 = scalar_lea.vmem %s0, 1255
  %v5068 = vld [vmem:[%s5067] sm:$0x80]
  %vm5069 = vcmask 1047559
  %v5070 = vsel %vm5069, %v5068, %v5066
  %5071 = vrot.lane.b32.xlu0 %v5070, 56
  %v5072 = vpop.permute.xlu0 %5071
  %vm5073 = vcmask 490944
  %s5074 = scalar_lea.vmem %s1, 32
  %5075 = vst.msk [vmem:[%s5074] sm:$0xff] %vm5073, %v5072
  %s5076 = scalar_lea.vmem %s0, 270
  %v5077 = vld [vmem:[%s5076] sm:$0x1]
  %s5078 = scalar_lea.vmem %s0, 301
  %v5079 = vld [vmem:[%s5078] sm:$0x2]
  %vm5080 = vcmask 1041409
  %v5081 = vsel %vm5080, %v5079, %v5077
  %s5082 = scalar_lea.vmem %s0, 332
  %v5083 = vld [vmem:[%s5082] sm:$0x4]
  %vm5084 = vcmask 1042434
  %v5085 = vsel %vm5084, %v5083, %v5081
  %s5086 = scalar_lea.vmem %s0, 363
  %v5087 = vld [vmem:[%s5086] sm:$0x8]
  %vm5088 = vcmask 1043459
  %v5089 = vsel %vm5088, %v5087, %v5085
  %s5090 = scalar_lea.vmem %s0, 394
  %v5091 = vld [vmem:[%s5090] sm:$0x10]
  %vm5092 = vcmask 1044484
  %v5093 = vsel %vm5092, %v5091, %v5089
  %s5094 = scalar_lea.vmem %s0, 425
  %v5095 = vld [vmem:[%s5094] sm:$0x20]
  %vm5096 = vcmask 1045509
  %v5097 = vsel %vm5096, %v5095, %v5093
  %s5098 = scalar_lea.vmem %s0, 456
  %v5099 = vld [vmem:[%s5098] sm:$0x40]
  %vm5100 = vcmask 1046534
  %v5101 = vsel %vm5100, %v5099, %v5097
  %s5102 = scalar_lea.vmem %s0, 487
  %v5103 = vld [vmem:[%s5102] sm:$0x80]
  %vm5104 = vcmask 1047559
  %v5105 = vsel %vm5104, %v5103, %v5101
  %5106 = vrot.lane.b32.xlu0 %v5105, 56
  %v5107 = vpop.permute.xlu0 %5106
  %vm5108 = vcmask 490944
  %s5109 = scalar_lea.vmem %s1, 8
  %5110 = vst.msk [vmem:[%s5109] sm:$0xff] %vm5108, %v5107
  %s5111 = scalar_lea.vmem %s0, 1294
  %v5112 = vld [vmem:[%s5111] sm:$0x1]
  %s5113 = scalar_lea.vmem %s0, 1325
  %v5114 = vld [vmem:[%s5113] sm:$0x2]
  %vm5115 = vcmask 1041409
  %v5116 = vsel %vm5115, %v5114, %v5112
  %s5117 = scalar_lea.vmem %s0, 1356
  %v5118 = vld [vmem:[%s5117] sm:$0x4]
  %vm5119 = vcmask 1042434
  %v5120 = vsel %vm5119, %v5118, %v5116
  %s5121 = scalar_lea.vmem %s0, 1387
  %v5122 = vld [vmem:[%s5121] sm:$0x8]
  %vm5123 = vcmask 1043459
  %v5124 = vsel %vm5123, %v5122, %v5120
  %s5125 = scalar_lea.vmem %s0, 1418
  %v5126 = vld [vmem:[%s5125] sm:$0x10]
  %vm5127 = vcmask 1044484
  %v5128 = vsel %vm5127, %v5126, %v5124
  %s5129 = scalar_lea.vmem %s0, 1449
  %v5130 = vld [vmem:[%s5129] sm:$0x20]
  %vm5131 = vcmask 1045509
  %v5132 = vsel %vm5131, %v5130, %v5128
  %s5133 = scalar_lea.vmem %s0, 1480
  %v5134 = vld [vmem:[%s5133] sm:$0x40]
  %vm5135 = vcmask 1046534
  %v5136 = vsel %vm5135, %v5134, %v5132
  %s5137 = scalar_lea.vmem %s0, 1511
  %v5138 = vld [vmem:[%s5137] sm:$0x80]
  %vm5139 = vcmask 1047559
  %v5140 = vsel %vm5139, %v5138, %v5136
  %5141 = vrot.lane.b32.xlu0 %v5140, 56
  %v5142 = vpop.permute.xlu0 %5141
  %vm5143 = vcmask 490944
  %s5144 = scalar_lea.vmem %s1, 40
  %5145 = vst.msk [vmem:[%s5144] sm:$0xff] %vm5143, %v5142
  %s5146 = scalar_lea.vmem %s0, 526
  %v5147 = vld [vmem:[%s5146] sm:$0x1]
  %s5148 = scalar_lea.vmem %s0, 557
  %v5149 = vld [vmem:[%s5148] sm:$0x2]
  %vm5150 = vcmask 1041409
  %v5151 = vsel %vm5150, %v5149, %v5147
  %s5152 = scalar_lea.vmem %s0, 588
  %v5153 = vld [vmem:[%s5152] sm:$0x4]
  %vm5154 = vcmask 1042434
  %v5155 = vsel %vm5154, %v5153, %v5151
  %s5156 = scalar_lea.vmem %s0, 619
  %v5157 = vld [vmem:[%s5156] sm:$0x8]
  %vm5158 = vcmask 1043459
  %v5159 = vsel %vm5158, %v5157, %v5155
  %s5160 = scalar_lea.vmem %s0, 650
  %v5161 = vld [vmem:[%s5160] sm:$0x10]
  %vm5162 = vcmask 1044484
  %v5163 = vsel %vm5162, %v5161, %v5159
  %s5164 = scalar_lea.vmem %s0, 681
  %v5165 = vld [vmem:[%s5164] sm:$0x20]
  %vm5166 = vcmask 1045509
  %v5167 = vsel %vm5166, %v5165, %v5163
  %s5168 = scalar_lea.vmem %s0, 712
  %v5169 = vld [vmem:[%s5168] sm:$0x40]
  %vm5170 = vcmask 1046534
  %v5171 = vsel %vm5170, %v5169, %v5167
  %s5172 = scalar_lea.vmem %s0, 743
  %v5173 = vld [vmem:[%s5172] sm:$0x80]
  %vm5174 = vcmask 1047559
  %v5175 = vsel %vm5174, %v5173, %v5171
  %5176 = vrot.lane.b32.xlu0 %v5175, 56
  %v5177 = vpop.permute.xlu0 %5176
  %vm5178 = vcmask 490944
  %s5179 = scalar_lea.vmem %s1, 16
  %5180 = vst.msk [vmem:[%s5179] sm:$0xff] %vm5178, %v5177
  %s5181 = scalar_lea.vmem %s0, 1550
  %v5182 = vld [vmem:[%s5181] sm:$0x1]
  %s5183 = scalar_lea.vmem %s0, 1581
  %v5184 = vld [vmem:[%s5183] sm:$0x2]
  %vm5185 = vcmask 1041409
  %v5186 = vsel %vm5185, %v5184, %v5182
  %s5187 = scalar_lea.vmem %s0, 1612
  %v5188 = vld [vmem:[%s5187] sm:$0x4]
  %vm5189 = vcmask 1042434
  %v5190 = vsel %vm5189, %v5188, %v5186
  %s5191 = scalar_lea.vmem %s0, 1643
  %v5192 = vld [vmem:[%s5191] sm:$0x8]
  %vm5193 = vcmask 1043459
  %v5194 = vsel %vm5193, %v5192, %v5190
  %s5195 = scalar_lea.vmem %s0, 1674
  %v5196 = vld [vmem:[%s5195] sm:$0x10]
  %vm5197 = vcmask 1044484
  %v5198 = vsel %vm5197, %v5196, %v5194
  %s5199 = scalar_lea.vmem %s0, 1705
  %v5200 = vld [vmem:[%s5199] sm:$0x20]
  %vm5201 = vcmask 1045509
  %v5202 = vsel %vm5201, %v5200, %v5198
  %s5203 = scalar_lea.vmem %s0, 1736
  %v5204 = vld [vmem:[%s5203] sm:$0x40]
  %vm5205 = vcmask 1046534
  %v5206 = vsel %vm5205, %v5204, %v5202
  %s5207 = scalar_lea.vmem %s0, 1767
  %v5208 = vld [vmem:[%s5207] sm:$0x80]
  %vm5209 = vcmask 1047559
  %v5210 = vsel %vm5209, %v5208, %v5206
  %5211 = vrot.lane.b32.xlu0 %v5210, 56
  %v5212 = vpop.permute.xlu0 %5211
  %vm5213 = vcmask 490944
  %s5214 = scalar_lea.vmem %s1, 48
  %5215 = vst.msk [vmem:[%s5214] sm:$0xff] %vm5213, %v5212
  %s5216 = scalar_lea.vmem %s0, 782
  %v5217 = vld [vmem:[%s5216] sm:$0x1]
  %s5218 = scalar_lea.vmem %s0, 813
  %v5219 = vld [vmem:[%s5218] sm:$0x2]
  %vm5220 = vcmask 1041409
  %v5221 = vsel %vm5220, %v5219, %v5217
  %s5222 = scalar_lea.vmem %s0, 844
  %v5223 = vld [vmem:[%s5222] sm:$0x4]
  %vm5224 = vcmask 1042434
  %v5225 = vsel %vm5224, %v5223, %v5221
  %s5226 = scalar_lea.vmem %s0, 875
  %v5227 = vld [vmem:[%s5226] sm:$0x8]
  %vm5228 = vcmask 1043459
  %v5229 = vsel %vm5228, %v5227, %v5225
  %s5230 = scalar_lea.vmem %s0, 906
  %v5231 = vld [vmem:[%s5230] sm:$0x10]
  %vm5232 = vcmask 1044484
  %v5233 = vsel %vm5232, %v5231, %v5229
  %s5234 = scalar_lea.vmem %s0, 937
  %v5235 = vld [vmem:[%s5234] sm:$0x20]
  %vm5236 = vcmask 1045509
  %v5237 = vsel %vm5236, %v5235, %v5233
  %s5238 = scalar_lea.vmem %s0, 968
  %v5239 = vld [vmem:[%s5238] sm:$0x40]
  %vm5240 = vcmask 1046534
  %v5241 = vsel %vm5240, %v5239, %v5237
  %s5242 = scalar_lea.vmem %s0, 999
  %v5243 = vld [vmem:[%s5242] sm:$0x80]
  %vm5244 = vcmask 1047559
  %v5245 = vsel %vm5244, %v5243, %v5241
  %5246 = vrot.lane.b32.xlu0 %v5245, 56
  %v5247 = vpop.permute.xlu0 %5246
  %vm5248 = vcmask 490944
  %s5249 = scalar_lea.vmem %s1, 24
  %5250 = vst.msk [vmem:[%s5249] sm:$0xff] %vm5248, %v5247
  %s5251 = scalar_lea.vmem %s0, 1806
  %v5252 = vld [vmem:[%s5251] sm:$0x1]
  %s5253 = scalar_lea.vmem %s0, 1837
  %v5254 = vld [vmem:[%s5253] sm:$0x2]
  %vm5255 = vcmask 1041409
  %v5256 = vsel %vm5255, %v5254, %v5252
  %s5257 = scalar_lea.vmem %s0, 1868
  %v5258 = vld [vmem:[%s5257] sm:$0x4]
  %vm5259 = vcmask 1042434
  %v5260 = vsel %vm5259, %v5258, %v5256
  %s5261 = scalar_lea.vmem %s0, 1899
  %v5262 = vld [vmem:[%s5261] sm:$0x8]
  %vm5263 = vcmask 1043459
  %v5264 = vsel %vm5263, %v5262, %v5260
  %s5265 = scalar_lea.vmem %s0, 1930
  %v5266 = vld [vmem:[%s5265] sm:$0x10]
  %vm5267 = vcmask 1044484
  %v5268 = vsel %vm5267, %v5266, %v5264
  %s5269 = scalar_lea.vmem %s0, 1961
  %v5270 = vld [vmem:[%s5269] sm:$0x20]
  %vm5271 = vcmask 1045509
  %v5272 = vsel %vm5271, %v5270, %v5268
  %s5273 = scalar_lea.vmem %s0, 1992
  %v5274 = vld [vmem:[%s5273] sm:$0x40]
  %vm5275 = vcmask 1046534
  %v5276 = vsel %vm5275, %v5274, %v5272
  %s5277 = scalar_lea.vmem %s0, 2023
  %v5278 = vld [vmem:[%s5277] sm:$0x80]
  %vm5279 = vcmask 1047559
  %v5280 = vsel %vm5279, %v5278, %v5276
  %5281 = vrot.lane.b32.xlu0 %v5280, 56
  %v5282 = vpop.permute.xlu0 %5281
  %vm5283 = vcmask 490944
  %s5284 = scalar_lea.vmem %s1, 56
  %5285 = vst.msk [vmem:[%s5284] sm:$0xff] %vm5283, %v5282
  %s5286 = scalar_lea.vmem %s0, 13
  %v5287 = vld [vmem:[%s5286] sm:$0x1]
  %s5288 = scalar_lea.vmem %s0, 44
  %v5289 = vld [vmem:[%s5288] sm:$0x2]
  %vm5290 = vcmask 1041409
  %v5291 = vsel %vm5290, %v5289, %v5287
  %s5292 = scalar_lea.vmem %s0, 75
  %v5293 = vld [vmem:[%s5292] sm:$0x4]
  %vm5294 = vcmask 1042434
  %v5295 = vsel %vm5294, %v5293, %v5291
  %s5296 = scalar_lea.vmem %s0, 106
  %v5297 = vld [vmem:[%s5296] sm:$0x8]
  %vm5298 = vcmask 1043459
  %v5299 = vsel %vm5298, %v5297, %v5295
  %s5300 = scalar_lea.vmem %s0, 137
  %v5301 = vld [vmem:[%s5300] sm:$0x10]
  %vm5302 = vcmask 1044484
  %v5303 = vsel %vm5302, %v5301, %v5299
  %s5304 = scalar_lea.vmem %s0, 168
  %v5305 = vld [vmem:[%s5304] sm:$0x20]
  %vm5306 = vcmask 1045509
  %v5307 = vsel %vm5306, %v5305, %v5303
  %s5308 = scalar_lea.vmem %s0, 199
  %v5309 = vld [vmem:[%s5308] sm:$0x40]
  %vm5310 = vcmask 1046534
  %v5311 = vsel %vm5310, %v5309, %v5307
  %s5312 = scalar_lea.vmem %s0, 230
  %v5313 = vld [vmem:[%s5312] sm:$0x80]
  %vm5314 = vcmask 1047559
  %v5315 = vsel %vm5314, %v5313, %v5311
  %5316 = vrot.lane.b32.xlu0 %v5315, 52
  %v5317 = vpop.permute.xlu0 %5316
  %vm5318 = vcmask 458144
  %5319 = vst.msk [vmem:[%s1] sm:$0xff] %vm5318, %v5317
  %s5320 = scalar_lea.vmem %s0, 1037
  %v5321 = vld [vmem:[%s5320] sm:$0x1]
  %s5322 = scalar_lea.vmem %s0, 1068
  %v5323 = vld [vmem:[%s5322] sm:$0x2]
  %vm5324 = vcmask 1041409
  %v5325 = vsel %vm5324, %v5323, %v5321
  %s5326 = scalar_lea.vmem %s0, 1099
  %v5327 = vld [vmem:[%s5326] sm:$0x4]
  %vm5328 = vcmask 1042434
  %v5329 = vsel %vm5328, %v5327, %v5325
  %s5330 = scalar_lea.vmem %s0, 1130
  %v5331 = vld [vmem:[%s5330] sm:$0x8]
  %vm5332 = vcmask 1043459
  %v5333 = vsel %vm5332, %v5331, %v5329
  %s5334 = scalar_lea.vmem %s0, 1161
  %v5335 = vld [vmem:[%s5334] sm:$0x10]
  %vm5336 = vcmask 1044484
  %v5337 = vsel %vm5336, %v5335, %v5333
  %s5338 = scalar_lea.vmem %s0, 1192
  %v5339 = vld [vmem:[%s5338] sm:$0x20]
  %vm5340 = vcmask 1045509
  %v5341 = vsel %vm5340, %v5339, %v5337
  %s5342 = scalar_lea.vmem %s0, 1223
  %v5343 = vld [vmem:[%s5342] sm:$0x40]
  %vm5344 = vcmask 1046534
  %v5345 = vsel %vm5344, %v5343, %v5341
  %s5346 = scalar_lea.vmem %s0, 1254
  %v5347 = vld [vmem:[%s5346] sm:$0x80]
  %vm5348 = vcmask 1047559
  %v5349 = vsel %vm5348, %v5347, %v5345
  %5350 = vrot.lane.b32.xlu0 %v5349, 52
  %v5351 = vpop.permute.xlu0 %5350
  %vm5352 = vcmask 458144
  %s5353 = scalar_lea.vmem %s1, 32
  %5354 = vst.msk [vmem:[%s5353] sm:$0xff] %vm5352, %v5351
  %s5355 = scalar_lea.vmem %s0, 269
  %v5356 = vld [vmem:[%s5355] sm:$0x1]
  %s5357 = scalar_lea.vmem %s0, 300
  %v5358 = vld [vmem:[%s5357] sm:$0x2]
  %vm5359 = vcmask 1041409
  %v5360 = vsel %vm5359, %v5358, %v5356
  %s5361 = scalar_lea.vmem %s0, 331
  %v5362 = vld [vmem:[%s5361] sm:$0x4]
  %vm5363 = vcmask 1042434
  %v5364 = vsel %vm5363, %v5362, %v5360
  %s5365 = scalar_lea.vmem %s0, 362
  %v5366 = vld [vmem:[%s5365] sm:$0x8]
  %vm5367 = vcmask 1043459
  %v5368 = vsel %vm5367, %v5366, %v5364
  %s5369 = scalar_lea.vmem %s0, 393
  %v5370 = vld [vmem:[%s5369] sm:$0x10]
  %vm5371 = vcmask 1044484
  %v5372 = vsel %vm5371, %v5370, %v5368
  %s5373 = scalar_lea.vmem %s0, 424
  %v5374 = vld [vmem:[%s5373] sm:$0x20]
  %vm5375 = vcmask 1045509
  %v5376 = vsel %vm5375, %v5374, %v5372
  %s5377 = scalar_lea.vmem %s0, 455
  %v5378 = vld [vmem:[%s5377] sm:$0x40]
  %vm5379 = vcmask 1046534
  %v5380 = vsel %vm5379, %v5378, %v5376
  %s5381 = scalar_lea.vmem %s0, 486
  %v5382 = vld [vmem:[%s5381] sm:$0x80]
  %vm5383 = vcmask 1047559
  %v5384 = vsel %vm5383, %v5382, %v5380
  %5385 = vrot.lane.b32.xlu0 %v5384, 52
  %v5386 = vpop.permute.xlu0 %5385
  %vm5387 = vcmask 458144
  %s5388 = scalar_lea.vmem %s1, 8
  %5389 = vst.msk [vmem:[%s5388] sm:$0xff] %vm5387, %v5386
  %s5390 = scalar_lea.vmem %s0, 1293
  %v5391 = vld [vmem:[%s5390] sm:$0x1]
  %s5392 = scalar_lea.vmem %s0, 1324
  %v5393 = vld [vmem:[%s5392] sm:$0x2]
  %vm5394 = vcmask 1041409
  %v5395 = vsel %vm5394, %v5393, %v5391
  %s5396 = scalar_lea.vmem %s0, 1355
  %v5397 = vld [vmem:[%s5396] sm:$0x4]
  %vm5398 = vcmask 1042434
  %v5399 = vsel %vm5398, %v5397, %v5395
  %s5400 = scalar_lea.vmem %s0, 1386
  %v5401 = vld [vmem:[%s5400] sm:$0x8]
  %vm5402 = vcmask 1043459
  %v5403 = vsel %vm5402, %v5401, %v5399
  %s5404 = scalar_lea.vmem %s0, 1417
  %v5405 = vld [vmem:[%s5404] sm:$0x10]
  %vm5406 = vcmask 1044484
  %v5407 = vsel %vm5406, %v5405, %v5403
  %s5408 = scalar_lea.vmem %s0, 1448
  %v5409 = vld [vmem:[%s5408] sm:$0x20]
  %vm5410 = vcmask 1045509
  %v5411 = vsel %vm5410, %v5409, %v5407
  %s5412 = scalar_lea.vmem %s0, 1479
  %v5413 = vld [vmem:[%s5412] sm:$0x40]
  %vm5414 = vcmask 1046534
  %v5415 = vsel %vm5414, %v5413, %v5411
  %s5416 = scalar_lea.vmem %s0, 1510
  %v5417 = vld [vmem:[%s5416] sm:$0x80]
  %vm5418 = vcmask 1047559
  %v5419 = vsel %vm5418, %v5417, %v5415
  %5420 = vrot.lane.b32.xlu0 %v5419, 52
  %v5421 = vpop.permute.xlu0 %5420
  %vm5422 = vcmask 458144
  %s5423 = scalar_lea.vmem %s1, 40
  %5424 = vst.msk [vmem:[%s5423] sm:$0xff] %vm5422, %v5421
  %s5425 = scalar_lea.vmem %s0, 525
  %v5426 = vld [vmem:[%s5425] sm:$0x1]
  %s5427 = scalar_lea.vmem %s0, 556
  %v5428 = vld [vmem:[%s5427] sm:$0x2]
  %vm5429 = vcmask 1041409
  %v5430 = vsel %vm5429, %v5428, %v5426
  %s5431 = scalar_lea.vmem %s0, 587
  %v5432 = vld [vmem:[%s5431] sm:$0x4]
  %vm5433 = vcmask 1042434
  %v5434 = vsel %vm5433, %v5432, %v5430
  %s5435 = scalar_lea.vmem %s0, 618
  %v5436 = vld [vmem:[%s5435] sm:$0x8]
  %vm5437 = vcmask 1043459
  %v5438 = vsel %vm5437, %v5436, %v5434
  %s5439 = scalar_lea.vmem %s0, 649
  %v5440 = vld [vmem:[%s5439] sm:$0x10]
  %vm5441 = vcmask 1044484
  %v5442 = vsel %vm5441, %v5440, %v5438
  %s5443 = scalar_lea.vmem %s0, 680
  %v5444 = vld [vmem:[%s5443] sm:$0x20]
  %vm5445 = vcmask 1045509
  %v5446 = vsel %vm5445, %v5444, %v5442
  %s5447 = scalar_lea.vmem %s0, 711
  %v5448 = vld [vmem:[%s5447] sm:$0x40]
  %vm5449 = vcmask 1046534
  %v5450 = vsel %vm5449, %v5448, %v5446
  %s5451 = scalar_lea.vmem %s0, 742
  %v5452 = vld [vmem:[%s5451] sm:$0x80]
  %vm5453 = vcmask 1047559
  %v5454 = vsel %vm5453, %v5452, %v5450
  %5455 = vrot.lane.b32.xlu0 %v5454, 52
  %v5456 = vpop.permute.xlu0 %5455
  %vm5457 = vcmask 458144
  %s5458 = scalar_lea.vmem %s1, 16
  %5459 = vst.msk [vmem:[%s5458] sm:$0xff] %vm5457, %v5456
  %s5460 = scalar_lea.vmem %s0, 1549
  %v5461 = vld [vmem:[%s5460] sm:$0x1]
  %s5462 = scalar_lea.vmem %s0, 1580
  %v5463 = vld [vmem:[%s5462] sm:$0x2]
  %vm5464 = vcmask 1041409
  %v5465 = vsel %vm5464, %v5463, %v5461
  %s5466 = scalar_lea.vmem %s0, 1611
  %v5467 = vld [vmem:[%s5466] sm:$0x4]
  %vm5468 = vcmask 1042434
  %v5469 = vsel %vm5468, %v5467, %v5465
  %s5470 = scalar_lea.vmem %s0, 1642
  %v5471 = vld [vmem:[%s5470] sm:$0x8]
  %vm5472 = vcmask 1043459
  %v5473 = vsel %vm5472, %v5471, %v5469
  %s5474 = scalar_lea.vmem %s0, 1673
  %v5475 = vld [vmem:[%s5474] sm:$0x10]
  %vm5476 = vcmask 1044484
  %v5477 = vsel %vm5476, %v5475, %v5473
  %s5478 = scalar_lea.vmem %s0, 1704
  %v5479 = vld [vmem:[%s5478] sm:$0x20]
  %vm5480 = vcmask 1045509
  %v5481 = vsel %vm5480, %v5479, %v5477
  %s5482 = scalar_lea.vmem %s0, 1735
  %v5483 = vld [vmem:[%s5482] sm:$0x40]
  %vm5484 = vcmask 1046534
  %v5485 = vsel %vm5484, %v5483, %v5481
  %s5486 = scalar_lea.vmem %s0, 1766
  %v5487 = vld [vmem:[%s5486] sm:$0x80]
  %vm5488 = vcmask 1047559
  %v5489 = vsel %vm5488, %v5487, %v5485
  %5490 = vrot.lane.b32.xlu0 %v5489, 52
  %v5491 = vpop.permute.xlu0 %5490
  %vm5492 = vcmask 458144
  %s5493 = scalar_lea.vmem %s1, 48
  %5494 = vst.msk [vmem:[%s5493] sm:$0xff] %vm5492, %v5491
  %s5495 = scalar_lea.vmem %s0, 781
  %v5496 = vld [vmem:[%s5495] sm:$0x1]
  %s5497 = scalar_lea.vmem %s0, 812
  %v5498 = vld [vmem:[%s5497] sm:$0x2]
  %vm5499 = vcmask 1041409
  %v5500 = vsel %vm5499, %v5498, %v5496
  %s5501 = scalar_lea.vmem %s0, 843
  %v5502 = vld [vmem:[%s5501] sm:$0x4]
  %vm5503 = vcmask 1042434
  %v5504 = vsel %vm5503, %v5502, %v5500
  %s5505 = scalar_lea.vmem %s0, 874
  %v5506 = vld [vmem:[%s5505] sm:$0x8]
  %vm5507 = vcmask 1043459
  %v5508 = vsel %vm5507, %v5506, %v5504
  %s5509 = scalar_lea.vmem %s0, 905
  %v5510 = vld [vmem:[%s5509] sm:$0x10]
  %vm5511 = vcmask 1044484
  %v5512 = vsel %vm5511, %v5510, %v5508
  %s5513 = scalar_lea.vmem %s0, 936
  %v5514 = vld [vmem:[%s5513] sm:$0x20]
  %vm5515 = vcmask 1045509
  %v5516 = vsel %vm5515, %v5514, %v5512
  %s5517 = scalar_lea.vmem %s0, 967
  %v5518 = vld [vmem:[%s5517] sm:$0x40]
  %vm5519 = vcmask 1046534
  %v5520 = vsel %vm5519, %v5518, %v5516
  %s5521 = scalar_lea.vmem %s0, 998
  %v5522 = vld [vmem:[%s5521] sm:$0x80]
  %vm5523 = vcmask 1047559
  %v5524 = vsel %vm5523, %v5522, %v5520
  %5525 = vrot.lane.b32.xlu0 %v5524, 52
  %v5526 = vpop.permute.xlu0 %5525
  %vm5527 = vcmask 458144
  %s5528 = scalar_lea.vmem %s1, 24
  %5529 = vst.msk [vmem:[%s5528] sm:$0xff] %vm5527, %v5526
  %s5530 = scalar_lea.vmem %s0, 1805
  %v5531 = vld [vmem:[%s5530] sm:$0x1]
  %s5532 = scalar_lea.vmem %s0, 1836
  %v5533 = vld [vmem:[%s5532] sm:$0x2]
  %vm5534 = vcmask 1041409
  %v5535 = vsel %vm5534, %v5533, %v5531
  %s5536 = scalar_lea.vmem %s0, 1867
  %v5537 = vld [vmem:[%s5536] sm:$0x4]
  %vm5538 = vcmask 1042434
  %v5539 = vsel %vm5538, %v5537, %v5535
  %s5540 = scalar_lea.vmem %s0, 1898
  %v5541 = vld [vmem:[%s5540] sm:$0x8]
  %vm5542 = vcmask 1043459
  %v5543 = vsel %vm5542, %v5541, %v5539
  %s5544 = scalar_lea.vmem %s0, 1929
  %v5545 = vld [vmem:[%s5544] sm:$0x10]
  %vm5546 = vcmask 1044484
  %v5547 = vsel %vm5546, %v5545, %v5543
  %s5548 = scalar_lea.vmem %s0, 1960
  %v5549 = vld [vmem:[%s5548] sm:$0x20]
  %vm5550 = vcmask 1045509
  %v5551 = vsel %vm5550, %v5549, %v5547
  %s5552 = scalar_lea.vmem %s0, 1991
  %v5553 = vld [vmem:[%s5552] sm:$0x40]
  %vm5554 = vcmask 1046534
  %v5555 = vsel %vm5554, %v5553, %v5551
  %s5556 = scalar_lea.vmem %s0, 2022
  %v5557 = vld [vmem:[%s5556] sm:$0x80]
  %vm5558 = vcmask 1047559
  %v5559 = vsel %vm5558, %v5557, %v5555
  %5560 = vrot.lane.b32.xlu0 %v5559, 52
  %v5561 = vpop.permute.xlu0 %5560
  %vm5562 = vcmask 458144
  %s5563 = scalar_lea.vmem %s1, 56
  %5564 = vst.msk [vmem:[%s5563] sm:$0xff] %vm5562, %v5561
  %s5565 = scalar_lea.vmem %s0, 12
  %v5566 = vld [vmem:[%s5565] sm:$0x1]
  %s5567 = scalar_lea.vmem %s0, 43
  %v5568 = vld [vmem:[%s5567] sm:$0x2]
  %vm5569 = vcmask 1041409
  %v5570 = vsel %vm5569, %v5568, %v5566
  %s5571 = scalar_lea.vmem %s0, 74
  %v5572 = vld [vmem:[%s5571] sm:$0x4]
  %vm5573 = vcmask 1042434
  %v5574 = vsel %vm5573, %v5572, %v5570
  %s5575 = scalar_lea.vmem %s0, 105
  %v5576 = vld [vmem:[%s5575] sm:$0x8]
  %vm5577 = vcmask 1043459
  %v5578 = vsel %vm5577, %v5576, %v5574
  %s5579 = scalar_lea.vmem %s0, 136
  %v5580 = vld [vmem:[%s5579] sm:$0x10]
  %vm5581 = vcmask 1044484
  %v5582 = vsel %vm5581, %v5580, %v5578
  %s5583 = scalar_lea.vmem %s0, 167
  %v5584 = vld [vmem:[%s5583] sm:$0x20]
  %vm5585 = vcmask 1045509
  %v5586 = vsel %vm5585, %v5584, %v5582
  %s5587 = scalar_lea.vmem %s0, 198
  %v5588 = vld [vmem:[%s5587] sm:$0x40]
  %vm5589 = vcmask 1046534
  %v5590 = vsel %vm5589, %v5588, %v5586
  %s5591 = scalar_lea.vmem %s0, 229
  %v5592 = vld [vmem:[%s5591] sm:$0x80]
  %vm5593 = vcmask 1047559
  %v5594 = vsel %vm5593, %v5592, %v5590
  %5595 = vrot.lane.b32.xlu0 %v5594, 48
  %v5596 = vpop.permute.xlu0 %5595
  %vm5597 = vcmask 425344
  %5598 = vst.msk [vmem:[%s1] sm:$0xff] %vm5597, %v5596
  %s5599 = scalar_lea.vmem %s0, 1036
  %v5600 = vld [vmem:[%s5599] sm:$0x1]
  %s5601 = scalar_lea.vmem %s0, 1067
  %v5602 = vld [vmem:[%s5601] sm:$0x2]
  %vm5603 = vcmask 1041409
  %v5604 = vsel %vm5603, %v5602, %v5600
  %s5605 = scalar_lea.vmem %s0, 1098
  %v5606 = vld [vmem:[%s5605] sm:$0x4]
  %vm5607 = vcmask 1042434
  %v5608 = vsel %vm5607, %v5606, %v5604
  %s5609 = scalar_lea.vmem %s0, 1129
  %v5610 = vld [vmem:[%s5609] sm:$0x8]
  %vm5611 = vcmask 1043459
  %v5612 = vsel %vm5611, %v5610, %v5608
  %s5613 = scalar_lea.vmem %s0, 1160
  %v5614 = vld [vmem:[%s5613] sm:$0x10]
  %vm5615 = vcmask 1044484
  %v5616 = vsel %vm5615, %v5614, %v5612
  %s5617 = scalar_lea.vmem %s0, 1191
  %v5618 = vld [vmem:[%s5617] sm:$0x20]
  %vm5619 = vcmask 1045509
  %v5620 = vsel %vm5619, %v5618, %v5616
  %s5621 = scalar_lea.vmem %s0, 1222
  %v5622 = vld [vmem:[%s5621] sm:$0x40]
  %vm5623 = vcmask 1046534
  %v5624 = vsel %vm5623, %v5622, %v5620
  %s5625 = scalar_lea.vmem %s0, 1253
  %v5626 = vld [vmem:[%s5625] sm:$0x80]
  %vm5627 = vcmask 1047559
  %v5628 = vsel %vm5627, %v5626, %v5624
  %5629 = vrot.lane.b32.xlu0 %v5628, 48
  %v5630 = vpop.permute.xlu0 %5629
  %vm5631 = vcmask 425344
  %s5632 = scalar_lea.vmem %s1, 32
  %5633 = vst.msk [vmem:[%s5632] sm:$0xff] %vm5631, %v5630
  %s5634 = scalar_lea.vmem %s0, 268
  %v5635 = vld [vmem:[%s5634] sm:$0x1]
  %s5636 = scalar_lea.vmem %s0, 299
  %v5637 = vld [vmem:[%s5636] sm:$0x2]
  %vm5638 = vcmask 1041409
  %v5639 = vsel %vm5638, %v5637, %v5635
  %s5640 = scalar_lea.vmem %s0, 330
  %v5641 = vld [vmem:[%s5640] sm:$0x4]
  %vm5642 = vcmask 1042434
  %v5643 = vsel %vm5642, %v5641, %v5639
  %s5644 = scalar_lea.vmem %s0, 361
  %v5645 = vld [vmem:[%s5644] sm:$0x8]
  %vm5646 = vcmask 1043459
  %v5647 = vsel %vm5646, %v5645, %v5643
  %s5648 = scalar_lea.vmem %s0, 392
  %v5649 = vld [vmem:[%s5648] sm:$0x10]
  %vm5650 = vcmask 1044484
  %v5651 = vsel %vm5650, %v5649, %v5647
  %s5652 = scalar_lea.vmem %s0, 423
  %v5653 = vld [vmem:[%s5652] sm:$0x20]
  %vm5654 = vcmask 1045509
  %v5655 = vsel %vm5654, %v5653, %v5651
  %s5656 = scalar_lea.vmem %s0, 454
  %v5657 = vld [vmem:[%s5656] sm:$0x40]
  %vm5658 = vcmask 1046534
  %v5659 = vsel %vm5658, %v5657, %v5655
  %s5660 = scalar_lea.vmem %s0, 485
  %v5661 = vld [vmem:[%s5660] sm:$0x80]
  %vm5662 = vcmask 1047559
  %v5663 = vsel %vm5662, %v5661, %v5659
  %5664 = vrot.lane.b32.xlu0 %v5663, 48
  %v5665 = vpop.permute.xlu0 %5664
  %vm5666 = vcmask 425344
  %s5667 = scalar_lea.vmem %s1, 8
  %5668 = vst.msk [vmem:[%s5667] sm:$0xff] %vm5666, %v5665
  %s5669 = scalar_lea.vmem %s0, 1292
  %v5670 = vld [vmem:[%s5669] sm:$0x1]
  %s5671 = scalar_lea.vmem %s0, 1323
  %v5672 = vld [vmem:[%s5671] sm:$0x2]
  %vm5673 = vcmask 1041409
  %v5674 = vsel %vm5673, %v5672, %v5670
  %s5675 = scalar_lea.vmem %s0, 1354
  %v5676 = vld [vmem:[%s5675] sm:$0x4]
  %vm5677 = vcmask 1042434
  %v5678 = vsel %vm5677, %v5676, %v5674
  %s5679 = scalar_lea.vmem %s0, 1385
  %v5680 = vld [vmem:[%s5679] sm:$0x8]
  %vm5681 = vcmask 1043459
  %v5682 = vsel %vm5681, %v5680, %v5678
  %s5683 = scalar_lea.vmem %s0, 1416
  %v5684 = vld [vmem:[%s5683] sm:$0x10]
  %vm5685 = vcmask 1044484
  %v5686 = vsel %vm5685, %v5684, %v5682
  %s5687 = scalar_lea.vmem %s0, 1447
  %v5688 = vld [vmem:[%s5687] sm:$0x20]
  %vm5689 = vcmask 1045509
  %v5690 = vsel %vm5689, %v5688, %v5686
  %s5691 = scalar_lea.vmem %s0, 1478
  %v5692 = vld [vmem:[%s5691] sm:$0x40]
  %vm5693 = vcmask 1046534
  %v5694 = vsel %vm5693, %v5692, %v5690
  %s5695 = scalar_lea.vmem %s0, 1509
  %v5696 = vld [vmem:[%s5695] sm:$0x80]
  %vm5697 = vcmask 1047559
  %v5698 = vsel %vm5697, %v5696, %v5694
  %5699 = vrot.lane.b32.xlu0 %v5698, 48
  %v5700 = vpop.permute.xlu0 %5699
  %vm5701 = vcmask 425344
  %s5702 = scalar_lea.vmem %s1, 40
  %5703 = vst.msk [vmem:[%s5702] sm:$0xff] %vm5701, %v5700
  %s5704 = scalar_lea.vmem %s0, 524
  %v5705 = vld [vmem:[%s5704] sm:$0x1]
  %s5706 = scalar_lea.vmem %s0, 555
  %v5707 = vld [vmem:[%s5706] sm:$0x2]
  %vm5708 = vcmask 1041409
  %v5709 = vsel %vm5708, %v5707, %v5705
  %s5710 = scalar_lea.vmem %s0, 586
  %v5711 = vld [vmem:[%s5710] sm:$0x4]
  %vm5712 = vcmask 1042434
  %v5713 = vsel %vm5712, %v5711, %v5709
  %s5714 = scalar_lea.vmem %s0, 617
  %v5715 = vld [vmem:[%s5714] sm:$0x8]
  %vm5716 = vcmask 1043459
  %v5717 = vsel %vm5716, %v5715, %v5713
  %s5718 = scalar_lea.vmem %s0, 648
  %v5719 = vld [vmem:[%s5718] sm:$0x10]
  %vm5720 = vcmask 1044484
  %v5721 = vsel %vm5720, %v5719, %v5717
  %s5722 = scalar_lea.vmem %s0, 679
  %v5723 = vld [vmem:[%s5722] sm:$0x20]
  %vm5724 = vcmask 1045509
  %v5725 = vsel %vm5724, %v5723, %v5721
  %s5726 = scalar_lea.vmem %s0, 710
  %v5727 = vld [vmem:[%s5726] sm:$0x40]
  %vm5728 = vcmask 1046534
  %v5729 = vsel %vm5728, %v5727, %v5725
  %s5730 = scalar_lea.vmem %s0, 741
  %v5731 = vld [vmem:[%s5730] sm:$0x80]
  %vm5732 = vcmask 1047559
  %v5733 = vsel %vm5732, %v5731, %v5729
  %5734 = vrot.lane.b32.xlu0 %v5733, 48
  %v5735 = vpop.permute.xlu0 %5734
  %vm5736 = vcmask 425344
  %s5737 = scalar_lea.vmem %s1, 16
  %5738 = vst.msk [vmem:[%s5737] sm:$0xff] %vm5736, %v5735
  %s5739 = scalar_lea.vmem %s0, 1548
  %v5740 = vld [vmem:[%s5739] sm:$0x1]
  %s5741 = scalar_lea.vmem %s0, 1579
  %v5742 = vld [vmem:[%s5741] sm:$0x2]
  %vm5743 = vcmask 1041409
  %v5744 = vsel %vm5743, %v5742, %v5740
  %s5745 = scalar_lea.vmem %s0, 1610
  %v5746 = vld [vmem:[%s5745] sm:$0x4]
  %vm5747 = vcmask 1042434
  %v5748 = vsel %vm5747, %v5746, %v5744
  %s5749 = scalar_lea.vmem %s0, 1641
  %v5750 = vld [vmem:[%s5749] sm:$0x8]
  %vm5751 = vcmask 1043459
  %v5752 = vsel %vm5751, %v5750, %v5748
  %s5753 = scalar_lea.vmem %s0, 1672
  %v5754 = vld [vmem:[%s5753] sm:$0x10]
  %vm5755 = vcmask 1044484
  %v5756 = vsel %vm5755, %v5754, %v5752
  %s5757 = scalar_lea.vmem %s0, 1703
  %v5758 = vld [vmem:[%s5757] sm:$0x20]
  %vm5759 = vcmask 1045509
  %v5760 = vsel %vm5759, %v5758, %v5756
  %s5761 = scalar_lea.vmem %s0, 1734
  %v5762 = vld [vmem:[%s5761] sm:$0x40]
  %vm5763 = vcmask 1046534
  %v5764 = vsel %vm5763, %v5762, %v5760
  %s5765 = scalar_lea.vmem %s0, 1765
  %v5766 = vld [vmem:[%s5765] sm:$0x80]
  %vm5767 = vcmask 1047559
  %v5768 = vsel %vm5767, %v5766, %v5764
  %5769 = vrot.lane.b32.xlu0 %v5768, 48
  %v5770 = vpop.permute.xlu0 %5769
  %vm5771 = vcmask 425344
  %s5772 = scalar_lea.vmem %s1, 48
  %5773 = vst.msk [vmem:[%s5772] sm:$0xff] %vm5771, %v5770
  %s5774 = scalar_lea.vmem %s0, 780
  %v5775 = vld [vmem:[%s5774] sm:$0x1]
  %s5776 = scalar_lea.vmem %s0, 811
  %v5777 = vld [vmem:[%s5776] sm:$0x2]
  %vm5778 = vcmask 1041409
  %v5779 = vsel %vm5778, %v5777, %v5775
  %s5780 = scalar_lea.vmem %s0, 842
  %v5781 = vld [vmem:[%s5780] sm:$0x4]
  %vm5782 = vcmask 1042434
  %v5783 = vsel %vm5782, %v5781, %v5779
  %s5784 = scalar_lea.vmem %s0, 873
  %v5785 = vld [vmem:[%s5784] sm:$0x8]
  %vm5786 = vcmask 1043459
  %v5787 = vsel %vm5786, %v5785, %v5783
  %s5788 = scalar_lea.vmem %s0, 904
  %v5789 = vld [vmem:[%s5788] sm:$0x10]
  %vm5790 = vcmask 1044484
  %v5791 = vsel %vm5790, %v5789, %v5787
  %s5792 = scalar_lea.vmem %s0, 935
  %v5793 = vld [vmem:[%s5792] sm:$0x20]
  %vm5794 = vcmask 1045509
  %v5795 = vsel %vm5794, %v5793, %v5791
  %s5796 = scalar_lea.vmem %s0, 966
  %v5797 = vld [vmem:[%s5796] sm:$0x40]
  %vm5798 = vcmask 1046534
  %v5799 = vsel %vm5798, %v5797, %v5795
  %s5800 = scalar_lea.vmem %s0, 997
  %v5801 = vld [vmem:[%s5800] sm:$0x80]
  %vm5802 = vcmask 1047559
  %v5803 = vsel %vm5802, %v5801, %v5799
  %5804 = vrot.lane.b32.xlu0 %v5803, 48
  %v5805 = vpop.permute.xlu0 %5804
  %vm5806 = vcmask 425344
  %s5807 = scalar_lea.vmem %s1, 24
  %5808 = vst.msk [vmem:[%s5807] sm:$0xff] %vm5806, %v5805
  %s5809 = scalar_lea.vmem %s0, 1804
  %v5810 = vld [vmem:[%s5809] sm:$0x1]
  %s5811 = scalar_lea.vmem %s0, 1835
  %v5812 = vld [vmem:[%s5811] sm:$0x2]
  %vm5813 = vcmask 1041409
  %v5814 = vsel %vm5813, %v5812, %v5810
  %s5815 = scalar_lea.vmem %s0, 1866
  %v5816 = vld [vmem:[%s5815] sm:$0x4]
  %vm5817 = vcmask 1042434
  %v5818 = vsel %vm5817, %v5816, %v5814
  %s5819 = scalar_lea.vmem %s0, 1897
  %v5820 = vld [vmem:[%s5819] sm:$0x8]
  %vm5821 = vcmask 1043459
  %v5822 = vsel %vm5821, %v5820, %v5818
  %s5823 = scalar_lea.vmem %s0, 1928
  %v5824 = vld [vmem:[%s5823] sm:$0x10]
  %vm5825 = vcmask 1044484
  %v5826 = vsel %vm5825, %v5824, %v5822
  %s5827 = scalar_lea.vmem %s0, 1959
  %v5828 = vld [vmem:[%s5827] sm:$0x20]
  %vm5829 = vcmask 1045509
  %v5830 = vsel %vm5829, %v5828, %v5826
  %s5831 = scalar_lea.vmem %s0, 1990
  %v5832 = vld [vmem:[%s5831] sm:$0x40]
  %vm5833 = vcmask 1046534
  %v5834 = vsel %vm5833, %v5832, %v5830
  %s5835 = scalar_lea.vmem %s0, 2021
  %v5836 = vld [vmem:[%s5835] sm:$0x80]
  %vm5837 = vcmask 1047559
  %v5838 = vsel %vm5837, %v5836, %v5834
  %5839 = vrot.lane.b32.xlu0 %v5838, 48
  %v5840 = vpop.permute.xlu0 %5839
  %vm5841 = vcmask 425344
  %s5842 = scalar_lea.vmem %s1, 56
  %5843 = vst.msk [vmem:[%s5842] sm:$0xff] %vm5841, %v5840
  %s5844 = scalar_lea.vmem %s0, 11
  %v5845 = vld [vmem:[%s5844] sm:$0x1]
  %s5846 = scalar_lea.vmem %s0, 42
  %v5847 = vld [vmem:[%s5846] sm:$0x2]
  %vm5848 = vcmask 1041409
  %v5849 = vsel %vm5848, %v5847, %v5845
  %s5850 = scalar_lea.vmem %s0, 73
  %v5851 = vld [vmem:[%s5850] sm:$0x4]
  %vm5852 = vcmask 1042434
  %v5853 = vsel %vm5852, %v5851, %v5849
  %s5854 = scalar_lea.vmem %s0, 104
  %v5855 = vld [vmem:[%s5854] sm:$0x8]
  %vm5856 = vcmask 1043459
  %v5857 = vsel %vm5856, %v5855, %v5853
  %s5858 = scalar_lea.vmem %s0, 135
  %v5859 = vld [vmem:[%s5858] sm:$0x10]
  %vm5860 = vcmask 1044484
  %v5861 = vsel %vm5860, %v5859, %v5857
  %s5862 = scalar_lea.vmem %s0, 166
  %v5863 = vld [vmem:[%s5862] sm:$0x20]
  %vm5864 = vcmask 1045509
  %v5865 = vsel %vm5864, %v5863, %v5861
  %s5866 = scalar_lea.vmem %s0, 197
  %v5867 = vld [vmem:[%s5866] sm:$0x40]
  %vm5868 = vcmask 1046534
  %v5869 = vsel %vm5868, %v5867, %v5865
  %s5870 = scalar_lea.vmem %s0, 228
  %v5871 = vld [vmem:[%s5870] sm:$0x80]
  %vm5872 = vcmask 1047559
  %v5873 = vsel %vm5872, %v5871, %v5869
  %5874 = vrot.lane.b32.xlu0 %v5873, 44
  %v5875 = vpop.permute.xlu0 %5874
  %vm5876 = vcmask 392544
  %5877 = vst.msk [vmem:[%s1] sm:$0xff] %vm5876, %v5875
  %s5878 = scalar_lea.vmem %s0, 1035
  %v5879 = vld [vmem:[%s5878] sm:$0x1]
  %s5880 = scalar_lea.vmem %s0, 1066
  %v5881 = vld [vmem:[%s5880] sm:$0x2]
  %vm5882 = vcmask 1041409
  %v5883 = vsel %vm5882, %v5881, %v5879
  %s5884 = scalar_lea.vmem %s0, 1097
  %v5885 = vld [vmem:[%s5884] sm:$0x4]
  %vm5886 = vcmask 1042434
  %v5887 = vsel %vm5886, %v5885, %v5883
  %s5888 = scalar_lea.vmem %s0, 1128
  %v5889 = vld [vmem:[%s5888] sm:$0x8]
  %vm5890 = vcmask 1043459
  %v5891 = vsel %vm5890, %v5889, %v5887
  %s5892 = scalar_lea.vmem %s0, 1159
  %v5893 = vld [vmem:[%s5892] sm:$0x10]
  %vm5894 = vcmask 1044484
  %v5895 = vsel %vm5894, %v5893, %v5891
  %s5896 = scalar_lea.vmem %s0, 1190
  %v5897 = vld [vmem:[%s5896] sm:$0x20]
  %vm5898 = vcmask 1045509
  %v5899 = vsel %vm5898, %v5897, %v5895
  %s5900 = scalar_lea.vmem %s0, 1221
  %v5901 = vld [vmem:[%s5900] sm:$0x40]
  %vm5902 = vcmask 1046534
  %v5903 = vsel %vm5902, %v5901, %v5899
  %s5904 = scalar_lea.vmem %s0, 1252
  %v5905 = vld [vmem:[%s5904] sm:$0x80]
  %vm5906 = vcmask 1047559
  %v5907 = vsel %vm5906, %v5905, %v5903
  %5908 = vrot.lane.b32.xlu0 %v5907, 44
  %v5909 = vpop.permute.xlu0 %5908
  %vm5910 = vcmask 392544
  %s5911 = scalar_lea.vmem %s1, 32
  %5912 = vst.msk [vmem:[%s5911] sm:$0xff] %vm5910, %v5909
  %s5913 = scalar_lea.vmem %s0, 267
  %v5914 = vld [vmem:[%s5913] sm:$0x1]
  %s5915 = scalar_lea.vmem %s0, 298
  %v5916 = vld [vmem:[%s5915] sm:$0x2]
  %vm5917 = vcmask 1041409
  %v5918 = vsel %vm5917, %v5916, %v5914
  %s5919 = scalar_lea.vmem %s0, 329
  %v5920 = vld [vmem:[%s5919] sm:$0x4]
  %vm5921 = vcmask 1042434
  %v5922 = vsel %vm5921, %v5920, %v5918
  %s5923 = scalar_lea.vmem %s0, 360
  %v5924 = vld [vmem:[%s5923] sm:$0x8]
  %vm5925 = vcmask 1043459
  %v5926 = vsel %vm5925, %v5924, %v5922
  %s5927 = scalar_lea.vmem %s0, 391
  %v5928 = vld [vmem:[%s5927] sm:$0x10]
  %vm5929 = vcmask 1044484
  %v5930 = vsel %vm5929, %v5928, %v5926
  %s5931 = scalar_lea.vmem %s0, 422
  %v5932 = vld [vmem:[%s5931] sm:$0x20]
  %vm5933 = vcmask 1045509
  %v5934 = vsel %vm5933, %v5932, %v5930
  %s5935 = scalar_lea.vmem %s0, 453
  %v5936 = vld [vmem:[%s5935] sm:$0x40]
  %vm5937 = vcmask 1046534
  %v5938 = vsel %vm5937, %v5936, %v5934
  %s5939 = scalar_lea.vmem %s0, 484
  %v5940 = vld [vmem:[%s5939] sm:$0x80]
  %vm5941 = vcmask 1047559
  %v5942 = vsel %vm5941, %v5940, %v5938
  %5943 = vrot.lane.b32.xlu0 %v5942, 44
  %v5944 = vpop.permute.xlu0 %5943
  %vm5945 = vcmask 392544
  %s5946 = scalar_lea.vmem %s1, 8
  %5947 = vst.msk [vmem:[%s5946] sm:$0xff] %vm5945, %v5944
  %s5948 = scalar_lea.vmem %s0, 1291
  %v5949 = vld [vmem:[%s5948] sm:$0x1]
  %s5950 = scalar_lea.vmem %s0, 1322
  %v5951 = vld [vmem:[%s5950] sm:$0x2]
  %vm5952 = vcmask 1041409
  %v5953 = vsel %vm5952, %v5951, %v5949
  %s5954 = scalar_lea.vmem %s0, 1353
  %v5955 = vld [vmem:[%s5954] sm:$0x4]
  %vm5956 = vcmask 1042434
  %v5957 = vsel %vm5956, %v5955, %v5953
  %s5958 = scalar_lea.vmem %s0, 1384
  %v5959 = vld [vmem:[%s5958] sm:$0x8]
  %vm5960 = vcmask 1043459
  %v5961 = vsel %vm5960, %v5959, %v5957
  %s5962 = scalar_lea.vmem %s0, 1415
  %v5963 = vld [vmem:[%s5962] sm:$0x10]
  %vm5964 = vcmask 1044484
  %v5965 = vsel %vm5964, %v5963, %v5961
  %s5966 = scalar_lea.vmem %s0, 1446
  %v5967 = vld [vmem:[%s5966] sm:$0x20]
  %vm5968 = vcmask 1045509
  %v5969 = vsel %vm5968, %v5967, %v5965
  %s5970 = scalar_lea.vmem %s0, 1477
  %v5971 = vld [vmem:[%s5970] sm:$0x40]
  %vm5972 = vcmask 1046534
  %v5973 = vsel %vm5972, %v5971, %v5969
  %s5974 = scalar_lea.vmem %s0, 1508
  %v5975 = vld [vmem:[%s5974] sm:$0x80]
  %vm5976 = vcmask 1047559
  %v5977 = vsel %vm5976, %v5975, %v5973
  %5978 = vrot.lane.b32.xlu0 %v5977, 44
  %v5979 = vpop.permute.xlu0 %5978
  %vm5980 = vcmask 392544
  %s5981 = scalar_lea.vmem %s1, 40
  %5982 = vst.msk [vmem:[%s5981] sm:$0xff] %vm5980, %v5979
  %s5983 = scalar_lea.vmem %s0, 523
  %v5984 = vld [vmem:[%s5983] sm:$0x1]
  %s5985 = scalar_lea.vmem %s0, 554
  %v5986 = vld [vmem:[%s5985] sm:$0x2]
  %vm5987 = vcmask 1041409
  %v5988 = vsel %vm5987, %v5986, %v5984
  %s5989 = scalar_lea.vmem %s0, 585
  %v5990 = vld [vmem:[%s5989] sm:$0x4]
  %vm5991 = vcmask 1042434
  %v5992 = vsel %vm5991, %v5990, %v5988
  %s5993 = scalar_lea.vmem %s0, 616
  %v5994 = vld [vmem:[%s5993] sm:$0x8]
  %vm5995 = vcmask 1043459
  %v5996 = vsel %vm5995, %v5994, %v5992
  %s5997 = scalar_lea.vmem %s0, 647
  %v5998 = vld [vmem:[%s5997] sm:$0x10]
  %vm5999 = vcmask 1044484
  %v6000 = vsel %vm5999, %v5998, %v5996
  %s6001 = scalar_lea.vmem %s0, 678
  %v6002 = vld [vmem:[%s6001] sm:$0x20]
  %vm6003 = vcmask 1045509
  %v6004 = vsel %vm6003, %v6002, %v6000
  %s6005 = scalar_lea.vmem %s0, 709
  %v6006 = vld [vmem:[%s6005] sm:$0x40]
  %vm6007 = vcmask 1046534
  %v6008 = vsel %vm6007, %v6006, %v6004
  %s6009 = scalar_lea.vmem %s0, 740
  %v6010 = vld [vmem:[%s6009] sm:$0x80]
  %vm6011 = vcmask 1047559
  %v6012 = vsel %vm6011, %v6010, %v6008
  %6013 = vrot.lane.b32.xlu0 %v6012, 44
  %v6014 = vpop.permute.xlu0 %6013
  %vm6015 = vcmask 392544
  %s6016 = scalar_lea.vmem %s1, 16
  %6017 = vst.msk [vmem:[%s6016] sm:$0xff] %vm6015, %v6014
  %s6018 = scalar_lea.vmem %s0, 1547
  %v6019 = vld [vmem:[%s6018] sm:$0x1]
  %s6020 = scalar_lea.vmem %s0, 1578
  %v6021 = vld [vmem:[%s6020] sm:$0x2]
  %vm6022 = vcmask 1041409
  %v6023 = vsel %vm6022, %v6021, %v6019
  %s6024 = scalar_lea.vmem %s0, 1609
  %v6025 = vld [vmem:[%s6024] sm:$0x4]
  %vm6026 = vcmask 1042434
  %v6027 = vsel %vm6026, %v6025, %v6023
  %s6028 = scalar_lea.vmem %s0, 1640
  %v6029 = vld [vmem:[%s6028] sm:$0x8]
  %vm6030 = vcmask 1043459
  %v6031 = vsel %vm6030, %v6029, %v6027
  %s6032 = scalar_lea.vmem %s0, 1671
  %v6033 = vld [vmem:[%s6032] sm:$0x10]
  %vm6034 = vcmask 1044484
  %v6035 = vsel %vm6034, %v6033, %v6031
  %s6036 = scalar_lea.vmem %s0, 1702
  %v6037 = vld [vmem:[%s6036] sm:$0x20]
  %vm6038 = vcmask 1045509
  %v6039 = vsel %vm6038, %v6037, %v6035
  %s6040 = scalar_lea.vmem %s0, 1733
  %v6041 = vld [vmem:[%s6040] sm:$0x40]
  %vm6042 = vcmask 1046534
  %v6043 = vsel %vm6042, %v6041, %v6039
  %s6044 = scalar_lea.vmem %s0, 1764
  %v6045 = vld [vmem:[%s6044] sm:$0x80]
  %vm6046 = vcmask 1047559
  %v6047 = vsel %vm6046, %v6045, %v6043
  %6048 = vrot.lane.b32.xlu0 %v6047, 44
  %v6049 = vpop.permute.xlu0 %6048
  %vm6050 = vcmask 392544
  %s6051 = scalar_lea.vmem %s1, 48
  %6052 = vst.msk [vmem:[%s6051] sm:$0xff] %vm6050, %v6049
  %s6053 = scalar_lea.vmem %s0, 779
  %v6054 = vld [vmem:[%s6053] sm:$0x1]
  %s6055 = scalar_lea.vmem %s0, 810
  %v6056 = vld [vmem:[%s6055] sm:$0x2]
  %vm6057 = vcmask 1041409
  %v6058 = vsel %vm6057, %v6056, %v6054
  %s6059 = scalar_lea.vmem %s0, 841
  %v6060 = vld [vmem:[%s6059] sm:$0x4]
  %vm6061 = vcmask 1042434
  %v6062 = vsel %vm6061, %v6060, %v6058
  %s6063 = scalar_lea.vmem %s0, 872
  %v6064 = vld [vmem:[%s6063] sm:$0x8]
  %vm6065 = vcmask 1043459
  %v6066 = vsel %vm6065, %v6064, %v6062
  %s6067 = scalar_lea.vmem %s0, 903
  %v6068 = vld [vmem:[%s6067] sm:$0x10]
  %vm6069 = vcmask 1044484
  %v6070 = vsel %vm6069, %v6068, %v6066
  %s6071 = scalar_lea.vmem %s0, 934
  %v6072 = vld [vmem:[%s6071] sm:$0x20]
  %vm6073 = vcmask 1045509
  %v6074 = vsel %vm6073, %v6072, %v6070
  %s6075 = scalar_lea.vmem %s0, 965
  %v6076 = vld [vmem:[%s6075] sm:$0x40]
  %vm6077 = vcmask 1046534
  %v6078 = vsel %vm6077, %v6076, %v6074
  %s6079 = scalar_lea.vmem %s0, 996
  %v6080 = vld [vmem:[%s6079] sm:$0x80]
  %vm6081 = vcmask 1047559
  %v6082 = vsel %vm6081, %v6080, %v6078
  %6083 = vrot.lane.b32.xlu0 %v6082, 44
  %v6084 = vpop.permute.xlu0 %6083
  %vm6085 = vcmask 392544
  %s6086 = scalar_lea.vmem %s1, 24
  %6087 = vst.msk [vmem:[%s6086] sm:$0xff] %vm6085, %v6084
  %s6088 = scalar_lea.vmem %s0, 1803
  %v6089 = vld [vmem:[%s6088] sm:$0x1]
  %s6090 = scalar_lea.vmem %s0, 1834
  %v6091 = vld [vmem:[%s6090] sm:$0x2]
  %vm6092 = vcmask 1041409
  %v6093 = vsel %vm6092, %v6091, %v6089
  %s6094 = scalar_lea.vmem %s0, 1865
  %v6095 = vld [vmem:[%s6094] sm:$0x4]
  %vm6096 = vcmask 1042434
  %v6097 = vsel %vm6096, %v6095, %v6093
  %s6098 = scalar_lea.vmem %s0, 1896
  %v6099 = vld [vmem:[%s6098] sm:$0x8]
  %vm6100 = vcmask 1043459
  %v6101 = vsel %vm6100, %v6099, %v6097
  %s6102 = scalar_lea.vmem %s0, 1927
  %v6103 = vld [vmem:[%s6102] sm:$0x10]
  %vm6104 = vcmask 1044484
  %v6105 = vsel %vm6104, %v6103, %v6101
  %s6106 = scalar_lea.vmem %s0, 1958
  %v6107 = vld [vmem:[%s6106] sm:$0x20]
  %vm6108 = vcmask 1045509
  %v6109 = vsel %vm6108, %v6107, %v6105
  %s6110 = scalar_lea.vmem %s0, 1989
  %v6111 = vld [vmem:[%s6110] sm:$0x40]
  %vm6112 = vcmask 1046534
  %v6113 = vsel %vm6112, %v6111, %v6109
  %s6114 = scalar_lea.vmem %s0, 2020
  %v6115 = vld [vmem:[%s6114] sm:$0x80]
  %vm6116 = vcmask 1047559
  %v6117 = vsel %vm6116, %v6115, %v6113
  %6118 = vrot.lane.b32.xlu0 %v6117, 44
  %v6119 = vpop.permute.xlu0 %6118
  %vm6120 = vcmask 392544
  %s6121 = scalar_lea.vmem %s1, 56
  %6122 = vst.msk [vmem:[%s6121] sm:$0xff] %vm6120, %v6119
  %s6123 = scalar_lea.vmem %s0, 10
  %v6124 = vld [vmem:[%s6123] sm:$0x1]
  %s6125 = scalar_lea.vmem %s0, 41
  %v6126 = vld [vmem:[%s6125] sm:$0x2]
  %vm6127 = vcmask 1041409
  %v6128 = vsel %vm6127, %v6126, %v6124
  %s6129 = scalar_lea.vmem %s0, 72
  %v6130 = vld [vmem:[%s6129] sm:$0x4]
  %vm6131 = vcmask 1042434
  %v6132 = vsel %vm6131, %v6130, %v6128
  %s6133 = scalar_lea.vmem %s0, 103
  %v6134 = vld [vmem:[%s6133] sm:$0x8]
  %vm6135 = vcmask 1043459
  %v6136 = vsel %vm6135, %v6134, %v6132
  %s6137 = scalar_lea.vmem %s0, 134
  %v6138 = vld [vmem:[%s6137] sm:$0x10]
  %vm6139 = vcmask 1044484
  %v6140 = vsel %vm6139, %v6138, %v6136
  %s6141 = scalar_lea.vmem %s0, 165
  %v6142 = vld [vmem:[%s6141] sm:$0x20]
  %vm6143 = vcmask 1045509
  %v6144 = vsel %vm6143, %v6142, %v6140
  %s6145 = scalar_lea.vmem %s0, 196
  %v6146 = vld [vmem:[%s6145] sm:$0x40]
  %vm6147 = vcmask 1046534
  %v6148 = vsel %vm6147, %v6146, %v6144
  %s6149 = scalar_lea.vmem %s0, 227
  %v6150 = vld [vmem:[%s6149] sm:$0x80]
  %vm6151 = vcmask 1047559
  %v6152 = vsel %vm6151, %v6150, %v6148
  %6153 = vrot.lane.b32.xlu0 %v6152, 40
  %v6154 = vpop.permute.xlu0 %6153
  %vm6155 = vcmask 359744
  %6156 = vst.msk [vmem:[%s1] sm:$0xff] %vm6155, %v6154
  %s6157 = scalar_lea.vmem %s0, 1034
  %v6158 = vld [vmem:[%s6157] sm:$0x1]
  %s6159 = scalar_lea.vmem %s0, 1065
  %v6160 = vld [vmem:[%s6159] sm:$0x2]
  %vm6161 = vcmask 1041409
  %v6162 = vsel %vm6161, %v6160, %v6158
  %s6163 = scalar_lea.vmem %s0, 1096
  %v6164 = vld [vmem:[%s6163] sm:$0x4]
  %vm6165 = vcmask 1042434
  %v6166 = vsel %vm6165, %v6164, %v6162
  %s6167 = scalar_lea.vmem %s0, 1127
  %v6168 = vld [vmem:[%s6167] sm:$0x8]
  %vm6169 = vcmask 1043459
  %v6170 = vsel %vm6169, %v6168, %v6166
  %s6171 = scalar_lea.vmem %s0, 1158
  %v6172 = vld [vmem:[%s6171] sm:$0x10]
  %vm6173 = vcmask 1044484
  %v6174 = vsel %vm6173, %v6172, %v6170
  %s6175 = scalar_lea.vmem %s0, 1189
  %v6176 = vld [vmem:[%s6175] sm:$0x20]
  %vm6177 = vcmask 1045509
  %v6178 = vsel %vm6177, %v6176, %v6174
  %s6179 = scalar_lea.vmem %s0, 1220
  %v6180 = vld [vmem:[%s6179] sm:$0x40]
  %vm6181 = vcmask 1046534
  %v6182 = vsel %vm6181, %v6180, %v6178
  %s6183 = scalar_lea.vmem %s0, 1251
  %v6184 = vld [vmem:[%s6183] sm:$0x80]
  %vm6185 = vcmask 1047559
  %v6186 = vsel %vm6185, %v6184, %v6182
  %6187 = vrot.lane.b32.xlu0 %v6186, 40
  %v6188 = vpop.permute.xlu0 %6187
  %vm6189 = vcmask 359744
  %s6190 = scalar_lea.vmem %s1, 32
  %6191 = vst.msk [vmem:[%s6190] sm:$0xff] %vm6189, %v6188
  %s6192 = scalar_lea.vmem %s0, 266
  %v6193 = vld [vmem:[%s6192] sm:$0x1]
  %s6194 = scalar_lea.vmem %s0, 297
  %v6195 = vld [vmem:[%s6194] sm:$0x2]
  %vm6196 = vcmask 1041409
  %v6197 = vsel %vm6196, %v6195, %v6193
  %s6198 = scalar_lea.vmem %s0, 328
  %v6199 = vld [vmem:[%s6198] sm:$0x4]
  %vm6200 = vcmask 1042434
  %v6201 = vsel %vm6200, %v6199, %v6197
  %s6202 = scalar_lea.vmem %s0, 359
  %v6203 = vld [vmem:[%s6202] sm:$0x8]
  %vm6204 = vcmask 1043459
  %v6205 = vsel %vm6204, %v6203, %v6201
  %s6206 = scalar_lea.vmem %s0, 390
  %v6207 = vld [vmem:[%s6206] sm:$0x10]
  %vm6208 = vcmask 1044484
  %v6209 = vsel %vm6208, %v6207, %v6205
  %s6210 = scalar_lea.vmem %s0, 421
  %v6211 = vld [vmem:[%s6210] sm:$0x20]
  %vm6212 = vcmask 1045509
  %v6213 = vsel %vm6212, %v6211, %v6209
  %s6214 = scalar_lea.vmem %s0, 452
  %v6215 = vld [vmem:[%s6214] sm:$0x40]
  %vm6216 = vcmask 1046534
  %v6217 = vsel %vm6216, %v6215, %v6213
  %s6218 = scalar_lea.vmem %s0, 483
  %v6219 = vld [vmem:[%s6218] sm:$0x80]
  %vm6220 = vcmask 1047559
  %v6221 = vsel %vm6220, %v6219, %v6217
  %6222 = vrot.lane.b32.xlu0 %v6221, 40
  %v6223 = vpop.permute.xlu0 %6222
  %vm6224 = vcmask 359744
  %s6225 = scalar_lea.vmem %s1, 8
  %6226 = vst.msk [vmem:[%s6225] sm:$0xff] %vm6224, %v6223
  %s6227 = scalar_lea.vmem %s0, 1290
  %v6228 = vld [vmem:[%s6227] sm:$0x1]
  %s6229 = scalar_lea.vmem %s0, 1321
  %v6230 = vld [vmem:[%s6229] sm:$0x2]
  %vm6231 = vcmask 1041409
  %v6232 = vsel %vm6231, %v6230, %v6228
  %s6233 = scalar_lea.vmem %s0, 1352
  %v6234 = vld [vmem:[%s6233] sm:$0x4]
  %vm6235 = vcmask 1042434
  %v6236 = vsel %vm6235, %v6234, %v6232
  %s6237 = scalar_lea.vmem %s0, 1383
  %v6238 = vld [vmem:[%s6237] sm:$0x8]
  %vm6239 = vcmask 1043459
  %v6240 = vsel %vm6239, %v6238, %v6236
  %s6241 = scalar_lea.vmem %s0, 1414
  %v6242 = vld [vmem:[%s6241] sm:$0x10]
  %vm6243 = vcmask 1044484
  %v6244 = vsel %vm6243, %v6242, %v6240
  %s6245 = scalar_lea.vmem %s0, 1445
  %v6246 = vld [vmem:[%s6245] sm:$0x20]
  %vm6247 = vcmask 1045509
  %v6248 = vsel %vm6247, %v6246, %v6244
  %s6249 = scalar_lea.vmem %s0, 1476
  %v6250 = vld [vmem:[%s6249] sm:$0x40]
  %vm6251 = vcmask 1046534
  %v6252 = vsel %vm6251, %v6250, %v6248
  %s6253 = scalar_lea.vmem %s0, 1507
  %v6254 = vld [vmem:[%s6253] sm:$0x80]
  %vm6255 = vcmask 1047559
  %v6256 = vsel %vm6255, %v6254, %v6252
  %6257 = vrot.lane.b32.xlu0 %v6256, 40
  %v6258 = vpop.permute.xlu0 %6257
  %vm6259 = vcmask 359744
  %s6260 = scalar_lea.vmem %s1, 40
  %6261 = vst.msk [vmem:[%s6260] sm:$0xff] %vm6259, %v6258
  %s6262 = scalar_lea.vmem %s0, 522
  %v6263 = vld [vmem:[%s6262] sm:$0x1]
  %s6264 = scalar_lea.vmem %s0, 553
  %v6265 = vld [vmem:[%s6264] sm:$0x2]
  %vm6266 = vcmask 1041409
  %v6267 = vsel %vm6266, %v6265, %v6263
  %s6268 = scalar_lea.vmem %s0, 584
  %v6269 = vld [vmem:[%s6268] sm:$0x4]
  %vm6270 = vcmask 1042434
  %v6271 = vsel %vm6270, %v6269, %v6267
  %s6272 = scalar_lea.vmem %s0, 615
  %v6273 = vld [vmem:[%s6272] sm:$0x8]
  %vm6274 = vcmask 1043459
  %v6275 = vsel %vm6274, %v6273, %v6271
  %s6276 = scalar_lea.vmem %s0, 646
  %v6277 = vld [vmem:[%s6276] sm:$0x10]
  %vm6278 = vcmask 1044484
  %v6279 = vsel %vm6278, %v6277, %v6275
  %s6280 = scalar_lea.vmem %s0, 677
  %v6281 = vld [vmem:[%s6280] sm:$0x20]
  %vm6282 = vcmask 1045509
  %v6283 = vsel %vm6282, %v6281, %v6279
  %s6284 = scalar_lea.vmem %s0, 708
  %v6285 = vld [vmem:[%s6284] sm:$0x40]
  %vm6286 = vcmask 1046534
  %v6287 = vsel %vm6286, %v6285, %v6283
  %s6288 = scalar_lea.vmem %s0, 739
  %v6289 = vld [vmem:[%s6288] sm:$0x80]
  %vm6290 = vcmask 1047559
  %v6291 = vsel %vm6290, %v6289, %v6287
  %6292 = vrot.lane.b32.xlu0 %v6291, 40
  %v6293 = vpop.permute.xlu0 %6292
  %vm6294 = vcmask 359744
  %s6295 = scalar_lea.vmem %s1, 16
  %6296 = vst.msk [vmem:[%s6295] sm:$0xff] %vm6294, %v6293
  %s6297 = scalar_lea.vmem %s0, 1546
  %v6298 = vld [vmem:[%s6297] sm:$0x1]
  %s6299 = scalar_lea.vmem %s0, 1577
  %v6300 = vld [vmem:[%s6299] sm:$0x2]
  %vm6301 = vcmask 1041409
  %v6302 = vsel %vm6301, %v6300, %v6298
  %s6303 = scalar_lea.vmem %s0, 1608
  %v6304 = vld [vmem:[%s6303] sm:$0x4]
  %vm6305 = vcmask 1042434
  %v6306 = vsel %vm6305, %v6304, %v6302
  %s6307 = scalar_lea.vmem %s0, 1639
  %v6308 = vld [vmem:[%s6307] sm:$0x8]
  %vm6309 = vcmask 1043459
  %v6310 = vsel %vm6309, %v6308, %v6306
  %s6311 = scalar_lea.vmem %s0, 1670
  %v6312 = vld [vmem:[%s6311] sm:$0x10]
  %vm6313 = vcmask 1044484
  %v6314 = vsel %vm6313, %v6312, %v6310
  %s6315 = scalar_lea.vmem %s0, 1701
  %v6316 = vld [vmem:[%s6315] sm:$0x20]
  %vm6317 = vcmask 1045509
  %v6318 = vsel %vm6317, %v6316, %v6314
  %s6319 = scalar_lea.vmem %s0, 1732
  %v6320 = vld [vmem:[%s6319] sm:$0x40]
  %vm6321 = vcmask 1046534
  %v6322 = vsel %vm6321, %v6320, %v6318
  %s6323 = scalar_lea.vmem %s0, 1763
  %v6324 = vld [vmem:[%s6323] sm:$0x80]
  %vm6325 = vcmask 1047559
  %v6326 = vsel %vm6325, %v6324, %v6322
  %6327 = vrot.lane.b32.xlu0 %v6326, 40
  %v6328 = vpop.permute.xlu0 %6327
  %vm6329 = vcmask 359744
  %s6330 = scalar_lea.vmem %s1, 48
  %6331 = vst.msk [vmem:[%s6330] sm:$0xff] %vm6329, %v6328
  %s6332 = scalar_lea.vmem %s0, 778
  %v6333 = vld [vmem:[%s6332] sm:$0x1]
  %s6334 = scalar_lea.vmem %s0, 809
  %v6335 = vld [vmem:[%s6334] sm:$0x2]
  %vm6336 = vcmask 1041409
  %v6337 = vsel %vm6336, %v6335, %v6333
  %s6338 = scalar_lea.vmem %s0, 840
  %v6339 = vld [vmem:[%s6338] sm:$0x4]
  %vm6340 = vcmask 1042434
  %v6341 = vsel %vm6340, %v6339, %v6337
  %s6342 = scalar_lea.vmem %s0, 871
  %v6343 = vld [vmem:[%s6342] sm:$0x8]
  %vm6344 = vcmask 1043459
  %v6345 = vsel %vm6344, %v6343, %v6341
  %s6346 = scalar_lea.vmem %s0, 902
  %v6347 = vld [vmem:[%s6346] sm:$0x10]
  %vm6348 = vcmask 1044484
  %v6349 = vsel %vm6348, %v6347, %v6345
  %s6350 = scalar_lea.vmem %s0, 933
  %v6351 = vld [vmem:[%s6350] sm:$0x20]
  %vm6352 = vcmask 1045509
  %v6353 = vsel %vm6352, %v6351, %v6349
  %s6354 = scalar_lea.vmem %s0, 964
  %v6355 = vld [vmem:[%s6354] sm:$0x40]
  %vm6356 = vcmask 1046534
  %v6357 = vsel %vm6356, %v6355, %v6353
  %s6358 = scalar_lea.vmem %s0, 995
  %v6359 = vld [vmem:[%s6358] sm:$0x80]
  %vm6360 = vcmask 1047559
  %v6361 = vsel %vm6360, %v6359, %v6357
  %6362 = vrot.lane.b32.xlu0 %v6361, 40
  %v6363 = vpop.permute.xlu0 %6362
  %vm6364 = vcmask 359744
  %s6365 = scalar_lea.vmem %s1, 24
  %6366 = vst.msk [vmem:[%s6365] sm:$0xff] %vm6364, %v6363
  %s6367 = scalar_lea.vmem %s0, 1802
  %v6368 = vld [vmem:[%s6367] sm:$0x1]
  %s6369 = scalar_lea.vmem %s0, 1833
  %v6370 = vld [vmem:[%s6369] sm:$0x2]
  %vm6371 = vcmask 1041409
  %v6372 = vsel %vm6371, %v6370, %v6368
  %s6373 = scalar_lea.vmem %s0, 1864
  %v6374 = vld [vmem:[%s6373] sm:$0x4]
  %vm6375 = vcmask 1042434
  %v6376 = vsel %vm6375, %v6374, %v6372
  %s6377 = scalar_lea.vmem %s0, 1895
  %v6378 = vld [vmem:[%s6377] sm:$0x8]
  %vm6379 = vcmask 1043459
  %v6380 = vsel %vm6379, %v6378, %v6376
  %s6381 = scalar_lea.vmem %s0, 1926
  %v6382 = vld [vmem:[%s6381] sm:$0x10]
  %vm6383 = vcmask 1044484
  %v6384 = vsel %vm6383, %v6382, %v6380
  %s6385 = scalar_lea.vmem %s0, 1957
  %v6386 = vld [vmem:[%s6385] sm:$0x20]
  %vm6387 = vcmask 1045509
  %v6388 = vsel %vm6387, %v6386, %v6384
  %s6389 = scalar_lea.vmem %s0, 1988
  %v6390 = vld [vmem:[%s6389] sm:$0x40]
  %vm6391 = vcmask 1046534
  %v6392 = vsel %vm6391, %v6390, %v6388
  %s6393 = scalar_lea.vmem %s0, 2019
  %v6394 = vld [vmem:[%s6393] sm:$0x80]
  %vm6395 = vcmask 1047559
  %v6396 = vsel %vm6395, %v6394, %v6392
  %6397 = vrot.lane.b32.xlu0 %v6396, 40
  %v6398 = vpop.permute.xlu0 %6397
  %vm6399 = vcmask 359744
  %s6400 = scalar_lea.vmem %s1, 56
  %6401 = vst.msk [vmem:[%s6400] sm:$0xff] %vm6399, %v6398
  %s6402 = scalar_lea.vmem %s0, 9
  %v6403 = vld [vmem:[%s6402] sm:$0x1]
  %s6404 = scalar_lea.vmem %s0, 40
  %v6405 = vld [vmem:[%s6404] sm:$0x2]
  %vm6406 = vcmask 1041409
  %v6407 = vsel %vm6406, %v6405, %v6403
  %s6408 = scalar_lea.vmem %s0, 71
  %v6409 = vld [vmem:[%s6408] sm:$0x4]
  %vm6410 = vcmask 1042434
  %v6411 = vsel %vm6410, %v6409, %v6407
  %s6412 = scalar_lea.vmem %s0, 102
  %v6413 = vld [vmem:[%s6412] sm:$0x8]
  %vm6414 = vcmask 1043459
  %v6415 = vsel %vm6414, %v6413, %v6411
  %s6416 = scalar_lea.vmem %s0, 133
  %v6417 = vld [vmem:[%s6416] sm:$0x10]
  %vm6418 = vcmask 1044484
  %v6419 = vsel %vm6418, %v6417, %v6415
  %s6420 = scalar_lea.vmem %s0, 164
  %v6421 = vld [vmem:[%s6420] sm:$0x20]
  %vm6422 = vcmask 1045509
  %v6423 = vsel %vm6422, %v6421, %v6419
  %s6424 = scalar_lea.vmem %s0, 195
  %v6425 = vld [vmem:[%s6424] sm:$0x40]
  %vm6426 = vcmask 1046534
  %v6427 = vsel %vm6426, %v6425, %v6423
  %s6428 = scalar_lea.vmem %s0, 226
  %v6429 = vld [vmem:[%s6428] sm:$0x80]
  %vm6430 = vcmask 1047559
  %v6431 = vsel %vm6430, %v6429, %v6427
  %6432 = vrot.lane.b32.xlu0 %v6431, 36
  %v6433 = vpop.permute.xlu0 %6432
  %vm6434 = vcmask 326944
  %6435 = vst.msk [vmem:[%s1] sm:$0xff] %vm6434, %v6433
  %s6436 = scalar_lea.vmem %s0, 1033
  %v6437 = vld [vmem:[%s6436] sm:$0x1]
  %s6438 = scalar_lea.vmem %s0, 1064
  %v6439 = vld [vmem:[%s6438] sm:$0x2]
  %vm6440 = vcmask 1041409
  %v6441 = vsel %vm6440, %v6439, %v6437
  %s6442 = scalar_lea.vmem %s0, 1095
  %v6443 = vld [vmem:[%s6442] sm:$0x4]
  %vm6444 = vcmask 1042434
  %v6445 = vsel %vm6444, %v6443, %v6441
  %s6446 = scalar_lea.vmem %s0, 1126
  %v6447 = vld [vmem:[%s6446] sm:$0x8]
  %vm6448 = vcmask 1043459
  %v6449 = vsel %vm6448, %v6447, %v6445
  %s6450 = scalar_lea.vmem %s0, 1157
  %v6451 = vld [vmem:[%s6450] sm:$0x10]
  %vm6452 = vcmask 1044484
  %v6453 = vsel %vm6452, %v6451, %v6449
  %s6454 = scalar_lea.vmem %s0, 1188
  %v6455 = vld [vmem:[%s6454] sm:$0x20]
  %vm6456 = vcmask 1045509
  %v6457 = vsel %vm6456, %v6455, %v6453
  %s6458 = scalar_lea.vmem %s0, 1219
  %v6459 = vld [vmem:[%s6458] sm:$0x40]
  %vm6460 = vcmask 1046534
  %v6461 = vsel %vm6460, %v6459, %v6457
  %s6462 = scalar_lea.vmem %s0, 1250
  %v6463 = vld [vmem:[%s6462] sm:$0x80]
  %vm6464 = vcmask 1047559
  %v6465 = vsel %vm6464, %v6463, %v6461
  %6466 = vrot.lane.b32.xlu0 %v6465, 36
  %v6467 = vpop.permute.xlu0 %6466
  %vm6468 = vcmask 326944
  %s6469 = scalar_lea.vmem %s1, 32
  %6470 = vst.msk [vmem:[%s6469] sm:$0xff] %vm6468, %v6467
  %s6471 = scalar_lea.vmem %s0, 265
  %v6472 = vld [vmem:[%s6471] sm:$0x1]
  %s6473 = scalar_lea.vmem %s0, 296
  %v6474 = vld [vmem:[%s6473] sm:$0x2]
  %vm6475 = vcmask 1041409
  %v6476 = vsel %vm6475, %v6474, %v6472
  %s6477 = scalar_lea.vmem %s0, 327
  %v6478 = vld [vmem:[%s6477] sm:$0x4]
  %vm6479 = vcmask 1042434
  %v6480 = vsel %vm6479, %v6478, %v6476
  %s6481 = scalar_lea.vmem %s0, 358
  %v6482 = vld [vmem:[%s6481] sm:$0x8]
  %vm6483 = vcmask 1043459
  %v6484 = vsel %vm6483, %v6482, %v6480
  %s6485 = scalar_lea.vmem %s0, 389
  %v6486 = vld [vmem:[%s6485] sm:$0x10]
  %vm6487 = vcmask 1044484
  %v6488 = vsel %vm6487, %v6486, %v6484
  %s6489 = scalar_lea.vmem %s0, 420
  %v6490 = vld [vmem:[%s6489] sm:$0x20]
  %vm6491 = vcmask 1045509
  %v6492 = vsel %vm6491, %v6490, %v6488
  %s6493 = scalar_lea.vmem %s0, 451
  %v6494 = vld [vmem:[%s6493] sm:$0x40]
  %vm6495 = vcmask 1046534
  %v6496 = vsel %vm6495, %v6494, %v6492
  %s6497 = scalar_lea.vmem %s0, 482
  %v6498 = vld [vmem:[%s6497] sm:$0x80]
  %vm6499 = vcmask 1047559
  %v6500 = vsel %vm6499, %v6498, %v6496
  %6501 = vrot.lane.b32.xlu0 %v6500, 36
  %v6502 = vpop.permute.xlu0 %6501
  %vm6503 = vcmask 326944
  %s6504 = scalar_lea.vmem %s1, 8
  %6505 = vst.msk [vmem:[%s6504] sm:$0xff] %vm6503, %v6502
  %s6506 = scalar_lea.vmem %s0, 1289
  %v6507 = vld [vmem:[%s6506] sm:$0x1]
  %s6508 = scalar_lea.vmem %s0, 1320
  %v6509 = vld [vmem:[%s6508] sm:$0x2]
  %vm6510 = vcmask 1041409
  %v6511 = vsel %vm6510, %v6509, %v6507
  %s6512 = scalar_lea.vmem %s0, 1351
  %v6513 = vld [vmem:[%s6512] sm:$0x4]
  %vm6514 = vcmask 1042434
  %v6515 = vsel %vm6514, %v6513, %v6511
  %s6516 = scalar_lea.vmem %s0, 1382
  %v6517 = vld [vmem:[%s6516] sm:$0x8]
  %vm6518 = vcmask 1043459
  %v6519 = vsel %vm6518, %v6517, %v6515
  %s6520 = scalar_lea.vmem %s0, 1413
  %v6521 = vld [vmem:[%s6520] sm:$0x10]
  %vm6522 = vcmask 1044484
  %v6523 = vsel %vm6522, %v6521, %v6519
  %s6524 = scalar_lea.vmem %s0, 1444
  %v6525 = vld [vmem:[%s6524] sm:$0x20]
  %vm6526 = vcmask 1045509
  %v6527 = vsel %vm6526, %v6525, %v6523
  %s6528 = scalar_lea.vmem %s0, 1475
  %v6529 = vld [vmem:[%s6528] sm:$0x40]
  %vm6530 = vcmask 1046534
  %v6531 = vsel %vm6530, %v6529, %v6527
  %s6532 = scalar_lea.vmem %s0, 1506
  %v6533 = vld [vmem:[%s6532] sm:$0x80]
  %vm6534 = vcmask 1047559
  %v6535 = vsel %vm6534, %v6533, %v6531
  %6536 = vrot.lane.b32.xlu0 %v6535, 36
  %v6537 = vpop.permute.xlu0 %6536
  %vm6538 = vcmask 326944
  %s6539 = scalar_lea.vmem %s1, 40
  %6540 = vst.msk [vmem:[%s6539] sm:$0xff] %vm6538, %v6537
  %s6541 = scalar_lea.vmem %s0, 521
  %v6542 = vld [vmem:[%s6541] sm:$0x1]
  %s6543 = scalar_lea.vmem %s0, 552
  %v6544 = vld [vmem:[%s6543] sm:$0x2]
  %vm6545 = vcmask 1041409
  %v6546 = vsel %vm6545, %v6544, %v6542
  %s6547 = scalar_lea.vmem %s0, 583
  %v6548 = vld [vmem:[%s6547] sm:$0x4]
  %vm6549 = vcmask 1042434
  %v6550 = vsel %vm6549, %v6548, %v6546
  %s6551 = scalar_lea.vmem %s0, 614
  %v6552 = vld [vmem:[%s6551] sm:$0x8]
  %vm6553 = vcmask 1043459
  %v6554 = vsel %vm6553, %v6552, %v6550
  %s6555 = scalar_lea.vmem %s0, 645
  %v6556 = vld [vmem:[%s6555] sm:$0x10]
  %vm6557 = vcmask 1044484
  %v6558 = vsel %vm6557, %v6556, %v6554
  %s6559 = scalar_lea.vmem %s0, 676
  %v6560 = vld [vmem:[%s6559] sm:$0x20]
  %vm6561 = vcmask 1045509
  %v6562 = vsel %vm6561, %v6560, %v6558
  %s6563 = scalar_lea.vmem %s0, 707
  %v6564 = vld [vmem:[%s6563] sm:$0x40]
  %vm6565 = vcmask 1046534
  %v6566 = vsel %vm6565, %v6564, %v6562
  %s6567 = scalar_lea.vmem %s0, 738
  %v6568 = vld [vmem:[%s6567] sm:$0x80]
  %vm6569 = vcmask 1047559
  %v6570 = vsel %vm6569, %v6568, %v6566
  %6571 = vrot.lane.b32.xlu0 %v6570, 36
  %v6572 = vpop.permute.xlu0 %6571
  %vm6573 = vcmask 326944
  %s6574 = scalar_lea.vmem %s1, 16
  %6575 = vst.msk [vmem:[%s6574] sm:$0xff] %vm6573, %v6572
  %s6576 = scalar_lea.vmem %s0, 1545
  %v6577 = vld [vmem:[%s6576] sm:$0x1]
  %s6578 = scalar_lea.vmem %s0, 1576
  %v6579 = vld [vmem:[%s6578] sm:$0x2]
  %vm6580 = vcmask 1041409
  %v6581 = vsel %vm6580, %v6579, %v6577
  %s6582 = scalar_lea.vmem %s0, 1607
  %v6583 = vld [vmem:[%s6582] sm:$0x4]
  %vm6584 = vcmask 1042434
  %v6585 = vsel %vm6584, %v6583, %v6581
  %s6586 = scalar_lea.vmem %s0, 1638
  %v6587 = vld [vmem:[%s6586] sm:$0x8]
  %vm6588 = vcmask 1043459
  %v6589 = vsel %vm6588, %v6587, %v6585
  %s6590 = scalar_lea.vmem %s0, 1669
  %v6591 = vld [vmem:[%s6590] sm:$0x10]
  %vm6592 = vcmask 1044484
  %v6593 = vsel %vm6592, %v6591, %v6589
  %s6594 = scalar_lea.vmem %s0, 1700
  %v6595 = vld [vmem:[%s6594] sm:$0x20]
  %vm6596 = vcmask 1045509
  %v6597 = vsel %vm6596, %v6595, %v6593
  %s6598 = scalar_lea.vmem %s0, 1731
  %v6599 = vld [vmem:[%s6598] sm:$0x40]
  %vm6600 = vcmask 1046534
  %v6601 = vsel %vm6600, %v6599, %v6597
  %s6602 = scalar_lea.vmem %s0, 1762
  %v6603 = vld [vmem:[%s6602] sm:$0x80]
  %vm6604 = vcmask 1047559
  %v6605 = vsel %vm6604, %v6603, %v6601
  %6606 = vrot.lane.b32.xlu0 %v6605, 36
  %v6607 = vpop.permute.xlu0 %6606
  %vm6608 = vcmask 326944
  %s6609 = scalar_lea.vmem %s1, 48
  %6610 = vst.msk [vmem:[%s6609] sm:$0xff] %vm6608, %v6607
  %s6611 = scalar_lea.vmem %s0, 777
  %v6612 = vld [vmem:[%s6611] sm:$0x1]
  %s6613 = scalar_lea.vmem %s0, 808
  %v6614 = vld [vmem:[%s6613] sm:$0x2]
  %vm6615 = vcmask 1041409
  %v6616 = vsel %vm6615, %v6614, %v6612
  %s6617 = scalar_lea.vmem %s0, 839
  %v6618 = vld [vmem:[%s6617] sm:$0x4]
  %vm6619 = vcmask 1042434
  %v6620 = vsel %vm6619, %v6618, %v6616
  %s6621 = scalar_lea.vmem %s0, 870
  %v6622 = vld [vmem:[%s6621] sm:$0x8]
  %vm6623 = vcmask 1043459
  %v6624 = vsel %vm6623, %v6622, %v6620
  %s6625 = scalar_lea.vmem %s0, 901
  %v6626 = vld [vmem:[%s6625] sm:$0x10]
  %vm6627 = vcmask 1044484
  %v6628 = vsel %vm6627, %v6626, %v6624
  %s6629 = scalar_lea.vmem %s0, 932
  %v6630 = vld [vmem:[%s6629] sm:$0x20]
  %vm6631 = vcmask 1045509
  %v6632 = vsel %vm6631, %v6630, %v6628
  %s6633 = scalar_lea.vmem %s0, 963
  %v6634 = vld [vmem:[%s6633] sm:$0x40]
  %vm6635 = vcmask 1046534
  %v6636 = vsel %vm6635, %v6634, %v6632
  %s6637 = scalar_lea.vmem %s0, 994
  %v6638 = vld [vmem:[%s6637] sm:$0x80]
  %vm6639 = vcmask 1047559
  %v6640 = vsel %vm6639, %v6638, %v6636
  %6641 = vrot.lane.b32.xlu0 %v6640, 36
  %v6642 = vpop.permute.xlu0 %6641
  %vm6643 = vcmask 326944
  %s6644 = scalar_lea.vmem %s1, 24
  %6645 = vst.msk [vmem:[%s6644] sm:$0xff] %vm6643, %v6642
  %s6646 = scalar_lea.vmem %s0, 1801
  %v6647 = vld [vmem:[%s6646] sm:$0x1]
  %s6648 = scalar_lea.vmem %s0, 1832
  %v6649 = vld [vmem:[%s6648] sm:$0x2]
  %vm6650 = vcmask 1041409
  %v6651 = vsel %vm6650, %v6649, %v6647
  %s6652 = scalar_lea.vmem %s0, 1863
  %v6653 = vld [vmem:[%s6652] sm:$0x4]
  %vm6654 = vcmask 1042434
  %v6655 = vsel %vm6654, %v6653, %v6651
  %s6656 = scalar_lea.vmem %s0, 1894
  %v6657 = vld [vmem:[%s6656] sm:$0x8]
  %vm6658 = vcmask 1043459
  %v6659 = vsel %vm6658, %v6657, %v6655
  %s6660 = scalar_lea.vmem %s0, 1925
  %v6661 = vld [vmem:[%s6660] sm:$0x10]
  %vm6662 = vcmask 1044484
  %v6663 = vsel %vm6662, %v6661, %v6659
  %s6664 = scalar_lea.vmem %s0, 1956
  %v6665 = vld [vmem:[%s6664] sm:$0x20]
  %vm6666 = vcmask 1045509
  %v6667 = vsel %vm6666, %v6665, %v6663
  %s6668 = scalar_lea.vmem %s0, 1987
  %v6669 = vld [vmem:[%s6668] sm:$0x40]
  %vm6670 = vcmask 1046534
  %v6671 = vsel %vm6670, %v6669, %v6667
  %s6672 = scalar_lea.vmem %s0, 2018
  %v6673 = vld [vmem:[%s6672] sm:$0x80]
  %vm6674 = vcmask 1047559
  %v6675 = vsel %vm6674, %v6673, %v6671
  %6676 = vrot.lane.b32.xlu0 %v6675, 36
  %v6677 = vpop.permute.xlu0 %6676
  %vm6678 = vcmask 326944
  %s6679 = scalar_lea.vmem %s1, 56
  %6680 = vst.msk [vmem:[%s6679] sm:$0xff] %vm6678, %v6677
  %s6681 = scalar_lea.vmem %s0, 8
  %v6682 = vld [vmem:[%s6681] sm:$0x1]
  %s6683 = scalar_lea.vmem %s0, 39
  %v6684 = vld [vmem:[%s6683] sm:$0x2]
  %vm6685 = vcmask 1041409
  %v6686 = vsel %vm6685, %v6684, %v6682
  %s6687 = scalar_lea.vmem %s0, 70
  %v6688 = vld [vmem:[%s6687] sm:$0x4]
  %vm6689 = vcmask 1042434
  %v6690 = vsel %vm6689, %v6688, %v6686
  %s6691 = scalar_lea.vmem %s0, 101
  %v6692 = vld [vmem:[%s6691] sm:$0x8]
  %vm6693 = vcmask 1043459
  %v6694 = vsel %vm6693, %v6692, %v6690
  %s6695 = scalar_lea.vmem %s0, 132
  %v6696 = vld [vmem:[%s6695] sm:$0x10]
  %vm6697 = vcmask 1044484
  %v6698 = vsel %vm6697, %v6696, %v6694
  %s6699 = scalar_lea.vmem %s0, 163
  %v6700 = vld [vmem:[%s6699] sm:$0x20]
  %vm6701 = vcmask 1045509
  %v6702 = vsel %vm6701, %v6700, %v6698
  %s6703 = scalar_lea.vmem %s0, 194
  %v6704 = vld [vmem:[%s6703] sm:$0x40]
  %vm6705 = vcmask 1046534
  %v6706 = vsel %vm6705, %v6704, %v6702
  %s6707 = scalar_lea.vmem %s0, 225
  %v6708 = vld [vmem:[%s6707] sm:$0x80]
  %vm6709 = vcmask 1047559
  %v6710 = vsel %vm6709, %v6708, %v6706
  %6711 = vrot.lane.b32.xlu0 %v6710, 32
  %v6712 = vpop.permute.xlu0 %6711
  %vm6713 = vcmask 294144
  %6714 = vst.msk [vmem:[%s1] sm:$0xff] %vm6713, %v6712
  %s6715 = scalar_lea.vmem %s0, 1032
  %v6716 = vld [vmem:[%s6715] sm:$0x1]
  %s6717 = scalar_lea.vmem %s0, 1063
  %v6718 = vld [vmem:[%s6717] sm:$0x2]
  %vm6719 = vcmask 1041409
  %v6720 = vsel %vm6719, %v6718, %v6716
  %s6721 = scalar_lea.vmem %s0, 1094
  %v6722 = vld [vmem:[%s6721] sm:$0x4]
  %vm6723 = vcmask 1042434
  %v6724 = vsel %vm6723, %v6722, %v6720
  %s6725 = scalar_lea.vmem %s0, 1125
  %v6726 = vld [vmem:[%s6725] sm:$0x8]
  %vm6727 = vcmask 1043459
  %v6728 = vsel %vm6727, %v6726, %v6724
  %s6729 = scalar_lea.vmem %s0, 1156
  %v6730 = vld [vmem:[%s6729] sm:$0x10]
  %vm6731 = vcmask 1044484
  %v6732 = vsel %vm6731, %v6730, %v6728
  %s6733 = scalar_lea.vmem %s0, 1187
  %v6734 = vld [vmem:[%s6733] sm:$0x20]
  %vm6735 = vcmask 1045509
  %v6736 = vsel %vm6735, %v6734, %v6732
  %s6737 = scalar_lea.vmem %s0, 1218
  %v6738 = vld [vmem:[%s6737] sm:$0x40]
  %vm6739 = vcmask 1046534
  %v6740 = vsel %vm6739, %v6738, %v6736
  %s6741 = scalar_lea.vmem %s0, 1249
  %v6742 = vld [vmem:[%s6741] sm:$0x80]
  %vm6743 = vcmask 1047559
  %v6744 = vsel %vm6743, %v6742, %v6740
  %6745 = vrot.lane.b32.xlu0 %v6744, 32
  %v6746 = vpop.permute.xlu0 %6745
  %vm6747 = vcmask 294144
  %s6748 = scalar_lea.vmem %s1, 32
  %6749 = vst.msk [vmem:[%s6748] sm:$0xff] %vm6747, %v6746
  %s6750 = scalar_lea.vmem %s0, 264
  %v6751 = vld [vmem:[%s6750] sm:$0x1]
  %s6752 = scalar_lea.vmem %s0, 295
  %v6753 = vld [vmem:[%s6752] sm:$0x2]
  %vm6754 = vcmask 1041409
  %v6755 = vsel %vm6754, %v6753, %v6751
  %s6756 = scalar_lea.vmem %s0, 326
  %v6757 = vld [vmem:[%s6756] sm:$0x4]
  %vm6758 = vcmask 1042434
  %v6759 = vsel %vm6758, %v6757, %v6755
  %s6760 = scalar_lea.vmem %s0, 357
  %v6761 = vld [vmem:[%s6760] sm:$0x8]
  %vm6762 = vcmask 1043459
  %v6763 = vsel %vm6762, %v6761, %v6759
  %s6764 = scalar_lea.vmem %s0, 388
  %v6765 = vld [vmem:[%s6764] sm:$0x10]
  %vm6766 = vcmask 1044484
  %v6767 = vsel %vm6766, %v6765, %v6763
  %s6768 = scalar_lea.vmem %s0, 419
  %v6769 = vld [vmem:[%s6768] sm:$0x20]
  %vm6770 = vcmask 1045509
  %v6771 = vsel %vm6770, %v6769, %v6767
  %s6772 = scalar_lea.vmem %s0, 450
  %v6773 = vld [vmem:[%s6772] sm:$0x40]
  %vm6774 = vcmask 1046534
  %v6775 = vsel %vm6774, %v6773, %v6771
  %s6776 = scalar_lea.vmem %s0, 481
  %v6777 = vld [vmem:[%s6776] sm:$0x80]
  %vm6778 = vcmask 1047559
  %v6779 = vsel %vm6778, %v6777, %v6775
  %6780 = vrot.lane.b32.xlu0 %v6779, 32
  %v6781 = vpop.permute.xlu0 %6780
  %vm6782 = vcmask 294144
  %s6783 = scalar_lea.vmem %s1, 8
  %6784 = vst.msk [vmem:[%s6783] sm:$0xff] %vm6782, %v6781
  %s6785 = scalar_lea.vmem %s0, 1288
  %v6786 = vld [vmem:[%s6785] sm:$0x1]
  %s6787 = scalar_lea.vmem %s0, 1319
  %v6788 = vld [vmem:[%s6787] sm:$0x2]
  %vm6789 = vcmask 1041409
  %v6790 = vsel %vm6789, %v6788, %v6786
  %s6791 = scalar_lea.vmem %s0, 1350
  %v6792 = vld [vmem:[%s6791] sm:$0x4]
  %vm6793 = vcmask 1042434
  %v6794 = vsel %vm6793, %v6792, %v6790
  %s6795 = scalar_lea.vmem %s0, 1381
  %v6796 = vld [vmem:[%s6795] sm:$0x8]
  %vm6797 = vcmask 1043459
  %v6798 = vsel %vm6797, %v6796, %v6794
  %s6799 = scalar_lea.vmem %s0, 1412
  %v6800 = vld [vmem:[%s6799] sm:$0x10]
  %vm6801 = vcmask 1044484
  %v6802 = vsel %vm6801, %v6800, %v6798
  %s6803 = scalar_lea.vmem %s0, 1443
  %v6804 = vld [vmem:[%s6803] sm:$0x20]
  %vm6805 = vcmask 1045509
  %v6806 = vsel %vm6805, %v6804, %v6802
  %s6807 = scalar_lea.vmem %s0, 1474
  %v6808 = vld [vmem:[%s6807] sm:$0x40]
  %vm6809 = vcmask 1046534
  %v6810 = vsel %vm6809, %v6808, %v6806
  %s6811 = scalar_lea.vmem %s0, 1505
  %v6812 = vld [vmem:[%s6811] sm:$0x80]
  %vm6813 = vcmask 1047559
  %v6814 = vsel %vm6813, %v6812, %v6810
  %6815 = vrot.lane.b32.xlu0 %v6814, 32
  %v6816 = vpop.permute.xlu0 %6815
  %vm6817 = vcmask 294144
  %s6818 = scalar_lea.vmem %s1, 40
  %6819 = vst.msk [vmem:[%s6818] sm:$0xff] %vm6817, %v6816
  %s6820 = scalar_lea.vmem %s0, 520
  %v6821 = vld [vmem:[%s6820] sm:$0x1]
  %s6822 = scalar_lea.vmem %s0, 551
  %v6823 = vld [vmem:[%s6822] sm:$0x2]
  %vm6824 = vcmask 1041409
  %v6825 = vsel %vm6824, %v6823, %v6821
  %s6826 = scalar_lea.vmem %s0, 582
  %v6827 = vld [vmem:[%s6826] sm:$0x4]
  %vm6828 = vcmask 1042434
  %v6829 = vsel %vm6828, %v6827, %v6825
  %s6830 = scalar_lea.vmem %s0, 613
  %v6831 = vld [vmem:[%s6830] sm:$0x8]
  %vm6832 = vcmask 1043459
  %v6833 = vsel %vm6832, %v6831, %v6829
  %s6834 = scalar_lea.vmem %s0, 644
  %v6835 = vld [vmem:[%s6834] sm:$0x10]
  %vm6836 = vcmask 1044484
  %v6837 = vsel %vm6836, %v6835, %v6833
  %s6838 = scalar_lea.vmem %s0, 675
  %v6839 = vld [vmem:[%s6838] sm:$0x20]
  %vm6840 = vcmask 1045509
  %v6841 = vsel %vm6840, %v6839, %v6837
  %s6842 = scalar_lea.vmem %s0, 706
  %v6843 = vld [vmem:[%s6842] sm:$0x40]
  %vm6844 = vcmask 1046534
  %v6845 = vsel %vm6844, %v6843, %v6841
  %s6846 = scalar_lea.vmem %s0, 737
  %v6847 = vld [vmem:[%s6846] sm:$0x80]
  %vm6848 = vcmask 1047559
  %v6849 = vsel %vm6848, %v6847, %v6845
  %6850 = vrot.lane.b32.xlu0 %v6849, 32
  %v6851 = vpop.permute.xlu0 %6850
  %vm6852 = vcmask 294144
  %s6853 = scalar_lea.vmem %s1, 16
  %6854 = vst.msk [vmem:[%s6853] sm:$0xff] %vm6852, %v6851
  %s6855 = scalar_lea.vmem %s0, 1544
  %v6856 = vld [vmem:[%s6855] sm:$0x1]
  %s6857 = scalar_lea.vmem %s0, 1575
  %v6858 = vld [vmem:[%s6857] sm:$0x2]
  %vm6859 = vcmask 1041409
  %v6860 = vsel %vm6859, %v6858, %v6856
  %s6861 = scalar_lea.vmem %s0, 1606
  %v6862 = vld [vmem:[%s6861] sm:$0x4]
  %vm6863 = vcmask 1042434
  %v6864 = vsel %vm6863, %v6862, %v6860
  %s6865 = scalar_lea.vmem %s0, 1637
  %v6866 = vld [vmem:[%s6865] sm:$0x8]
  %vm6867 = vcmask 1043459
  %v6868 = vsel %vm6867, %v6866, %v6864
  %s6869 = scalar_lea.vmem %s0, 1668
  %v6870 = vld [vmem:[%s6869] sm:$0x10]
  %vm6871 = vcmask 1044484
  %v6872 = vsel %vm6871, %v6870, %v6868
  %s6873 = scalar_lea.vmem %s0, 1699
  %v6874 = vld [vmem:[%s6873] sm:$0x20]
  %vm6875 = vcmask 1045509
  %v6876 = vsel %vm6875, %v6874, %v6872
  %s6877 = scalar_lea.vmem %s0, 1730
  %v6878 = vld [vmem:[%s6877] sm:$0x40]
  %vm6879 = vcmask 1046534
  %v6880 = vsel %vm6879, %v6878, %v6876
  %s6881 = scalar_lea.vmem %s0, 1761
  %v6882 = vld [vmem:[%s6881] sm:$0x80]
  %vm6883 = vcmask 1047559
  %v6884 = vsel %vm6883, %v6882, %v6880
  %6885 = vrot.lane.b32.xlu0 %v6884, 32
  %v6886 = vpop.permute.xlu0 %6885
  %vm6887 = vcmask 294144
  %s6888 = scalar_lea.vmem %s1, 48
  %6889 = vst.msk [vmem:[%s6888] sm:$0xff] %vm6887, %v6886
  %s6890 = scalar_lea.vmem %s0, 776
  %v6891 = vld [vmem:[%s6890] sm:$0x1]
  %s6892 = scalar_lea.vmem %s0, 807
  %v6893 = vld [vmem:[%s6892] sm:$0x2]
  %vm6894 = vcmask 1041409
  %v6895 = vsel %vm6894, %v6893, %v6891
  %s6896 = scalar_lea.vmem %s0, 838
  %v6897 = vld [vmem:[%s6896] sm:$0x4]
  %vm6898 = vcmask 1042434
  %v6899 = vsel %vm6898, %v6897, %v6895
  %s6900 = scalar_lea.vmem %s0, 869
  %v6901 = vld [vmem:[%s6900] sm:$0x8]
  %vm6902 = vcmask 1043459
  %v6903 = vsel %vm6902, %v6901, %v6899
  %s6904 = scalar_lea.vmem %s0, 900
  %v6905 = vld [vmem:[%s6904] sm:$0x10]
  %vm6906 = vcmask 1044484
  %v6907 = vsel %vm6906, %v6905, %v6903
  %s6908 = scalar_lea.vmem %s0, 931
  %v6909 = vld [vmem:[%s6908] sm:$0x20]
  %vm6910 = vcmask 1045509
  %v6911 = vsel %vm6910, %v6909, %v6907
  %s6912 = scalar_lea.vmem %s0, 962
  %v6913 = vld [vmem:[%s6912] sm:$0x40]
  %vm6914 = vcmask 1046534
  %v6915 = vsel %vm6914, %v6913, %v6911
  %s6916 = scalar_lea.vmem %s0, 993
  %v6917 = vld [vmem:[%s6916] sm:$0x80]
  %vm6918 = vcmask 1047559
  %v6919 = vsel %vm6918, %v6917, %v6915
  %6920 = vrot.lane.b32.xlu0 %v6919, 32
  %v6921 = vpop.permute.xlu0 %6920
  %vm6922 = vcmask 294144
  %s6923 = scalar_lea.vmem %s1, 24
  %6924 = vst.msk [vmem:[%s6923] sm:$0xff] %vm6922, %v6921
  %s6925 = scalar_lea.vmem %s0, 1800
  %v6926 = vld [vmem:[%s6925] sm:$0x1]
  %s6927 = scalar_lea.vmem %s0, 1831
  %v6928 = vld [vmem:[%s6927] sm:$0x2]
  %vm6929 = vcmask 1041409
  %v6930 = vsel %vm6929, %v6928, %v6926
  %s6931 = scalar_lea.vmem %s0, 1862
  %v6932 = vld [vmem:[%s6931] sm:$0x4]
  %vm6933 = vcmask 1042434
  %v6934 = vsel %vm6933, %v6932, %v6930
  %s6935 = scalar_lea.vmem %s0, 1893
  %v6936 = vld [vmem:[%s6935] sm:$0x8]
  %vm6937 = vcmask 1043459
  %v6938 = vsel %vm6937, %v6936, %v6934
  %s6939 = scalar_lea.vmem %s0, 1924
  %v6940 = vld [vmem:[%s6939] sm:$0x10]
  %vm6941 = vcmask 1044484
  %v6942 = vsel %vm6941, %v6940, %v6938
  %s6943 = scalar_lea.vmem %s0, 1955
  %v6944 = vld [vmem:[%s6943] sm:$0x20]
  %vm6945 = vcmask 1045509
  %v6946 = vsel %vm6945, %v6944, %v6942
  %s6947 = scalar_lea.vmem %s0, 1986
  %v6948 = vld [vmem:[%s6947] sm:$0x40]
  %vm6949 = vcmask 1046534
  %v6950 = vsel %vm6949, %v6948, %v6946
  %s6951 = scalar_lea.vmem %s0, 2017
  %v6952 = vld [vmem:[%s6951] sm:$0x80]
  %vm6953 = vcmask 1047559
  %v6954 = vsel %vm6953, %v6952, %v6950
  %6955 = vrot.lane.b32.xlu0 %v6954, 32
  %v6956 = vpop.permute.xlu0 %6955
  %vm6957 = vcmask 294144
  %s6958 = scalar_lea.vmem %s1, 56
  %6959 = vst.msk [vmem:[%s6958] sm:$0xff] %vm6957, %v6956
  %s6960 = scalar_lea.vmem %s0, 7
  %v6961 = vld [vmem:[%s6960] sm:$0x1]
  %s6962 = scalar_lea.vmem %s0, 38
  %v6963 = vld [vmem:[%s6962] sm:$0x2]
  %vm6964 = vcmask 1041409
  %v6965 = vsel %vm6964, %v6963, %v6961
  %s6966 = scalar_lea.vmem %s0, 69
  %v6967 = vld [vmem:[%s6966] sm:$0x4]
  %vm6968 = vcmask 1042434
  %v6969 = vsel %vm6968, %v6967, %v6965
  %s6970 = scalar_lea.vmem %s0, 100
  %v6971 = vld [vmem:[%s6970] sm:$0x8]
  %vm6972 = vcmask 1043459
  %v6973 = vsel %vm6972, %v6971, %v6969
  %s6974 = scalar_lea.vmem %s0, 131
  %v6975 = vld [vmem:[%s6974] sm:$0x10]
  %vm6976 = vcmask 1044484
  %v6977 = vsel %vm6976, %v6975, %v6973
  %s6978 = scalar_lea.vmem %s0, 162
  %v6979 = vld [vmem:[%s6978] sm:$0x20]
  %vm6980 = vcmask 1045509
  %v6981 = vsel %vm6980, %v6979, %v6977
  %s6982 = scalar_lea.vmem %s0, 193
  %v6983 = vld [vmem:[%s6982] sm:$0x40]
  %vm6984 = vcmask 1046534
  %v6985 = vsel %vm6984, %v6983, %v6981
  %s6986 = scalar_lea.vmem %s0, 224
  %v6987 = vld [vmem:[%s6986] sm:$0x80]
  %vm6988 = vcmask 1047559
  %v6989 = vsel %vm6988, %v6987, %v6985
  %6990 = vrot.lane.b32.xlu0 %v6989, 28
  %v6991 = vpop.permute.xlu0 %6990
  %vm6992 = vcmask 261344
  %6993 = vst.msk [vmem:[%s1] sm:$0xff] %vm6992, %v6991
  %s6994 = scalar_lea.vmem %s0, 1031
  %v6995 = vld [vmem:[%s6994] sm:$0x1]
  %s6996 = scalar_lea.vmem %s0, 1062
  %v6997 = vld [vmem:[%s6996] sm:$0x2]
  %vm6998 = vcmask 1041409
  %v6999 = vsel %vm6998, %v6997, %v6995
  %s7000 = scalar_lea.vmem %s0, 1093
  %v7001 = vld [vmem:[%s7000] sm:$0x4]
  %vm7002 = vcmask 1042434
  %v7003 = vsel %vm7002, %v7001, %v6999
  %s7004 = scalar_lea.vmem %s0, 1124
  %v7005 = vld [vmem:[%s7004] sm:$0x8]
  %vm7006 = vcmask 1043459
  %v7007 = vsel %vm7006, %v7005, %v7003
  %s7008 = scalar_lea.vmem %s0, 1155
  %v7009 = vld [vmem:[%s7008] sm:$0x10]
  %vm7010 = vcmask 1044484
  %v7011 = vsel %vm7010, %v7009, %v7007
  %s7012 = scalar_lea.vmem %s0, 1186
  %v7013 = vld [vmem:[%s7012] sm:$0x20]
  %vm7014 = vcmask 1045509
  %v7015 = vsel %vm7014, %v7013, %v7011
  %s7016 = scalar_lea.vmem %s0, 1217
  %v7017 = vld [vmem:[%s7016] sm:$0x40]
  %vm7018 = vcmask 1046534
  %v7019 = vsel %vm7018, %v7017, %v7015
  %s7020 = scalar_lea.vmem %s0, 1248
  %v7021 = vld [vmem:[%s7020] sm:$0x80]
  %vm7022 = vcmask 1047559
  %v7023 = vsel %vm7022, %v7021, %v7019
  %7024 = vrot.lane.b32.xlu0 %v7023, 28
  %v7025 = vpop.permute.xlu0 %7024
  %vm7026 = vcmask 261344
  %s7027 = scalar_lea.vmem %s1, 32
  %7028 = vst.msk [vmem:[%s7027] sm:$0xff] %vm7026, %v7025
  %s7029 = scalar_lea.vmem %s0, 263
  %v7030 = vld [vmem:[%s7029] sm:$0x1]
  %s7031 = scalar_lea.vmem %s0, 294
  %v7032 = vld [vmem:[%s7031] sm:$0x2]
  %vm7033 = vcmask 1041409
  %v7034 = vsel %vm7033, %v7032, %v7030
  %s7035 = scalar_lea.vmem %s0, 325
  %v7036 = vld [vmem:[%s7035] sm:$0x4]
  %vm7037 = vcmask 1042434
  %v7038 = vsel %vm7037, %v7036, %v7034
  %s7039 = scalar_lea.vmem %s0, 356
  %v7040 = vld [vmem:[%s7039] sm:$0x8]
  %vm7041 = vcmask 1043459
  %v7042 = vsel %vm7041, %v7040, %v7038
  %s7043 = scalar_lea.vmem %s0, 387
  %v7044 = vld [vmem:[%s7043] sm:$0x10]
  %vm7045 = vcmask 1044484
  %v7046 = vsel %vm7045, %v7044, %v7042
  %s7047 = scalar_lea.vmem %s0, 418
  %v7048 = vld [vmem:[%s7047] sm:$0x20]
  %vm7049 = vcmask 1045509
  %v7050 = vsel %vm7049, %v7048, %v7046
  %s7051 = scalar_lea.vmem %s0, 449
  %v7052 = vld [vmem:[%s7051] sm:$0x40]
  %vm7053 = vcmask 1046534
  %v7054 = vsel %vm7053, %v7052, %v7050
  %s7055 = scalar_lea.vmem %s0, 480
  %v7056 = vld [vmem:[%s7055] sm:$0x80]
  %vm7057 = vcmask 1047559
  %v7058 = vsel %vm7057, %v7056, %v7054
  %7059 = vrot.lane.b32.xlu0 %v7058, 28
  %v7060 = vpop.permute.xlu0 %7059
  %vm7061 = vcmask 261344
  %s7062 = scalar_lea.vmem %s1, 8
  %7063 = vst.msk [vmem:[%s7062] sm:$0xff] %vm7061, %v7060
  %s7064 = scalar_lea.vmem %s0, 1287
  %v7065 = vld [vmem:[%s7064] sm:$0x1]
  %s7066 = scalar_lea.vmem %s0, 1318
  %v7067 = vld [vmem:[%s7066] sm:$0x2]
  %vm7068 = vcmask 1041409
  %v7069 = vsel %vm7068, %v7067, %v7065
  %s7070 = scalar_lea.vmem %s0, 1349
  %v7071 = vld [vmem:[%s7070] sm:$0x4]
  %vm7072 = vcmask 1042434
  %v7073 = vsel %vm7072, %v7071, %v7069
  %s7074 = scalar_lea.vmem %s0, 1380
  %v7075 = vld [vmem:[%s7074] sm:$0x8]
  %vm7076 = vcmask 1043459
  %v7077 = vsel %vm7076, %v7075, %v7073
  %s7078 = scalar_lea.vmem %s0, 1411
  %v7079 = vld [vmem:[%s7078] sm:$0x10]
  %vm7080 = vcmask 1044484
  %v7081 = vsel %vm7080, %v7079, %v7077
  %s7082 = scalar_lea.vmem %s0, 1442
  %v7083 = vld [vmem:[%s7082] sm:$0x20]
  %vm7084 = vcmask 1045509
  %v7085 = vsel %vm7084, %v7083, %v7081
  %s7086 = scalar_lea.vmem %s0, 1473
  %v7087 = vld [vmem:[%s7086] sm:$0x40]
  %vm7088 = vcmask 1046534
  %v7089 = vsel %vm7088, %v7087, %v7085
  %s7090 = scalar_lea.vmem %s0, 1504
  %v7091 = vld [vmem:[%s7090] sm:$0x80]
  %vm7092 = vcmask 1047559
  %v7093 = vsel %vm7092, %v7091, %v7089
  %7094 = vrot.lane.b32.xlu0 %v7093, 28
  %v7095 = vpop.permute.xlu0 %7094
  %vm7096 = vcmask 261344
  %s7097 = scalar_lea.vmem %s1, 40
  %7098 = vst.msk [vmem:[%s7097] sm:$0xff] %vm7096, %v7095
  %s7099 = scalar_lea.vmem %s0, 519
  %v7100 = vld [vmem:[%s7099] sm:$0x1]
  %s7101 = scalar_lea.vmem %s0, 550
  %v7102 = vld [vmem:[%s7101] sm:$0x2]
  %vm7103 = vcmask 1041409
  %v7104 = vsel %vm7103, %v7102, %v7100
  %s7105 = scalar_lea.vmem %s0, 581
  %v7106 = vld [vmem:[%s7105] sm:$0x4]
  %vm7107 = vcmask 1042434
  %v7108 = vsel %vm7107, %v7106, %v7104
  %s7109 = scalar_lea.vmem %s0, 612
  %v7110 = vld [vmem:[%s7109] sm:$0x8]
  %vm7111 = vcmask 1043459
  %v7112 = vsel %vm7111, %v7110, %v7108
  %s7113 = scalar_lea.vmem %s0, 643
  %v7114 = vld [vmem:[%s7113] sm:$0x10]
  %vm7115 = vcmask 1044484
  %v7116 = vsel %vm7115, %v7114, %v7112
  %s7117 = scalar_lea.vmem %s0, 674
  %v7118 = vld [vmem:[%s7117] sm:$0x20]
  %vm7119 = vcmask 1045509
  %v7120 = vsel %vm7119, %v7118, %v7116
  %s7121 = scalar_lea.vmem %s0, 705
  %v7122 = vld [vmem:[%s7121] sm:$0x40]
  %vm7123 = vcmask 1046534
  %v7124 = vsel %vm7123, %v7122, %v7120
  %s7125 = scalar_lea.vmem %s0, 736
  %v7126 = vld [vmem:[%s7125] sm:$0x80]
  %vm7127 = vcmask 1047559
  %v7128 = vsel %vm7127, %v7126, %v7124
  %7129 = vrot.lane.b32.xlu0 %v7128, 28
  %v7130 = vpop.permute.xlu0 %7129
  %vm7131 = vcmask 261344
  %s7132 = scalar_lea.vmem %s1, 16
  %7133 = vst.msk [vmem:[%s7132] sm:$0xff] %vm7131, %v7130
  %s7134 = scalar_lea.vmem %s0, 1543
  %v7135 = vld [vmem:[%s7134] sm:$0x1]
  %s7136 = scalar_lea.vmem %s0, 1574
  %v7137 = vld [vmem:[%s7136] sm:$0x2]
  %vm7138 = vcmask 1041409
  %v7139 = vsel %vm7138, %v7137, %v7135
  %s7140 = scalar_lea.vmem %s0, 1605
  %v7141 = vld [vmem:[%s7140] sm:$0x4]
  %vm7142 = vcmask 1042434
  %v7143 = vsel %vm7142, %v7141, %v7139
  %s7144 = scalar_lea.vmem %s0, 1636
  %v7145 = vld [vmem:[%s7144] sm:$0x8]
  %vm7146 = vcmask 1043459
  %v7147 = vsel %vm7146, %v7145, %v7143
  %s7148 = scalar_lea.vmem %s0, 1667
  %v7149 = vld [vmem:[%s7148] sm:$0x10]
  %vm7150 = vcmask 1044484
  %v7151 = vsel %vm7150, %v7149, %v7147
  %s7152 = scalar_lea.vmem %s0, 1698
  %v7153 = vld [vmem:[%s7152] sm:$0x20]
  %vm7154 = vcmask 1045509
  %v7155 = vsel %vm7154, %v7153, %v7151
  %s7156 = scalar_lea.vmem %s0, 1729
  %v7157 = vld [vmem:[%s7156] sm:$0x40]
  %vm7158 = vcmask 1046534
  %v7159 = vsel %vm7158, %v7157, %v7155
  %s7160 = scalar_lea.vmem %s0, 1760
  %v7161 = vld [vmem:[%s7160] sm:$0x80]
  %vm7162 = vcmask 1047559
  %v7163 = vsel %vm7162, %v7161, %v7159
  %7164 = vrot.lane.b32.xlu0 %v7163, 28
  %v7165 = vpop.permute.xlu0 %7164
  %vm7166 = vcmask 261344
  %s7167 = scalar_lea.vmem %s1, 48
  %7168 = vst.msk [vmem:[%s7167] sm:$0xff] %vm7166, %v7165
  %s7169 = scalar_lea.vmem %s0, 775
  %v7170 = vld [vmem:[%s7169] sm:$0x1]
  %s7171 = scalar_lea.vmem %s0, 806
  %v7172 = vld [vmem:[%s7171] sm:$0x2]
  %vm7173 = vcmask 1041409
  %v7174 = vsel %vm7173, %v7172, %v7170
  %s7175 = scalar_lea.vmem %s0, 837
  %v7176 = vld [vmem:[%s7175] sm:$0x4]
  %vm7177 = vcmask 1042434
  %v7178 = vsel %vm7177, %v7176, %v7174
  %s7179 = scalar_lea.vmem %s0, 868
  %v7180 = vld [vmem:[%s7179] sm:$0x8]
  %vm7181 = vcmask 1043459
  %v7182 = vsel %vm7181, %v7180, %v7178
  %s7183 = scalar_lea.vmem %s0, 899
  %v7184 = vld [vmem:[%s7183] sm:$0x10]
  %vm7185 = vcmask 1044484
  %v7186 = vsel %vm7185, %v7184, %v7182
  %s7187 = scalar_lea.vmem %s0, 930
  %v7188 = vld [vmem:[%s7187] sm:$0x20]
  %vm7189 = vcmask 1045509
  %v7190 = vsel %vm7189, %v7188, %v7186
  %s7191 = scalar_lea.vmem %s0, 961
  %v7192 = vld [vmem:[%s7191] sm:$0x40]
  %vm7193 = vcmask 1046534
  %v7194 = vsel %vm7193, %v7192, %v7190
  %s7195 = scalar_lea.vmem %s0, 992
  %v7196 = vld [vmem:[%s7195] sm:$0x80]
  %vm7197 = vcmask 1047559
  %v7198 = vsel %vm7197, %v7196, %v7194
  %7199 = vrot.lane.b32.xlu0 %v7198, 28
  %v7200 = vpop.permute.xlu0 %7199
  %vm7201 = vcmask 261344
  %s7202 = scalar_lea.vmem %s1, 24
  %7203 = vst.msk [vmem:[%s7202] sm:$0xff] %vm7201, %v7200
  %s7204 = scalar_lea.vmem %s0, 1799
  %v7205 = vld [vmem:[%s7204] sm:$0x1]
  %s7206 = scalar_lea.vmem %s0, 1830
  %v7207 = vld [vmem:[%s7206] sm:$0x2]
  %vm7208 = vcmask 1041409
  %v7209 = vsel %vm7208, %v7207, %v7205
  %s7210 = scalar_lea.vmem %s0, 1861
  %v7211 = vld [vmem:[%s7210] sm:$0x4]
  %vm7212 = vcmask 1042434
  %v7213 = vsel %vm7212, %v7211, %v7209
  %s7214 = scalar_lea.vmem %s0, 1892
  %v7215 = vld [vmem:[%s7214] sm:$0x8]
  %vm7216 = vcmask 1043459
  %v7217 = vsel %vm7216, %v7215, %v7213
  %s7218 = scalar_lea.vmem %s0, 1923
  %v7219 = vld [vmem:[%s7218] sm:$0x10]
  %vm7220 = vcmask 1044484
  %v7221 = vsel %vm7220, %v7219, %v7217
  %s7222 = scalar_lea.vmem %s0, 1954
  %v7223 = vld [vmem:[%s7222] sm:$0x20]
  %vm7224 = vcmask 1045509
  %v7225 = vsel %vm7224, %v7223, %v7221
  %s7226 = scalar_lea.vmem %s0, 1985
  %v7227 = vld [vmem:[%s7226] sm:$0x40]
  %vm7228 = vcmask 1046534
  %v7229 = vsel %vm7228, %v7227, %v7225
  %s7230 = scalar_lea.vmem %s0, 2016
  %v7231 = vld [vmem:[%s7230] sm:$0x80]
  %vm7232 = vcmask 1047559
  %v7233 = vsel %vm7232, %v7231, %v7229
  %7234 = vrot.lane.b32.xlu0 %v7233, 28
  %v7235 = vpop.permute.xlu0 %7234
  %vm7236 = vcmask 261344
  %s7237 = scalar_lea.vmem %s1, 56
  %7238 = vst.msk [vmem:[%s7237] sm:$0xff] %vm7236, %v7235
  %s7239 = scalar_lea.vmem %s0, 6
  %v7240 = vld [vmem:[%s7239] sm:$0x1]
  %s7241 = scalar_lea.vmem %s0, 37
  %v7242 = vld [vmem:[%s7241] sm:$0x2]
  %vm7243 = vcmask 1041409
  %v7244 = vsel %vm7243, %v7242, %v7240
  %s7245 = scalar_lea.vmem %s0, 68
  %v7246 = vld [vmem:[%s7245] sm:$0x4]
  %vm7247 = vcmask 1042434
  %v7248 = vsel %vm7247, %v7246, %v7244
  %s7249 = scalar_lea.vmem %s0, 99
  %v7250 = vld [vmem:[%s7249] sm:$0x8]
  %vm7251 = vcmask 1043459
  %v7252 = vsel %vm7251, %v7250, %v7248
  %s7253 = scalar_lea.vmem %s0, 130
  %v7254 = vld [vmem:[%s7253] sm:$0x10]
  %vm7255 = vcmask 1044484
  %v7256 = vsel %vm7255, %v7254, %v7252
  %s7257 = scalar_lea.vmem %s0, 161
  %v7258 = vld [vmem:[%s7257] sm:$0x20]
  %vm7259 = vcmask 1045509
  %v7260 = vsel %vm7259, %v7258, %v7256
  %s7261 = scalar_lea.vmem %s0, 192
  %v7262 = vld [vmem:[%s7261] sm:$0x40]
  %vm7263 = vcmask 1046534
  %v7264 = vsel %vm7263, %v7262, %v7260
  %s7265 = scalar_lea.vmem %s0, 223
  %v7266 = vld [vmem:[%s7265] sm:$0x80]
  %vm7267 = vcmask 1047559
  %v7268 = vsel %vm7267, %v7266, %v7264
  %7269 = vrot.lane.b32.xlu0 %v7268, 24
  %v7270 = vpop.permute.xlu0 %7269
  %vm7271 = vcmask 228544
  %7272 = vst.msk [vmem:[%s1] sm:$0xff] %vm7271, %v7270
  %s7273 = scalar_lea.vmem %s0, 1030
  %v7274 = vld [vmem:[%s7273] sm:$0x1]
  %s7275 = scalar_lea.vmem %s0, 1061
  %v7276 = vld [vmem:[%s7275] sm:$0x2]
  %vm7277 = vcmask 1041409
  %v7278 = vsel %vm7277, %v7276, %v7274
  %s7279 = scalar_lea.vmem %s0, 1092
  %v7280 = vld [vmem:[%s7279] sm:$0x4]
  %vm7281 = vcmask 1042434
  %v7282 = vsel %vm7281, %v7280, %v7278
  %s7283 = scalar_lea.vmem %s0, 1123
  %v7284 = vld [vmem:[%s7283] sm:$0x8]
  %vm7285 = vcmask 1043459
  %v7286 = vsel %vm7285, %v7284, %v7282
  %s7287 = scalar_lea.vmem %s0, 1154
  %v7288 = vld [vmem:[%s7287] sm:$0x10]
  %vm7289 = vcmask 1044484
  %v7290 = vsel %vm7289, %v7288, %v7286
  %s7291 = scalar_lea.vmem %s0, 1185
  %v7292 = vld [vmem:[%s7291] sm:$0x20]
  %vm7293 = vcmask 1045509
  %v7294 = vsel %vm7293, %v7292, %v7290
  %s7295 = scalar_lea.vmem %s0, 1216
  %v7296 = vld [vmem:[%s7295] sm:$0x40]
  %vm7297 = vcmask 1046534
  %v7298 = vsel %vm7297, %v7296, %v7294
  %s7299 = scalar_lea.vmem %s0, 1247
  %v7300 = vld [vmem:[%s7299] sm:$0x80]
  %vm7301 = vcmask 1047559
  %v7302 = vsel %vm7301, %v7300, %v7298
  %7303 = vrot.lane.b32.xlu0 %v7302, 24
  %v7304 = vpop.permute.xlu0 %7303
  %vm7305 = vcmask 228544
  %s7306 = scalar_lea.vmem %s1, 32
  %7307 = vst.msk [vmem:[%s7306] sm:$0xff] %vm7305, %v7304
  %s7308 = scalar_lea.vmem %s0, 262
  %v7309 = vld [vmem:[%s7308] sm:$0x1]
  %s7310 = scalar_lea.vmem %s0, 293
  %v7311 = vld [vmem:[%s7310] sm:$0x2]
  %vm7312 = vcmask 1041409
  %v7313 = vsel %vm7312, %v7311, %v7309
  %s7314 = scalar_lea.vmem %s0, 324
  %v7315 = vld [vmem:[%s7314] sm:$0x4]
  %vm7316 = vcmask 1042434
  %v7317 = vsel %vm7316, %v7315, %v7313
  %s7318 = scalar_lea.vmem %s0, 355
  %v7319 = vld [vmem:[%s7318] sm:$0x8]
  %vm7320 = vcmask 1043459
  %v7321 = vsel %vm7320, %v7319, %v7317
  %s7322 = scalar_lea.vmem %s0, 386
  %v7323 = vld [vmem:[%s7322] sm:$0x10]
  %vm7324 = vcmask 1044484
  %v7325 = vsel %vm7324, %v7323, %v7321
  %s7326 = scalar_lea.vmem %s0, 417
  %v7327 = vld [vmem:[%s7326] sm:$0x20]
  %vm7328 = vcmask 1045509
  %v7329 = vsel %vm7328, %v7327, %v7325
  %s7330 = scalar_lea.vmem %s0, 448
  %v7331 = vld [vmem:[%s7330] sm:$0x40]
  %vm7332 = vcmask 1046534
  %v7333 = vsel %vm7332, %v7331, %v7329
  %s7334 = scalar_lea.vmem %s0, 479
  %v7335 = vld [vmem:[%s7334] sm:$0x80]
  %vm7336 = vcmask 1047559
  %v7337 = vsel %vm7336, %v7335, %v7333
  %7338 = vrot.lane.b32.xlu0 %v7337, 24
  %v7339 = vpop.permute.xlu0 %7338
  %vm7340 = vcmask 228544
  %s7341 = scalar_lea.vmem %s1, 8
  %7342 = vst.msk [vmem:[%s7341] sm:$0xff] %vm7340, %v7339
  %s7343 = scalar_lea.vmem %s0, 1286
  %v7344 = vld [vmem:[%s7343] sm:$0x1]
  %s7345 = scalar_lea.vmem %s0, 1317
  %v7346 = vld [vmem:[%s7345] sm:$0x2]
  %vm7347 = vcmask 1041409
  %v7348 = vsel %vm7347, %v7346, %v7344
  %s7349 = scalar_lea.vmem %s0, 1348
  %v7350 = vld [vmem:[%s7349] sm:$0x4]
  %vm7351 = vcmask 1042434
  %v7352 = vsel %vm7351, %v7350, %v7348
  %s7353 = scalar_lea.vmem %s0, 1379
  %v7354 = vld [vmem:[%s7353] sm:$0x8]
  %vm7355 = vcmask 1043459
  %v7356 = vsel %vm7355, %v7354, %v7352
  %s7357 = scalar_lea.vmem %s0, 1410
  %v7358 = vld [vmem:[%s7357] sm:$0x10]
  %vm7359 = vcmask 1044484
  %v7360 = vsel %vm7359, %v7358, %v7356
  %s7361 = scalar_lea.vmem %s0, 1441
  %v7362 = vld [vmem:[%s7361] sm:$0x20]
  %vm7363 = vcmask 1045509
  %v7364 = vsel %vm7363, %v7362, %v7360
  %s7365 = scalar_lea.vmem %s0, 1472
  %v7366 = vld [vmem:[%s7365] sm:$0x40]
  %vm7367 = vcmask 1046534
  %v7368 = vsel %vm7367, %v7366, %v7364
  %s7369 = scalar_lea.vmem %s0, 1503
  %v7370 = vld [vmem:[%s7369] sm:$0x80]
  %vm7371 = vcmask 1047559
  %v7372 = vsel %vm7371, %v7370, %v7368
  %7373 = vrot.lane.b32.xlu0 %v7372, 24
  %v7374 = vpop.permute.xlu0 %7373
  %vm7375 = vcmask 228544
  %s7376 = scalar_lea.vmem %s1, 40
  %7377 = vst.msk [vmem:[%s7376] sm:$0xff] %vm7375, %v7374
  %s7378 = scalar_lea.vmem %s0, 518
  %v7379 = vld [vmem:[%s7378] sm:$0x1]
  %s7380 = scalar_lea.vmem %s0, 549
  %v7381 = vld [vmem:[%s7380] sm:$0x2]
  %vm7382 = vcmask 1041409
  %v7383 = vsel %vm7382, %v7381, %v7379
  %s7384 = scalar_lea.vmem %s0, 580
  %v7385 = vld [vmem:[%s7384] sm:$0x4]
  %vm7386 = vcmask 1042434
  %v7387 = vsel %vm7386, %v7385, %v7383
  %s7388 = scalar_lea.vmem %s0, 611
  %v7389 = vld [vmem:[%s7388] sm:$0x8]
  %vm7390 = vcmask 1043459
  %v7391 = vsel %vm7390, %v7389, %v7387
  %s7392 = scalar_lea.vmem %s0, 642
  %v7393 = vld [vmem:[%s7392] sm:$0x10]
  %vm7394 = vcmask 1044484
  %v7395 = vsel %vm7394, %v7393, %v7391
  %s7396 = scalar_lea.vmem %s0, 673
  %v7397 = vld [vmem:[%s7396] sm:$0x20]
  %vm7398 = vcmask 1045509
  %v7399 = vsel %vm7398, %v7397, %v7395
  %s7400 = scalar_lea.vmem %s0, 704
  %v7401 = vld [vmem:[%s7400] sm:$0x40]
  %vm7402 = vcmask 1046534
  %v7403 = vsel %vm7402, %v7401, %v7399
  %s7404 = scalar_lea.vmem %s0, 735
  %v7405 = vld [vmem:[%s7404] sm:$0x80]
  %vm7406 = vcmask 1047559
  %v7407 = vsel %vm7406, %v7405, %v7403
  %7408 = vrot.lane.b32.xlu0 %v7407, 24
  %v7409 = vpop.permute.xlu0 %7408
  %vm7410 = vcmask 228544
  %s7411 = scalar_lea.vmem %s1, 16
  %7412 = vst.msk [vmem:[%s7411] sm:$0xff] %vm7410, %v7409
  %s7413 = scalar_lea.vmem %s0, 1542
  %v7414 = vld [vmem:[%s7413] sm:$0x1]
  %s7415 = scalar_lea.vmem %s0, 1573
  %v7416 = vld [vmem:[%s7415] sm:$0x2]
  %vm7417 = vcmask 1041409
  %v7418 = vsel %vm7417, %v7416, %v7414
  %s7419 = scalar_lea.vmem %s0, 1604
  %v7420 = vld [vmem:[%s7419] sm:$0x4]
  %vm7421 = vcmask 1042434
  %v7422 = vsel %vm7421, %v7420, %v7418
  %s7423 = scalar_lea.vmem %s0, 1635
  %v7424 = vld [vmem:[%s7423] sm:$0x8]
  %vm7425 = vcmask 1043459
  %v7426 = vsel %vm7425, %v7424, %v7422
  %s7427 = scalar_lea.vmem %s0, 1666
  %v7428 = vld [vmem:[%s7427] sm:$0x10]
  %vm7429 = vcmask 1044484
  %v7430 = vsel %vm7429, %v7428, %v7426
  %s7431 = scalar_lea.vmem %s0, 1697
  %v7432 = vld [vmem:[%s7431] sm:$0x20]
  %vm7433 = vcmask 1045509
  %v7434 = vsel %vm7433, %v7432, %v7430
  %s7435 = scalar_lea.vmem %s0, 1728
  %v7436 = vld [vmem:[%s7435] sm:$0x40]
  %vm7437 = vcmask 1046534
  %v7438 = vsel %vm7437, %v7436, %v7434
  %s7439 = scalar_lea.vmem %s0, 1759
  %v7440 = vld [vmem:[%s7439] sm:$0x80]
  %vm7441 = vcmask 1047559
  %v7442 = vsel %vm7441, %v7440, %v7438
  %7443 = vrot.lane.b32.xlu0 %v7442, 24
  %v7444 = vpop.permute.xlu0 %7443
  %vm7445 = vcmask 228544
  %s7446 = scalar_lea.vmem %s1, 48
  %7447 = vst.msk [vmem:[%s7446] sm:$0xff] %vm7445, %v7444
  %s7448 = scalar_lea.vmem %s0, 774
  %v7449 = vld [vmem:[%s7448] sm:$0x1]
  %s7450 = scalar_lea.vmem %s0, 805
  %v7451 = vld [vmem:[%s7450] sm:$0x2]
  %vm7452 = vcmask 1041409
  %v7453 = vsel %vm7452, %v7451, %v7449
  %s7454 = scalar_lea.vmem %s0, 836
  %v7455 = vld [vmem:[%s7454] sm:$0x4]
  %vm7456 = vcmask 1042434
  %v7457 = vsel %vm7456, %v7455, %v7453
  %s7458 = scalar_lea.vmem %s0, 867
  %v7459 = vld [vmem:[%s7458] sm:$0x8]
  %vm7460 = vcmask 1043459
  %v7461 = vsel %vm7460, %v7459, %v7457
  %s7462 = scalar_lea.vmem %s0, 898
  %v7463 = vld [vmem:[%s7462] sm:$0x10]
  %vm7464 = vcmask 1044484
  %v7465 = vsel %vm7464, %v7463, %v7461
  %s7466 = scalar_lea.vmem %s0, 929
  %v7467 = vld [vmem:[%s7466] sm:$0x20]
  %vm7468 = vcmask 1045509
  %v7469 = vsel %vm7468, %v7467, %v7465
  %s7470 = scalar_lea.vmem %s0, 960
  %v7471 = vld [vmem:[%s7470] sm:$0x40]
  %vm7472 = vcmask 1046534
  %v7473 = vsel %vm7472, %v7471, %v7469
  %s7474 = scalar_lea.vmem %s0, 991
  %v7475 = vld [vmem:[%s7474] sm:$0x80]
  %vm7476 = vcmask 1047559
  %v7477 = vsel %vm7476, %v7475, %v7473
  %7478 = vrot.lane.b32.xlu0 %v7477, 24
  %v7479 = vpop.permute.xlu0 %7478
  %vm7480 = vcmask 228544
  %s7481 = scalar_lea.vmem %s1, 24
  %7482 = vst.msk [vmem:[%s7481] sm:$0xff] %vm7480, %v7479
  %s7483 = scalar_lea.vmem %s0, 1798
  %v7484 = vld [vmem:[%s7483] sm:$0x1]
  %s7485 = scalar_lea.vmem %s0, 1829
  %v7486 = vld [vmem:[%s7485] sm:$0x2]
  %vm7487 = vcmask 1041409
  %v7488 = vsel %vm7487, %v7486, %v7484
  %s7489 = scalar_lea.vmem %s0, 1860
  %v7490 = vld [vmem:[%s7489] sm:$0x4]
  %vm7491 = vcmask 1042434
  %v7492 = vsel %vm7491, %v7490, %v7488
  %s7493 = scalar_lea.vmem %s0, 1891
  %v7494 = vld [vmem:[%s7493] sm:$0x8]
  %vm7495 = vcmask 1043459
  %v7496 = vsel %vm7495, %v7494, %v7492
  %s7497 = scalar_lea.vmem %s0, 1922
  %v7498 = vld [vmem:[%s7497] sm:$0x10]
  %vm7499 = vcmask 1044484
  %v7500 = vsel %vm7499, %v7498, %v7496
  %s7501 = scalar_lea.vmem %s0, 1953
  %v7502 = vld [vmem:[%s7501] sm:$0x20]
  %vm7503 = vcmask 1045509
  %v7504 = vsel %vm7503, %v7502, %v7500
  %s7505 = scalar_lea.vmem %s0, 1984
  %v7506 = vld [vmem:[%s7505] sm:$0x40]
  %vm7507 = vcmask 1046534
  %v7508 = vsel %vm7507, %v7506, %v7504
  %s7509 = scalar_lea.vmem %s0, 2015
  %v7510 = vld [vmem:[%s7509] sm:$0x80]
  %vm7511 = vcmask 1047559
  %v7512 = vsel %vm7511, %v7510, %v7508
  %7513 = vrot.lane.b32.xlu0 %v7512, 24
  %v7514 = vpop.permute.xlu0 %7513
  %vm7515 = vcmask 228544
  %s7516 = scalar_lea.vmem %s1, 56
  %7517 = vst.msk [vmem:[%s7516] sm:$0xff] %vm7515, %v7514
  %s7518 = scalar_lea.vmem %s0, 5
  %v7519 = vld [vmem:[%s7518] sm:$0x1]
  %s7520 = scalar_lea.vmem %s0, 36
  %v7521 = vld [vmem:[%s7520] sm:$0x2]
  %vm7522 = vcmask 1041409
  %v7523 = vsel %vm7522, %v7521, %v7519
  %s7524 = scalar_lea.vmem %s0, 67
  %v7525 = vld [vmem:[%s7524] sm:$0x4]
  %vm7526 = vcmask 1042434
  %v7527 = vsel %vm7526, %v7525, %v7523
  %s7528 = scalar_lea.vmem %s0, 98
  %v7529 = vld [vmem:[%s7528] sm:$0x8]
  %vm7530 = vcmask 1043459
  %v7531 = vsel %vm7530, %v7529, %v7527
  %s7532 = scalar_lea.vmem %s0, 129
  %v7533 = vld [vmem:[%s7532] sm:$0x10]
  %vm7534 = vcmask 1044484
  %v7535 = vsel %vm7534, %v7533, %v7531
  %s7536 = scalar_lea.vmem %s0, 160
  %v7537 = vld [vmem:[%s7536] sm:$0x20]
  %vm7538 = vcmask 1045509
  %v7539 = vsel %vm7538, %v7537, %v7535
  %s7540 = scalar_lea.vmem %s0, 191
  %v7541 = vld [vmem:[%s7540] sm:$0x40]
  %vm7542 = vcmask 1046534
  %v7543 = vsel %vm7542, %v7541, %v7539
  %s7544 = scalar_lea.vmem %s0, 222
  %v7545 = vld [vmem:[%s7544] sm:$0x80]
  %vm7546 = vcmask 1047559
  %v7547 = vsel %vm7546, %v7545, %v7543
  %7548 = vrot.lane.b32.xlu0 %v7547, 20
  %v7549 = vpop.permute.xlu0 %7548
  %vm7550 = vcmask 195744
  %7551 = vst.msk [vmem:[%s1] sm:$0xff] %vm7550, %v7549
  %s7552 = scalar_lea.vmem %s0, 1029
  %v7553 = vld [vmem:[%s7552] sm:$0x1]
  %s7554 = scalar_lea.vmem %s0, 1060
  %v7555 = vld [vmem:[%s7554] sm:$0x2]
  %vm7556 = vcmask 1041409
  %v7557 = vsel %vm7556, %v7555, %v7553
  %s7558 = scalar_lea.vmem %s0, 1091
  %v7559 = vld [vmem:[%s7558] sm:$0x4]
  %vm7560 = vcmask 1042434
  %v7561 = vsel %vm7560, %v7559, %v7557
  %s7562 = scalar_lea.vmem %s0, 1122
  %v7563 = vld [vmem:[%s7562] sm:$0x8]
  %vm7564 = vcmask 1043459
  %v7565 = vsel %vm7564, %v7563, %v7561
  %s7566 = scalar_lea.vmem %s0, 1153
  %v7567 = vld [vmem:[%s7566] sm:$0x10]
  %vm7568 = vcmask 1044484
  %v7569 = vsel %vm7568, %v7567, %v7565
  %s7570 = scalar_lea.vmem %s0, 1184
  %v7571 = vld [vmem:[%s7570] sm:$0x20]
  %vm7572 = vcmask 1045509
  %v7573 = vsel %vm7572, %v7571, %v7569
  %s7574 = scalar_lea.vmem %s0, 1215
  %v7575 = vld [vmem:[%s7574] sm:$0x40]
  %vm7576 = vcmask 1046534
  %v7577 = vsel %vm7576, %v7575, %v7573
  %s7578 = scalar_lea.vmem %s0, 1246
  %v7579 = vld [vmem:[%s7578] sm:$0x80]
  %vm7580 = vcmask 1047559
  %v7581 = vsel %vm7580, %v7579, %v7577
  %7582 = vrot.lane.b32.xlu0 %v7581, 20
  %v7583 = vpop.permute.xlu0 %7582
  %vm7584 = vcmask 195744
  %s7585 = scalar_lea.vmem %s1, 32
  %7586 = vst.msk [vmem:[%s7585] sm:$0xff] %vm7584, %v7583
  %s7587 = scalar_lea.vmem %s0, 261
  %v7588 = vld [vmem:[%s7587] sm:$0x1]
  %s7589 = scalar_lea.vmem %s0, 292
  %v7590 = vld [vmem:[%s7589] sm:$0x2]
  %vm7591 = vcmask 1041409
  %v7592 = vsel %vm7591, %v7590, %v7588
  %s7593 = scalar_lea.vmem %s0, 323
  %v7594 = vld [vmem:[%s7593] sm:$0x4]
  %vm7595 = vcmask 1042434
  %v7596 = vsel %vm7595, %v7594, %v7592
  %s7597 = scalar_lea.vmem %s0, 354
  %v7598 = vld [vmem:[%s7597] sm:$0x8]
  %vm7599 = vcmask 1043459
  %v7600 = vsel %vm7599, %v7598, %v7596
  %s7601 = scalar_lea.vmem %s0, 385
  %v7602 = vld [vmem:[%s7601] sm:$0x10]
  %vm7603 = vcmask 1044484
  %v7604 = vsel %vm7603, %v7602, %v7600
  %s7605 = scalar_lea.vmem %s0, 416
  %v7606 = vld [vmem:[%s7605] sm:$0x20]
  %vm7607 = vcmask 1045509
  %v7608 = vsel %vm7607, %v7606, %v7604
  %s7609 = scalar_lea.vmem %s0, 447
  %v7610 = vld [vmem:[%s7609] sm:$0x40]
  %vm7611 = vcmask 1046534
  %v7612 = vsel %vm7611, %v7610, %v7608
  %s7613 = scalar_lea.vmem %s0, 478
  %v7614 = vld [vmem:[%s7613] sm:$0x80]
  %vm7615 = vcmask 1047559
  %v7616 = vsel %vm7615, %v7614, %v7612
  %7617 = vrot.lane.b32.xlu0 %v7616, 20
  %v7618 = vpop.permute.xlu0 %7617
  %vm7619 = vcmask 195744
  %s7620 = scalar_lea.vmem %s1, 8
  %7621 = vst.msk [vmem:[%s7620] sm:$0xff] %vm7619, %v7618
  %s7622 = scalar_lea.vmem %s0, 1285
  %v7623 = vld [vmem:[%s7622] sm:$0x1]
  %s7624 = scalar_lea.vmem %s0, 1316
  %v7625 = vld [vmem:[%s7624] sm:$0x2]
  %vm7626 = vcmask 1041409
  %v7627 = vsel %vm7626, %v7625, %v7623
  %s7628 = scalar_lea.vmem %s0, 1347
  %v7629 = vld [vmem:[%s7628] sm:$0x4]
  %vm7630 = vcmask 1042434
  %v7631 = vsel %vm7630, %v7629, %v7627
  %s7632 = scalar_lea.vmem %s0, 1378
  %v7633 = vld [vmem:[%s7632] sm:$0x8]
  %vm7634 = vcmask 1043459
  %v7635 = vsel %vm7634, %v7633, %v7631
  %s7636 = scalar_lea.vmem %s0, 1409
  %v7637 = vld [vmem:[%s7636] sm:$0x10]
  %vm7638 = vcmask 1044484
  %v7639 = vsel %vm7638, %v7637, %v7635
  %s7640 = scalar_lea.vmem %s0, 1440
  %v7641 = vld [vmem:[%s7640] sm:$0x20]
  %vm7642 = vcmask 1045509
  %v7643 = vsel %vm7642, %v7641, %v7639
  %s7644 = scalar_lea.vmem %s0, 1471
  %v7645 = vld [vmem:[%s7644] sm:$0x40]
  %vm7646 = vcmask 1046534
  %v7647 = vsel %vm7646, %v7645, %v7643
  %s7648 = scalar_lea.vmem %s0, 1502
  %v7649 = vld [vmem:[%s7648] sm:$0x80]
  %vm7650 = vcmask 1047559
  %v7651 = vsel %vm7650, %v7649, %v7647
  %7652 = vrot.lane.b32.xlu0 %v7651, 20
  %v7653 = vpop.permute.xlu0 %7652
  %vm7654 = vcmask 195744
  %s7655 = scalar_lea.vmem %s1, 40
  %7656 = vst.msk [vmem:[%s7655] sm:$0xff] %vm7654, %v7653
  %s7657 = scalar_lea.vmem %s0, 517
  %v7658 = vld [vmem:[%s7657] sm:$0x1]
  %s7659 = scalar_lea.vmem %s0, 548
  %v7660 = vld [vmem:[%s7659] sm:$0x2]
  %vm7661 = vcmask 1041409
  %v7662 = vsel %vm7661, %v7660, %v7658
  %s7663 = scalar_lea.vmem %s0, 579
  %v7664 = vld [vmem:[%s7663] sm:$0x4]
  %vm7665 = vcmask 1042434
  %v7666 = vsel %vm7665, %v7664, %v7662
  %s7667 = scalar_lea.vmem %s0, 610
  %v7668 = vld [vmem:[%s7667] sm:$0x8]
  %vm7669 = vcmask 1043459
  %v7670 = vsel %vm7669, %v7668, %v7666
  %s7671 = scalar_lea.vmem %s0, 641
  %v7672 = vld [vmem:[%s7671] sm:$0x10]
  %vm7673 = vcmask 1044484
  %v7674 = vsel %vm7673, %v7672, %v7670
  %s7675 = scalar_lea.vmem %s0, 672
  %v7676 = vld [vmem:[%s7675] sm:$0x20]
  %vm7677 = vcmask 1045509
  %v7678 = vsel %vm7677, %v7676, %v7674
  %s7679 = scalar_lea.vmem %s0, 703
  %v7680 = vld [vmem:[%s7679] sm:$0x40]
  %vm7681 = vcmask 1046534
  %v7682 = vsel %vm7681, %v7680, %v7678
  %s7683 = scalar_lea.vmem %s0, 734
  %v7684 = vld [vmem:[%s7683] sm:$0x80]
  %vm7685 = vcmask 1047559
  %v7686 = vsel %vm7685, %v7684, %v7682
  %7687 = vrot.lane.b32.xlu0 %v7686, 20
  %v7688 = vpop.permute.xlu0 %7687
  %vm7689 = vcmask 195744
  %s7690 = scalar_lea.vmem %s1, 16
  %7691 = vst.msk [vmem:[%s7690] sm:$0xff] %vm7689, %v7688
  %s7692 = scalar_lea.vmem %s0, 1541
  %v7693 = vld [vmem:[%s7692] sm:$0x1]
  %s7694 = scalar_lea.vmem %s0, 1572
  %v7695 = vld [vmem:[%s7694] sm:$0x2]
  %vm7696 = vcmask 1041409
  %v7697 = vsel %vm7696, %v7695, %v7693
  %s7698 = scalar_lea.vmem %s0, 1603
  %v7699 = vld [vmem:[%s7698] sm:$0x4]
  %vm7700 = vcmask 1042434
  %v7701 = vsel %vm7700, %v7699, %v7697
  %s7702 = scalar_lea.vmem %s0, 1634
  %v7703 = vld [vmem:[%s7702] sm:$0x8]
  %vm7704 = vcmask 1043459
  %v7705 = vsel %vm7704, %v7703, %v7701
  %s7706 = scalar_lea.vmem %s0, 1665
  %v7707 = vld [vmem:[%s7706] sm:$0x10]
  %vm7708 = vcmask 1044484
  %v7709 = vsel %vm7708, %v7707, %v7705
  %s7710 = scalar_lea.vmem %s0, 1696
  %v7711 = vld [vmem:[%s7710] sm:$0x20]
  %vm7712 = vcmask 1045509
  %v7713 = vsel %vm7712, %v7711, %v7709
  %s7714 = scalar_lea.vmem %s0, 1727
  %v7715 = vld [vmem:[%s7714] sm:$0x40]
  %vm7716 = vcmask 1046534
  %v7717 = vsel %vm7716, %v7715, %v7713
  %s7718 = scalar_lea.vmem %s0, 1758
  %v7719 = vld [vmem:[%s7718] sm:$0x80]
  %vm7720 = vcmask 1047559
  %v7721 = vsel %vm7720, %v7719, %v7717
  %7722 = vrot.lane.b32.xlu0 %v7721, 20
  %v7723 = vpop.permute.xlu0 %7722
  %vm7724 = vcmask 195744
  %s7725 = scalar_lea.vmem %s1, 48
  %7726 = vst.msk [vmem:[%s7725] sm:$0xff] %vm7724, %v7723
  %s7727 = scalar_lea.vmem %s0, 773
  %v7728 = vld [vmem:[%s7727] sm:$0x1]
  %s7729 = scalar_lea.vmem %s0, 804
  %v7730 = vld [vmem:[%s7729] sm:$0x2]
  %vm7731 = vcmask 1041409
  %v7732 = vsel %vm7731, %v7730, %v7728
  %s7733 = scalar_lea.vmem %s0, 835
  %v7734 = vld [vmem:[%s7733] sm:$0x4]
  %vm7735 = vcmask 1042434
  %v7736 = vsel %vm7735, %v7734, %v7732
  %s7737 = scalar_lea.vmem %s0, 866
  %v7738 = vld [vmem:[%s7737] sm:$0x8]
  %vm7739 = vcmask 1043459
  %v7740 = vsel %vm7739, %v7738, %v7736
  %s7741 = scalar_lea.vmem %s0, 897
  %v7742 = vld [vmem:[%s7741] sm:$0x10]
  %vm7743 = vcmask 1044484
  %v7744 = vsel %vm7743, %v7742, %v7740
  %s7745 = scalar_lea.vmem %s0, 928
  %v7746 = vld [vmem:[%s7745] sm:$0x20]
  %vm7747 = vcmask 1045509
  %v7748 = vsel %vm7747, %v7746, %v7744
  %s7749 = scalar_lea.vmem %s0, 959
  %v7750 = vld [vmem:[%s7749] sm:$0x40]
  %vm7751 = vcmask 1046534
  %v7752 = vsel %vm7751, %v7750, %v7748
  %s7753 = scalar_lea.vmem %s0, 990
  %v7754 = vld [vmem:[%s7753] sm:$0x80]
  %vm7755 = vcmask 1047559
  %v7756 = vsel %vm7755, %v7754, %v7752
  %7757 = vrot.lane.b32.xlu0 %v7756, 20
  %v7758 = vpop.permute.xlu0 %7757
  %vm7759 = vcmask 195744
  %s7760 = scalar_lea.vmem %s1, 24
  %7761 = vst.msk [vmem:[%s7760] sm:$0xff] %vm7759, %v7758
  %s7762 = scalar_lea.vmem %s0, 1797
  %v7763 = vld [vmem:[%s7762] sm:$0x1]
  %s7764 = scalar_lea.vmem %s0, 1828
  %v7765 = vld [vmem:[%s7764] sm:$0x2]
  %vm7766 = vcmask 1041409
  %v7767 = vsel %vm7766, %v7765, %v7763
  %s7768 = scalar_lea.vmem %s0, 1859
  %v7769 = vld [vmem:[%s7768] sm:$0x4]
  %vm7770 = vcmask 1042434
  %v7771 = vsel %vm7770, %v7769, %v7767
  %s7772 = scalar_lea.vmem %s0, 1890
  %v7773 = vld [vmem:[%s7772] sm:$0x8]
  %vm7774 = vcmask 1043459
  %v7775 = vsel %vm7774, %v7773, %v7771
  %s7776 = scalar_lea.vmem %s0, 1921
  %v7777 = vld [vmem:[%s7776] sm:$0x10]
  %vm7778 = vcmask 1044484
  %v7779 = vsel %vm7778, %v7777, %v7775
  %s7780 = scalar_lea.vmem %s0, 1952
  %v7781 = vld [vmem:[%s7780] sm:$0x20]
  %vm7782 = vcmask 1045509
  %v7783 = vsel %vm7782, %v7781, %v7779
  %s7784 = scalar_lea.vmem %s0, 1983
  %v7785 = vld [vmem:[%s7784] sm:$0x40]
  %vm7786 = vcmask 1046534
  %v7787 = vsel %vm7786, %v7785, %v7783
  %s7788 = scalar_lea.vmem %s0, 2014
  %v7789 = vld [vmem:[%s7788] sm:$0x80]
  %vm7790 = vcmask 1047559
  %v7791 = vsel %vm7790, %v7789, %v7787
  %7792 = vrot.lane.b32.xlu0 %v7791, 20
  %v7793 = vpop.permute.xlu0 %7792
  %vm7794 = vcmask 195744
  %s7795 = scalar_lea.vmem %s1, 56
  %7796 = vst.msk [vmem:[%s7795] sm:$0xff] %vm7794, %v7793
  %s7797 = scalar_lea.vmem %s0, 4
  %v7798 = vld [vmem:[%s7797] sm:$0x1]
  %s7799 = scalar_lea.vmem %s0, 35
  %v7800 = vld [vmem:[%s7799] sm:$0x2]
  %vm7801 = vcmask 1041409
  %v7802 = vsel %vm7801, %v7800, %v7798
  %s7803 = scalar_lea.vmem %s0, 66
  %v7804 = vld [vmem:[%s7803] sm:$0x4]
  %vm7805 = vcmask 1042434
  %v7806 = vsel %vm7805, %v7804, %v7802
  %s7807 = scalar_lea.vmem %s0, 97
  %v7808 = vld [vmem:[%s7807] sm:$0x8]
  %vm7809 = vcmask 1043459
  %v7810 = vsel %vm7809, %v7808, %v7806
  %s7811 = scalar_lea.vmem %s0, 128
  %v7812 = vld [vmem:[%s7811] sm:$0x10]
  %vm7813 = vcmask 1044484
  %v7814 = vsel %vm7813, %v7812, %v7810
  %s7815 = scalar_lea.vmem %s0, 159
  %v7816 = vld [vmem:[%s7815] sm:$0x20]
  %vm7817 = vcmask 1045509
  %v7818 = vsel %vm7817, %v7816, %v7814
  %s7819 = scalar_lea.vmem %s0, 190
  %v7820 = vld [vmem:[%s7819] sm:$0x40]
  %vm7821 = vcmask 1046534
  %v7822 = vsel %vm7821, %v7820, %v7818
  %s7823 = scalar_lea.vmem %s0, 221
  %v7824 = vld [vmem:[%s7823] sm:$0x80]
  %vm7825 = vcmask 1047559
  %v7826 = vsel %vm7825, %v7824, %v7822
  %7827 = vrot.lane.b32.xlu0 %v7826, 16
  %v7828 = vpop.permute.xlu0 %7827
  %vm7829 = vcmask 162944
  %7830 = vst.msk [vmem:[%s1] sm:$0xff] %vm7829, %v7828
  %s7831 = scalar_lea.vmem %s0, 1028
  %v7832 = vld [vmem:[%s7831] sm:$0x1]
  %s7833 = scalar_lea.vmem %s0, 1059
  %v7834 = vld [vmem:[%s7833] sm:$0x2]
  %vm7835 = vcmask 1041409
  %v7836 = vsel %vm7835, %v7834, %v7832
  %s7837 = scalar_lea.vmem %s0, 1090
  %v7838 = vld [vmem:[%s7837] sm:$0x4]
  %vm7839 = vcmask 1042434
  %v7840 = vsel %vm7839, %v7838, %v7836
  %s7841 = scalar_lea.vmem %s0, 1121
  %v7842 = vld [vmem:[%s7841] sm:$0x8]
  %vm7843 = vcmask 1043459
  %v7844 = vsel %vm7843, %v7842, %v7840
  %s7845 = scalar_lea.vmem %s0, 1152
  %v7846 = vld [vmem:[%s7845] sm:$0x10]
  %vm7847 = vcmask 1044484
  %v7848 = vsel %vm7847, %v7846, %v7844
  %s7849 = scalar_lea.vmem %s0, 1183
  %v7850 = vld [vmem:[%s7849] sm:$0x20]
  %vm7851 = vcmask 1045509
  %v7852 = vsel %vm7851, %v7850, %v7848
  %s7853 = scalar_lea.vmem %s0, 1214
  %v7854 = vld [vmem:[%s7853] sm:$0x40]
  %vm7855 = vcmask 1046534
  %v7856 = vsel %vm7855, %v7854, %v7852
  %s7857 = scalar_lea.vmem %s0, 1245
  %v7858 = vld [vmem:[%s7857] sm:$0x80]
  %vm7859 = vcmask 1047559
  %v7860 = vsel %vm7859, %v7858, %v7856
  %7861 = vrot.lane.b32.xlu0 %v7860, 16
  %v7862 = vpop.permute.xlu0 %7861
  %vm7863 = vcmask 162944
  %s7864 = scalar_lea.vmem %s1, 32
  %7865 = vst.msk [vmem:[%s7864] sm:$0xff] %vm7863, %v7862
  %s7866 = scalar_lea.vmem %s0, 260
  %v7867 = vld [vmem:[%s7866] sm:$0x1]
  %s7868 = scalar_lea.vmem %s0, 291
  %v7869 = vld [vmem:[%s7868] sm:$0x2]
  %vm7870 = vcmask 1041409
  %v7871 = vsel %vm7870, %v7869, %v7867
  %s7872 = scalar_lea.vmem %s0, 322
  %v7873 = vld [vmem:[%s7872] sm:$0x4]
  %vm7874 = vcmask 1042434
  %v7875 = vsel %vm7874, %v7873, %v7871
  %s7876 = scalar_lea.vmem %s0, 353
  %v7877 = vld [vmem:[%s7876] sm:$0x8]
  %vm7878 = vcmask 1043459
  %v7879 = vsel %vm7878, %v7877, %v7875
  %s7880 = scalar_lea.vmem %s0, 384
  %v7881 = vld [vmem:[%s7880] sm:$0x10]
  %vm7882 = vcmask 1044484
  %v7883 = vsel %vm7882, %v7881, %v7879
  %s7884 = scalar_lea.vmem %s0, 415
  %v7885 = vld [vmem:[%s7884] sm:$0x20]
  %vm7886 = vcmask 1045509
  %v7887 = vsel %vm7886, %v7885, %v7883
  %s7888 = scalar_lea.vmem %s0, 446
  %v7889 = vld [vmem:[%s7888] sm:$0x40]
  %vm7890 = vcmask 1046534
  %v7891 = vsel %vm7890, %v7889, %v7887
  %s7892 = scalar_lea.vmem %s0, 477
  %v7893 = vld [vmem:[%s7892] sm:$0x80]
  %vm7894 = vcmask 1047559
  %v7895 = vsel %vm7894, %v7893, %v7891
  %7896 = vrot.lane.b32.xlu0 %v7895, 16
  %v7897 = vpop.permute.xlu0 %7896
  %vm7898 = vcmask 162944
  %s7899 = scalar_lea.vmem %s1, 8
  %7900 = vst.msk [vmem:[%s7899] sm:$0xff] %vm7898, %v7897
  %s7901 = scalar_lea.vmem %s0, 1284
  %v7902 = vld [vmem:[%s7901] sm:$0x1]
  %s7903 = scalar_lea.vmem %s0, 1315
  %v7904 = vld [vmem:[%s7903] sm:$0x2]
  %vm7905 = vcmask 1041409
  %v7906 = vsel %vm7905, %v7904, %v7902
  %s7907 = scalar_lea.vmem %s0, 1346
  %v7908 = vld [vmem:[%s7907] sm:$0x4]
  %vm7909 = vcmask 1042434
  %v7910 = vsel %vm7909, %v7908, %v7906
  %s7911 = scalar_lea.vmem %s0, 1377
  %v7912 = vld [vmem:[%s7911] sm:$0x8]
  %vm7913 = vcmask 1043459
  %v7914 = vsel %vm7913, %v7912, %v7910
  %s7915 = scalar_lea.vmem %s0, 1408
  %v7916 = vld [vmem:[%s7915] sm:$0x10]
  %vm7917 = vcmask 1044484
  %v7918 = vsel %vm7917, %v7916, %v7914
  %s7919 = scalar_lea.vmem %s0, 1439
  %v7920 = vld [vmem:[%s7919] sm:$0x20]
  %vm7921 = vcmask 1045509
  %v7922 = vsel %vm7921, %v7920, %v7918
  %s7923 = scalar_lea.vmem %s0, 1470
  %v7924 = vld [vmem:[%s7923] sm:$0x40]
  %vm7925 = vcmask 1046534
  %v7926 = vsel %vm7925, %v7924, %v7922
  %s7927 = scalar_lea.vmem %s0, 1501
  %v7928 = vld [vmem:[%s7927] sm:$0x80]
  %vm7929 = vcmask 1047559
  %v7930 = vsel %vm7929, %v7928, %v7926
  %7931 = vrot.lane.b32.xlu0 %v7930, 16
  %v7932 = vpop.permute.xlu0 %7931
  %vm7933 = vcmask 162944
  %s7934 = scalar_lea.vmem %s1, 40
  %7935 = vst.msk [vmem:[%s7934] sm:$0xff] %vm7933, %v7932
  %s7936 = scalar_lea.vmem %s0, 516
  %v7937 = vld [vmem:[%s7936] sm:$0x1]
  %s7938 = scalar_lea.vmem %s0, 547
  %v7939 = vld [vmem:[%s7938] sm:$0x2]
  %vm7940 = vcmask 1041409
  %v7941 = vsel %vm7940, %v7939, %v7937
  %s7942 = scalar_lea.vmem %s0, 578
  %v7943 = vld [vmem:[%s7942] sm:$0x4]
  %vm7944 = vcmask 1042434
  %v7945 = vsel %vm7944, %v7943, %v7941
  %s7946 = scalar_lea.vmem %s0, 609
  %v7947 = vld [vmem:[%s7946] sm:$0x8]
  %vm7948 = vcmask 1043459
  %v7949 = vsel %vm7948, %v7947, %v7945
  %s7950 = scalar_lea.vmem %s0, 640
  %v7951 = vld [vmem:[%s7950] sm:$0x10]
  %vm7952 = vcmask 1044484
  %v7953 = vsel %vm7952, %v7951, %v7949
  %s7954 = scalar_lea.vmem %s0, 671
  %v7955 = vld [vmem:[%s7954] sm:$0x20]
  %vm7956 = vcmask 1045509
  %v7957 = vsel %vm7956, %v7955, %v7953
  %s7958 = scalar_lea.vmem %s0, 702
  %v7959 = vld [vmem:[%s7958] sm:$0x40]
  %vm7960 = vcmask 1046534
  %v7961 = vsel %vm7960, %v7959, %v7957
  %s7962 = scalar_lea.vmem %s0, 733
  %v7963 = vld [vmem:[%s7962] sm:$0x80]
  %vm7964 = vcmask 1047559
  %v7965 = vsel %vm7964, %v7963, %v7961
  %7966 = vrot.lane.b32.xlu0 %v7965, 16
  %v7967 = vpop.permute.xlu0 %7966
  %vm7968 = vcmask 162944
  %s7969 = scalar_lea.vmem %s1, 16
  %7970 = vst.msk [vmem:[%s7969] sm:$0xff] %vm7968, %v7967
  %s7971 = scalar_lea.vmem %s0, 1540
  %v7972 = vld [vmem:[%s7971] sm:$0x1]
  %s7973 = scalar_lea.vmem %s0, 1571
  %v7974 = vld [vmem:[%s7973] sm:$0x2]
  %vm7975 = vcmask 1041409
  %v7976 = vsel %vm7975, %v7974, %v7972
  %s7977 = scalar_lea.vmem %s0, 1602
  %v7978 = vld [vmem:[%s7977] sm:$0x4]
  %vm7979 = vcmask 1042434
  %v7980 = vsel %vm7979, %v7978, %v7976
  %s7981 = scalar_lea.vmem %s0, 1633
  %v7982 = vld [vmem:[%s7981] sm:$0x8]
  %vm7983 = vcmask 1043459
  %v7984 = vsel %vm7983, %v7982, %v7980
  %s7985 = scalar_lea.vmem %s0, 1664
  %v7986 = vld [vmem:[%s7985] sm:$0x10]
  %vm7987 = vcmask 1044484
  %v7988 = vsel %vm7987, %v7986, %v7984
  %s7989 = scalar_lea.vmem %s0, 1695
  %v7990 = vld [vmem:[%s7989] sm:$0x20]
  %vm7991 = vcmask 1045509
  %v7992 = vsel %vm7991, %v7990, %v7988
  %s7993 = scalar_lea.vmem %s0, 1726
  %v7994 = vld [vmem:[%s7993] sm:$0x40]
  %vm7995 = vcmask 1046534
  %v7996 = vsel %vm7995, %v7994, %v7992
  %s7997 = scalar_lea.vmem %s0, 1757
  %v7998 = vld [vmem:[%s7997] sm:$0x80]
  %vm7999 = vcmask 1047559
  %v8000 = vsel %vm7999, %v7998, %v7996
  %8001 = vrot.lane.b32.xlu0 %v8000, 16
  %v8002 = vpop.permute.xlu0 %8001
  %vm8003 = vcmask 162944
  %s8004 = scalar_lea.vmem %s1, 48
  %8005 = vst.msk [vmem:[%s8004] sm:$0xff] %vm8003, %v8002
  %s8006 = scalar_lea.vmem %s0, 772
  %v8007 = vld [vmem:[%s8006] sm:$0x1]
  %s8008 = scalar_lea.vmem %s0, 803
  %v8009 = vld [vmem:[%s8008] sm:$0x2]
  %vm8010 = vcmask 1041409
  %v8011 = vsel %vm8010, %v8009, %v8007
  %s8012 = scalar_lea.vmem %s0, 834
  %v8013 = vld [vmem:[%s8012] sm:$0x4]
  %vm8014 = vcmask 1042434
  %v8015 = vsel %vm8014, %v8013, %v8011
  %s8016 = scalar_lea.vmem %s0, 865
  %v8017 = vld [vmem:[%s8016] sm:$0x8]
  %vm8018 = vcmask 1043459
  %v8019 = vsel %vm8018, %v8017, %v8015
  %s8020 = scalar_lea.vmem %s0, 896
  %v8021 = vld [vmem:[%s8020] sm:$0x10]
  %vm8022 = vcmask 1044484
  %v8023 = vsel %vm8022, %v8021, %v8019
  %s8024 = scalar_lea.vmem %s0, 927
  %v8025 = vld [vmem:[%s8024] sm:$0x20]
  %vm8026 = vcmask 1045509
  %v8027 = vsel %vm8026, %v8025, %v8023
  %s8028 = scalar_lea.vmem %s0, 958
  %v8029 = vld [vmem:[%s8028] sm:$0x40]
  %vm8030 = vcmask 1046534
  %v8031 = vsel %vm8030, %v8029, %v8027
  %s8032 = scalar_lea.vmem %s0, 989
  %v8033 = vld [vmem:[%s8032] sm:$0x80]
  %vm8034 = vcmask 1047559
  %v8035 = vsel %vm8034, %v8033, %v8031
  %8036 = vrot.lane.b32.xlu0 %v8035, 16
  %v8037 = vpop.permute.xlu0 %8036
  %vm8038 = vcmask 162944
  %s8039 = scalar_lea.vmem %s1, 24
  %8040 = vst.msk [vmem:[%s8039] sm:$0xff] %vm8038, %v8037
  %s8041 = scalar_lea.vmem %s0, 1796
  %v8042 = vld [vmem:[%s8041] sm:$0x1]
  %s8043 = scalar_lea.vmem %s0, 1827
  %v8044 = vld [vmem:[%s8043] sm:$0x2]
  %vm8045 = vcmask 1041409
  %v8046 = vsel %vm8045, %v8044, %v8042
  %s8047 = scalar_lea.vmem %s0, 1858
  %v8048 = vld [vmem:[%s8047] sm:$0x4]
  %vm8049 = vcmask 1042434
  %v8050 = vsel %vm8049, %v8048, %v8046
  %s8051 = scalar_lea.vmem %s0, 1889
  %v8052 = vld [vmem:[%s8051] sm:$0x8]
  %vm8053 = vcmask 1043459
  %v8054 = vsel %vm8053, %v8052, %v8050
  %s8055 = scalar_lea.vmem %s0, 1920
  %v8056 = vld [vmem:[%s8055] sm:$0x10]
  %vm8057 = vcmask 1044484
  %v8058 = vsel %vm8057, %v8056, %v8054
  %s8059 = scalar_lea.vmem %s0, 1951
  %v8060 = vld [vmem:[%s8059] sm:$0x20]
  %vm8061 = vcmask 1045509
  %v8062 = vsel %vm8061, %v8060, %v8058
  %s8063 = scalar_lea.vmem %s0, 1982
  %v8064 = vld [vmem:[%s8063] sm:$0x40]
  %vm8065 = vcmask 1046534
  %v8066 = vsel %vm8065, %v8064, %v8062
  %s8067 = scalar_lea.vmem %s0, 2013
  %v8068 = vld [vmem:[%s8067] sm:$0x80]
  %vm8069 = vcmask 1047559
  %v8070 = vsel %vm8069, %v8068, %v8066
  %8071 = vrot.lane.b32.xlu0 %v8070, 16
  %v8072 = vpop.permute.xlu0 %8071
  %vm8073 = vcmask 162944
  %s8074 = scalar_lea.vmem %s1, 56
  %8075 = vst.msk [vmem:[%s8074] sm:$0xff] %vm8073, %v8072
  %s8076 = scalar_lea.vmem %s0, 3
  %v8077 = vld [vmem:[%s8076] sm:$0x1]
  %s8078 = scalar_lea.vmem %s0, 34
  %v8079 = vld [vmem:[%s8078] sm:$0x2]
  %vm8080 = vcmask 1041409
  %v8081 = vsel %vm8080, %v8079, %v8077
  %s8082 = scalar_lea.vmem %s0, 65
  %v8083 = vld [vmem:[%s8082] sm:$0x4]
  %vm8084 = vcmask 1042434
  %v8085 = vsel %vm8084, %v8083, %v8081
  %s8086 = scalar_lea.vmem %s0, 96
  %v8087 = vld [vmem:[%s8086] sm:$0x8]
  %vm8088 = vcmask 1043459
  %v8089 = vsel %vm8088, %v8087, %v8085
  %s8090 = scalar_lea.vmem %s0, 127
  %v8091 = vld [vmem:[%s8090] sm:$0x10]
  %vm8092 = vcmask 1044484
  %v8093 = vsel %vm8092, %v8091, %v8089
  %s8094 = scalar_lea.vmem %s0, 158
  %v8095 = vld [vmem:[%s8094] sm:$0x20]
  %vm8096 = vcmask 1045509
  %v8097 = vsel %vm8096, %v8095, %v8093
  %s8098 = scalar_lea.vmem %s0, 189
  %v8099 = vld [vmem:[%s8098] sm:$0x40]
  %vm8100 = vcmask 1046534
  %v8101 = vsel %vm8100, %v8099, %v8097
  %s8102 = scalar_lea.vmem %s0, 220
  %v8103 = vld [vmem:[%s8102] sm:$0x80]
  %vm8104 = vcmask 1047559
  %v8105 = vsel %vm8104, %v8103, %v8101
  %8106 = vrot.lane.b32.xlu0 %v8105, 12
  %v8107 = vpop.permute.xlu0 %8106
  %vm8108 = vcmask 130144
  %8109 = vst.msk [vmem:[%s1] sm:$0xff] %vm8108, %v8107
  %s8110 = scalar_lea.vmem %s0, 1027
  %v8111 = vld [vmem:[%s8110] sm:$0x1]
  %s8112 = scalar_lea.vmem %s0, 1058
  %v8113 = vld [vmem:[%s8112] sm:$0x2]
  %vm8114 = vcmask 1041409
  %v8115 = vsel %vm8114, %v8113, %v8111
  %s8116 = scalar_lea.vmem %s0, 1089
  %v8117 = vld [vmem:[%s8116] sm:$0x4]
  %vm8118 = vcmask 1042434
  %v8119 = vsel %vm8118, %v8117, %v8115
  %s8120 = scalar_lea.vmem %s0, 1120
  %v8121 = vld [vmem:[%s8120] sm:$0x8]
  %vm8122 = vcmask 1043459
  %v8123 = vsel %vm8122, %v8121, %v8119
  %s8124 = scalar_lea.vmem %s0, 1151
  %v8125 = vld [vmem:[%s8124] sm:$0x10]
  %vm8126 = vcmask 1044484
  %v8127 = vsel %vm8126, %v8125, %v8123
  %s8128 = scalar_lea.vmem %s0, 1182
  %v8129 = vld [vmem:[%s8128] sm:$0x20]
  %vm8130 = vcmask 1045509
  %v8131 = vsel %vm8130, %v8129, %v8127
  %s8132 = scalar_lea.vmem %s0, 1213
  %v8133 = vld [vmem:[%s8132] sm:$0x40]
  %vm8134 = vcmask 1046534
  %v8135 = vsel %vm8134, %v8133, %v8131
  %s8136 = scalar_lea.vmem %s0, 1244
  %v8137 = vld [vmem:[%s8136] sm:$0x80]
  %vm8138 = vcmask 1047559
  %v8139 = vsel %vm8138, %v8137, %v8135
  %8140 = vrot.lane.b32.xlu0 %v8139, 12
  %v8141 = vpop.permute.xlu0 %8140
  %vm8142 = vcmask 130144
  %s8143 = scalar_lea.vmem %s1, 32
  %8144 = vst.msk [vmem:[%s8143] sm:$0xff] %vm8142, %v8141
  %s8145 = scalar_lea.vmem %s0, 259
  %v8146 = vld [vmem:[%s8145] sm:$0x1]
  %s8147 = scalar_lea.vmem %s0, 290
  %v8148 = vld [vmem:[%s8147] sm:$0x2]
  %vm8149 = vcmask 1041409
  %v8150 = vsel %vm8149, %v8148, %v8146
  %s8151 = scalar_lea.vmem %s0, 321
  %v8152 = vld [vmem:[%s8151] sm:$0x4]
  %vm8153 = vcmask 1042434
  %v8154 = vsel %vm8153, %v8152, %v8150
  %s8155 = scalar_lea.vmem %s0, 352
  %v8156 = vld [vmem:[%s8155] sm:$0x8]
  %vm8157 = vcmask 1043459
  %v8158 = vsel %vm8157, %v8156, %v8154
  %s8159 = scalar_lea.vmem %s0, 383
  %v8160 = vld [vmem:[%s8159] sm:$0x10]
  %vm8161 = vcmask 1044484
  %v8162 = vsel %vm8161, %v8160, %v8158
  %s8163 = scalar_lea.vmem %s0, 414
  %v8164 = vld [vmem:[%s8163] sm:$0x20]
  %vm8165 = vcmask 1045509
  %v8166 = vsel %vm8165, %v8164, %v8162
  %s8167 = scalar_lea.vmem %s0, 445
  %v8168 = vld [vmem:[%s8167] sm:$0x40]
  %vm8169 = vcmask 1046534
  %v8170 = vsel %vm8169, %v8168, %v8166
  %s8171 = scalar_lea.vmem %s0, 476
  %v8172 = vld [vmem:[%s8171] sm:$0x80]
  %vm8173 = vcmask 1047559
  %v8174 = vsel %vm8173, %v8172, %v8170
  %8175 = vrot.lane.b32.xlu0 %v8174, 12
  %v8176 = vpop.permute.xlu0 %8175
  %vm8177 = vcmask 130144
  %s8178 = scalar_lea.vmem %s1, 8
  %8179 = vst.msk [vmem:[%s8178] sm:$0xff] %vm8177, %v8176
  %s8180 = scalar_lea.vmem %s0, 1283
  %v8181 = vld [vmem:[%s8180] sm:$0x1]
  %s8182 = scalar_lea.vmem %s0, 1314
  %v8183 = vld [vmem:[%s8182] sm:$0x2]
  %vm8184 = vcmask 1041409
  %v8185 = vsel %vm8184, %v8183, %v8181
  %s8186 = scalar_lea.vmem %s0, 1345
  %v8187 = vld [vmem:[%s8186] sm:$0x4]
  %vm8188 = vcmask 1042434
  %v8189 = vsel %vm8188, %v8187, %v8185
  %s8190 = scalar_lea.vmem %s0, 1376
  %v8191 = vld [vmem:[%s8190] sm:$0x8]
  %vm8192 = vcmask 1043459
  %v8193 = vsel %vm8192, %v8191, %v8189
  %s8194 = scalar_lea.vmem %s0, 1407
  %v8195 = vld [vmem:[%s8194] sm:$0x10]
  %vm8196 = vcmask 1044484
  %v8197 = vsel %vm8196, %v8195, %v8193
  %s8198 = scalar_lea.vmem %s0, 1438
  %v8199 = vld [vmem:[%s8198] sm:$0x20]
  %vm8200 = vcmask 1045509
  %v8201 = vsel %vm8200, %v8199, %v8197
  %s8202 = scalar_lea.vmem %s0, 1469
  %v8203 = vld [vmem:[%s8202] sm:$0x40]
  %vm8204 = vcmask 1046534
  %v8205 = vsel %vm8204, %v8203, %v8201
  %s8206 = scalar_lea.vmem %s0, 1500
  %v8207 = vld [vmem:[%s8206] sm:$0x80]
  %vm8208 = vcmask 1047559
  %v8209 = vsel %vm8208, %v8207, %v8205
  %8210 = vrot.lane.b32.xlu0 %v8209, 12
  %v8211 = vpop.permute.xlu0 %8210
  %vm8212 = vcmask 130144
  %s8213 = scalar_lea.vmem %s1, 40
  %8214 = vst.msk [vmem:[%s8213] sm:$0xff] %vm8212, %v8211
  %s8215 = scalar_lea.vmem %s0, 515
  %v8216 = vld [vmem:[%s8215] sm:$0x1]
  %s8217 = scalar_lea.vmem %s0, 546
  %v8218 = vld [vmem:[%s8217] sm:$0x2]
  %vm8219 = vcmask 1041409
  %v8220 = vsel %vm8219, %v8218, %v8216
  %s8221 = scalar_lea.vmem %s0, 577
  %v8222 = vld [vmem:[%s8221] sm:$0x4]
  %vm8223 = vcmask 1042434
  %v8224 = vsel %vm8223, %v8222, %v8220
  %s8225 = scalar_lea.vmem %s0, 608
  %v8226 = vld [vmem:[%s8225] sm:$0x8]
  %vm8227 = vcmask 1043459
  %v8228 = vsel %vm8227, %v8226, %v8224
  %s8229 = scalar_lea.vmem %s0, 639
  %v8230 = vld [vmem:[%s8229] sm:$0x10]
  %vm8231 = vcmask 1044484
  %v8232 = vsel %vm8231, %v8230, %v8228
  %s8233 = scalar_lea.vmem %s0, 670
  %v8234 = vld [vmem:[%s8233] sm:$0x20]
  %vm8235 = vcmask 1045509
  %v8236 = vsel %vm8235, %v8234, %v8232
  %s8237 = scalar_lea.vmem %s0, 701
  %v8238 = vld [vmem:[%s8237] sm:$0x40]
  %vm8239 = vcmask 1046534
  %v8240 = vsel %vm8239, %v8238, %v8236
  %s8241 = scalar_lea.vmem %s0, 732
  %v8242 = vld [vmem:[%s8241] sm:$0x80]
  %vm8243 = vcmask 1047559
  %v8244 = vsel %vm8243, %v8242, %v8240
  %8245 = vrot.lane.b32.xlu0 %v8244, 12
  %v8246 = vpop.permute.xlu0 %8245
  %vm8247 = vcmask 130144
  %s8248 = scalar_lea.vmem %s1, 16
  %8249 = vst.msk [vmem:[%s8248] sm:$0xff] %vm8247, %v8246
  %s8250 = scalar_lea.vmem %s0, 1539
  %v8251 = vld [vmem:[%s8250] sm:$0x1]
  %s8252 = scalar_lea.vmem %s0, 1570
  %v8253 = vld [vmem:[%s8252] sm:$0x2]
  %vm8254 = vcmask 1041409
  %v8255 = vsel %vm8254, %v8253, %v8251
  %s8256 = scalar_lea.vmem %s0, 1601
  %v8257 = vld [vmem:[%s8256] sm:$0x4]
  %vm8258 = vcmask 1042434
  %v8259 = vsel %vm8258, %v8257, %v8255
  %s8260 = scalar_lea.vmem %s0, 1632
  %v8261 = vld [vmem:[%s8260] sm:$0x8]
  %vm8262 = vcmask 1043459
  %v8263 = vsel %vm8262, %v8261, %v8259
  %s8264 = scalar_lea.vmem %s0, 1663
  %v8265 = vld [vmem:[%s8264] sm:$0x10]
  %vm8266 = vcmask 1044484
  %v8267 = vsel %vm8266, %v8265, %v8263
  %s8268 = scalar_lea.vmem %s0, 1694
  %v8269 = vld [vmem:[%s8268] sm:$0x20]
  %vm8270 = vcmask 1045509
  %v8271 = vsel %vm8270, %v8269, %v8267
  %s8272 = scalar_lea.vmem %s0, 1725
  %v8273 = vld [vmem:[%s8272] sm:$0x40]
  %vm8274 = vcmask 1046534
  %v8275 = vsel %vm8274, %v8273, %v8271
  %s8276 = scalar_lea.vmem %s0, 1756
  %v8277 = vld [vmem:[%s8276] sm:$0x80]
  %vm8278 = vcmask 1047559
  %v8279 = vsel %vm8278, %v8277, %v8275
  %8280 = vrot.lane.b32.xlu0 %v8279, 12
  %v8281 = vpop.permute.xlu0 %8280
  %vm8282 = vcmask 130144
  %s8283 = scalar_lea.vmem %s1, 48
  %8284 = vst.msk [vmem:[%s8283] sm:$0xff] %vm8282, %v8281
  %s8285 = scalar_lea.vmem %s0, 771
  %v8286 = vld [vmem:[%s8285] sm:$0x1]
  %s8287 = scalar_lea.vmem %s0, 802
  %v8288 = vld [vmem:[%s8287] sm:$0x2]
  %vm8289 = vcmask 1041409
  %v8290 = vsel %vm8289, %v8288, %v8286
  %s8291 = scalar_lea.vmem %s0, 833
  %v8292 = vld [vmem:[%s8291] sm:$0x4]
  %vm8293 = vcmask 1042434
  %v8294 = vsel %vm8293, %v8292, %v8290
  %s8295 = scalar_lea.vmem %s0, 864
  %v8296 = vld [vmem:[%s8295] sm:$0x8]
  %vm8297 = vcmask 1043459
  %v8298 = vsel %vm8297, %v8296, %v8294
  %s8299 = scalar_lea.vmem %s0, 895
  %v8300 = vld [vmem:[%s8299] sm:$0x10]
  %vm8301 = vcmask 1044484
  %v8302 = vsel %vm8301, %v8300, %v8298
  %s8303 = scalar_lea.vmem %s0, 926
  %v8304 = vld [vmem:[%s8303] sm:$0x20]
  %vm8305 = vcmask 1045509
  %v8306 = vsel %vm8305, %v8304, %v8302
  %s8307 = scalar_lea.vmem %s0, 957
  %v8308 = vld [vmem:[%s8307] sm:$0x40]
  %vm8309 = vcmask 1046534
  %v8310 = vsel %vm8309, %v8308, %v8306
  %s8311 = scalar_lea.vmem %s0, 988
  %v8312 = vld [vmem:[%s8311] sm:$0x80]
  %vm8313 = vcmask 1047559
  %v8314 = vsel %vm8313, %v8312, %v8310
  %8315 = vrot.lane.b32.xlu0 %v8314, 12
  %v8316 = vpop.permute.xlu0 %8315
  %vm8317 = vcmask 130144
  %s8318 = scalar_lea.vmem %s1, 24
  %8319 = vst.msk [vmem:[%s8318] sm:$0xff] %vm8317, %v8316
  %s8320 = scalar_lea.vmem %s0, 1795
  %v8321 = vld [vmem:[%s8320] sm:$0x1]
  %s8322 = scalar_lea.vmem %s0, 1826
  %v8323 = vld [vmem:[%s8322] sm:$0x2]
  %vm8324 = vcmask 1041409
  %v8325 = vsel %vm8324, %v8323, %v8321
  %s8326 = scalar_lea.vmem %s0, 1857
  %v8327 = vld [vmem:[%s8326] sm:$0x4]
  %vm8328 = vcmask 1042434
  %v8329 = vsel %vm8328, %v8327, %v8325
  %s8330 = scalar_lea.vmem %s0, 1888
  %v8331 = vld [vmem:[%s8330] sm:$0x8]
  %vm8332 = vcmask 1043459
  %v8333 = vsel %vm8332, %v8331, %v8329
  %s8334 = scalar_lea.vmem %s0, 1919
  %v8335 = vld [vmem:[%s8334] sm:$0x10]
  %vm8336 = vcmask 1044484
  %v8337 = vsel %vm8336, %v8335, %v8333
  %s8338 = scalar_lea.vmem %s0, 1950
  %v8339 = vld [vmem:[%s8338] sm:$0x20]
  %vm8340 = vcmask 1045509
  %v8341 = vsel %vm8340, %v8339, %v8337
  %s8342 = scalar_lea.vmem %s0, 1981
  %v8343 = vld [vmem:[%s8342] sm:$0x40]
  %vm8344 = vcmask 1046534
  %v8345 = vsel %vm8344, %v8343, %v8341
  %s8346 = scalar_lea.vmem %s0, 2012
  %v8347 = vld [vmem:[%s8346] sm:$0x80]
  %vm8348 = vcmask 1047559
  %v8349 = vsel %vm8348, %v8347, %v8345
  %8350 = vrot.lane.b32.xlu0 %v8349, 12
  %v8351 = vpop.permute.xlu0 %8350
  %vm8352 = vcmask 130144
  %s8353 = scalar_lea.vmem %s1, 56
  %8354 = vst.msk [vmem:[%s8353] sm:$0xff] %vm8352, %v8351
  %s8355 = scalar_lea.vmem %s0, 2
  %v8356 = vld [vmem:[%s8355] sm:$0x1]
  %s8357 = scalar_lea.vmem %s0, 33
  %v8358 = vld [vmem:[%s8357] sm:$0x2]
  %vm8359 = vcmask 1041409
  %v8360 = vsel %vm8359, %v8358, %v8356
  %s8361 = scalar_lea.vmem %s0, 64
  %v8362 = vld [vmem:[%s8361] sm:$0x4]
  %vm8363 = vcmask 1042434
  %v8364 = vsel %vm8363, %v8362, %v8360
  %s8365 = scalar_lea.vmem %s0, 95
  %v8366 = vld [vmem:[%s8365] sm:$0x8]
  %vm8367 = vcmask 1043459
  %v8368 = vsel %vm8367, %v8366, %v8364
  %s8369 = scalar_lea.vmem %s0, 126
  %v8370 = vld [vmem:[%s8369] sm:$0x10]
  %vm8371 = vcmask 1044484
  %v8372 = vsel %vm8371, %v8370, %v8368
  %s8373 = scalar_lea.vmem %s0, 157
  %v8374 = vld [vmem:[%s8373] sm:$0x20]
  %vm8375 = vcmask 1045509
  %v8376 = vsel %vm8375, %v8374, %v8372
  %s8377 = scalar_lea.vmem %s0, 188
  %v8378 = vld [vmem:[%s8377] sm:$0x40]
  %vm8379 = vcmask 1046534
  %v8380 = vsel %vm8379, %v8378, %v8376
  %s8381 = scalar_lea.vmem %s0, 219
  %v8382 = vld [vmem:[%s8381] sm:$0x80]
  %vm8383 = vcmask 1047559
  %v8384 = vsel %vm8383, %v8382, %v8380
  %8385 = vrot.lane.b32.xlu0 %v8384, 8
  %v8386 = vpop.permute.xlu0 %8385
  %vm8387 = vcmask 97344
  %8388 = vst.msk [vmem:[%s1] sm:$0xff] %vm8387, %v8386
  %s8389 = scalar_lea.vmem %s0, 1026
  %v8390 = vld [vmem:[%s8389] sm:$0x1]
  %s8391 = scalar_lea.vmem %s0, 1057
  %v8392 = vld [vmem:[%s8391] sm:$0x2]
  %vm8393 = vcmask 1041409
  %v8394 = vsel %vm8393, %v8392, %v8390
  %s8395 = scalar_lea.vmem %s0, 1088
  %v8396 = vld [vmem:[%s8395] sm:$0x4]
  %vm8397 = vcmask 1042434
  %v8398 = vsel %vm8397, %v8396, %v8394
  %s8399 = scalar_lea.vmem %s0, 1119
  %v8400 = vld [vmem:[%s8399] sm:$0x8]
  %vm8401 = vcmask 1043459
  %v8402 = vsel %vm8401, %v8400, %v8398
  %s8403 = scalar_lea.vmem %s0, 1150
  %v8404 = vld [vmem:[%s8403] sm:$0x10]
  %vm8405 = vcmask 1044484
  %v8406 = vsel %vm8405, %v8404, %v8402
  %s8407 = scalar_lea.vmem %s0, 1181
  %v8408 = vld [vmem:[%s8407] sm:$0x20]
  %vm8409 = vcmask 1045509
  %v8410 = vsel %vm8409, %v8408, %v8406
  %s8411 = scalar_lea.vmem %s0, 1212
  %v8412 = vld [vmem:[%s8411] sm:$0x40]
  %vm8413 = vcmask 1046534
  %v8414 = vsel %vm8413, %v8412, %v8410
  %s8415 = scalar_lea.vmem %s0, 1243
  %v8416 = vld [vmem:[%s8415] sm:$0x80]
  %vm8417 = vcmask 1047559
  %v8418 = vsel %vm8417, %v8416, %v8414
  %8419 = vrot.lane.b32.xlu0 %v8418, 8
  %v8420 = vpop.permute.xlu0 %8419
  %vm8421 = vcmask 97344
  %s8422 = scalar_lea.vmem %s1, 32
  %8423 = vst.msk [vmem:[%s8422] sm:$0xff] %vm8421, %v8420
  %s8424 = scalar_lea.vmem %s0, 258
  %v8425 = vld [vmem:[%s8424] sm:$0x1]
  %s8426 = scalar_lea.vmem %s0, 289
  %v8427 = vld [vmem:[%s8426] sm:$0x2]
  %vm8428 = vcmask 1041409
  %v8429 = vsel %vm8428, %v8427, %v8425
  %s8430 = scalar_lea.vmem %s0, 320
  %v8431 = vld [vmem:[%s8430] sm:$0x4]
  %vm8432 = vcmask 1042434
  %v8433 = vsel %vm8432, %v8431, %v8429
  %s8434 = scalar_lea.vmem %s0, 351
  %v8435 = vld [vmem:[%s8434] sm:$0x8]
  %vm8436 = vcmask 1043459
  %v8437 = vsel %vm8436, %v8435, %v8433
  %s8438 = scalar_lea.vmem %s0, 382
  %v8439 = vld [vmem:[%s8438] sm:$0x10]
  %vm8440 = vcmask 1044484
  %v8441 = vsel %vm8440, %v8439, %v8437
  %s8442 = scalar_lea.vmem %s0, 413
  %v8443 = vld [vmem:[%s8442] sm:$0x20]
  %vm8444 = vcmask 1045509
  %v8445 = vsel %vm8444, %v8443, %v8441
  %s8446 = scalar_lea.vmem %s0, 444
  %v8447 = vld [vmem:[%s8446] sm:$0x40]
  %vm8448 = vcmask 1046534
  %v8449 = vsel %vm8448, %v8447, %v8445
  %s8450 = scalar_lea.vmem %s0, 475
  %v8451 = vld [vmem:[%s8450] sm:$0x80]
  %vm8452 = vcmask 1047559
  %v8453 = vsel %vm8452, %v8451, %v8449
  %8454 = vrot.lane.b32.xlu0 %v8453, 8
  %v8455 = vpop.permute.xlu0 %8454
  %vm8456 = vcmask 97344
  %s8457 = scalar_lea.vmem %s1, 8
  %8458 = vst.msk [vmem:[%s8457] sm:$0xff] %vm8456, %v8455
  %s8459 = scalar_lea.vmem %s0, 1282
  %v8460 = vld [vmem:[%s8459] sm:$0x1]
  %s8461 = scalar_lea.vmem %s0, 1313
  %v8462 = vld [vmem:[%s8461] sm:$0x2]
  %vm8463 = vcmask 1041409
  %v8464 = vsel %vm8463, %v8462, %v8460
  %s8465 = scalar_lea.vmem %s0, 1344
  %v8466 = vld [vmem:[%s8465] sm:$0x4]
  %vm8467 = vcmask 1042434
  %v8468 = vsel %vm8467, %v8466, %v8464
  %s8469 = scalar_lea.vmem %s0, 1375
  %v8470 = vld [vmem:[%s8469] sm:$0x8]
  %vm8471 = vcmask 1043459
  %v8472 = vsel %vm8471, %v8470, %v8468
  %s8473 = scalar_lea.vmem %s0, 1406
  %v8474 = vld [vmem:[%s8473] sm:$0x10]
  %vm8475 = vcmask 1044484
  %v8476 = vsel %vm8475, %v8474, %v8472
  %s8477 = scalar_lea.vmem %s0, 1437
  %v8478 = vld [vmem:[%s8477] sm:$0x20]
  %vm8479 = vcmask 1045509
  %v8480 = vsel %vm8479, %v8478, %v8476
  %s8481 = scalar_lea.vmem %s0, 1468
  %v8482 = vld [vmem:[%s8481] sm:$0x40]
  %vm8483 = vcmask 1046534
  %v8484 = vsel %vm8483, %v8482, %v8480
  %s8485 = scalar_lea.vmem %s0, 1499
  %v8486 = vld [vmem:[%s8485] sm:$0x80]
  %vm8487 = vcmask 1047559
  %v8488 = vsel %vm8487, %v8486, %v8484
  %8489 = vrot.lane.b32.xlu0 %v8488, 8
  %v8490 = vpop.permute.xlu0 %8489
  %vm8491 = vcmask 97344
  %s8492 = scalar_lea.vmem %s1, 40
  %8493 = vst.msk [vmem:[%s8492] sm:$0xff] %vm8491, %v8490
  %s8494 = scalar_lea.vmem %s0, 514
  %v8495 = vld [vmem:[%s8494] sm:$0x1]
  %s8496 = scalar_lea.vmem %s0, 545
  %v8497 = vld [vmem:[%s8496] sm:$0x2]
  %vm8498 = vcmask 1041409
  %v8499 = vsel %vm8498, %v8497, %v8495
  %s8500 = scalar_lea.vmem %s0, 576
  %v8501 = vld [vmem:[%s8500] sm:$0x4]
  %vm8502 = vcmask 1042434
  %v8503 = vsel %vm8502, %v8501, %v8499
  %s8504 = scalar_lea.vmem %s0, 607
  %v8505 = vld [vmem:[%s8504] sm:$0x8]
  %vm8506 = vcmask 1043459
  %v8507 = vsel %vm8506, %v8505, %v8503
  %s8508 = scalar_lea.vmem %s0, 638
  %v8509 = vld [vmem:[%s8508] sm:$0x10]
  %vm8510 = vcmask 1044484
  %v8511 = vsel %vm8510, %v8509, %v8507
  %s8512 = scalar_lea.vmem %s0, 669
  %v8513 = vld [vmem:[%s8512] sm:$0x20]
  %vm8514 = vcmask 1045509
  %v8515 = vsel %vm8514, %v8513, %v8511
  %s8516 = scalar_lea.vmem %s0, 700
  %v8517 = vld [vmem:[%s8516] sm:$0x40]
  %vm8518 = vcmask 1046534
  %v8519 = vsel %vm8518, %v8517, %v8515
  %s8520 = scalar_lea.vmem %s0, 731
  %v8521 = vld [vmem:[%s8520] sm:$0x80]
  %vm8522 = vcmask 1047559
  %v8523 = vsel %vm8522, %v8521, %v8519
  %8524 = vrot.lane.b32.xlu0 %v8523, 8
  %v8525 = vpop.permute.xlu0 %8524
  %vm8526 = vcmask 97344
  %s8527 = scalar_lea.vmem %s1, 16
  %8528 = vst.msk [vmem:[%s8527] sm:$0xff] %vm8526, %v8525
  %s8529 = scalar_lea.vmem %s0, 1538
  %v8530 = vld [vmem:[%s8529] sm:$0x1]
  %s8531 = scalar_lea.vmem %s0, 1569
  %v8532 = vld [vmem:[%s8531] sm:$0x2]
  %vm8533 = vcmask 1041409
  %v8534 = vsel %vm8533, %v8532, %v8530
  %s8535 = scalar_lea.vmem %s0, 1600
  %v8536 = vld [vmem:[%s8535] sm:$0x4]
  %vm8537 = vcmask 1042434
  %v8538 = vsel %vm8537, %v8536, %v8534
  %s8539 = scalar_lea.vmem %s0, 1631
  %v8540 = vld [vmem:[%s8539] sm:$0x8]
  %vm8541 = vcmask 1043459
  %v8542 = vsel %vm8541, %v8540, %v8538
  %s8543 = scalar_lea.vmem %s0, 1662
  %v8544 = vld [vmem:[%s8543] sm:$0x10]
  %vm8545 = vcmask 1044484
  %v8546 = vsel %vm8545, %v8544, %v8542
  %s8547 = scalar_lea.vmem %s0, 1693
  %v8548 = vld [vmem:[%s8547] sm:$0x20]
  %vm8549 = vcmask 1045509
  %v8550 = vsel %vm8549, %v8548, %v8546
  %s8551 = scalar_lea.vmem %s0, 1724
  %v8552 = vld [vmem:[%s8551] sm:$0x40]
  %vm8553 = vcmask 1046534
  %v8554 = vsel %vm8553, %v8552, %v8550
  %s8555 = scalar_lea.vmem %s0, 1755
  %v8556 = vld [vmem:[%s8555] sm:$0x80]
  %vm8557 = vcmask 1047559
  %v8558 = vsel %vm8557, %v8556, %v8554
  %8559 = vrot.lane.b32.xlu0 %v8558, 8
  %v8560 = vpop.permute.xlu0 %8559
  %vm8561 = vcmask 97344
  %s8562 = scalar_lea.vmem %s1, 48
  %8563 = vst.msk [vmem:[%s8562] sm:$0xff] %vm8561, %v8560
  %s8564 = scalar_lea.vmem %s0, 770
  %v8565 = vld [vmem:[%s8564] sm:$0x1]
  %s8566 = scalar_lea.vmem %s0, 801
  %v8567 = vld [vmem:[%s8566] sm:$0x2]
  %vm8568 = vcmask 1041409
  %v8569 = vsel %vm8568, %v8567, %v8565
  %s8570 = scalar_lea.vmem %s0, 832
  %v8571 = vld [vmem:[%s8570] sm:$0x4]
  %vm8572 = vcmask 1042434
  %v8573 = vsel %vm8572, %v8571, %v8569
  %s8574 = scalar_lea.vmem %s0, 863
  %v8575 = vld [vmem:[%s8574] sm:$0x8]
  %vm8576 = vcmask 1043459
  %v8577 = vsel %vm8576, %v8575, %v8573
  %s8578 = scalar_lea.vmem %s0, 894
  %v8579 = vld [vmem:[%s8578] sm:$0x10]
  %vm8580 = vcmask 1044484
  %v8581 = vsel %vm8580, %v8579, %v8577
  %s8582 = scalar_lea.vmem %s0, 925
  %v8583 = vld [vmem:[%s8582] sm:$0x20]
  %vm8584 = vcmask 1045509
  %v8585 = vsel %vm8584, %v8583, %v8581
  %s8586 = scalar_lea.vmem %s0, 956
  %v8587 = vld [vmem:[%s8586] sm:$0x40]
  %vm8588 = vcmask 1046534
  %v8589 = vsel %vm8588, %v8587, %v8585
  %s8590 = scalar_lea.vmem %s0, 987
  %v8591 = vld [vmem:[%s8590] sm:$0x80]
  %vm8592 = vcmask 1047559
  %v8593 = vsel %vm8592, %v8591, %v8589
  %8594 = vrot.lane.b32.xlu0 %v8593, 8
  %v8595 = vpop.permute.xlu0 %8594
  %vm8596 = vcmask 97344
  %s8597 = scalar_lea.vmem %s1, 24
  %8598 = vst.msk [vmem:[%s8597] sm:$0xff] %vm8596, %v8595
  %s8599 = scalar_lea.vmem %s0, 1794
  %v8600 = vld [vmem:[%s8599] sm:$0x1]
  %s8601 = scalar_lea.vmem %s0, 1825
  %v8602 = vld [vmem:[%s8601] sm:$0x2]
  %vm8603 = vcmask 1041409
  %v8604 = vsel %vm8603, %v8602, %v8600
  %s8605 = scalar_lea.vmem %s0, 1856
  %v8606 = vld [vmem:[%s8605] sm:$0x4]
  %vm8607 = vcmask 1042434
  %v8608 = vsel %vm8607, %v8606, %v8604
  %s8609 = scalar_lea.vmem %s0, 1887
  %v8610 = vld [vmem:[%s8609] sm:$0x8]
  %vm8611 = vcmask 1043459
  %v8612 = vsel %vm8611, %v8610, %v8608
  %s8613 = scalar_lea.vmem %s0, 1918
  %v8614 = vld [vmem:[%s8613] sm:$0x10]
  %vm8615 = vcmask 1044484
  %v8616 = vsel %vm8615, %v8614, %v8612
  %s8617 = scalar_lea.vmem %s0, 1949
  %v8618 = vld [vmem:[%s8617] sm:$0x20]
  %vm8619 = vcmask 1045509
  %v8620 = vsel %vm8619, %v8618, %v8616
  %s8621 = scalar_lea.vmem %s0, 1980
  %v8622 = vld [vmem:[%s8621] sm:$0x40]
  %vm8623 = vcmask 1046534
  %v8624 = vsel %vm8623, %v8622, %v8620
  %s8625 = scalar_lea.vmem %s0, 2011
  %v8626 = vld [vmem:[%s8625] sm:$0x80]
  %vm8627 = vcmask 1047559
  %v8628 = vsel %vm8627, %v8626, %v8624
  %8629 = vrot.lane.b32.xlu0 %v8628, 8
  %v8630 = vpop.permute.xlu0 %8629
  %vm8631 = vcmask 97344
  %s8632 = scalar_lea.vmem %s1, 56
  %8633 = vst.msk [vmem:[%s8632] sm:$0xff] %vm8631, %v8630
  %s8634 = scalar_lea.vmem %s0, 1
  %v8635 = vld [vmem:[%s8634] sm:$0x1]
  %s8636 = scalar_lea.vmem %s0, 32
  %v8637 = vld [vmem:[%s8636] sm:$0x2]
  %vm8638 = vcmask 1041409
  %v8639 = vsel %vm8638, %v8637, %v8635
  %s8640 = scalar_lea.vmem %s0, 63
  %v8641 = vld [vmem:[%s8640] sm:$0x4]
  %vm8642 = vcmask 1042434
  %v8643 = vsel %vm8642, %v8641, %v8639
  %s8644 = scalar_lea.vmem %s0, 94
  %v8645 = vld [vmem:[%s8644] sm:$0x8]
  %vm8646 = vcmask 1043459
  %v8647 = vsel %vm8646, %v8645, %v8643
  %s8648 = scalar_lea.vmem %s0, 125
  %v8649 = vld [vmem:[%s8648] sm:$0x10]
  %vm8650 = vcmask 1044484
  %v8651 = vsel %vm8650, %v8649, %v8647
  %s8652 = scalar_lea.vmem %s0, 156
  %v8653 = vld [vmem:[%s8652] sm:$0x20]
  %vm8654 = vcmask 1045509
  %v8655 = vsel %vm8654, %v8653, %v8651
  %s8656 = scalar_lea.vmem %s0, 187
  %v8657 = vld [vmem:[%s8656] sm:$0x40]
  %vm8658 = vcmask 1046534
  %v8659 = vsel %vm8658, %v8657, %v8655
  %s8660 = scalar_lea.vmem %s0, 218
  %v8661 = vld [vmem:[%s8660] sm:$0x80]
  %vm8662 = vcmask 1047559
  %v8663 = vsel %vm8662, %v8661, %v8659
  %8664 = vrot.lane.b32.xlu0 %v8663, 4
  %v8665 = vpop.permute.xlu0 %8664
  %vm8666 = vcmask 64544
  %8667 = vst.msk [vmem:[%s1] sm:$0xff] %vm8666, %v8665
  %s8668 = scalar_lea.vmem %s0, 1025
  %v8669 = vld [vmem:[%s8668] sm:$0x1]
  %s8670 = scalar_lea.vmem %s0, 1056
  %v8671 = vld [vmem:[%s8670] sm:$0x2]
  %vm8672 = vcmask 1041409
  %v8673 = vsel %vm8672, %v8671, %v8669
  %s8674 = scalar_lea.vmem %s0, 1087
  %v8675 = vld [vmem:[%s8674] sm:$0x4]
  %vm8676 = vcmask 1042434
  %v8677 = vsel %vm8676, %v8675, %v8673
  %s8678 = scalar_lea.vmem %s0, 1118
  %v8679 = vld [vmem:[%s8678] sm:$0x8]
  %vm8680 = vcmask 1043459
  %v8681 = vsel %vm8680, %v8679, %v8677
  %s8682 = scalar_lea.vmem %s0, 1149
  %v8683 = vld [vmem:[%s8682] sm:$0x10]
  %vm8684 = vcmask 1044484
  %v8685 = vsel %vm8684, %v8683, %v8681
  %s8686 = scalar_lea.vmem %s0, 1180
  %v8687 = vld [vmem:[%s8686] sm:$0x20]
  %vm8688 = vcmask 1045509
  %v8689 = vsel %vm8688, %v8687, %v8685
  %s8690 = scalar_lea.vmem %s0, 1211
  %v8691 = vld [vmem:[%s8690] sm:$0x40]
  %vm8692 = vcmask 1046534
  %v8693 = vsel %vm8692, %v8691, %v8689
  %s8694 = scalar_lea.vmem %s0, 1242
  %v8695 = vld [vmem:[%s8694] sm:$0x80]
  %vm8696 = vcmask 1047559
  %v8697 = vsel %vm8696, %v8695, %v8693
  %8698 = vrot.lane.b32.xlu0 %v8697, 4
  %v8699 = vpop.permute.xlu0 %8698
  %vm8700 = vcmask 64544
  %s8701 = scalar_lea.vmem %s1, 32
  %8702 = vst.msk [vmem:[%s8701] sm:$0xff] %vm8700, %v8699
  %s8703 = scalar_lea.vmem %s0, 257
  %v8704 = vld [vmem:[%s8703] sm:$0x1]
  %s8705 = scalar_lea.vmem %s0, 288
  %v8706 = vld [vmem:[%s8705] sm:$0x2]
  %vm8707 = vcmask 1041409
  %v8708 = vsel %vm8707, %v8706, %v8704
  %s8709 = scalar_lea.vmem %s0, 319
  %v8710 = vld [vmem:[%s8709] sm:$0x4]
  %vm8711 = vcmask 1042434
  %v8712 = vsel %vm8711, %v8710, %v8708
  %s8713 = scalar_lea.vmem %s0, 350
  %v8714 = vld [vmem:[%s8713] sm:$0x8]
  %vm8715 = vcmask 1043459
  %v8716 = vsel %vm8715, %v8714, %v8712
  %s8717 = scalar_lea.vmem %s0, 381
  %v8718 = vld [vmem:[%s8717] sm:$0x10]
  %vm8719 = vcmask 1044484
  %v8720 = vsel %vm8719, %v8718, %v8716
  %s8721 = scalar_lea.vmem %s0, 412
  %v8722 = vld [vmem:[%s8721] sm:$0x20]
  %vm8723 = vcmask 1045509
  %v8724 = vsel %vm8723, %v8722, %v8720
  %s8725 = scalar_lea.vmem %s0, 443
  %v8726 = vld [vmem:[%s8725] sm:$0x40]
  %vm8727 = vcmask 1046534
  %v8728 = vsel %vm8727, %v8726, %v8724
  %s8729 = scalar_lea.vmem %s0, 474
  %v8730 = vld [vmem:[%s8729] sm:$0x80]
  %vm8731 = vcmask 1047559
  %v8732 = vsel %vm8731, %v8730, %v8728
  %8733 = vrot.lane.b32.xlu0 %v8732, 4
  %v8734 = vpop.permute.xlu0 %8733
  %vm8735 = vcmask 64544
  %s8736 = scalar_lea.vmem %s1, 8
  %8737 = vst.msk [vmem:[%s8736] sm:$0xff] %vm8735, %v8734
  %s8738 = scalar_lea.vmem %s0, 1281
  %v8739 = vld [vmem:[%s8738] sm:$0x1]
  %s8740 = scalar_lea.vmem %s0, 1312
  %v8741 = vld [vmem:[%s8740] sm:$0x2]
  %vm8742 = vcmask 1041409
  %v8743 = vsel %vm8742, %v8741, %v8739
  %s8744 = scalar_lea.vmem %s0, 1343
  %v8745 = vld [vmem:[%s8744] sm:$0x4]
  %vm8746 = vcmask 1042434
  %v8747 = vsel %vm8746, %v8745, %v8743
  %s8748 = scalar_lea.vmem %s0, 1374
  %v8749 = vld [vmem:[%s8748] sm:$0x8]
  %vm8750 = vcmask 1043459
  %v8751 = vsel %vm8750, %v8749, %v8747
  %s8752 = scalar_lea.vmem %s0, 1405
  %v8753 = vld [vmem:[%s8752] sm:$0x10]
  %vm8754 = vcmask 1044484
  %v8755 = vsel %vm8754, %v8753, %v8751
  %s8756 = scalar_lea.vmem %s0, 1436
  %v8757 = vld [vmem:[%s8756] sm:$0x20]
  %vm8758 = vcmask 1045509
  %v8759 = vsel %vm8758, %v8757, %v8755
  %s8760 = scalar_lea.vmem %s0, 1467
  %v8761 = vld [vmem:[%s8760] sm:$0x40]
  %vm8762 = vcmask 1046534
  %v8763 = vsel %vm8762, %v8761, %v8759
  %s8764 = scalar_lea.vmem %s0, 1498
  %v8765 = vld [vmem:[%s8764] sm:$0x80]
  %vm8766 = vcmask 1047559
  %v8767 = vsel %vm8766, %v8765, %v8763
  %8768 = vrot.lane.b32.xlu0 %v8767, 4
  %v8769 = vpop.permute.xlu0 %8768
  %vm8770 = vcmask 64544
  %s8771 = scalar_lea.vmem %s1, 40
  %8772 = vst.msk [vmem:[%s8771] sm:$0xff] %vm8770, %v8769
  %s8773 = scalar_lea.vmem %s0, 513
  %v8774 = vld [vmem:[%s8773] sm:$0x1]
  %s8775 = scalar_lea.vmem %s0, 544
  %v8776 = vld [vmem:[%s8775] sm:$0x2]
  %vm8777 = vcmask 1041409
  %v8778 = vsel %vm8777, %v8776, %v8774
  %s8779 = scalar_lea.vmem %s0, 575
  %v8780 = vld [vmem:[%s8779] sm:$0x4]
  %vm8781 = vcmask 1042434
  %v8782 = vsel %vm8781, %v8780, %v8778
  %s8783 = scalar_lea.vmem %s0, 606
  %v8784 = vld [vmem:[%s8783] sm:$0x8]
  %vm8785 = vcmask 1043459
  %v8786 = vsel %vm8785, %v8784, %v8782
  %s8787 = scalar_lea.vmem %s0, 637
  %v8788 = vld [vmem:[%s8787] sm:$0x10]
  %vm8789 = vcmask 1044484
  %v8790 = vsel %vm8789, %v8788, %v8786
  %s8791 = scalar_lea.vmem %s0, 668
  %v8792 = vld [vmem:[%s8791] sm:$0x20]
  %vm8793 = vcmask 1045509
  %v8794 = vsel %vm8793, %v8792, %v8790
  %s8795 = scalar_lea.vmem %s0, 699
  %v8796 = vld [vmem:[%s8795] sm:$0x40]
  %vm8797 = vcmask 1046534
  %v8798 = vsel %vm8797, %v8796, %v8794
  %s8799 = scalar_lea.vmem %s0, 730
  %v8800 = vld [vmem:[%s8799] sm:$0x80]
  %vm8801 = vcmask 1047559
  %v8802 = vsel %vm8801, %v8800, %v8798
  %8803 = vrot.lane.b32.xlu0 %v8802, 4
  %v8804 = vpop.permute.xlu0 %8803
  %vm8805 = vcmask 64544
  %s8806 = scalar_lea.vmem %s1, 16
  %8807 = vst.msk [vmem:[%s8806] sm:$0xff] %vm8805, %v8804
  %s8808 = scalar_lea.vmem %s0, 1537
  %v8809 = vld [vmem:[%s8808] sm:$0x1]
  %s8810 = scalar_lea.vmem %s0, 1568
  %v8811 = vld [vmem:[%s8810] sm:$0x2]
  %vm8812 = vcmask 1041409
  %v8813 = vsel %vm8812, %v8811, %v8809
  %s8814 = scalar_lea.vmem %s0, 1599
  %v8815 = vld [vmem:[%s8814] sm:$0x4]
  %vm8816 = vcmask 1042434
  %v8817 = vsel %vm8816, %v8815, %v8813
  %s8818 = scalar_lea.vmem %s0, 1630
  %v8819 = vld [vmem:[%s8818] sm:$0x8]
  %vm8820 = vcmask 1043459
  %v8821 = vsel %vm8820, %v8819, %v8817
  %s8822 = scalar_lea.vmem %s0, 1661
  %v8823 = vld [vmem:[%s8822] sm:$0x10]
  %vm8824 = vcmask 1044484
  %v8825 = vsel %vm8824, %v8823, %v8821
  %s8826 = scalar_lea.vmem %s0, 1692
  %v8827 = vld [vmem:[%s8826] sm:$0x20]
  %vm8828 = vcmask 1045509
  %v8829 = vsel %vm8828, %v8827, %v8825
  %s8830 = scalar_lea.vmem %s0, 1723
  %v8831 = vld [vmem:[%s8830] sm:$0x40]
  %vm8832 = vcmask 1046534
  %v8833 = vsel %vm8832, %v8831, %v8829
  %s8834 = scalar_lea.vmem %s0, 1754
  %v8835 = vld [vmem:[%s8834] sm:$0x80]
  %vm8836 = vcmask 1047559
  %v8837 = vsel %vm8836, %v8835, %v8833
  %8838 = vrot.lane.b32.xlu0 %v8837, 4
  %v8839 = vpop.permute.xlu0 %8838
  %vm8840 = vcmask 64544
  %s8841 = scalar_lea.vmem %s1, 48
  %8842 = vst.msk [vmem:[%s8841] sm:$0xff] %vm8840, %v8839
  %s8843 = scalar_lea.vmem %s0, 769
  %v8844 = vld [vmem:[%s8843] sm:$0x1]
  %s8845 = scalar_lea.vmem %s0, 800
  %v8846 = vld [vmem:[%s8845] sm:$0x2]
  %vm8847 = vcmask 1041409
  %v8848 = vsel %vm8847, %v8846, %v8844
  %s8849 = scalar_lea.vmem %s0, 831
  %v8850 = vld [vmem:[%s8849] sm:$0x4]
  %vm8851 = vcmask 1042434
  %v8852 = vsel %vm8851, %v8850, %v8848
  %s8853 = scalar_lea.vmem %s0, 862
  %v8854 = vld [vmem:[%s8853] sm:$0x8]
  %vm8855 = vcmask 1043459
  %v8856 = vsel %vm8855, %v8854, %v8852
  %s8857 = scalar_lea.vmem %s0, 893
  %v8858 = vld [vmem:[%s8857] sm:$0x10]
  %vm8859 = vcmask 1044484
  %v8860 = vsel %vm8859, %v8858, %v8856
  %s8861 = scalar_lea.vmem %s0, 924
  %v8862 = vld [vmem:[%s8861] sm:$0x20]
  %vm8863 = vcmask 1045509
  %v8864 = vsel %vm8863, %v8862, %v8860
  %s8865 = scalar_lea.vmem %s0, 955
  %v8866 = vld [vmem:[%s8865] sm:$0x40]
  %vm8867 = vcmask 1046534
  %v8868 = vsel %vm8867, %v8866, %v8864
  %s8869 = scalar_lea.vmem %s0, 986
  %v8870 = vld [vmem:[%s8869] sm:$0x80]
  %vm8871 = vcmask 1047559
  %v8872 = vsel %vm8871, %v8870, %v8868
  %8873 = vrot.lane.b32.xlu0 %v8872, 4
  %v8874 = vpop.permute.xlu0 %8873
  %vm8875 = vcmask 64544
  %s8876 = scalar_lea.vmem %s1, 24
  %8877 = vst.msk [vmem:[%s8876] sm:$0xff] %vm8875, %v8874
  %s8878 = scalar_lea.vmem %s0, 1793
  %v8879 = vld [vmem:[%s8878] sm:$0x1]
  %s8880 = scalar_lea.vmem %s0, 1824
  %v8881 = vld [vmem:[%s8880] sm:$0x2]
  %vm8882 = vcmask 1041409
  %v8883 = vsel %vm8882, %v8881, %v8879
  %s8884 = scalar_lea.vmem %s0, 1855
  %v8885 = vld [vmem:[%s8884] sm:$0x4]
  %vm8886 = vcmask 1042434
  %v8887 = vsel %vm8886, %v8885, %v8883
  %s8888 = scalar_lea.vmem %s0, 1886
  %v8889 = vld [vmem:[%s8888] sm:$0x8]
  %vm8890 = vcmask 1043459
  %v8891 = vsel %vm8890, %v8889, %v8887
  %s8892 = scalar_lea.vmem %s0, 1917
  %v8893 = vld [vmem:[%s8892] sm:$0x10]
  %vm8894 = vcmask 1044484
  %v8895 = vsel %vm8894, %v8893, %v8891
  %s8896 = scalar_lea.vmem %s0, 1948
  %v8897 = vld [vmem:[%s8896] sm:$0x20]
  %vm8898 = vcmask 1045509
  %v8899 = vsel %vm8898, %v8897, %v8895
  %s8900 = scalar_lea.vmem %s0, 1979
  %v8901 = vld [vmem:[%s8900] sm:$0x40]
  %vm8902 = vcmask 1046534
  %v8903 = vsel %vm8902, %v8901, %v8899
  %s8904 = scalar_lea.vmem %s0, 2010
  %v8905 = vld [vmem:[%s8904] sm:$0x80]
  %vm8906 = vcmask 1047559
  %v8907 = vsel %vm8906, %v8905, %v8903
  %8908 = vrot.lane.b32.xlu0 %v8907, 4
  %v8909 = vpop.permute.xlu0 %8908
  %vm8910 = vcmask 64544
  %s8911 = scalar_lea.vmem %s1, 56
  %8912 = vst.msk [vmem:[%s8911] sm:$0xff] %vm8910, %v8909

// kernel: _lambda_.1
$region0: #{_lambda_.1}
  #allocation0 [shape = 'u32[]', space=smem, size = 0x4, offset = 0x4, fixed_abs, tag = 'smem constant byte address 0x4 - core index']
  #allocation1 [shape = 'u32[72,128]{1,0:T(1,128)}', space=vmem, size = 0x9000, scoped, tag = 'internal scratch']
  %s0 = inlined_call_operand.vmem [shape: bf16[2,18,64], index: 0, kind: input, shape index: {}]
  %s1 = inlined_call_operand.vmem [shape: bf16[3,64,256], index: 1, kind: input, shape index: {}]
  %s2 = inlined_call_operand.vmem [shape: f32[1,256], index: 2, kind: input, shape index: {}]
  %s3 = inlined_call_operand.vmem [shape: f32[2,16,256], index: 3, kind: output, shape index: {}]
  %s4 = sld [smem:[#allocation0]]
  $region45: #{_lambda_.1} parent=0
    _
  %s6 = ssub.s32 1, %s4
  %s7 = scalar_select 0, %s6, %s4
  loop: start=0, step=1, limit=4
  $region2: #{_lambda_.1} parent=0 // loop_pre_header
    _
  $region3: #{_lambda_.1} parent=0 // loop_header
    %s9 = sphi 0, %s13
    %p10 = scmp.ge.s32.totalorder %s9, 4
    %s16 = sphi 0, %s28
    %s17 = sphi 0, %s24
    %s18 = sphi 0, %s16
    %s19 = sphi 0, %s17
    %s20 = sphi 0, %s18
    %s21 = sphi 0, %s19
    %s31 = sphi 0, %s33
    %s34 = sphi 0, %s31
    %s35 = sphi 0, %s34
    %s51 = sphi 0, %s35
    %s57 = sphi 0, %s59
    %s60 = sphi 0, %s57
    %s61 = sphi 0, %s60
    %s77 = sphi 0, %s61
    %s83 = sphi 0, %s85
    %s86 = sphi 0, %s83
    %s87 = sphi 0, %s86
    %s103 = sphi 0, %s87
    %s111 = sphi 0, %s113
    %s114 = sphi 0, %s111
    %s115 = sphi 0, %s114
    %s131 = sphi 0, %s115
  $region4: #{_lambda_.1} parent=0 // loop_header_branch
    %12 = sbr.rel (%p10) target = $region8
  $region5: #{_lambda_.1} parent=0 // loop_body
    %s14 = ssub.s32 %s9, 1
    %s15 = ssub.s32 %s9, 2
    %s22 = sadd.s32 1, %s17
    %p23 = scmp.ge.s32.totalorder %s22, 1
    %s24 = scalar_select %p23, 0, %s22
    %s25 = sadd.s32 1, %s16
    %s26 = scalar_select %p23, %s25, %s16
    %p27 = scmp.ge.s32.totalorder %s26, 2
    %s28 = scalar_select %p27, 0, %s26
    %s29 = ssub.s32 %s16, %s28
    %p30 = scmp.eq.s32.totalorder %s29, 0
    %s32 = sadd.s32 %s31, 1
    %s33 = scalar_select %p30, %s31, %s32
    %p36 = pneg %p30
    %p37 = scmp.eq.s32.totalorder %s9, 1
    %p38 = por %p36, %p37
    %p39 = scmp.ne.s32.totalorder %s31, %s34
    %p40 = scmp.eq.s32.totalorder %s9, 0
    %p41 = por %p39, %p40
    %p42 = scmp.ne.s32.totalorder %s31, %s34
    %p43 = scmp.eq.s32.totalorder %s14, 1
    %p44 = por %p42, %p43
    %p45 = scmp.ne.s32.totalorder %s34, %s35
    %p46 = scmp.eq.s32.totalorder %s14, 0
    %p47 = por %p45, %p46
    %p48 = scmp.ne.s32.totalorder %s34, %s35
    %p49 = scmp.eq.s32.totalorder %s15, 1
    %p50 = por %p48, %p49
    %p52 = scmp.ne.s32.totalorder %s35, %s51
    %p53 = scmp.eq.s32.totalorder %s15, 0
    %p54 = por %p52, %p53
    %s55 = ssub.s32 %s17, %s24
    %p56 = scmp.eq.s32.totalorder %s55, 0
    %s58 = sadd.s32 %s57, 1
    %s59 = scalar_select %p56, %s57, %s58
    %p62 = pneg %p56
    %p63 = scmp.eq.s32.totalorder %s9, 1
    %p64 = por %p62, %p63
    %p65 = scmp.ne.s32.totalorder %s57, %s60
    %p66 = scmp.eq.s32.totalorder %s9, 0
    %p67 = por %p65, %p66
    %p68 = scmp.ne.s32.totalorder %s57, %s60
    %p69 = scmp.eq.s32.totalorder %s14, 1
    %p70 = por %p68, %p69
    %p71 = scmp.ne.s32.totalorder %s60, %s61
    %p72 = scmp.eq.s32.totalorder %s14, 0
    %p73 = por %p71, %p72
    %p74 = scmp.ne.s32.totalorder %s60, %s61
    %p75 = scmp.eq.s32.totalorder %s15, 1
    %p76 = por %p74, %p75
    %p78 = scmp.ne.s32.totalorder %s61, %s77
    %p79 = scmp.eq.s32.totalorder %s15, 0
    %p80 = por %p78, %p79
    %s81 = ssub.s32 %s17, %s24
    %p82 = scmp.eq.s32.totalorder %s81, 0
    %s84 = sadd.s32 %s83, 1
    %s85 = scalar_select %p82, %s83, %s84
    %p88 = pneg %p82
    %p89 = scmp.eq.s32.totalorder %s9, 1
    %p90 = por %p88, %p89
    %p91 = scmp.ne.s32.totalorder %s83, %s86
    %p92 = scmp.eq.s32.totalorder %s9, 0
    %p93 = por %p91, %p92
    %p94 = scmp.ne.s32.totalorder %s83, %s86
    %p95 = scmp.eq.s32.totalorder %s14, 1
    %p96 = por %p94, %p95
    %p97 = scmp.ne.s32.totalorder %s86, %s87
    %p98 = scmp.eq.s32.totalorder %s14, 0
    %p99 = por %p97, %p98
    %p100 = scmp.ne.s32.totalorder %s86, %s87
    %p101 = scmp.eq.s32.totalorder %s15, 1
    %p102 = por %p100, %p101
    %p104 = scmp.ne.s32.totalorder %s87, %s103
    %p105 = scmp.eq.s32.totalorder %s15, 0
    %p106 = por %p104, %p105
    %s107 = ssub.s32 %s16, %s28
    %s108 = ssub.s32 %s17, %s24
    %s109 = sor.u32 %s107, %s108
    %p110 = scmp.eq.s32.totalorder %s109, 0
    %s112 = sadd.s32 %s111, 1
    %s113 = scalar_select %p110, %s111, %s112
    %p116 = pneg %p110
    %p117 = scmp.eq.s32.totalorder %s9, 1
    %p118 = por %p116, %p117
    %p119 = scmp.ne.s32.totalorder %s111, %s114
    %p120 = scmp.eq.s32.totalorder %s9, 0
    %p121 = por %p119, %p120
    %p122 = scmp.ne.s32.totalorder %s111, %s114
    %p123 = scmp.eq.s32.totalorder %s14, 1
    %p124 = por %p122, %p123
    %p125 = scmp.ne.s32.totalorder %s114, %s115
    %p126 = scmp.eq.s32.totalorder %s14, 0
    %p127 = por %p125, %p126
    %p128 = scmp.ne.s32.totalorder %s114, %s115
    %p129 = scmp.eq.s32.totalorder %s15, 1
    %p130 = por %p128, %p129
    %p132 = scmp.ne.s32.totalorder %s115, %s131
    %p133 = scmp.eq.s32.totalorder %s15, 0
    %p134 = por %p132, %p133
    %p135 = scmp.le.s32.totalorder 1, %s9
    %p136 = scmp.lt.s32.totalorder %s9, 3
    %p137 = pnand %p135, %p136
    %p138 = pneg %p137
    // Predicated region
    $region9: #{_lambda_.1} parent=5 // pred_check
      _
    $region10: #{_lambda_.1} parent=5 // pred_check_branch
      %140 = sbr.rel (%p137) target = $region12
    $region11: #{_lambda_.1} parent=5 // pred_region
      %s141 = ssub.s32 %s9, 1
      // Predicated region
      $region13: #{_lambda_.1} parent=11 // pred_check
        %p142 = pneg %p73
      $region14: #{_lambda_.1} parent=11 // pred_check_branch
        %144 = sbr.rel (%p142) target = $region16
      $region15: #{_lambda_.1} parent=11 // pred_region
        %s145 = smul.u32 2, %s19
        %p146 = scmp.lt.s32.totalorder %s145, 1
        %s147 = scalar_select %p146, %s145, 1
        %s148 = smul.addr %s147, 4
        %s149 = scalar_lea.vmem %s1, %s148
        %s150 = smul.u32 2, %s19
      $region16: #{_lambda_.1} parent=11 // pred_fallthru
        _
      // Predicated region
      $region17: #{_lambda_.1} parent=11 // pred_check
        %p151 = pneg %p99
      $region18: #{_lambda_.1} parent=11 // pred_check_branch
        %153 = sbr.rel (%p151) target = $region20
      $region19: #{_lambda_.1} parent=11 // pred_region
        %s154 = smul.u32 2, %s19
        %p155 = scmp.lt.s32.totalorder %s154, 1
        %s156 = scalar_select %p155, %s154, 1
        %s157 = scalar_lea.vmem %s2, %s156
        %s158 = smul.u32 2, %s19
      $region20: #{_lambda_.1} parent=11 // pred_fallthru
        _
    $region12: #{_lambda_.1} parent=5 // pred_fallthru
      _
    %p159 = scmp.lt.s32.totalorder %s9, 2
    // Predicated region
    $region21: #{_lambda_.1} parent=5 // pred_check
      %p160 = pneg %p159
    $region22: #{_lambda_.1} parent=5 // pred_check_branch
      %162 = sbr.rel (%p160) target = $region24
    $region23: #{_lambda_.1} parent=5 // pred_region
      // Predicated region
      $region25: #{_lambda_.1} parent=23 // pred_check
        %p163 = pneg %p41
      $region26: #{_lambda_.1} parent=23 // pred_check_branch
        %165 = sbr.rel (%p163) target = $region28
      $region27: #{_lambda_.1} parent=23 // pred_region
        %p166 = scmp.lt.s32.totalorder %s16, 1
        %s167 = scalar_select %p166, %s16, 1
        %s168 = smul.addr %s167, 3
        %s169 = smul.addr %s168, 4
        %s170 = scalar_lea.vmem %s0, %s169
      $region28: #{_lambda_.1} parent=23 // pred_fallthru
        _
    $region24: #{_lambda_.1} parent=5 // pred_fallthru
      _
    %p171 = scmp.le.s32.totalorder 1, %s9
    %p172 = scmp.lt.s32.totalorder %s9, 3
    %p173 = pnand %p171, %p172
    %p174 = pneg %p173
    // Predicated region
    $region29: #{_lambda_.1} parent=5 // pred_check
      _
    $region30: #{_lambda_.1} parent=5 // pred_check_branch
      %176 = sbr.rel (%p173) target = $region32
    $region31: #{_lambda_.1} parent=5 // pred_region
      %s177 = ssub.s32 %s9, 1
      %p178 = scmp.lt.s32.totalorder %s18, 1
      %s179 = scalar_select %p178, %s18, 1
      %s180 = smul.addr %s179, 3
      %s181 = smul.addr %s180, 4
      %s182 = scalar_lea.vmem %s0, %s181
      %p183 = pneg %p47
      %p184 = pneg %p44
      %s185 = smul.u32 2, %s19
      %p186 = scmp.lt.s32.totalorder %s185, 1
      %s187 = scalar_select %p186, %s185, 1
      %s188 = smul.addr %s187, 4
      %s189 = scalar_lea.vmem %s1, %s188
      %p190 = pneg %p73
      %p191 = pneg %p70
      %s192 = smul.u32 2, %s19
      %p193 = scmp.lt.s32.totalorder %s192, 1
      %s194 = scalar_select %p193, %s192, 1
      %s195 = scalar_lea.vmem %s2, %s194
      %p196 = pneg %p99
      %p197 = pneg %p96
      %p198 = pneg %p127
      %p199 = pneg %p124
      %s200 = smul.u32 2, %s19
      %p201 = scmp.lt.s32.totalorder %s18, 1
      %s202 = scalar_select %p201, %s18, 1
      %p203 = scmp.lt.s32.totalorder %s200, 1
      %s204 = scalar_select %p203, %s200, 1
      %s205 = smul.addr %s202, 4
      %s206 = sadd.s32 %s204, %s205
      %s207 = smul.addr %s206, 8
      %s208 = scalar_lea.vmem %s3, %s207
      %p209 = scmp.lt.s32.totalorder %s18, 1
      %s210 = scalar_select %p209, %s18, 1
      %s211 = smul.addr %s210, 3
      %s212 = smul.addr %s211, 4
      %s213 = scalar_lea.vmem %s0, %s212
      %s214 = smul.u32 2, %s19
      %p215 = scmp.lt.s32.totalorder %s214, 1
      %s216 = scalar_select %p215, %s214, 1
      %s217 = smul.addr %s216, 4
      %s218 = scalar_lea.vmem %s1, %s217
      %s219 = smul.u32 2, %s19
      %s220 = smul.u32 2, %s19
      %p221 = scmp.lt.s32.totalorder %s220, 1
      %s222 = scalar_select %p221, %s220, 1
      %s223 = scalar_lea.vmem %s2, %s222
      %s224 = smul.u32 2, %s19
      %s225 = smul.u32 2, %s19
      %p226 = scmp.lt.s32.totalorder %s18, 1
      %s227 = scalar_select %p226, %s18, 1
      %p228 = scmp.lt.s32.totalorder %s225, 1
      %s229 = scalar_select %p228, %s225, 1
      %s230 = smul.addr %s227, 4
      %s231 = sadd.s32 %s229, %s230
      %s232 = smul.addr %s231, 8
      %s233 = scalar_lea.vmem %s3, %s232
      %s234 = smul.u32 2, %s19
      %v236 = vld [vmem:[%s213] sm:$0xf]
      %v237 = vld [vmem:[%s213 + $0x4] sm:$0xf]
      %v238 = vld [vmem:[%s213 + $0x8] sm:$0x1]
      %v239 = vld [vmem:[%s218] sm:$0xff]
      %v240 = vld [vmem:[%s218 + $0x8] sm:$0xff]
      %v241 = vld [vmem:[%s218 + $0x10] sm:$0xff]
      %v242 = vld [vmem:[%s218 + $0x18] sm:$0xff]
      %v243 = vld [vmem:[%s218 + $0x20] sm:$0xff]
      %v244 = vld [vmem:[%s218 + $0x28] sm:$0xff]
      %v245 = vld [vmem:[%s218 + $0x30] sm:$0xff]
      %v246 = vld [vmem:[%s218 + $0x38] sm:$0xff]
      %s247 = scalar_lea.vmem %s218, 64
      %v248 = vld [vmem:[%s247] sm:$0xff]
      %v249 = vld [vmem:[%s247 + $0x8] sm:$0xff]
      %v250 = vld [vmem:[%s247 + $0x10] sm:$0xff]
      %v251 = vld [vmem:[%s247 + $0x18] sm:$0xff]
      %v252 = vld [vmem:[%s247 + $0x20] sm:$0xff]
      %v253 = vld [vmem:[%s247 + $0x28] sm:$0xff]
      %v254 = vld [vmem:[%s247 + $0x30] sm:$0xff]
      %v255 = vld [vmem:[%s247 + $0x38] sm:$0xff]
      %v259 = vunpack.c.l.b16 %v236
      %v260 = vunpack.c.l.b16 %v237
      %v261 = vunpack.c.l.b16 %v238
      %v262 = vpack.c.b16 %v260, %v259
      %v263 = vpack.c.b16 %v261, %v261
      %vm264 = vsmask.f32 7424
      %v266 = vshrl.u32 %v262, 16
      %v268 = vshll.u32 %v262, 16
      %v270 = vrot.slane %v268, 1
      %v271 = vor.u32 %v266, %v270
      %v273 = vshll.u32 %v263, 16
      %v275 = vrot.slane %v273, 1
      %v276 = vsel %vm264, %v271, %v275
      %v285 = vunpack.c.l.b16 %v248
      %v286 = vunpack.c.h.b16 %v248
      %v287 = vunpack.c.l.b16 %v249
      %v288 = vunpack.c.h.b16 %v249
      %v289 = vunpack.c.l.b16 %v250
      %v290 = vunpack.c.h.b16 %v250
      %v291 = vunpack.c.l.b16 %v251
      %v292 = vunpack.c.h.b16 %v251
      %v293 = vunpack.c.l.b16 %v252
      %v294 = vunpack.c.h.b16 %v252
      %v295 = vunpack.c.l.b16 %v253
      %v296 = vunpack.c.h.b16 %v253
      %v297 = vunpack.c.l.b16 %v254
      %v298 = vunpack.c.h.b16 %v254
      %v299 = vunpack.c.l.b16 %v255
      %v300 = vunpack.c.h.b16 %v255
      %v301 = vpack.c.b16 %v287, %v285
      %v302 = vpack.c.b16 %v288, %v286
      %v303 = vpack.c.b16 %v291, %v289
      %v304 = vpack.c.b16 %v292, %v290
      %v305 = vpack.c.b16 %v295, %v293
      %v306 = vpack.c.b16 %v296, %v294
      %v307 = vpack.c.b16 %v299, %v297
      %v308 = vpack.c.b16 %v300, %v298
      %vm317 = vcmask 523264
      %v319 = vsel %vm317, %v276, 0
      %321 = vmatpush.bf16.msra.mxu0 0
      %322 = vmatpush.bf16.msra.mxu0 0
      %323 = vmatpush.bf16.msra.mxu0 0
      %324 = vmatpush.bf16.msra.mxu0 0
      %325 = vmatpush.bf16.msra.mxu0 %v307
      %326 = vmatpush.bf16.msra.mxu0 %v305
      %327 = vmatpush.bf16.msra.mxu0 %v303
      %328 = vmatpush.bf16.msra.mxu0 %v301
      %329 = vmatmul.bf16.gmra.mxu0 %v319
      %v330 = vpop.f32.mrf.mxu0
      %v331 = vadd.f32 0.0, %v330
      %v332 = vpop.f32.mrf.mxu0
      %v333 = vadd.f32 0.0, %v332
      %334 = vdwg.mxu0
      %335 = vmatpush.bf16.msra.mxu0 0
      %336 = vmatpush.bf16.msra.mxu0 0
      %337 = vmatpush.bf16.msra.mxu0 0
      %338 = vmatpush.bf16.msra.mxu0 0
      %339 = vmatpush.bf16.msra.mxu0 %v308
      %340 = vmatpush.bf16.msra.mxu0 %v306
      %341 = vmatpush.bf16.msra.mxu0 %v304
      %342 = vmatpush.bf16.msra.mxu0 %v302
      %343 = vmatmul.bf16.gmra.mxu0 %v319
      %v344 = vpop.f32.mrf.mxu0
      %v345 = vadd.f32 0.0, %v344
      %v346 = vpop.f32.mrf.mxu0
      %v347 = vadd.f32 0.0, %v346
      %348 = vdwg.mxu0
      %v357 = vunpack.c.l.b16 %v239
      %v358 = vunpack.c.h.b16 %v239
      %v359 = vunpack.c.l.b16 %v240
      %v360 = vunpack.c.h.b16 %v240
      %v361 = vunpack.c.l.b16 %v241
      %v362 = vunpack.c.h.b16 %v241
      %v363 = vunpack.c.l.b16 %v242
      %v364 = vunpack.c.h.b16 %v242
      %v365 = vunpack.c.l.b16 %v243
      %v366 = vunpack.c.h.b16 %v243
      %v367 = vunpack.c.l.b16 %v244
      %v368 = vunpack.c.h.b16 %v244
      %v369 = vunpack.c.l.b16 %v245
      %v370 = vunpack.c.h.b16 %v245
      %v371 = vunpack.c.l.b16 %v246
      %v372 = vunpack.c.h.b16 %v246
      %v373 = vpack.c.b16 %v359, %v357
      %v374 = vpack.c.b16 %v360, %v358
      %v375 = vpack.c.b16 %v363, %v361
      %v376 = vpack.c.b16 %v364, %v362
      %v377 = vpack.c.b16 %v367, %v365
      %v378 = vpack.c.b16 %v368, %v366
      %v379 = vpack.c.b16 %v371, %v369
      %v380 = vpack.c.b16 %v372, %v370
      %v389 = vsel %vm317, %v262, 0
      %391 = vmatpush.bf16.msra.mxu0 0
      %392 = vmatpush.bf16.msra.mxu0 0
      %393 = vmatpush.bf16.msra.mxu0 0
      %394 = vmatpush.bf16.msra.mxu0 0
      %395 = vmatpush.bf16.msra.mxu0 %v379
      %396 = vmatpush.bf16.msra.mxu0 %v377
      %397 = vmatpush.bf16.msra.mxu0 %v375
      %398 = vmatpush.bf16.msra.mxu0 %v373
      %399 = vmatmul.bf16.gmra.mxu0 %v389
      %v400 = vpop.f32.mrf.mxu0
      %v401 = vadd.f32 %v331, %v400
      %v402 = vpop.f32.mrf.mxu0
      %v403 = vadd.f32 %v333, %v402
      %404 = vdwg.mxu0
      %405 = vmatpush.bf16.msra.mxu0 0
      %406 = vmatpush.bf16.msra.mxu0 0
      %407 = vmatpush.bf16.msra.mxu0 0
      %408 = vmatpush.bf16.msra.mxu0 0
      %409 = vmatpush.bf16.msra.mxu0 %v380
      %410 = vmatpush.bf16.msra.mxu0 %v378
      %411 = vmatpush.bf16.msra.mxu0 %v376
      %412 = vmatpush.bf16.msra.mxu0 %v374
      %413 = vmatmul.bf16.gmra.mxu0 %v389
      %v414 = vpop.f32.mrf.mxu0
      %v415 = vadd.f32 %v345, %v414
      %v416 = vpop.f32.mrf.mxu0
      %v417 = vadd.f32 %v347, %v416
      %418 = vdwg.mxu0
      %s419 = scalar_lea.vmem %s218, 128
      %v420 = vld [vmem:[%s419] sm:$0xff]
      %v421 = vld [vmem:[%s419 + $0x8] sm:$0xff]
      %v422 = vld [vmem:[%s419 + $0x10] sm:$0xff]
      %v423 = vld [vmem:[%s419 + $0x18] sm:$0xff]
      %v424 = vld [vmem:[%s419 + $0x20] sm:$0xff]
      %v425 = vld [vmem:[%s419 + $0x28] sm:$0xff]
      %v426 = vld [vmem:[%s419 + $0x30] sm:$0xff]
      %v427 = vld [vmem:[%s419 + $0x38] sm:$0xff]
      %vm428 = vcmask 1046528
      %v429 = vrot.slane %v262, 1
      %v430 = vrot.slane %v263, 1
      %v431 = vsel %vm428, %v429, %v430
      %v440 = vunpack.c.l.b16 %v420
      %v441 = vunpack.c.h.b16 %v420
      %v442 = vunpack.c.l.b16 %v421
      %v443 = vunpack.c.h.b16 %v421
      %v444 = vunpack.c.l.b16 %v422
      %v445 = vunpack.c.h.b16 %v422
      %v446 = vunpack.c.l.b16 %v423
      %v447 = vunpack.c.h.b16 %v423
      %v448 = vunpack.c.l.b16 %v424
      %v449 = vunpack.c.h.b16 %v424
      %v450 = vunpack.c.l.b16 %v425
      %v451 = vunpack.c.h.b16 %v425
      %v452 = vunpack.c.l.b16 %v426
      %v453 = vunpack.c.h.b16 %v426
      %v454 = vunpack.c.l.b16 %v427
      %v455 = vunpack.c.h.b16 %v427
      %v456 = vpack.c.b16 %v442, %v440
      %v457 = vpack.c.b16 %v443, %v441
      %v458 = vpack.c.b16 %v446, %v444
      %v459 = vpack.c.b16 %v447, %v445
      %v460 = vpack.c.b16 %v450, %v448
      %v461 = vpack.c.b16 %v451, %v449
      %v462 = vpack.c.b16 %v454, %v452
      %v463 = vpack.c.b16 %v455, %v453
      %v473 = vsel %vm317, %v431, 0
      %475 = vmatpush.bf16.msra.mxu0 0
      %476 = vmatpush.bf16.msra.mxu0 0
      %477 = vmatpush.bf16.msra.mxu0 0
      %478 = vmatpush.bf16.msra.mxu0 0
      %479 = vmatpush.bf16.msra.mxu0 %v462
      %480 = vmatpush.bf16.msra.mxu0 %v460
      %481 = vmatpush.bf16.msra.mxu0 %v458
      %482 = vmatpush.bf16.msra.mxu0 %v456
      %483 = vmatmul.bf16.gmra.mxu0 %v473
      %v484 = vpop.f32.mrf.mxu0
      %v485 = vadd.f32 0.0, %v484
      %v486 = vpop.f32.mrf.mxu0
      %v487 = vadd.f32 0.0, %v486
      %488 = vdwg.mxu0
      %489 = vmatpush.bf16.msra.mxu0 0
      %490 = vmatpush.bf16.msra.mxu0 0
      %491 = vmatpush.bf16.msra.mxu0 0
      %492 = vmatpush.bf16.msra.mxu0 0
      %493 = vmatpush.bf16.msra.mxu0 %v463
      %494 = vmatpush.bf16.msra.mxu0 %v461
      %495 = vmatpush.bf16.msra.mxu0 %v459
      %496 = vmatpush.bf16.msra.mxu0 %v457
      %497 = vmatmul.bf16.gmra.mxu0 %v473
      %v498 = vpop.f32.mrf.mxu0
      %v499 = vadd.f32 0.0, %v498
      %v500 = vpop.f32.mrf.mxu0
      %v501 = vadd.f32 0.0, %v500
      %502 = vdwg.mxu0
      %v503 = vadd.f32 %v401, %v485
      %v504 = vadd.f32 %v415, %v499
      %v505 = vadd.f32 %v403, %v487
      %v506 = vadd.f32 %v417, %v501
      %v507 = vld [vmem:[%s223] sm:$0x3]
      %v509 = vperm.slane %v507, 0
      %v510 = vperm.slane %v507, 1
      %v513 = vadd.f32 %v503, %v509
      %v514 = vadd.f32 %v504, %v510
      %v515 = vadd.f32 %v505, %v509
      %v516 = vadd.f32 %v506, %v510
      %517 = vst [vmem:[%s233] sm:$0xff] %v513
      %518 = vst [vmem:[%s233 + $0x8] sm:$0xff] %v514
      %519 = vst [vmem:[%s233 + $0x10] sm:$0xff] %v515
      %520 = vst [vmem:[%s233 + $0x18] sm:$0xff] %v516
      %s521 = smul.u32 2, %s19
      %p522 = scmp.lt.s32.totalorder %s18, 1
      %s523 = scalar_select %p522, %s18, 1
      %p524 = scmp.lt.s32.totalorder %s521, 1
      %s525 = scalar_select %p524, %s521, 1
      %s526 = smul.addr %s523, 4
      %s527 = sadd.s32 %s525, %s526
      %s528 = smul.addr %s527, 8
      %s529 = scalar_lea.vmem %s3, %s528
      // Predicated region
      $region33: #{_lambda_.1} parent=31 // pred_check
        %p530 = pneg %p124
      $region34: #{_lambda_.1} parent=31 // pred_check_branch
        %532 = sbr.rel (%p530) target = $region36
      $region35: #{_lambda_.1} parent=31 // pred_region
        %s533 = smul.u32 2, %s19
      $region36: #{_lambda_.1} parent=31 // pred_fallthru
        _
    $region32: #{_lambda_.1} parent=5 // pred_fallthru
      _
    %p534 = scmp.le.s32.totalorder 2, %s9
    // Predicated region
    $region37: #{_lambda_.1} parent=5 // pred_check
      %p535 = pneg %p534
    $region38: #{_lambda_.1} parent=5 // pred_check_branch
      %537 = sbr.rel (%p535) target = $region40
    $region39: #{_lambda_.1} parent=5 // pred_region
      %s538 = ssub.s32 %s9, 2
      // Predicated region
      $region41: #{_lambda_.1} parent=39 // pred_check
        %p539 = pneg %p130
      $region42: #{_lambda_.1} parent=39 // pred_check_branch
        %541 = sbr.rel (%p539) target = $region44
      $region43: #{_lambda_.1} parent=39 // pred_region
        %s542 = smul.u32 2, %s21
        %p543 = scmp.lt.s32.totalorder %s20, 1
        %s544 = scalar_select %p543, %s20, 1
        %p545 = scmp.lt.s32.totalorder %s542, 1
        %s546 = scalar_select %p545, %s542, 1
        %s547 = smul.addr %s544, 4
        %s548 = sadd.s32 %s546, %s547
        %s549 = smul.addr %s548, 8
        %s550 = scalar_lea.vmem %s3, %s549
      $region44: #{_lambda_.1} parent=39 // pred_fallthru
        _
    $region40: #{_lambda_.1} parent=5 // pred_fallthru
      _
  $region6: #{_lambda_.1} parent=0 // loop_footer
    %s13 = sadd.s32 1, %s9
  $region7: #{_lambda_.1} parent=0 // loop_footer_branch
    %8 = sbr.rel target = $region3
  $region8: #{_lambda_.1} parent=0 // loop_exit
    _

</llo_original>
